<compile_context>
chip_gen: v6e
topology: v6e:2x2x1
jax: 0.10.0
libtpu: 0.0.40
codegen_flags: <defaults>
</compile_context>

<pallas_src>
import math
import numpy as np
import jax
import jax.numpy as jnp
from jax import lax
from jax.experimental import pallas as pl
from jax.experimental.pallas import tpu as pltpu

H, W = 56, 128                     # input spatial size (matches x1 in the module)
K = 3                              # 3x3 kernels
OH, OW = H - K + 1, W - K + 1      # 54, 126 valid output size
C1_OUT = 5                         # Conv2d(1, 5, 3)
CT_IN, CT_OUT = 5, 5
PAD_TOP = 8                        # scratch row where conv1-output row 0 is stored
SR = 72                            # scratch rows per channel (stage-2 reads reach row 64)


def _shift_lanes(v, s):
    # result[..., j] = v[..., j + s]  (lane rotate; wrapped lanes only ever land in
    # columns that are zero-padded or sliced-off garbage).  pltpu.roll == jnp.roll.
    if s == 0:
        return v
    return pltpu.roll(v, (-s) % W, axis=1)


def fused_kernel(x_ref, w1_ref, b1_ref, w2_ref, b2_ref, o_ref, p_ref):
    # x_ref : (56,128) f32 VMEM input image
    # w1_ref: (45,)  f32 SMEM   Conv2d weight, OIHW flattened (I=1)
    # b1_ref: (5,)   f32 SMEM
    # w2_ref: (225,) f32 SMEM   ConvTranspose2d weight, (in,out,kh,kw) flattened
    # b2_ref: (5,)   f32 SMEM
    # o_ref : (5,56,128) f32 VMEM lane-dense output (valid region [:54,:126])
    # p_ref : (5,72,128) f32 VMEM scratch: zero-bordered conv1 output per channel
    #         layout: rows 8..61 = conv1 output rows 0..53 (cols 0..125 valid),
    #                 row 7 / row 62 / cols>=126 = zeros (the transpose-conv padding).

    # ---------------- stage 1: conv1 (valid 3x3), tap-outer / channel-inner --------
    col_keep = lax.broadcasted_iota(jnp.int32, (OH, W), 1) < OW   # lanes < 126

    acc1 = [jnp.full((OH, W), b1_ref[c], jnp.float32) for c in range(C1_OUT)]
    for u in range(K):
        band = x_ref[u:u + OH, :]                        # (54,128), one load per u
        for v in range(K):
            win = _shift_lanes(band, v)                  # win[r,s] = x[r+u, s+v]
            for c in range(C1_OUT):
                acc1[c] = acc1[c] + win * w1_ref[c * 9 + u * 3 + v]

    for c in range(C1_OUT):
        # zero only what stage 2 may read as padding
        p_ref[c, 0:PAD_TOP, :] = jnp.zeros((PAD_TOP, W), jnp.float32)          # top pad
        p_ref[c, PAD_TOP + OH:PAD_TOP + OH + 2, :] = jnp.zeros((2, W), jnp.float32)  # bottom pad
        # aligned, full-width store; cols >= 126 masked to zero (right pad)
        p_ref[c, PAD_TOP:PAD_TOP + OH, :] = jnp.where(col_keep, acc1[c], 0.0)

    # ---------------- stage 2: transpose-conv (== conv with flipped taps over the ---
    #                  zero-bordered intermediate) + fused hard-swish ---------------
    # Output channels processed in groups of 3+2 to bound live vregs (~35).
    for group in ((0, 1, 2), (3, 4)):
        acc2 = [jnp.full((H, W), b2_ref[co], jnp.float32) for co in group]
        for ci in range(CT_IN):
            base = ci * CT_OUT * 9
            for kh in range(K):
                band = p_ref[ci, PAD_TOP - 1 + kh:PAD_TOP - 1 + kh + H, :]   # (56,128)
                for kw in range(K):
                    win = _shift_lanes(band, kw - 1)     # win[i,j] = band[i, j+kw-1]
                    fidx = (K - 1 - kh) * K + (K - 1 - kw)                   # flipped tap
                    for gi, co in enumerate(group):
                        acc2[gi] = acc2[gi] + win * w2_ref[base + co * 9 + fidx]
        for gi, co in enumerate(group):
            v1 = acc2[gi]
            o_ref[co, :, :] = v1 * jnp.clip(v1 + 3.0, 0.0, 6.0) * (1.0 / 6.0)


def _vmem_spec():
    return pl.BlockSpec(memory_space=pltpu.MemorySpace.VMEM)


def _smem_spec():
    return pl.BlockSpec(memory_space=pltpu.MemorySpace.SMEM)


@jax.jit
def model_forward(x, w1, b1, w2, b2):
    # x: (1,1,56,128); w1: (5,1,3,3) OIHW; b1: (5,); w2: (5,5,3,3) (in,out,kh,kw); b2: (5,)
    x2d = x[0, 0]
    out_full = pl.pallas_call(
        fused_kernel,
        out_shape=jax.ShapeDtypeStruct((CT_OUT, H, W), jnp.float32),
        in_specs=[_vmem_spec(), _smem_spec(), _smem_spec(), _smem_spec(), _smem_spec()],
        out_specs=_vmem_spec(),
        scratch_shapes=[pltpu.VMEM((CT_IN, SR, W), jnp.float32)],
    )(x2d, w1.reshape(-1), b1, w2.reshape(-1), b2)
    # slice lane-dense (5,56,128) back to the valid (1,5,54,126)
    return out_full[None, :, :OH, :OW]


def reference(x, w1, b1, w2, b2):
    dn = ('NCHW', 'OIHW', 'NCHW')
    v1a = lax.conv_general_dilated(x, w1, (1, 1), 'VALID', dimension_numbers=dn,
                                   precision=lax.Precision.HIGHEST)
    v1a = v1a + b1.reshape(1, -1, 1, 1)
    w2_conv = jnp.flip(w2, axis=(2, 3)).transpose(1, 0, 2, 3)   # -> (out, in, kh, kw)
    v1 = lax.conv_general_dilated(v1a, w2_conv, (1, 1), ((1, 1), (1, 1)),
                                  dimension_numbers=dn,
                                  precision=lax.Precision.HIGHEST)
    v1 = v1 + b2.reshape(1, -1, 1, 1)
    return v1 * jnp.clip(v1 + 3.0, 0.0, 6.0) / 6.0


if __name__ == "__main__":
    key = jax.random.PRNGKey(0)
    k = jax.random.split(key, 5)
    x = jax.random.normal(k[0], (1, 1, H, W), jnp.float32)
    w1 = jax.random.normal(k[1], (C1_OUT, 1, K, K), jnp.float32) * (1.0 / 3.0)
    b1 = jax.random.normal(k[2], (C1_OUT,), jnp.float32) * 0.1
    w2 = jax.random.normal(k[3], (CT_IN, CT_OUT, K, K), jnp.float32) * (1.0 / math.sqrt(CT_IN * K * K))
    b2 = jax.random.normal(k[4], (CT_OUT,), jnp.float32) * 0.1

    out = model_forward(x, w1, b1, w2, b2)
    jax.block_until_ready(out)

    ref = reference(x, w1, b1, w2, b2)
    np.testing.assert_allclose(np.asarray(out), np.asarray(ref), rtol=1e-3, atol=1e-3)
    print("KERNEL_OK")
</pallas_src>

<mosaic_0001>
module attributes {stable_mosaic.version = 11 : i64} {
  func.func @fused_kernel(%arg0: memref<56x128xf32, #tpu.memory_space<vmem>>, %arg1: memref<45xf32, #tpu.memory_space<smem>>, %arg2: memref<5xf32, #tpu.memory_space<smem>>, %arg3: memref<225xf32, #tpu.memory_space<smem>>, %arg4: memref<5xf32, #tpu.memory_space<smem>>, %arg5: memref<5x56x128xf32, #tpu.memory_space<vmem>>, %arg6: memref<5x72x128xf32, #tpu.memory_space<vmem>>) attributes {dimension_semantics = [], scalar_prefetch = 0 : i64, scratch_operands = 1 : i64, tpu.core_type = #tpu.core_type<tc>} {
    %0 = tpu.iota {dimensions = array<i32: 1>} : vector<54x128xi32>
    %c126_i32 = arith.constant 126 : i32
    %1 = vector.broadcast %c126_i32 : i32 to vector<54x128xi32>
    %2 = arith.cmpi slt, %0, %1 : vector<54x128xi32>
    %c0 = arith.constant 0 : index
    %3 = memref.load %arg2[%c0] : memref<5xf32, #tpu.memory_space<smem>>
    %4 = vector.broadcast %3 : f32 to vector<54x128xf32>
    %c1 = arith.constant 1 : index
    %5 = memref.load %arg2[%c1] : memref<5xf32, #tpu.memory_space<smem>>
    %6 = vector.broadcast %5 : f32 to vector<54x128xf32>
    %c2 = arith.constant 2 : index
    %7 = memref.load %arg2[%c2] : memref<5xf32, #tpu.memory_space<smem>>
    %8 = vector.broadcast %7 : f32 to vector<54x128xf32>
    %c3 = arith.constant 3 : index
    %9 = memref.load %arg2[%c3] : memref<5xf32, #tpu.memory_space<smem>>
    %10 = vector.broadcast %9 : f32 to vector<54x128xf32>
    %c4 = arith.constant 4 : index
    %11 = memref.load %arg2[%c4] : memref<5xf32, #tpu.memory_space<smem>>
    %12 = vector.broadcast %11 : f32 to vector<54x128xf32>
    %c0_0 = arith.constant 0 : index
    %c0_1 = arith.constant 0 : index
    %13 = vector.load %arg0[%c0_0, %c0_1] : memref<56x128xf32, #tpu.memory_space<vmem>>, vector<54x128xf32>
    %c0_2 = arith.constant 0 : index
    %14 = memref.load %arg1[%c0_2] : memref<45xf32, #tpu.memory_space<smem>>
    %15 = vector.broadcast %14 : f32 to vector<54x128xf32>
    %16 = arith.mulf %13, %15 : vector<54x128xf32>
    %17 = arith.addf %4, %16 : vector<54x128xf32>
    %c9 = arith.constant 9 : index
    %18 = memref.load %arg1[%c9] : memref<45xf32, #tpu.memory_space<smem>>
    %19 = vector.broadcast %18 : f32 to vector<54x128xf32>
    %20 = arith.mulf %13, %19 : vector<54x128xf32>
    %21 = arith.addf %6, %20 : vector<54x128xf32>
    %c18 = arith.constant 18 : index
    %22 = memref.load %arg1[%c18] : memref<45xf32, #tpu.memory_space<smem>>
    %23 = vector.broadcast %22 : f32 to vector<54x128xf32>
    %24 = arith.mulf %13, %23 : vector<54x128xf32>
    %25 = arith.addf %8, %24 : vector<54x128xf32>
    %c27 = arith.constant 27 : index
    %26 = memref.load %arg1[%c27] : memref<45xf32, #tpu.memory_space<smem>>
    %27 = vector.broadcast %26 : f32 to vector<54x128xf32>
    %28 = arith.mulf %13, %27 : vector<54x128xf32>
    %29 = arith.addf %10, %28 : vector<54x128xf32>
    %c36 = arith.constant 36 : index
    %30 = memref.load %arg1[%c36] : memref<45xf32, #tpu.memory_space<smem>>
    %31 = vector.broadcast %30 : f32 to vector<54x128xf32>
    %32 = arith.mulf %13, %31 : vector<54x128xf32>
    %33 = arith.addf %12, %32 : vector<54x128xf32>
    %c127_i32 = arith.constant 127 : i32
    %34 = tpu.dynamic_rotate %13 by %c127_i32 dim 1 : vector<54x128xf32>, i32 -> vector<54x128xf32>
    %c1_3 = arith.constant 1 : index
    %35 = memref.load %arg1[%c1_3] : memref<45xf32, #tpu.memory_space<smem>>
    %36 = vector.broadcast %35 : f32 to vector<54x128xf32>
    %37 = arith.mulf %34, %36 : vector<54x128xf32>
    %38 = arith.addf %17, %37 : vector<54x128xf32>
    %c10 = arith.constant 10 : index
    %39 = memref.load %arg1[%c10] : memref<45xf32, #tpu.memory_space<smem>>
    %40 = vector.broadcast %39 : f32 to vector<54x128xf32>
    %41 = arith.mulf %34, %40 : vector<54x128xf32>
    %42 = arith.addf %21, %41 : vector<54x128xf32>
    %c19 = arith.constant 19 : index
    %43 = memref.load %arg1[%c19] : memref<45xf32, #tpu.memory_space<smem>>
    %44 = vector.broadcast %43 : f32 to vector<54x128xf32>
    %45 = arith.mulf %34, %44 : vector<54x128xf32>
    %46 = arith.addf %25, %45 : vector<54x128xf32>
    %c28 = arith.constant 28 : index
    %47 = memref.load %arg1[%c28] : memref<45xf32, #tpu.memory_space<smem>>
    %48 = vector.broadcast %47 : f32 to vector<54x128xf32>
    %49 = arith.mulf %34, %48 : vector<54x128xf32>
    %50 = arith.addf %29, %49 : vector<54x128xf32>
    %c37 = arith.constant 37 : index
    %51 = memref.load %arg1[%c37] : memref<45xf32, #tpu.memory_space<smem>>
    %52 = vector.broadcast %51 : f32 to vector<54x128xf32>
    %53 = arith.mulf %34, %52 : vector<54x128xf32>
    %54 = arith.addf %33, %53 : vector<54x128xf32>
    %c126_i32_4 = arith.constant 126 : i32
    %55 = tpu.dynamic_rotate %13 by %c126_i32_4 dim 1 : vector<54x128xf32>, i32 -> vector<54x128xf32>
    %c2_5 = arith.constant 2 : index
    %56 = memref.load %arg1[%c2_5] : memref<45xf32, #tpu.memory_space<smem>>
    %57 = vector.broadcast %56 : f32 to vector<54x128xf32>
    %58 = arith.mulf %55, %57 : vector<54x128xf32>
    %59 = arith.addf %38, %58 : vector<54x128xf32>
    %c11 = arith.constant 11 : index
    %60 = memref.load %arg1[%c11] : memref<45xf32, #tpu.memory_space<smem>>
    %61 = vector.broadcast %60 : f32 to vector<54x128xf32>
    %62 = arith.mulf %55, %61 : vector<54x128xf32>
    %63 = arith.addf %42, %62 : vector<54x128xf32>
    %c20 = arith.constant 20 : index
    %64 = memref.load %arg1[%c20] : memref<45xf32, #tpu.memory_space<smem>>
    %65 = vector.broadcast %64 : f32 to vector<54x128xf32>
    %66 = arith.mulf %55, %65 : vector<54x128xf32>
    %67 = arith.addf %46, %66 : vector<54x128xf32>
    %c29 = arith.constant 29 : index
    %68 = memref.load %arg1[%c29] : memref<45xf32, #tpu.memory_space<smem>>
    %69 = vector.broadcast %68 : f32 to vector<54x128xf32>
    %70 = arith.mulf %55, %69 : vector<54x128xf32>
    %71 = arith.addf %50, %70 : vector<54x128xf32>
    %c38 = arith.constant 38 : index
    %72 = memref.load %arg1[%c38] : memref<45xf32, #tpu.memory_space<smem>>
    %73 = vector.broadcast %72 : f32 to vector<54x128xf32>
    %74 = arith.mulf %55, %73 : vector<54x128xf32>
    %75 = arith.addf %54, %74 : vector<54x128xf32>
    %c1_6 = arith.constant 1 : index
    %c0_7 = arith.constant 0 : index
    %76 = vector.load %arg0[%c1_6, %c0_7] : memref<56x128xf32, #tpu.memory_space<vmem>>, vector<54x128xf32>
    %c3_8 = arith.constant 3 : index
    %77 = memref.load %arg1[%c3_8] : memref<45xf32, #tpu.memory_space<smem>>
    %78 = vector.broadcast %77 : f32 to vector<54x128xf32>
    %79 = arith.mulf %76, %78 : vector<54x128xf32>
    %80 = arith.addf %59, %79 : vector<54x128xf32>
    %c12 = arith.constant 12 : index
    %81 = memref.load %arg1[%c12] : memref<45xf32, #tpu.memory_space<smem>>
    %82 = vector.broadcast %81 : f32 to vector<54x128xf32>
    %83 = arith.mulf %76, %82 : vector<54x128xf32>
    %84 = arith.addf %63, %83 : vector<54x128xf32>
    %c21 = arith.constant 21 : index
    %85 = memref.load %arg1[%c21] : memref<45xf32, #tpu.memory_space<smem>>
    %86 = vector.broadcast %85 : f32 to vector<54x128xf32>
    %87 = arith.mulf %76, %86 : vector<54x128xf32>
    %88 = arith.addf %67, %87 : vector<54x128xf32>
    %c30 = arith.constant 30 : index
    %89 = memref.load %arg1[%c30] : memref<45xf32, #tpu.memory_space<smem>>
    %90 = vector.broadcast %89 : f32 to vector<54x128xf32>
    %91 = arith.mulf %76, %90 : vector<54x128xf32>
    %92 = arith.addf %71, %91 : vector<54x128xf32>
    %c39 = arith.constant 39 : index
    %93 = memref.load %arg1[%c39] : memref<45xf32, #tpu.memory_space<smem>>
    %94 = vector.broadcast %93 : f32 to vector<54x128xf32>
    %95 = arith.mulf %76, %94 : vector<54x128xf32>
    %96 = arith.addf %75, %95 : vector<54x128xf32>
    %c127_i32_9 = arith.constant 127 : i32
    %97 = tpu.dynamic_rotate %76 by %c127_i32_9 dim 1 : vector<54x128xf32>, i32 -> vector<54x128xf32>
    %c4_10 = arith.constant 4 : index
    %98 = memref.load %arg1[%c4_10] : memref<45xf32, #tpu.memory_space<smem>>
    %99 = vector.broadcast %98 : f32 to vector<54x128xf32>
    %100 = arith.mulf %97, %99 : vector<54x128xf32>
    %101 = arith.addf %80, %100 : vector<54x128xf32>
    %c13 = arith.constant 13 : index
    %102 = memref.load %arg1[%c13] : memref<45xf32, #tpu.memory_space<smem>>
    %103 = vector.broadcast %102 : f32 to vector<54x128xf32>
    %104 = arith.mulf %97, %103 : vector<54x128xf32>
    %105 = arith.addf %84, %104 : vector<54x128xf32>
    %c22 = arith.constant 22 : index
    %106 = memref.load %arg1[%c22] : memref<45xf32, #tpu.memory_space<smem>>
    %107 = vector.broadcast %106 : f32 to vector<54x128xf32>
    %108 = arith.mulf %97, %107 : vector<54x128xf32>
    %109 = arith.addf %88, %108 : vector<54x128xf32>
    %c31 = arith.constant 31 : index
    %110 = memref.load %arg1[%c31] : memref<45xf32, #tpu.memory_space<smem>>
    %111 = vector.broadcast %110 : f32 to vector<54x128xf32>
    %112 = arith.mulf %97, %111 : vector<54x128xf32>
    %113 = arith.addf %92, %112 : vector<54x128xf32>
    %c40 = arith.constant 40 : index
    %114 = memref.load %arg1[%c40] : memref<45xf32, #tpu.memory_space<smem>>
    %115 = vector.broadcast %114 : f32 to vector<54x128xf32>
    %116 = arith.mulf %97, %115 : vector<54x128xf32>
    %117 = arith.addf %96, %116 : vector<54x128xf32>
    %c126_i32_11 = arith.constant 126 : i32
    %118 = tpu.dynamic_rotate %76 by %c126_i32_11 dim 1 : vector<54x128xf32>, i32 -> vector<54x128xf32>
    %c5 = arith.constant 5 : index
    %119 = memref.load %arg1[%c5] : memref<45xf32, #tpu.memory_space<smem>>
    %120 = vector.broadcast %119 : f32 to vector<54x128xf32>
    %121 = arith.mulf %118, %120 : vector<54x128xf32>
    %122 = arith.addf %101, %121 : vector<54x128xf32>
    %c14 = arith.constant 14 : index
    %123 = memref.load %arg1[%c14] : memref<45xf32, #tpu.memory_space<smem>>
    %124 = vector.broadcast %123 : f32 to vector<54x128xf32>
    %125 = arith.mulf %118, %124 : vector<54x128xf32>
    %126 = arith.addf %105, %125 : vector<54x128xf32>
    %c23 = arith.constant 23 : index
    %127 = memref.load %arg1[%c23] : memref<45xf32, #tpu.memory_space<smem>>
    %128 = vector.broadcast %127 : f32 to vector<54x128xf32>
    %129 = arith.mulf %118, %128 : vector<54x128xf32>
    %130 = arith.addf %109, %129 : vector<54x128xf32>
    %c32 = arith.constant 32 : index
    %131 = memref.load %arg1[%c32] : memref<45xf32, #tpu.memory_space<smem>>
    %132 = vector.broadcast %131 : f32 to vector<54x128xf32>
    %133 = arith.mulf %118, %132 : vector<54x128xf32>
    %134 = arith.addf %113, %133 : vector<54x128xf32>
    %c41 = arith.constant 41 : index
    %135 = memref.load %arg1[%c41] : memref<45xf32, #tpu.memory_space<smem>>
    %136 = vector.broadcast %135 : f32 to vector<54x128xf32>
    %137 = arith.mulf %118, %136 : vector<54x128xf32>
    %138 = arith.addf %117, %137 : vector<54x128xf32>
    %c2_12 = arith.constant 2 : index
    %c0_13 = arith.constant 0 : index
    %139 = vector.load %arg0[%c2_12, %c0_13] : memref<56x128xf32, #tpu.memory_space<vmem>>, vector<54x128xf32>
    %c6 = arith.constant 6 : index
    %140 = memref.load %arg1[%c6] : memref<45xf32, #tpu.memory_space<smem>>
    %141 = vector.broadcast %140 : f32 to vector<54x128xf32>
    %142 = arith.mulf %139, %141 : vector<54x128xf32>
    %143 = arith.addf %122, %142 : vector<54x128xf32>
    %c15 = arith.constant 15 : index
    %144 = memref.load %arg1[%c15] : memref<45xf32, #tpu.memory_space<smem>>
    %145 = vector.broadcast %144 : f32 to vector<54x128xf32>
    %146 = arith.mulf %139, %145 : vector<54x128xf32>
    %147 = arith.addf %126, %146 : vector<54x128xf32>
    %c24 = arith.constant 24 : index
    %148 = memref.load %arg1[%c24] : memref<45xf32, #tpu.memory_space<smem>>
    %149 = vector.broadcast %148 : f32 to vector<54x128xf32>
    %150 = arith.mulf %139, %149 : vector<54x128xf32>
    %151 = arith.addf %130, %150 : vector<54x128xf32>
    %c33 = arith.constant 33 : index
    %152 = memref.load %arg1[%c33] : memref<45xf32, #tpu.memory_space<smem>>
    %153 = vector.broadcast %152 : f32 to vector<54x128xf32>
    %154 = arith.mulf %139, %153 : vector<54x128xf32>
    %155 = arith.addf %134, %154 : vector<54x128xf32>
    %c42 = arith.constant 42 : index
    %156 = memref.load %arg1[%c42] : memref<45xf32, #tpu.memory_space<smem>>
    %157 = vector.broadcast %156 : f32 to vector<54x128xf32>
    %158 = arith.mulf %139, %157 : vector<54x128xf32>
    %159 = arith.addf %138, %158 : vector<54x128xf32>
    %c127_i32_14 = arith.constant 127 : i32
    %160 = tpu.dynamic_rotate %139 by %c127_i32_14 dim 1 : vector<54x128xf32>, i32 -> vector<54x128xf32>
    %c7 = arith.constant 7 : index
    %161 = memref.load %arg1[%c7] : memref<45xf32, #tpu.memory_space<smem>>
    %162 = vector.broadcast %161 : f32 to vector<54x128xf32>
    %163 = arith.mulf %160, %162 : vector<54x128xf32>
    %164 = arith.addf %143, %163 : vector<54x128xf32>
    %c16 = arith.constant 16 : index
    %165 = memref.load %arg1[%c16] : memref<45xf32, #tpu.memory_space<smem>>
    %166 = vector.broadcast %165 : f32 to vector<54x128xf32>
    %167 = arith.mulf %160, %166 : vector<54x128xf32>
    %168 = arith.addf %147, %167 : vector<54x128xf32>
    %c25 = arith.constant 25 : index
    %169 = memref.load %arg1[%c25] : memref<45xf32, #tpu.memory_space<smem>>
    %170 = vector.broadcast %169 : f32 to vector<54x128xf32>
    %171 = arith.mulf %160, %170 : vector<54x128xf32>
    %172 = arith.addf %151, %171 : vector<54x128xf32>
    %c34 = arith.constant 34 : index
    %173 = memref.load %arg1[%c34] : memref<45xf32, #tpu.memory_space<smem>>
    %174 = vector.broadcast %173 : f32 to vector<54x128xf32>
    %175 = arith.mulf %160, %174 : vector<54x128xf32>
    %176 = arith.addf %155, %175 : vector<54x128xf32>
    %c43 = arith.constant 43 : index
    %177 = memref.load %arg1[%c43] : memref<45xf32, #tpu.memory_space<smem>>
    %178 = vector.broadcast %177 : f32 to vector<54x128xf32>
    %179 = arith.mulf %160, %178 : vector<54x128xf32>
    %180 = arith.addf %159, %179 : vector<54x128xf32>
    %c126_i32_15 = arith.constant 126 : i32
    %181 = tpu.dynamic_rotate %139 by %c126_i32_15 dim 1 : vector<54x128xf32>, i32 -> vector<54x128xf32>
    %c8 = arith.constant 8 : index
    %182 = memref.load %arg1[%c8] : memref<45xf32, #tpu.memory_space<smem>>
    %183 = vector.broadcast %182 : f32 to vector<54x128xf32>
    %184 = arith.mulf %181, %183 : vector<54x128xf32>
    %185 = arith.addf %164, %184 : vector<54x128xf32>
    %c17 = arith.constant 17 : index
    %186 = memref.load %arg1[%c17] : memref<45xf32, #tpu.memory_space<smem>>
    %187 = vector.broadcast %186 : f32 to vector<54x128xf32>
    %188 = arith.mulf %181, %187 : vector<54x128xf32>
    %189 = arith.addf %168, %188 : vector<54x128xf32>
    %c26 = arith.constant 26 : index
    %190 = memref.load %arg1[%c26] : memref<45xf32, #tpu.memory_space<smem>>
    %191 = vector.broadcast %190 : f32 to vector<54x128xf32>
    %192 = arith.mulf %181, %191 : vector<54x128xf32>
    %193 = arith.addf %172, %192 : vector<54x128xf32>
    %c35 = arith.constant 35 : index
    %194 = memref.load %arg1[%c35] : memref<45xf32, #tpu.memory_space<smem>>
    %195 = vector.broadcast %194 : f32 to vector<54x128xf32>
    %196 = arith.mulf %181, %195 : vector<54x128xf32>
    %197 = arith.addf %176, %196 : vector<54x128xf32>
    %c44 = arith.constant 44 : index
    %198 = memref.load %arg1[%c44] : memref<45xf32, #tpu.memory_space<smem>>
    %199 = vector.broadcast %198 : f32 to vector<54x128xf32>
    %200 = arith.mulf %181, %199 : vector<54x128xf32>
    %201 = arith.addf %180, %200 : vector<54x128xf32>
    %cst = arith.constant 0.000000e+00 : f32
    %202 = vector.broadcast %cst : f32 to vector<8x128xf32>
    %c0_16 = arith.constant 0 : index
    %c0_17 = arith.constant 0 : index
    %c0_18 = arith.constant 0 : index
    %203 = vector.load %arg6[%c0_16, %c0_17, %c0_18] : memref<5x72x128xf32, #tpu.memory_space<vmem>>, vector<1x8x128xf32>
    %204 = vector.shape_cast %203 : vector<1x8x128xf32> to vector<8x128xf32>
    %205 = vector.shape_cast %202 : vector<8x128xf32> to vector<1x8x128xf32>
    tpu.vector_store %arg6[%c0_16, %c0_17, %c0_18], %205 {strides = array<i32>} : memref<5x72x128xf32, #tpu.memory_space<vmem>>, vector<1x8x128xf32>,
    %cst_19 = arith.constant 0.000000e+00 : f32
    %206 = vector.broadcast %cst_19 : f32 to vector<2x128xf32>
    %c0_20 = arith.constant 0 : index
    %c62 = arith.constant 62 : index
    %c0_21 = arith.constant 0 : index
    %207 = vector.load %arg6[%c0_20, %c62, %c0_21] : memref<5x72x128xf32, #tpu.memory_space<vmem>>, vector<1x2x128xf32>
    %208 = vector.shape_cast %207 : vector<1x2x128xf32> to vector<2x128xf32>
    %209 = vector.shape_cast %206 : vector<2x128xf32> to vector<1x2x128xf32>
    tpu.vector_store %arg6[%c0_20, %c62, %c0_21], %209 {strides = array<i32>} : memref<5x72x128xf32, #tpu.memory_space<vmem>>, vector<1x2x128xf32>,
    %cst_22 = arith.constant 0.000000e+00 : f32
    %210 = vector.broadcast %cst_22 : f32 to vector<54x128xf32>
    %211 = arith.select %2, %185, %210 : vector<54x128xi1>, vector<54x128xf32>
    %c0_23 = arith.constant 0 : index
    %c8_24 = arith.constant 8 : index
    %c0_25 = arith.constant 0 : index
    %212 = vector.load %arg6[%c0_23, %c8_24, %c0_25] : memref<5x72x128xf32, #tpu.memory_space<vmem>>, vector<1x54x128xf32>
    %213 = vector.shape_cast %212 : vector<1x54x128xf32> to vector<54x128xf32>
    %214 = vector.shape_cast %211 : vector<54x128xf32> to vector<1x54x128xf32>
    tpu.vector_store %arg6[%c0_23, %c8_24, %c0_25], %214 {strides = array<i32>} : memref<5x72x128xf32, #tpu.memory_space<vmem>>, vector<1x54x128xf32>,
    %cst_26 = arith.constant 0.000000e+00 : f32
    %215 = vector.broadcast %cst_26 : f32 to vector<8x128xf32>
    %c1_27 = arith.constant 1 : index
    %c0_28 = arith.constant 0 : index
    %c0_29 = arith.constant 0 : index
    %216 = vector.load %arg6[%c1_27, %c0_28, %c0_29] : memref<5x72x128xf32, #tpu.memory_space<vmem>>, vector<1x8x128xf32>
    %217 = vector.shape_cast %216 : vector<1x8x128xf32> to vector<8x128xf32>
    %218 = vector.shape_cast %215 : vector<8x128xf32> to vector<1x8x128xf32>
    tpu.vector_store %arg6[%c1_27, %c0_28, %c0_29], %218 {strides = array<i32>} : memref<5x72x128xf32, #tpu.memory_space<vmem>>, vector<1x8x128xf32>,
    %cst_30 = arith.constant 0.000000e+00 : f32
    %219 = vector.broadcast %cst_30 : f32 to vector<2x128xf32>
    %c1_31 = arith.constant 1 : index
    %c62_32 = arith.constant 62 : index
    %c0_33 = arith.constant 0 : index
    %220 = vector.load %arg6[%c1_31, %c62_32, %c0_33] : memref<5x72x128xf32, #tpu.memory_space<vmem>>, vector<1x2x128xf32>
    %221 = vector.shape_cast %220 : vector<1x2x128xf32> to vector<2x128xf32>
    %222 = vector.shape_cast %219 : vector<2x128xf32> to vector<1x2x128xf32>
    tpu.vector_store %arg6[%c1_31, %c62_32, %c0_33], %222 {strides = array<i32>} : memref<5x72x128xf32, #tpu.memory_space<vmem>>, vector<1x2x128xf32>,
    %cst_34 = arith.constant 0.000000e+00 : f32
    %223 = vector.broadcast %cst_34 : f32 to vector<54x128xf32>
    %224 = arith.select %2, %189, %223 : vector<54x128xi1>, vector<54x128xf32>
    %c1_35 = arith.constant 1 : index
    %c8_36 = arith.constant 8 : index
    %c0_37 = arith.constant 0 : index
    %225 = vector.load %arg6[%c1_35, %c8_36, %c0_37] : memref<5x72x128xf32, #tpu.memory_space<vmem>>, vector<1x54x128xf32>
    %226 = vector.shape_cast %225 : vector<1x54x128xf32> to vector<54x128xf32>
    %227 = vector.shape_cast %224 : vector<54x128xf32> to vector<1x54x128xf32>
    tpu.vector_store %arg6[%c1_35, %c8_36, %c0_37], %227 {strides = array<i32>} : memref<5x72x128xf32, #tpu.memory_space<vmem>>, vector<1x54x128xf32>,
    %cst_38 = arith.constant 0.000000e+00 : f32
    %228 = vector.broadcast %cst_38 : f32 to vector<8x128xf32>
    %c2_39 = arith.constant 2 : index
    %c0_40 = arith.constant 0 : index
    %c0_41 = arith.constant 0 : index
    %229 = vector.load %arg6[%c2_39, %c0_40, %c0_41] : memref<5x72x128xf32, #tpu.memory_space<vmem>>, vector<1x8x128xf32>
    %230 = vector.shape_cast %229 : vector<1x8x128xf32> to vector<8x128xf32>
    %231 = vector.shape_cast %228 : vector<8x128xf32> to vector<1x8x128xf32>
    tpu.vector_store %arg6[%c2_39, %c0_40, %c0_41], %231 {strides = array<i32>} : memref<5x72x128xf32, #tpu.memory_space<vmem>>, vector<1x8x128xf32>,
    %cst_42 = arith.constant 0.000000e+00 : f32
    %232 = vector.broadcast %cst_42 : f32 to vector<2x128xf32>
    %c2_43 = arith.constant 2 : index
    %c62_44 = arith.constant 62 : index
    %c0_45 = arith.constant 0 : index
    %233 = vector.load %arg6[%c2_43, %c62_44, %c0_45] : memref<5x72x128xf32, #tpu.memory_space<vmem>>, vector<1x2x128xf32>
    %234 = vector.shape_cast %233 : vector<1x2x128xf32> to vector<2x128xf32>
    %235 = vector.shape_cast %232 : vector<2x128xf32> to vector<1x2x128xf32>
    tpu.vector_store %arg6[%c2_43, %c62_44, %c0_45], %235 {strides = array<i32>} : memref<5x72x128xf32, #tpu.memory_space<vmem>>, vector<1x2x128xf32>,
    %cst_46 = arith.constant 0.000000e+00 : f32
    %236 = vector.broadcast %cst_46 : f32 to vector<54x128xf32>
    %237 = arith.select %2, %193, %236 : vector<54x128xi1>, vector<54x128xf32>
    %c2_47 = arith.constant 2 : index
    %c8_48 = arith.constant 8 : index
    %c0_49 = arith.constant 0 : index
    %238 = vector.load %arg6[%c2_47, %c8_48, %c0_49] : memref<5x72x128xf32, #tpu.memory_space<vmem>>, vector<1x54x128xf32>
    %239 = vector.shape_cast %238 : vector<1x54x128xf32> to vector<54x128xf32>
    %240 = vector.shape_cast %237 : vector<54x128xf32> to vector<1x54x128xf32>
    tpu.vector_store %arg6[%c2_47, %c8_48, %c0_49], %240 {strides = array<i32>} : memref<5x72x128xf32, #tpu.memory_space<vmem>>, vector<1x54x128xf32>,
    %cst_50 = arith.constant 0.000000e+00 : f32
    %241 = vector.broadcast %cst_50 : f32 to vector<8x128xf32>
    %c3_51 = arith.constant 3 : index
    %c0_52 = arith.constant 0 : index
    %c0_53 = arith.constant 0 : index
    %242 = vector.load %arg6[%c3_51, %c0_52, %c0_53] : memref<5x72x128xf32, #tpu.memory_space<vmem>>, vector<1x8x128xf32>
    %243 = vector.shape_cast %242 : vector<1x8x128xf32> to vector<8x128xf32>
    %244 = vector.shape_cast %241 : vector<8x128xf32> to vector<1x8x128xf32>
    tpu.vector_store %arg6[%c3_51, %c0_52, %c0_53], %244 {strides = array<i32>} : memref<5x72x128xf32, #tpu.memory_space<vmem>>, vector<1x8x128xf32>,
    %cst_54 = arith.constant 0.000000e+00 : f32
    %245 = vector.broadcast %cst_54 : f32 to vector<2x128xf32>
    %c3_55 = arith.constant 3 : index
    %c62_56 = arith.constant 62 : index
    %c0_57 = arith.constant 0 : index
    %246 = vector.load %arg6[%c3_55, %c62_56, %c0_57] : memref<5x72x128xf32, #tpu.memory_space<vmem>>, vector<1x2x128xf32>
    %247 = vector.shape_cast %246 : vector<1x2x128xf32> to vector<2x128xf32>
    %248 = vector.shape_cast %245 : vector<2x128xf32> to vector<1x2x128xf32>
    tpu.vector_store %arg6[%c3_55, %c62_56, %c0_57], %248 {strides = array<i32>} : memref<5x72x128xf32, #tpu.memory_space<vmem>>, vector<1x2x128xf32>,
    %cst_58 = arith.constant 0.000000e+00 : f32
    %249 = vector.broadcast %cst_58 : f32 to vector<54x128xf32>
    %250 = arith.select %2, %197, %249 : vector<54x128xi1>, vector<54x128xf32>
    %c3_59 = arith.constant 3 : index
    %c8_60 = arith.constant 8 : index
    %c0_61 = arith.constant 0 : index
    %251 = vector.load %arg6[%c3_59, %c8_60, %c0_61] : memref<5x72x128xf32, #tpu.memory_space<vmem>>, vector<1x54x128xf32>
    %252 = vector.shape_cast %251 : vector<1x54x128xf32> to vector<54x128xf32>
    %253 = vector.shape_cast %250 : vector<54x128xf32> to vector<1x54x128xf32>
    tpu.vector_store %arg6[%c3_59, %c8_60, %c0_61], %253 {strides = array<i32>} : memref<5x72x128xf32, #tpu.memory_space<vmem>>, vector<1x54x128xf32>,
    %cst_62 = arith.constant 0.000000e+00 : f32
    %254 = vector.broadcast %cst_62 : f32 to vector<8x128xf32>
    %c4_63 = arith.constant 4 : index
    %c0_64 = arith.constant 0 : index
    %c0_65 = arith.constant 0 : index
    %255 = vector.load %arg6[%c4_63, %c0_64, %c0_65] : memref<5x72x128xf32, #tpu.memory_space<vmem>>, vector<1x8x128xf32>
    %256 = vector.shape_cast %255 : vector<1x8x128xf32> to vector<8x128xf32>
    %257 = vector.shape_cast %254 : vector<8x128xf32> to vector<1x8x128xf32>
    tpu.vector_store %arg6[%c4_63, %c0_64, %c0_65], %257 {strides = array<i32>} : memref<5x72x128xf32, #tpu.memory_space<vmem>>, vector<1x8x128xf32>,
    %cst_66 = arith.constant 0.000000e+00 : f32
    %258 = vector.broadcast %cst_66 : f32 to vector<2x128xf32>
    %c4_67 = arith.constant 4 : index
    %c62_68 = arith.constant 62 : index
    %c0_69 = arith.constant 0 : index
    %259 = vector.load %arg6[%c4_67, %c62_68, %c0_69] : memref<5x72x128xf32, #tpu.memory_space<vmem>>, vector<1x2x128xf32>
    %260 = vector.shape_cast %259 : vector<1x2x128xf32> to vector<2x128xf32>
    %261 = vector.shape_cast %258 : vector<2x128xf32> to vector<1x2x128xf32>
    tpu.vector_store %arg6[%c4_67, %c62_68, %c0_69], %261 {strides = array<i32>} : memref<5x72x128xf32, #tpu.memory_space<vmem>>, vector<1x2x128xf32>,
    %cst_70 = arith.constant 0.000000e+00 : f32
    %262 = vector.broadcast %cst_70 : f32 to vector<54x128xf32>
    %263 = arith.select %2, %201, %262 : vector<54x128xi1>, vector<54x128xf32>
    %c4_71 = arith.constant 4 : index
    %c8_72 = arith.constant 8 : index
    %c0_73 = arith.constant 0 : index
    %264 = vector.load %arg6[%c4_71, %c8_72, %c0_73] : memref<5x72x128xf32, #tpu.memory_space<vmem>>, vector<1x54x128xf32>
    %265 = vector.shape_cast %264 : vector<1x54x128xf32> to vector<54x128xf32>
    %266 = vector.shape_cast %263 : vector<54x128xf32> to vector<1x54x128xf32>
    tpu.vector_store %arg6[%c4_71, %c8_72, %c0_73], %266 {strides = array<i32>} : memref<5x72x128xf32, #tpu.memory_space<vmem>>, vector<1x54x128xf32>,
    %c0_74 = arith.constant 0 : index
    %267 = memref.load %arg4[%c0_74] : memref<5xf32, #tpu.memory_space<smem>>
    %268 = vector.broadcast %267 : f32 to vector<56x128xf32>
    %c1_75 = arith.constant 1 : index
    %269 = memref.load %arg4[%c1_75] : memref<5xf32, #tpu.memory_space<smem>>
    %270 = vector.broadcast %269 : f32 to vector<56x128xf32>
    %c2_76 = arith.constant 2 : index
    %271 = memref.load %arg4[%c2_76] : memref<5xf32, #tpu.memory_space<smem>>
    %272 = vector.broadcast %271 : f32 to vector<56x128xf32>
    %c0_77 = arith.constant 0 : index
    %c7_78 = arith.constant 7 : index
    %c0_79 = arith.constant 0 : index
    %273 = vector.load %arg6[%c0_77, %c7_78, %c0_79] : memref<5x72x128xf32, #tpu.memory_space<vmem>>, vector<1x56x128xf32>
    %274 = vector.shape_cast %273 : vector<1x56x128xf32> to vector<56x128xf32>
    %c1_i32 = arith.constant 1 : i32
    %275 = tpu.dynamic_rotate %274 by %c1_i32 dim 1 : vector<56x128xf32>, i32 -> vector<56x128xf32>
    %c8_80 = arith.constant 8 : index
    %276 = memref.load %arg3[%c8_80] : memref<225xf32, #tpu.memory_space<smem>>
    %277 = vector.broadcast %276 : f32 to vector<56x128xf32>
    %278 = arith.mulf %275, %277 : vector<56x128xf32>
    %279 = arith.addf %268, %278 : vector<56x128xf32>
    %c17_81 = arith.constant 17 : index
    %280 = memref.load %arg3[%c17_81] : memref<225xf32, #tpu.memory_space<smem>>
    %281 = vector.broadcast %280 : f32 to vector<56x128xf32>
    %282 = arith.mulf %275, %281 : vector<56x128xf32>
    %283 = arith.addf %270, %282 : vector<56x128xf32>
    %c26_82 = arith.constant 26 : index
    %284 = memref.load %arg3[%c26_82] : memref<225xf32, #tpu.memory_space<smem>>
    %285 = vector.broadcast %284 : f32 to vector<56x128xf32>
    %286 = arith.mulf %275, %285 : vector<56x128xf32>
    %287 = arith.addf %272, %286 : vector<56x128xf32>
    %c7_83 = arith.constant 7 : index
    %288 = memref.load %arg3[%c7_83] : memref<225xf32, #tpu.memory_space<smem>>
    %289 = vector.broadcast %288 : f32 to vector<56x128xf32>
    %290 = arith.mulf %274, %289 : vector<56x128xf32>
    %291 = arith.addf %279, %290 : vector<56x128xf32>
    %c16_84 = arith.constant 16 : index
    %292 = memref.load %arg3[%c16_84] : memref<225xf32, #tpu.memory_space<smem>>
    %293 = vector.broadcast %292 : f32 to vector<56x128xf32>
    %294 = arith.mulf %274, %293 : vector<56x128xf32>
    %295 = arith.addf %283, %294 : vector<56x128xf32>
    %c25_85 = arith.constant 25 : index
    %296 = memref.load %arg3[%c25_85] : memref<225xf32, #tpu.memory_space<smem>>
    %297 = vector.broadcast %296 : f32 to vector<56x128xf32>
    %298 = arith.mulf %274, %297 : vector<56x128xf32>
    %299 = arith.addf %287, %298 : vector<56x128xf32>
    %c127_i32_86 = arith.constant 127 : i32
    %300 = tpu.dynamic_rotate %274 by %c127_i32_86 dim 1 : vector<56x128xf32>, i32 -> vector<56x128xf32>
    %c6_87 = arith.constant 6 : index
    %301 = memref.load %arg3[%c6_87] : memref<225xf32, #tpu.memory_space<smem>>
    %302 = vector.broadcast %301 : f32 to vector<56x128xf32>
    %303 = arith.mulf %300, %302 : vector<56x128xf32>
    %304 = arith.addf %291, %303 : vector<56x128xf32>
    %c15_88 = arith.constant 15 : index
    %305 = memref.load %arg3[%c15_88] : memref<225xf32, #tpu.memory_space<smem>>
    %306 = vector.broadcast %305 : f32 to vector<56x128xf32>
    %307 = arith.mulf %300, %306 : vector<56x128xf32>
    %308 = arith.addf %295, %307 : vector<56x128xf32>
    %c24_89 = arith.constant 24 : index
    %309 = memref.load %arg3[%c24_89] : memref<225xf32, #tpu.memory_space<smem>>
    %310 = vector.broadcast %309 : f32 to vector<56x128xf32>
    %311 = arith.mulf %300, %310 : vector<56x128xf32>
    %312 = arith.addf %299, %311 : vector<56x128xf32>
    %c0_90 = arith.constant 0 : index
    %c8_91 = arith.constant 8 : index
    %c0_92 = arith.constant 0 : index
    %313 = vector.load %arg6[%c0_90, %c8_91, %c0_92] : memref<5x72x128xf32, #tpu.memory_space<vmem>>, vector<1x56x128xf32>
    %314 = vector.shape_cast %313 : vector<1x56x128xf32> to vector<56x128xf32>
    %c1_i32_93 = arith.constant 1 : i32
    %315 = tpu.dynamic_rotate %314 by %c1_i32_93 dim 1 : vector<56x128xf32>, i32 -> vector<56x128xf32>
    %c5_94 = arith.constant 5 : index
    %316 = memref.load %arg3[%c5_94] : memref<225xf32, #tpu.memory_space<smem>>
    %317 = vector.broadcast %316 : f32 to vector<56x128xf32>
    %318 = arith.mulf %315, %317 : vector<56x128xf32>
    %319 = arith.addf %304, %318 : vector<56x128xf32>
    %c14_95 = arith.constant 14 : index
    %320 = memref.load %arg3[%c14_95] : memref<225xf32, #tpu.memory_space<smem>>
    %321 = vector.broadcast %320 : f32 to vector<56x128xf32>
    %322 = arith.mulf %315, %321 : vector<56x128xf32>
    %323 = arith.addf %308, %322 : vector<56x128xf32>
    %c23_96 = arith.constant 23 : index
    %324 = memref.load %arg3[%c23_96] : memref<225xf32, #tpu.memory_space<smem>>
    %325 = vector.broadcast %324 : f32 to vector<56x128xf32>
    %326 = arith.mulf %315, %325 : vector<56x128xf32>
    %327 = arith.addf %312, %326 : vector<56x128xf32>
    %c4_97 = arith.constant 4 : index
    %328 = memref.load %arg3[%c4_97] : memref<225xf32, #tpu.memory_space<smem>>
    %329 = vector.broadcast %328 : f32 to vector<56x128xf32>
    %330 = arith.mulf %314, %329 : vector<56x128xf32>
    %331 = arith.addf %319, %330 : vector<56x128xf32>
    %c13_98 = arith.constant 13 : index
    %332 = memref.load %arg3[%c13_98] : memref<225xf32, #tpu.memory_space<smem>>
    %333 = vector.broadcast %332 : f32 to vector<56x128xf32>
    %334 = arith.mulf %314, %333 : vector<56x128xf32>
    %335 = arith.addf %323, %334 : vector<56x128xf32>
    %c22_99 = arith.constant 22 : index
    %336 = memref.load %arg3[%c22_99] : memref<225xf32, #tpu.memory_space<smem>>
    %337 = vector.broadcast %336 : f32 to vector<56x128xf32>
    %338 = arith.mulf %314, %337 : vector<56x128xf32>
    %339 = arith.addf %327, %338 : vector<56x128xf32>
    %c127_i32_100 = arith.constant 127 : i32
    %340 = tpu.dynamic_rotate %314 by %c127_i32_100 dim 1 : vector<56x128xf32>, i32 -> vector<56x128xf32>
    %c3_101 = arith.constant 3 : index
    %341 = memref.load %arg3[%c3_101] : memref<225xf32, #tpu.memory_space<smem>>
    %342 = vector.broadcast %341 : f32 to vector<56x128xf32>
    %343 = arith.mulf %340, %342 : vector<56x128xf32>
    %344 = arith.addf %331, %343 : vector<56x128xf32>
    %c12_102 = arith.constant 12 : index
    %345 = memref.load %arg3[%c12_102] : memref<225xf32, #tpu.memory_space<smem>>
    %346 = vector.broadcast %345 : f32 to vector<56x128xf32>
    %347 = arith.mulf %340, %346 : vector<56x128xf32>
    %348 = arith.addf %335, %347 : vector<56x128xf32>
    %c21_103 = arith.constant 21 : index
    %349 = memref.load %arg3[%c21_103] : memref<225xf32, #tpu.memory_space<smem>>
    %350 = vector.broadcast %349 : f32 to vector<56x128xf32>
    %351 = arith.mulf %340, %350 : vector<56x128xf32>
    %352 = arith.addf %339, %351 : vector<56x128xf32>
    %c0_104 = arith.constant 0 : index
    %c9_105 = arith.constant 9 : index
    %c0_106 = arith.constant 0 : index
    %353 = vector.load %arg6[%c0_104, %c9_105, %c0_106] : memref<5x72x128xf32, #tpu.memory_space<vmem>>, vector<1x56x128xf32>
    %354 = vector.shape_cast %353 : vector<1x56x128xf32> to vector<56x128xf32>
    %c1_i32_107 = arith.constant 1 : i32
    %355 = tpu.dynamic_rotate %354 by %c1_i32_107 dim 1 : vector<56x128xf32>, i32 -> vector<56x128xf32>
    %c2_108 = arith.constant 2 : index
    %356 = memref.load %arg3[%c2_108] : memref<225xf32, #tpu.memory_space<smem>>
    %357 = vector.broadcast %356 : f32 to vector<56x128xf32>
    %358 = arith.mulf %355, %357 : vector<56x128xf32>
    %359 = arith.addf %344, %358 : vector<56x128xf32>
    %c11_109 = arith.constant 11 : index
    %360 = memref.load %arg3[%c11_109] : memref<225xf32, #tpu.memory_space<smem>>
    %361 = vector.broadcast %360 : f32 to vector<56x128xf32>
    %362 = arith.mulf %355, %361 : vector<56x128xf32>
    %363 = arith.addf %348, %362 : vector<56x128xf32>
    %c20_110 = arith.constant 20 : index
    %364 = memref.load %arg3[%c20_110] : memref<225xf32, #tpu.memory_space<smem>>
    %365 = vector.broadcast %364 : f32 to vector<56x128xf32>
    %366 = arith.mulf %355, %365 : vector<56x128xf32>
    %367 = arith.addf %352, %366 : vector<56x128xf32>
    %c1_111 = arith.constant 1 : index
    %368 = memref.load %arg3[%c1_111] : memref<225xf32, #tpu.memory_space<smem>>
    %369 = vector.broadcast %368 : f32 to vector<56x128xf32>
    %370 = arith.mulf %354, %369 : vector<56x128xf32>
    %371 = arith.addf %359, %370 : vector<56x128xf32>
    %c10_112 = arith.constant 10 : index
    %372 = memref.load %arg3[%c10_112] : memref<225xf32, #tpu.memory_space<smem>>
    %373 = vector.broadcast %372 : f32 to vector<56x128xf32>
    %374 = arith.mulf %354, %373 : vector<56x128xf32>
    %375 = arith.addf %363, %374 : vector<56x128xf32>
    %c19_113 = arith.constant 19 : index
    %376 = memref.load %arg3[%c19_113] : memref<225xf32, #tpu.memory_space<smem>>
    %377 = vector.broadcast %376 : f32 to vector<56x128xf32>
    %378 = arith.mulf %354, %377 : vector<56x128xf32>
    %379 = arith.addf %367, %378 : vector<56x128xf32>
    %c127_i32_114 = arith.constant 127 : i32
    %380 = tpu.dynamic_rotate %354 by %c127_i32_114 dim 1 : vector<56x128xf32>, i32 -> vector<56x128xf32>
    %c0_115 = arith.constant 0 : index
    %381 = memref.load %arg3[%c0_115] : memref<225xf32, #tpu.memory_space<smem>>
    %382 = vector.broadcast %381 : f32 to vector<56x128xf32>
    %383 = arith.mulf %380, %382 : vector<56x128xf32>
    %384 = arith.addf %371, %383 : vector<56x128xf32>
    %c9_116 = arith.constant 9 : index
    %385 = memref.load %arg3[%c9_116] : memref<225xf32, #tpu.memory_space<smem>>
    %386 = vector.broadcast %385 : f32 to vector<56x128xf32>
    %387 = arith.mulf %380, %386 : vector<56x128xf32>
    %388 = arith.addf %375, %387 : vector<56x128xf32>
    %c18_117 = arith.constant 18 : index
    %389 = memref.load %arg3[%c18_117] : memref<225xf32, #tpu.memory_space<smem>>
    %390 = vector.broadcast %389 : f32 to vector<56x128xf32>
    %391 = arith.mulf %380, %390 : vector<56x128xf32>
    %392 = arith.addf %379, %391 : vector<56x128xf32>
    %c1_118 = arith.constant 1 : index
    %c7_119 = arith.constant 7 : index
    %c0_120 = arith.constant 0 : index
    %393 = vector.load %arg6[%c1_118, %c7_119, %c0_120] : memref<5x72x128xf32, #tpu.memory_space<vmem>>, vector<1x56x128xf32>
    %394 = vector.shape_cast %393 : vector<1x56x128xf32> to vector<56x128xf32>
    %c1_i32_121 = arith.constant 1 : i32
    %395 = tpu.dynamic_rotate %394 by %c1_i32_121 dim 1 : vector<56x128xf32>, i32 -> vector<56x128xf32>
    %c53 = arith.constant 53 : index
    %396 = memref.load %arg3[%c53] : memref<225xf32, #tpu.memory_space<smem>>
    %397 = vector.broadcast %396 : f32 to vector<56x128xf32>
    %398 = arith.mulf %395, %397 : vector<56x128xf32>
    %399 = arith.addf %384, %398 : vector<56x128xf32>
    %c62_122 = arith.constant 62 : index
    %400 = memref.load %arg3[%c62_122] : memref<225xf32, #tpu.memory_space<smem>>
    %401 = vector.broadcast %400 : f32 to vector<56x128xf32>
    %402 = arith.mulf %395, %401 : vector<56x128xf32>
    %403 = arith.addf %388, %402 : vector<56x128xf32>
    %c71 = arith.constant 71 : index
    %404 = memref.load %arg3[%c71] : memref<225xf32, #tpu.memory_space<smem>>
    %405 = vector.broadcast %404 : f32 to vector<56x128xf32>
    %406 = arith.mulf %395, %405 : vector<56x128xf32>
    %407 = arith.addf %392, %406 : vector<56x128xf32>
    %c52 = arith.constant 52 : index
    %408 = memref.load %arg3[%c52] : memref<225xf32, #tpu.memory_space<smem>>
    %409 = vector.broadcast %408 : f32 to vector<56x128xf32>
    %410 = arith.mulf %394, %409 : vector<56x128xf32>
    %411 = arith.addf %399, %410 : vector<56x128xf32>
    %c61 = arith.constant 61 : index
    %412 = memref.load %arg3[%c61] : memref<225xf32, #tpu.memory_space<smem>>
    %413 = vector.broadcast %412 : f32 to vector<56x128xf32>
    %414 = arith.mulf %394, %413 : vector<56x128xf32>
    %415 = arith.addf %403, %414 : vector<56x128xf32>
    %c70 = arith.constant 70 : index
    %416 = memref.load %arg3[%c70] : memref<225xf32, #tpu.memory_space<smem>>
    %417 = vector.broadcast %416 : f32 to vector<56x128xf32>
    %418 = arith.mulf %394, %417 : vector<56x128xf32>
    %419 = arith.addf %407, %418 : vector<56x128xf32>
    %c127_i32_123 = arith.constant 127 : i32
    %420 = tpu.dynamic_rotate %394 by %c127_i32_123 dim 1 : vector<56x128xf32>, i32 -> vector<56x128xf32>
    %c51 = arith.constant 51 : index
    %421 = memref.load %arg3[%c51] : memref<225xf32, #tpu.memory_space<smem>>
    %422 = vector.broadcast %421 : f32 to vector<56x128xf32>
    %423 = arith.mulf %420, %422 : vector<56x128xf32>
    %424 = arith.addf %411, %423 : vector<56x128xf32>
    %c60 = arith.constant 60 : index
    %425 = memref.load %arg3[%c60] : memref<225xf32, #tpu.memory_space<smem>>
    %426 = vector.broadcast %425 : f32 to vector<56x128xf32>
    %427 = arith.mulf %420, %426 : vector<56x128xf32>
    %428 = arith.addf %415, %427 : vector<56x128xf32>
    %c69 = arith.constant 69 : index
    %429 = memref.load %arg3[%c69] : memref<225xf32, #tpu.memory_space<smem>>
    %430 = vector.broadcast %429 : f32 to vector<56x128xf32>
    %431 = arith.mulf %420, %430 : vector<56x128xf32>
    %432 = arith.addf %419, %431 : vector<56x128xf32>
    %c1_124 = arith.constant 1 : index
    %c8_125 = arith.constant 8 : index
    %c0_126 = arith.constant 0 : index
    %433 = vector.load %arg6[%c1_124, %c8_125, %c0_126] : memref<5x72x128xf32, #tpu.memory_space<vmem>>, vector<1x56x128xf32>
    %434 = vector.shape_cast %433 : vector<1x56x128xf32> to vector<56x128xf32>
    %c1_i32_127 = arith.constant 1 : i32
    %435 = tpu.dynamic_rotate %434 by %c1_i32_127 dim 1 : vector<56x128xf32>, i32 -> vector<56x128xf32>
    %c50 = arith.constant 50 : index
    %436 = memref.load %arg3[%c50] : memref<225xf32, #tpu.memory_space<smem>>
    %437 = vector.broadcast %436 : f32 to vector<56x128xf32>
    %438 = arith.mulf %435, %437 : vector<56x128xf32>
    %439 = arith.addf %424, %438 : vector<56x128xf32>
    %c59 = arith.constant 59 : index
    %440 = memref.load %arg3[%c59] : memref<225xf32, #tpu.memory_space<smem>>
    %441 = vector.broadcast %440 : f32 to vector<56x128xf32>
    %442 = arith.mulf %435, %441 : vector<56x128xf32>
    %443 = arith.addf %428, %442 : vector<56x128xf32>
    %c68 = arith.constant 68 : index
    %444 = memref.load %arg3[%c68] : memref<225xf32, #tpu.memory_space<smem>>
    %445 = vector.broadcast %444 : f32 to vector<56x128xf32>
    %446 = arith.mulf %435, %445 : vector<56x128xf32>
    %447 = arith.addf %432, %446 : vector<56x128xf32>
    %c49 = arith.constant 49 : index
    %448 = memref.load %arg3[%c49] : memref<225xf32, #tpu.memory_space<smem>>
    %449 = vector.broadcast %448 : f32 to vector<56x128xf32>
    %450 = arith.mulf %434, %449 : vector<56x128xf32>
    %451 = arith.addf %439, %450 : vector<56x128xf32>
    %c58 = arith.constant 58 : index
    %452 = memref.load %arg3[%c58] : memref<225xf32, #tpu.memory_space<smem>>
    %453 = vector.broadcast %452 : f32 to vector<56x128xf32>
    %454 = arith.mulf %434, %453 : vector<56x128xf32>
    %455 = arith.addf %443, %454 : vector<56x128xf32>
    %c67 = arith.constant 67 : index
    %456 = memref.load %arg3[%c67] : memref<225xf32, #tpu.memory_space<smem>>
    %457 = vector.broadcast %456 : f32 to vector<56x128xf32>
    %458 = arith.mulf %434, %457 : vector<56x128xf32>
    %459 = arith.addf %447, %458 : vector<56x128xf32>
    %c127_i32_128 = arith.constant 127 : i32
    %460 = tpu.dynamic_rotate %434 by %c127_i32_128 dim 1 : vector<56x128xf32>, i32 -> vector<56x128xf32>
    %c48 = arith.constant 48 : index
    %461 = memref.load %arg3[%c48] : memref<225xf32, #tpu.memory_space<smem>>
    %462 = vector.broadcast %461 : f32 to vector<56x128xf32>
    %463 = arith.mulf %460, %462 : vector<56x128xf32>
    %464 = arith.addf %451, %463 : vector<56x128xf32>
    %c57 = arith.constant 57 : index
    %465 = memref.load %arg3[%c57] : memref<225xf32, #tpu.memory_space<smem>>
    %466 = vector.broadcast %465 : f32 to vector<56x128xf32>
    %467 = arith.mulf %460, %466 : vector<56x128xf32>
    %468 = arith.addf %455, %467 : vector<56x128xf32>
    %c66 = arith.constant 66 : index
    %469 = memref.load %arg3[%c66] : memref<225xf32, #tpu.memory_space<smem>>
    %470 = vector.broadcast %469 : f32 to vector<56x128xf32>
    %471 = arith.mulf %460, %470 : vector<56x128xf32>
    %472 = arith.addf %459, %471 : vector<56x128xf32>
    %c1_129 = arith.constant 1 : index
    %c9_130 = arith.constant 9 : index
    %c0_131 = arith.constant 0 : index
    %473 = vector.load %arg6[%c1_129, %c9_130, %c0_131] : memref<5x72x128xf32, #tpu.memory_space<vmem>>, vector<1x56x128xf32>
    %474 = vector.shape_cast %473 : vector<1x56x128xf32> to vector<56x128xf32>
    %c1_i32_132 = arith.constant 1 : i32
    %475 = tpu.dynamic_rotate %474 by %c1_i32_132 dim 1 : vector<56x128xf32>, i32 -> vector<56x128xf32>
    %c47 = arith.constant 47 : index
    %476 = memref.load %arg3[%c47] : memref<225xf32, #tpu.memory_space<smem>>
    %477 = vector.broadcast %476 : f32 to vector<56x128xf32>
    %478 = arith.mulf %475, %477 : vector<56x128xf32>
    %479 = arith.addf %464, %478 : vector<56x128xf32>
    %c56 = arith.constant 56 : index
    %480 = memref.load %arg3[%c56] : memref<225xf32, #tpu.memory_space<smem>>
    %481 = vector.broadcast %480 : f32 to vector<56x128xf32>
    %482 = arith.mulf %475, %481 : vector<56x128xf32>
    %483 = arith.addf %468, %482 : vector<56x128xf32>
    %c65 = arith.constant 65 : index
    %484 = memref.load %arg3[%c65] : memref<225xf32, #tpu.memory_space<smem>>
    %485 = vector.broadcast %484 : f32 to vector<56x128xf32>
    %486 = arith.mulf %475, %485 : vector<56x128xf32>
    %487 = arith.addf %472, %486 : vector<56x128xf32>
    %c46 = arith.constant 46 : index
    %488 = memref.load %arg3[%c46] : memref<225xf32, #tpu.memory_space<smem>>
    %489 = vector.broadcast %488 : f32 to vector<56x128xf32>
    %490 = arith.mulf %474, %489 : vector<56x128xf32>
    %491 = arith.addf %479, %490 : vector<56x128xf32>
    %c55 = arith.constant 55 : index
    %492 = memref.load %arg3[%c55] : memref<225xf32, #tpu.memory_space<smem>>
    %493 = vector.broadcast %492 : f32 to vector<56x128xf32>
    %494 = arith.mulf %474, %493 : vector<56x128xf32>
    %495 = arith.addf %483, %494 : vector<56x128xf32>
    %c64 = arith.constant 64 : index
    %496 = memref.load %arg3[%c64] : memref<225xf32, #tpu.memory_space<smem>>
    %497 = vector.broadcast %496 : f32 to vector<56x128xf32>
    %498 = arith.mulf %474, %497 : vector<56x128xf32>
    %499 = arith.addf %487, %498 : vector<56x128xf32>
    %c127_i32_133 = arith.constant 127 : i32
    %500 = tpu.dynamic_rotate %474 by %c127_i32_133 dim 1 : vector<56x128xf32>, i32 -> vector<56x128xf32>
    %c45 = arith.constant 45 : index
    %501 = memref.load %arg3[%c45] : memref<225xf32, #tpu.memory_space<smem>>
    %502 = vector.broadcast %501 : f32 to vector<56x128xf32>
    %503 = arith.mulf %500, %502 : vector<56x128xf32>
    %504 = arith.addf %491, %503 : vector<56x128xf32>
    %c54 = arith.constant 54 : index
    %505 = memref.load %arg3[%c54] : memref<225xf32, #tpu.memory_space<smem>>
    %506 = vector.broadcast %505 : f32 to vector<56x128xf32>
    %507 = arith.mulf %500, %506 : vector<56x128xf32>
    %508 = arith.addf %495, %507 : vector<56x128xf32>
    %c63 = arith.constant 63 : index
    %509 = memref.load %arg3[%c63] : memref<225xf32, #tpu.memory_space<smem>>
    %510 = vector.broadcast %509 : f32 to vector<56x128xf32>
    %511 = arith.mulf %500, %510 : vector<56x128xf32>
    %512 = arith.addf %499, %511 : vector<56x128xf32>
    %c2_134 = arith.constant 2 : index
    %c7_135 = arith.constant 7 : index
    %c0_136 = arith.constant 0 : index
    %513 = vector.load %arg6[%c2_134, %c7_135, %c0_136] : memref<5x72x128xf32, #tpu.memory_space<vmem>>, vector<1x56x128xf32>
    %514 = vector.shape_cast %513 : vector<1x56x128xf32> to vector<56x128xf32>
    %c1_i32_137 = arith.constant 1 : i32
    %515 = tpu.dynamic_rotate %514 by %c1_i32_137 dim 1 : vector<56x128xf32>, i32 -> vector<56x128xf32>
    %c98 = arith.constant 98 : index
    %516 = memref.load %arg3[%c98] : memref<225xf32, #tpu.memory_space<smem>>
    %517 = vector.broadcast %516 : f32 to vector<56x128xf32>
    %518 = arith.mulf %515, %517 : vector<56x128xf32>
    %519 = arith.addf %504, %518 : vector<56x128xf32>
    %c107 = arith.constant 107 : index
    %520 = memref.load %arg3[%c107] : memref<225xf32, #tpu.memory_space<smem>>
    %521 = vector.broadcast %520 : f32 to vector<56x128xf32>
    %522 = arith.mulf %515, %521 : vector<56x128xf32>
    %523 = arith.addf %508, %522 : vector<56x128xf32>
    %c116 = arith.constant 116 : index
    %524 = memref.load %arg3[%c116] : memref<225xf32, #tpu.memory_space<smem>>
    %525 = vector.broadcast %524 : f32 to vector<56x128xf32>
    %526 = arith.mulf %515, %525 : vector<56x128xf32>
    %527 = arith.addf %512, %526 : vector<56x128xf32>
    %c97 = arith.constant 97 : index
    %528 = memref.load %arg3[%c97] : memref<225xf32, #tpu.memory_space<smem>>
    %529 = vector.broadcast %528 : f32 to vector<56x128xf32>
    %530 = arith.mulf %514, %529 : vector<56x128xf32>
    %531 = arith.addf %519, %530 : vector<56x128xf32>
    %c106 = arith.constant 106 : index
    %532 = memref.load %arg3[%c106] : memref<225xf32, #tpu.memory_space<smem>>
    %533 = vector.broadcast %532 : f32 to vector<56x128xf32>
    %534 = arith.mulf %514, %533 : vector<56x128xf32>
    %535 = arith.addf %523, %534 : vector<56x128xf32>
    %c115 = arith.constant 115 : index
    %536 = memref.load %arg3[%c115] : memref<225xf32, #tpu.memory_space<smem>>
    %537 = vector.broadcast %536 : f32 to vector<56x128xf32>
    %538 = arith.mulf %514, %537 : vector<56x128xf32>
    %539 = arith.addf %527, %538 : vector<56x128xf32>
    %c127_i32_138 = arith.constant 127 : i32
    %540 = tpu.dynamic_rotate %514 by %c127_i32_138 dim 1 : vector<56x128xf32>, i32 -> vector<56x128xf32>
    %c96 = arith.constant 96 : index
    %541 = memref.load %arg3[%c96] : memref<225xf32, #tpu.memory_space<smem>>
    %542 = vector.broadcast %541 : f32 to vector<56x128xf32>
    %543 = arith.mulf %540, %542 : vector<56x128xf32>
    %544 = arith.addf %531, %543 : vector<56x128xf32>
    %c105 = arith.constant 105 : index
    %545 = memref.load %arg3[%c105] : memref<225xf32, #tpu.memory_space<smem>>
    %546 = vector.broadcast %545 : f32 to vector<56x128xf32>
    %547 = arith.mulf %540, %546 : vector<56x128xf32>
    %548 = arith.addf %535, %547 : vector<56x128xf32>
    %c114 = arith.constant 114 : index
    %549 = memref.load %arg3[%c114] : memref<225xf32, #tpu.memory_space<smem>>
    %550 = vector.broadcast %549 : f32 to vector<56x128xf32>
    %551 = arith.mulf %540, %550 : vector<56x128xf32>
    %552 = arith.addf %539, %551 : vector<56x128xf32>
    %c2_139 = arith.constant 2 : index
    %c8_140 = arith.constant 8 : index
    %c0_141 = arith.constant 0 : index
    %553 = vector.load %arg6[%c2_139, %c8_140, %c0_141] : memref<5x72x128xf32, #tpu.memory_space<vmem>>, vector<1x56x128xf32>
    %554 = vector.shape_cast %553 : vector<1x56x128xf32> to vector<56x128xf32>
    %c1_i32_142 = arith.constant 1 : i32
    %555 = tpu.dynamic_rotate %554 by %c1_i32_142 dim 1 : vector<56x128xf32>, i32 -> vector<56x128xf32>
    %c95 = arith.constant 95 : index
    %556 = memref.load %arg3[%c95] : memref<225xf32, #tpu.memory_space<smem>>
    %557 = vector.broadcast %556 : f32 to vector<56x128xf32>
    %558 = arith.mulf %555, %557 : vector<56x128xf32>
    %559 = arith.addf %544, %558 : vector<56x128xf32>
    %c104 = arith.constant 104 : index
    %560 = memref.load %arg3[%c104] : memref<225xf32, #tpu.memory_space<smem>>
    %561 = vector.broadcast %560 : f32 to vector<56x128xf32>
    %562 = arith.mulf %555, %561 : vector<56x128xf32>
    %563 = arith.addf %548, %562 : vector<56x128xf32>
    %c113 = arith.constant 113 : index
    %564 = memref.load %arg3[%c113] : memref<225xf32, #tpu.memory_space<smem>>
    %565 = vector.broadcast %564 : f32 to vector<56x128xf32>
    %566 = arith.mulf %555, %565 : vector<56x128xf32>
    %567 = arith.addf %552, %566 : vector<56x128xf32>
    %c94 = arith.constant 94 : index
    %568 = memref.load %arg3[%c94] : memref<225xf32, #tpu.memory_space<smem>>
    %569 = vector.broadcast %568 : f32 to vector<56x128xf32>
    %570 = arith.mulf %554, %569 : vector<56x128xf32>
    %571 = arith.addf %559, %570 : vector<56x128xf32>
    %c103 = arith.constant 103 : index
    %572 = memref.load %arg3[%c103] : memref<225xf32, #tpu.memory_space<smem>>
    %573 = vector.broadcast %572 : f32 to vector<56x128xf32>
    %574 = arith.mulf %554, %573 : vector<56x128xf32>
    %575 = arith.addf %563, %574 : vector<56x128xf32>
    %c112 = arith.constant 112 : index
    %576 = memref.load %arg3[%c112] : memref<225xf32, #tpu.memory_space<smem>>
    %577 = vector.broadcast %576 : f32 to vector<56x128xf32>
    %578 = arith.mulf %554, %577 : vector<56x128xf32>
    %579 = arith.addf %567, %578 : vector<56x128xf32>
    %c127_i32_143 = arith.constant 127 : i32
    %580 = tpu.dynamic_rotate %554 by %c127_i32_143 dim 1 : vector<56x128xf32>, i32 -> vector<56x128xf32>
    %c93 = arith.constant 93 : index
    %581 = memref.load %arg3[%c93] : memref<225xf32, #tpu.memory_space<smem>>
    %582 = vector.broadcast %581 : f32 to vector<56x128xf32>
    %583 = arith.mulf %580, %582 : vector<56x128xf32>
    %584 = arith.addf %571, %583 : vector<56x128xf32>
    %c102 = arith.constant 102 : index
    %585 = memref.load %arg3[%c102] : memref<225xf32, #tpu.memory_space<smem>>
    %586 = vector.broadcast %585 : f32 to vector<56x128xf32>
    %587 = arith.mulf %580, %586 : vector<56x128xf32>
    %588 = arith.addf %575, %587 : vector<56x128xf32>
    %c111 = arith.constant 111 : index
    %589 = memref.load %arg3[%c111] : memref<225xf32, #tpu.memory_space<smem>>
    %590 = vector.broadcast %589 : f32 to vector<56x128xf32>
    %591 = arith.mulf %580, %590 : vector<56x128xf32>
    %592 = arith.addf %579, %591 : vector<56x128xf32>
    %c2_144 = arith.constant 2 : index
    %c9_145 = arith.constant 9 : index
    %c0_146 = arith.constant 0 : index
    %593 = vector.load %arg6[%c2_144, %c9_145, %c0_146] : memref<5x72x128xf32, #tpu.memory_space<vmem>>, vector<1x56x128xf32>
    %594 = vector.shape_cast %593 : vector<1x56x128xf32> to vector<56x128xf32>
    %c1_i32_147 = arith.constant 1 : i32
    %595 = tpu.dynamic_rotate %594 by %c1_i32_147 dim 1 : vector<56x128xf32>, i32 -> vector<56x128xf32>
    %c92 = arith.constant 92 : index
    %596 = memref.load %arg3[%c92] : memref<225xf32, #tpu.memory_space<smem>>
    %597 = vector.broadcast %596 : f32 to vector<56x128xf32>
    %598 = arith.mulf %595, %597 : vector<56x128xf32>
    %599 = arith.addf %584, %598 : vector<56x128xf32>
    %c101 = arith.constant 101 : index
    %600 = memref.load %arg3[%c101] : memref<225xf32, #tpu.memory_space<smem>>
    %601 = vector.broadcast %600 : f32 to vector<56x128xf32>
    %602 = arith.mulf %595, %601 : vector<56x128xf32>
    %603 = arith.addf %588, %602 : vector<56x128xf32>
    %c110 = arith.constant 110 : index
    %604 = memref.load %arg3[%c110] : memref<225xf32, #tpu.memory_space<smem>>
    %605 = vector.broadcast %604 : f32 to vector<56x128xf32>
    %606 = arith.mulf %595, %605 : vector<56x128xf32>
    %607 = arith.addf %592, %606 : vector<56x128xf32>
    %c91 = arith.constant 91 : index
    %608 = memref.load %arg3[%c91] : memref<225xf32, #tpu.memory_space<smem>>
    %609 = vector.broadcast %608 : f32 to vector<56x128xf32>
    %610 = arith.mulf %594, %609 : vector<56x128xf32>
    %611 = arith.addf %599, %610 : vector<56x128xf32>
    %c100 = arith.constant 100 : index
    %612 = memref.load %arg3[%c100] : memref<225xf32, #tpu.memory_space<smem>>
    %613 = vector.broadcast %612 : f32 to vector<56x128xf32>
    %614 = arith.mulf %594, %613 : vector<56x128xf32>
    %615 = arith.addf %603, %614 : vector<56x128xf32>
    %c109 = arith.constant 109 : index
    %616 = memref.load %arg3[%c109] : memref<225xf32, #tpu.memory_space<smem>>
    %617 = vector.broadcast %616 : f32 to vector<56x128xf32>
    %618 = arith.mulf %594, %617 : vector<56x128xf32>
    %619 = arith.addf %607, %618 : vector<56x128xf32>
    %c127_i32_148 = arith.constant 127 : i32
    %620 = tpu.dynamic_rotate %594 by %c127_i32_148 dim 1 : vector<56x128xf32>, i32 -> vector<56x128xf32>
    %c90 = arith.constant 90 : index
    %621 = memref.load %arg3[%c90] : memref<225xf32, #tpu.memory_space<smem>>
    %622 = vector.broadcast %621 : f32 to vector<56x128xf32>
    %623 = arith.mulf %620, %622 : vector<56x128xf32>
    %624 = arith.addf %611, %623 : vector<56x128xf32>
    %c99 = arith.constant 99 : index
    %625 = memref.load %arg3[%c99] : memref<225xf32, #tpu.memory_space<smem>>
    %626 = vector.broadcast %625 : f32 to vector<56x128xf32>
    %627 = arith.mulf %620, %626 : vector<56x128xf32>
    %628 = arith.addf %615, %627 : vector<56x128xf32>
    %c108 = arith.constant 108 : index
    %629 = memref.load %arg3[%c108] : memref<225xf32, #tpu.memory_space<smem>>
    %630 = vector.broadcast %629 : f32 to vector<56x128xf32>
    %631 = arith.mulf %620, %630 : vector<56x128xf32>
    %632 = arith.addf %619, %631 : vector<56x128xf32>
    %c3_149 = arith.constant 3 : index
    %c7_150 = arith.constant 7 : index
    %c0_151 = arith.constant 0 : index
    %633 = vector.load %arg6[%c3_149, %c7_150, %c0_151] : memref<5x72x128xf32, #tpu.memory_space<vmem>>, vector<1x56x128xf32>
    %634 = vector.shape_cast %633 : vector<1x56x128xf32> to vector<56x128xf32>
    %c1_i32_152 = arith.constant 1 : i32
    %635 = tpu.dynamic_rotate %634 by %c1_i32_152 dim 1 : vector<56x128xf32>, i32 -> vector<56x128xf32>
    %c143 = arith.constant 143 : index
    %636 = memref.load %arg3[%c143] : memref<225xf32, #tpu.memory_space<smem>>
    %637 = vector.broadcast %636 : f32 to vector<56x128xf32>
    %638 = arith.mulf %635, %637 : vector<56x128xf32>
    %639 = arith.addf %624, %638 : vector<56x128xf32>
    %c152 = arith.constant 152 : index
    %640 = memref.load %arg3[%c152] : memref<225xf32, #tpu.memory_space<smem>>
    %641 = vector.broadcast %640 : f32 to vector<56x128xf32>
    %642 = arith.mulf %635, %641 : vector<56x128xf32>
    %643 = arith.addf %628, %642 : vector<56x128xf32>
    %c161 = arith.constant 161 : index
    %644 = memref.load %arg3[%c161] : memref<225xf32, #tpu.memory_space<smem>>
    %645 = vector.broadcast %644 : f32 to vector<56x128xf32>
    %646 = arith.mulf %635, %645 : vector<56x128xf32>
    %647 = arith.addf %632, %646 : vector<56x128xf32>
    %c142 = arith.constant 142 : index
    %648 = memref.load %arg3[%c142] : memref<225xf32, #tpu.memory_space<smem>>
    %649 = vector.broadcast %648 : f32 to vector<56x128xf32>
    %650 = arith.mulf %634, %649 : vector<56x128xf32>
    %651 = arith.addf %639, %650 : vector<56x128xf32>
    %c151 = arith.constant 151 : index
    %652 = memref.load %arg3[%c151] : memref<225xf32, #tpu.memory_space<smem>>
    %653 = vector.broadcast %652 : f32 to vector<56x128xf32>
    %654 = arith.mulf %634, %653 : vector<56x128xf32>
    %655 = arith.addf %643, %654 : vector<56x128xf32>
    %c160 = arith.constant 160 : index
    %656 = memref.load %arg3[%c160] : memref<225xf32, #tpu.memory_space<smem>>
    %657 = vector.broadcast %656 : f32 to vector<56x128xf32>
    %658 = arith.mulf %634, %657 : vector<56x128xf32>
    %659 = arith.addf %647, %658 : vector<56x128xf32>
    %c127_i32_153 = arith.constant 127 : i32
    %660 = tpu.dynamic_rotate %634 by %c127_i32_153 dim 1 : vector<56x128xf32>, i32 -> vector<56x128xf32>
    %c141 = arith.constant 141 : index
    %661 = memref.load %arg3[%c141] : memref<225xf32, #tpu.memory_space<smem>>
    %662 = vector.broadcast %661 : f32 to vector<56x128xf32>
    %663 = arith.mulf %660, %662 : vector<56x128xf32>
    %664 = arith.addf %651, %663 : vector<56x128xf32>
    %c150 = arith.constant 150 : index
    %665 = memref.load %arg3[%c150] : memref<225xf32, #tpu.memory_space<smem>>
    %666 = vector.broadcast %665 : f32 to vector<56x128xf32>
    %667 = arith.mulf %660, %666 : vector<56x128xf32>
    %668 = arith.addf %655, %667 : vector<56x128xf32>
    %c159 = arith.constant 159 : index
    %669 = memref.load %arg3[%c159] : memref<225xf32, #tpu.memory_space<smem>>
    %670 = vector.broadcast %669 : f32 to vector<56x128xf32>
    %671 = arith.mulf %660, %670 : vector<56x128xf32>
    %672 = arith.addf %659, %671 : vector<56x128xf32>
    %c3_154 = arith.constant 3 : index
    %c8_155 = arith.constant 8 : index
    %c0_156 = arith.constant 0 : index
    %673 = vector.load %arg6[%c3_154, %c8_155, %c0_156] : memref<5x72x128xf32, #tpu.memory_space<vmem>>, vector<1x56x128xf32>
    %674 = vector.shape_cast %673 : vector<1x56x128xf32> to vector<56x128xf32>
    %c1_i32_157 = arith.constant 1 : i32
    %675 = tpu.dynamic_rotate %674 by %c1_i32_157 dim 1 : vector<56x128xf32>, i32 -> vector<56x128xf32>
    %c140 = arith.constant 140 : index
    %676 = memref.load %arg3[%c140] : memref<225xf32, #tpu.memory_space<smem>>
    %677 = vector.broadcast %676 : f32 to vector<56x128xf32>
    %678 = arith.mulf %675, %677 : vector<56x128xf32>
    %679 = arith.addf %664, %678 : vector<56x128xf32>
    %c149 = arith.constant 149 : index
    %680 = memref.load %arg3[%c149] : memref<225xf32, #tpu.memory_space<smem>>
    %681 = vector.broadcast %680 : f32 to vector<56x128xf32>
    %682 = arith.mulf %675, %681 : vector<56x128xf32>
    %683 = arith.addf %668, %682 : vector<56x128xf32>
    %c158 = arith.constant 158 : index
    %684 = memref.load %arg3[%c158] : memref<225xf32, #tpu.memory_space<smem>>
    %685 = vector.broadcast %684 : f32 to vector<56x128xf32>
    %686 = arith.mulf %675, %685 : vector<56x128xf32>
    %687 = arith.addf %672, %686 : vector<56x128xf32>
    %c139 = arith.constant 139 : index
    %688 = memref.load %arg3[%c139] : memref<225xf32, #tpu.memory_space<smem>>
    %689 = vector.broadcast %688 : f32 to vector<56x128xf32>
    %690 = arith.mulf %674, %689 : vector<56x128xf32>
    %691 = arith.addf %679, %690 : vector<56x128xf32>
    %c148 = arith.constant 148 : index
    %692 = memref.load %arg3[%c148] : memref<225xf32, #tpu.memory_space<smem>>
    %693 = vector.broadcast %692 : f32 to vector<56x128xf32>
    %694 = arith.mulf %674, %693 : vector<56x128xf32>
    %695 = arith.addf %683, %694 : vector<56x128xf32>
    %c157 = arith.constant 157 : index
    %696 = memref.load %arg3[%c157] : memref<225xf32, #tpu.memory_space<smem>>
    %697 = vector.broadcast %696 : f32 to vector<56x128xf32>
    %698 = arith.mulf %674, %697 : vector<56x128xf32>
    %699 = arith.addf %687, %698 : vector<56x128xf32>
    %c127_i32_158 = arith.constant 127 : i32
    %700 = tpu.dynamic_rotate %674 by %c127_i32_158 dim 1 : vector<56x128xf32>, i32 -> vector<56x128xf32>
    %c138 = arith.constant 138 : index
    %701 = memref.load %arg3[%c138] : memref<225xf32, #tpu.memory_space<smem>>
    %702 = vector.broadcast %701 : f32 to vector<56x128xf32>
    %703 = arith.mulf %700, %702 : vector<56x128xf32>
    %704 = arith.addf %691, %703 : vector<56x128xf32>
    %c147 = arith.constant 147 : index
    %705 = memref.load %arg3[%c147] : memref<225xf32, #tpu.memory_space<smem>>
    %706 = vector.broadcast %705 : f32 to vector<56x128xf32>
    %707 = arith.mulf %700, %706 : vector<56x128xf32>
    %708 = arith.addf %695, %707 : vector<56x128xf32>
    %c156 = arith.constant 156 : index
    %709 = memref.load %arg3[%c156] : memref<225xf32, #tpu.memory_space<smem>>
    %710 = vector.broadcast %709 : f32 to vector<56x128xf32>
    %711 = arith.mulf %700, %710 : vector<56x128xf32>
    %712 = arith.addf %699, %711 : vector<56x128xf32>
    %c3_159 = arith.constant 3 : index
    %c9_160 = arith.constant 9 : index
    %c0_161 = arith.constant 0 : index
    %713 = vector.load %arg6[%c3_159, %c9_160, %c0_161] : memref<5x72x128xf32, #tpu.memory_space<vmem>>, vector<1x56x128xf32>
    %714 = vector.shape_cast %713 : vector<1x56x128xf32> to vector<56x128xf32>
    %c1_i32_162 = arith.constant 1 : i32
    %715 = tpu.dynamic_rotate %714 by %c1_i32_162 dim 1 : vector<56x128xf32>, i32 -> vector<56x128xf32>
    %c137 = arith.constant 137 : index
    %716 = memref.load %arg3[%c137] : memref<225xf32, #tpu.memory_space<smem>>
    %717 = vector.broadcast %716 : f32 to vector<56x128xf32>
    %718 = arith.mulf %715, %717 : vector<56x128xf32>
    %719 = arith.addf %704, %718 : vector<56x128xf32>
    %c146 = arith.constant 146 : index
    %720 = memref.load %arg3[%c146] : memref<225xf32, #tpu.memory_space<smem>>
    %721 = vector.broadcast %720 : f32 to vector<56x128xf32>
    %722 = arith.mulf %715, %721 : vector<56x128xf32>
    %723 = arith.addf %708, %722 : vector<56x128xf32>
    %c155 = arith.constant 155 : index
    %724 = memref.load %arg3[%c155] : memref<225xf32, #tpu.memory_space<smem>>
    %725 = vector.broadcast %724 : f32 to vector<56x128xf32>
    %726 = arith.mulf %715, %725 : vector<56x128xf32>
    %727 = arith.addf %712, %726 : vector<56x128xf32>
    %c136 = arith.constant 136 : index
    %728 = memref.load %arg3[%c136] : memref<225xf32, #tpu.memory_space<smem>>
    %729 = vector.broadcast %728 : f32 to vector<56x128xf32>
    %730 = arith.mulf %714, %729 : vector<56x128xf32>
    %731 = arith.addf %719, %730 : vector<56x128xf32>
    %c145 = arith.constant 145 : index
    %732 = memref.load %arg3[%c145] : memref<225xf32, #tpu.memory_space<smem>>
    %733 = vector.broadcast %732 : f32 to vector<56x128xf32>
    %734 = arith.mulf %714, %733 : vector<56x128xf32>
    %735 = arith.addf %723, %734 : vector<56x128xf32>
    %c154 = arith.constant 154 : index
    %736 = memref.load %arg3[%c154] : memref<225xf32, #tpu.memory_space<smem>>
    %737 = vector.broadcast %736 : f32 to vector<56x128xf32>
    %738 = arith.mulf %714, %737 : vector<56x128xf32>
    %739 = arith.addf %727, %738 : vector<56x128xf32>
    %c127_i32_163 = arith.constant 127 : i32
    %740 = tpu.dynamic_rotate %714 by %c127_i32_163 dim 1 : vector<56x128xf32>, i32 -> vector<56x128xf32>
    %c135 = arith.constant 135 : index
    %741 = memref.load %arg3[%c135] : memref<225xf32, #tpu.memory_space<smem>>
    %742 = vector.broadcast %741 : f32 to vector<56x128xf32>
    %743 = arith.mulf %740, %742 : vector<56x128xf32>
    %744 = arith.addf %731, %743 : vector<56x128xf32>
    %c144 = arith.constant 144 : index
    %745 = memref.load %arg3[%c144] : memref<225xf32, #tpu.memory_space<smem>>
    %746 = vector.broadcast %745 : f32 to vector<56x128xf32>
    %747 = arith.mulf %740, %746 : vector<56x128xf32>
    %748 = arith.addf %735, %747 : vector<56x128xf32>
    %c153 = arith.constant 153 : index
    %749 = memref.load %arg3[%c153] : memref<225xf32, #tpu.memory_space<smem>>
    %750 = vector.broadcast %749 : f32 to vector<56x128xf32>
    %751 = arith.mulf %740, %750 : vector<56x128xf32>
    %752 = arith.addf %739, %751 : vector<56x128xf32>
    %c4_164 = arith.constant 4 : index
    %c7_165 = arith.constant 7 : index
    %c0_166 = arith.constant 0 : index
    %753 = vector.load %arg6[%c4_164, %c7_165, %c0_166] : memref<5x72x128xf32, #tpu.memory_space<vmem>>, vector<1x56x128xf32>
    %754 = vector.shape_cast %753 : vector<1x56x128xf32> to vector<56x128xf32>
    %c1_i32_167 = arith.constant 1 : i32
    %755 = tpu.dynamic_rotate %754 by %c1_i32_167 dim 1 : vector<56x128xf32>, i32 -> vector<56x128xf32>
    %c188 = arith.constant 188 : index
    %756 = memref.load %arg3[%c188] : memref<225xf32, #tpu.memory_space<smem>>
    %757 = vector.broadcast %756 : f32 to vector<56x128xf32>
    %758 = arith.mulf %755, %757 : vector<56x128xf32>
    %759 = arith.addf %744, %758 : vector<56x128xf32>
    %c197 = arith.constant 197 : index
    %760 = memref.load %arg3[%c197] : memref<225xf32, #tpu.memory_space<smem>>
    %761 = vector.broadcast %760 : f32 to vector<56x128xf32>
    %762 = arith.mulf %755, %761 : vector<56x128xf32>
    %763 = arith.addf %748, %762 : vector<56x128xf32>
    %c206 = arith.constant 206 : index
    %764 = memref.load %arg3[%c206] : memref<225xf32, #tpu.memory_space<smem>>
    %765 = vector.broadcast %764 : f32 to vector<56x128xf32>
    %766 = arith.mulf %755, %765 : vector<56x128xf32>
    %767 = arith.addf %752, %766 : vector<56x128xf32>
    %c187 = arith.constant 187 : index
    %768 = memref.load %arg3[%c187] : memref<225xf32, #tpu.memory_space<smem>>
    %769 = vector.broadcast %768 : f32 to vector<56x128xf32>
    %770 = arith.mulf %754, %769 : vector<56x128xf32>
    %771 = arith.addf %759, %770 : vector<56x128xf32>
    %c196 = arith.constant 196 : index
    %772 = memref.load %arg3[%c196] : memref<225xf32, #tpu.memory_space<smem>>
    %773 = vector.broadcast %772 : f32 to vector<56x128xf32>
    %774 = arith.mulf %754, %773 : vector<56x128xf32>
    %775 = arith.addf %763, %774 : vector<56x128xf32>
    %c205 = arith.constant 205 : index
    %776 = memref.load %arg3[%c205] : memref<225xf32, #tpu.memory_space<smem>>
    %777 = vector.broadcast %776 : f32 to vector<56x128xf32>
    %778 = arith.mulf %754, %777 : vector<56x128xf32>
    %779 = arith.addf %767, %778 : vector<56x128xf32>
    %c127_i32_168 = arith.constant 127 : i32
    %780 = tpu.dynamic_rotate %754 by %c127_i32_168 dim 1 : vector<56x128xf32>, i32 -> vector<56x128xf32>
    %c186 = arith.constant 186 : index
    %781 = memref.load %arg3[%c186] : memref<225xf32, #tpu.memory_space<smem>>
    %782 = vector.broadcast %781 : f32 to vector<56x128xf32>
    %783 = arith.mulf %780, %782 : vector<56x128xf32>
    %784 = arith.addf %771, %783 : vector<56x128xf32>
    %c195 = arith.constant 195 : index
    %785 = memref.load %arg3[%c195] : memref<225xf32, #tpu.memory_space<smem>>
    %786 = vector.broadcast %785 : f32 to vector<56x128xf32>
    %787 = arith.mulf %780, %786 : vector<56x128xf32>
    %788 = arith.addf %775, %787 : vector<56x128xf32>
    %c204 = arith.constant 204 : index
    %789 = memref.load %arg3[%c204] : memref<225xf32, #tpu.memory_space<smem>>
    %790 = vector.broadcast %789 : f32 to vector<56x128xf32>
    %791 = arith.mulf %780, %790 : vector<56x128xf32>
    %792 = arith.addf %779, %791 : vector<56x128xf32>
    %c4_169 = arith.constant 4 : index
    %c8_170 = arith.constant 8 : index
    %c0_171 = arith.constant 0 : index
    %793 = vector.load %arg6[%c4_169, %c8_170, %c0_171] : memref<5x72x128xf32, #tpu.memory_space<vmem>>, vector<1x56x128xf32>
    %794 = vector.shape_cast %793 : vector<1x56x128xf32> to vector<56x128xf32>
    %c1_i32_172 = arith.constant 1 : i32
    %795 = tpu.dynamic_rotate %794 by %c1_i32_172 dim 1 : vector<56x128xf32>, i32 -> vector<56x128xf32>
    %c185 = arith.constant 185 : index
    %796 = memref.load %arg3[%c185] : memref<225xf32, #tpu.memory_space<smem>>
    %797 = vector.broadcast %796 : f32 to vector<56x128xf32>
    %798 = arith.mulf %795, %797 : vector<56x128xf32>
    %799 = arith.addf %784, %798 : vector<56x128xf32>
    %c194 = arith.constant 194 : index
    %800 = memref.load %arg3[%c194] : memref<225xf32, #tpu.memory_space<smem>>
    %801 = vector.broadcast %800 : f32 to vector<56x128xf32>
    %802 = arith.mulf %795, %801 : vector<56x128xf32>
    %803 = arith.addf %788, %802 : vector<56x128xf32>
    %c203 = arith.constant 203 : index
    %804 = memref.load %arg3[%c203] : memref<225xf32, #tpu.memory_space<smem>>
    %805 = vector.broadcast %804 : f32 to vector<56x128xf32>
    %806 = arith.mulf %795, %805 : vector<56x128xf32>
    %807 = arith.addf %792, %806 : vector<56x128xf32>
    %c184 = arith.constant 184 : index
    %808 = memref.load %arg3[%c184] : memref<225xf32, #tpu.memory_space<smem>>
    %809 = vector.broadcast %808 : f32 to vector<56x128xf32>
    %810 = arith.mulf %794, %809 : vector<56x128xf32>
    %811 = arith.addf %799, %810 : vector<56x128xf32>
    %c193 = arith.constant 193 : index
    %812 = memref.load %arg3[%c193] : memref<225xf32, #tpu.memory_space<smem>>
    %813 = vector.broadcast %812 : f32 to vector<56x128xf32>
    %814 = arith.mulf %794, %813 : vector<56x128xf32>
    %815 = arith.addf %803, %814 : vector<56x128xf32>
    %c202 = arith.constant 202 : index
    %816 = memref.load %arg3[%c202] : memref<225xf32, #tpu.memory_space<smem>>
    %817 = vector.broadcast %816 : f32 to vector<56x128xf32>
    %818 = arith.mulf %794, %817 : vector<56x128xf32>
    %819 = arith.addf %807, %818 : vector<56x128xf32>
    %c127_i32_173 = arith.constant 127 : i32
    %820 = tpu.dynamic_rotate %794 by %c127_i32_173 dim 1 : vector<56x128xf32>, i32 -> vector<56x128xf32>
    %c183 = arith.constant 183 : index
    %821 = memref.load %arg3[%c183] : memref<225xf32, #tpu.memory_space<smem>>
    %822 = vector.broadcast %821 : f32 to vector<56x128xf32>
    %823 = arith.mulf %820, %822 : vector<56x128xf32>
    %824 = arith.addf %811, %823 : vector<56x128xf32>
    %c192 = arith.constant 192 : index
    %825 = memref.load %arg3[%c192] : memref<225xf32, #tpu.memory_space<smem>>
    %826 = vector.broadcast %825 : f32 to vector<56x128xf32>
    %827 = arith.mulf %820, %826 : vector<56x128xf32>
    %828 = arith.addf %815, %827 : vector<56x128xf32>
    %c201 = arith.constant 201 : index
    %829 = memref.load %arg3[%c201] : memref<225xf32, #tpu.memory_space<smem>>
    %830 = vector.broadcast %829 : f32 to vector<56x128xf32>
    %831 = arith.mulf %820, %830 : vector<56x128xf32>
    %832 = arith.addf %819, %831 : vector<56x128xf32>
    %c4_174 = arith.constant 4 : index
    %c9_175 = arith.constant 9 : index
    %c0_176 = arith.constant 0 : index
    %833 = vector.load %arg6[%c4_174, %c9_175, %c0_176] : memref<5x72x128xf32, #tpu.memory_space<vmem>>, vector<1x56x128xf32>
    %834 = vector.shape_cast %833 : vector<1x56x128xf32> to vector<56x128xf32>
    %c1_i32_177 = arith.constant 1 : i32
    %835 = tpu.dynamic_rotate %834 by %c1_i32_177 dim 1 : vector<56x128xf32>, i32 -> vector<56x128xf32>
    %c182 = arith.constant 182 : index
    %836 = memref.load %arg3[%c182] : memref<225xf32, #tpu.memory_space<smem>>
    %837 = vector.broadcast %836 : f32 to vector<56x128xf32>
    %838 = arith.mulf %835, %837 : vector<56x128xf32>
    %839 = arith.addf %824, %838 : vector<56x128xf32>
    %c191 = arith.constant 191 : index
    %840 = memref.load %arg3[%c191] : memref<225xf32, #tpu.memory_space<smem>>
    %841 = vector.broadcast %840 : f32 to vector<56x128xf32>
    %842 = arith.mulf %835, %841 : vector<56x128xf32>
    %843 = arith.addf %828, %842 : vector<56x128xf32>
    %c200 = arith.constant 200 : index
    %844 = memref.load %arg3[%c200] : memref<225xf32, #tpu.memory_space<smem>>
    %845 = vector.broadcast %844 : f32 to vector<56x128xf32>
    %846 = arith.mulf %835, %845 : vector<56x128xf32>
    %847 = arith.addf %832, %846 : vector<56x128xf32>
    %c181 = arith.constant 181 : index
    %848 = memref.load %arg3[%c181] : memref<225xf32, #tpu.memory_space<smem>>
    %849 = vector.broadcast %848 : f32 to vector<56x128xf32>
    %850 = arith.mulf %834, %849 : vector<56x128xf32>
    %851 = arith.addf %839, %850 : vector<56x128xf32>
    %c190 = arith.constant 190 : index
    %852 = memref.load %arg3[%c190] : memref<225xf32, #tpu.memory_space<smem>>
    %853 = vector.broadcast %852 : f32 to vector<56x128xf32>
    %854 = arith.mulf %834, %853 : vector<56x128xf32>
    %855 = arith.addf %843, %854 : vector<56x128xf32>
    %c199 = arith.constant 199 : index
    %856 = memref.load %arg3[%c199] : memref<225xf32, #tpu.memory_space<smem>>
    %857 = vector.broadcast %856 : f32 to vector<56x128xf32>
    %858 = arith.mulf %834, %857 : vector<56x128xf32>
    %859 = arith.addf %847, %858 : vector<56x128xf32>
    %c127_i32_178 = arith.constant 127 : i32
    %860 = tpu.dynamic_rotate %834 by %c127_i32_178 dim 1 : vector<56x128xf32>, i32 -> vector<56x128xf32>
    %c180 = arith.constant 180 : index
    %861 = memref.load %arg3[%c180] : memref<225xf32, #tpu.memory_space<smem>>
    %862 = vector.broadcast %861 : f32 to vector<56x128xf32>
    %863 = arith.mulf %860, %862 : vector<56x128xf32>
    %864 = arith.addf %851, %863 : vector<56x128xf32>
    %c189 = arith.constant 189 : index
    %865 = memref.load %arg3[%c189] : memref<225xf32, #tpu.memory_space<smem>>
    %866 = vector.broadcast %865 : f32 to vector<56x128xf32>
    %867 = arith.mulf %860, %866 : vector<56x128xf32>
    %868 = arith.addf %855, %867 : vector<56x128xf32>
    %c198 = arith.constant 198 : index
    %869 = memref.load %arg3[%c198] : memref<225xf32, #tpu.memory_space<smem>>
    %870 = vector.broadcast %869 : f32 to vector<56x128xf32>
    %871 = arith.mulf %860, %870 : vector<56x128xf32>
    %872 = arith.addf %859, %871 : vector<56x128xf32>
    %cst_179 = arith.constant 3.000000e+00 : f32
    %873 = vector.broadcast %cst_179 : f32 to vector<56x128xf32>
    %874 = arith.addf %864, %873 : vector<56x128xf32>
    %cst_180 = arith.constant 0.000000e+00 : f32
    %cst_181 = arith.constant 6.000000e+00 : f32
    %875 = vector.broadcast %cst_180 : f32 to vector<56x128xf32>
    %876 = arith.maximumf %875, %874 : vector<56x128xf32>
    %877 = vector.broadcast %cst_181 : f32 to vector<56x128xf32>
    %878 = arith.minimumf %877, %876 : vector<56x128xf32>
    %879 = arith.mulf %864, %878 : vector<56x128xf32>
    %cst_182 = arith.constant 0.166666672 : f32
    %880 = vector.broadcast %cst_182 : f32 to vector<56x128xf32>
    %881 = arith.mulf %879, %880 : vector<56x128xf32>
    %c0_183 = arith.constant 0 : index
    %c0_184 = arith.constant 0 : index
    %c0_185 = arith.constant 0 : index
    %882 = vector.load %arg5[%c0_183, %c0_184, %c0_185] : memref<5x56x128xf32, #tpu.memory_space<vmem>>, vector<1x56x128xf32>
    %883 = vector.shape_cast %882 : vector<1x56x128xf32> to vector<56x128xf32>
    %884 = vector.shape_cast %881 : vector<56x128xf32> to vector<1x56x128xf32>
    tpu.vector_store %arg5[%c0_183, %c0_184, %c0_185], %884 {strides = array<i32>} : memref<5x56x128xf32, #tpu.memory_space<vmem>>, vector<1x56x128xf32>,
    %cst_186 = arith.constant 3.000000e+00 : f32
    %885 = vector.broadcast %cst_186 : f32 to vector<56x128xf32>
    %886 = arith.addf %868, %885 : vector<56x128xf32>
    %cst_187 = arith.constant 0.000000e+00 : f32
    %cst_188 = arith.constant 6.000000e+00 : f32
    %887 = vector.broadcast %cst_187 : f32 to vector<56x128xf32>
    %888 = arith.maximumf %887, %886 : vector<56x128xf32>
    %889 = vector.broadcast %cst_188 : f32 to vector<56x128xf32>
    %890 = arith.minimumf %889, %888 : vector<56x128xf32>
    %891 = arith.mulf %868, %890 : vector<56x128xf32>
    %cst_189 = arith.constant 0.166666672 : f32
    %892 = vector.broadcast %cst_189 : f32 to vector<56x128xf32>
    %893 = arith.mulf %891, %892 : vector<56x128xf32>
    %c1_190 = arith.constant 1 : index
    %c0_191 = arith.constant 0 : index
    %c0_192 = arith.constant 0 : index
    %894 = vector.load %arg5[%c1_190, %c0_191, %c0_192] : memref<5x56x128xf32, #tpu.memory_space<vmem>>, vector<1x56x128xf32>
    %895 = vector.shape_cast %894 : vector<1x56x128xf32> to vector<56x128xf32>
    %896 = vector.shape_cast %893 : vector<56x128xf32> to vector<1x56x128xf32>
    tpu.vector_store %arg5[%c1_190, %c0_191, %c0_192], %896 {strides = array<i32>} : memref<5x56x128xf32, #tpu.memory_space<vmem>>, vector<1x56x128xf32>,
    %cst_193 = arith.constant 3.000000e+00 : f32
    %897 = vector.broadcast %cst_193 : f32 to vector<56x128xf32>
    %898 = arith.addf %872, %897 : vector<56x128xf32>
    %cst_194 = arith.constant 0.000000e+00 : f32
    %cst_195 = arith.constant 6.000000e+00 : f32
    %899 = vector.broadcast %cst_194 : f32 to vector<56x128xf32>
    %900 = arith.maximumf %899, %898 : vector<56x128xf32>
    %901 = vector.broadcast %cst_195 : f32 to vector<56x128xf32>
    %902 = arith.minimumf %901, %900 : vector<56x128xf32>
    %903 = arith.mulf %872, %902 : vector<56x128xf32>
    %cst_196 = arith.constant 0.166666672 : f32
    %904 = vector.broadcast %cst_196 : f32 to vector<56x128xf32>
    %905 = arith.mulf %903, %904 : vector<56x128xf32>
    %c2_197 = arith.constant 2 : index
    %c0_198 = arith.constant 0 : index
    %c0_199 = arith.constant 0 : index
    %906 = vector.load %arg5[%c2_197, %c0_198, %c0_199] : memref<5x56x128xf32, #tpu.memory_space<vmem>>, vector<1x56x128xf32>
    %907 = vector.shape_cast %906 : vector<1x56x128xf32> to vector<56x128xf32>
    %908 = vector.shape_cast %905 : vector<56x128xf32> to vector<1x56x128xf32>
    tpu.vector_store %arg5[%c2_197, %c0_198, %c0_199], %908 {strides = array<i32>} : memref<5x56x128xf32, #tpu.memory_space<vmem>>, vector<1x56x128xf32>,
    %c3_200 = arith.constant 3 : index
    %909 = memref.load %arg4[%c3_200] : memref<5xf32, #tpu.memory_space<smem>>
    %910 = vector.broadcast %909 : f32 to vector<56x128xf32>
    %c4_201 = arith.constant 4 : index
    %911 = memref.load %arg4[%c4_201] : memref<5xf32, #tpu.memory_space<smem>>
    %912 = vector.broadcast %911 : f32 to vector<56x128xf32>
    %c0_202 = arith.constant 0 : index
    %c7_203 = arith.constant 7 : index
    %c0_204 = arith.constant 0 : index
    %913 = vector.load %arg6[%c0_202, %c7_203, %c0_204] : memref<5x72x128xf32, #tpu.memory_space<vmem>>, vector<1x56x128xf32>
    %914 = vector.shape_cast %913 : vector<1x56x128xf32> to vector<56x128xf32>
    %c1_i32_205 = arith.constant 1 : i32
    %915 = tpu.dynamic_rotate %914 by %c1_i32_205 dim 1 : vector<56x128xf32>, i32 -> vector<56x128xf32>
    %c35_206 = arith.constant 35 : index
    %916 = memref.load %arg3[%c35_206] : memref<225xf32, #tpu.memory_space<smem>>
    %917 = vector.broadcast %916 : f32 to vector<56x128xf32>
    %918 = arith.mulf %915, %917 : vector<56x128xf32>
    %919 = arith.addf %910, %918 : vector<56x128xf32>
    %c44_207 = arith.constant 44 : index
    %920 = memref.load %arg3[%c44_207] : memref<225xf32, #tpu.memory_space<smem>>
    %921 = vector.broadcast %920 : f32 to vector<56x128xf32>
    %922 = arith.mulf %915, %921 : vector<56x128xf32>
    %923 = arith.addf %912, %922 : vector<56x128xf32>
    %c34_208 = arith.constant 34 : index
    %924 = memref.load %arg3[%c34_208] : memref<225xf32, #tpu.memory_space<smem>>
    %925 = vector.broadcast %924 : f32 to vector<56x128xf32>
    %926 = arith.mulf %914, %925 : vector<56x128xf32>
    %927 = arith.addf %919, %926 : vector<56x128xf32>
    %c43_209 = arith.constant 43 : index
    %928 = memref.load %arg3[%c43_209] : memref<225xf32, #tpu.memory_space<smem>>
    %929 = vector.broadcast %928 : f32 to vector<56x128xf32>
    %930 = arith.mulf %914, %929 : vector<56x128xf32>
    %931 = arith.addf %923, %930 : vector<56x128xf32>
    %c127_i32_210 = arith.constant 127 : i32
    %932 = tpu.dynamic_rotate %914 by %c127_i32_210 dim 1 : vector<56x128xf32>, i32 -> vector<56x128xf32>
    %c33_211 = arith.constant 33 : index
    %933 = memref.load %arg3[%c33_211] : memref<225xf32, #tpu.memory_space<smem>>
    %934 = vector.broadcast %933 : f32 to vector<56x128xf32>
    %935 = arith.mulf %932, %934 : vector<56x128xf32>
    %936 = arith.addf %927, %935 : vector<56x128xf32>
    %c42_212 = arith.constant 42 : index
    %937 = memref.load %arg3[%c42_212] : memref<225xf32, #tpu.memory_space<smem>>
    %938 = vector.broadcast %937 : f32 to vector<56x128xf32>
    %939 = arith.mulf %932, %938 : vector<56x128xf32>
    %940 = arith.addf %931, %939 : vector<56x128xf32>
    %c0_213 = arith.constant 0 : index
    %c8_214 = arith.constant 8 : index
    %c0_215 = arith.constant 0 : index
    %941 = vector.load %arg6[%c0_213, %c8_214, %c0_215] : memref<5x72x128xf32, #tpu.memory_space<vmem>>, vector<1x56x128xf32>
    %942 = vector.shape_cast %941 : vector<1x56x128xf32> to vector<56x128xf32>
    %c1_i32_216 = arith.constant 1 : i32
    %943 = tpu.dynamic_rotate %942 by %c1_i32_216 dim 1 : vector<56x128xf32>, i32 -> vector<56x128xf32>
    %c32_217 = arith.constant 32 : index
    %944 = memref.load %arg3[%c32_217] : memref<225xf32, #tpu.memory_space<smem>>
    %945 = vector.broadcast %944 : f32 to vector<56x128xf32>
    %946 = arith.mulf %943, %945 : vector<56x128xf32>
    %947 = arith.addf %936, %946 : vector<56x128xf32>
    %c41_218 = arith.constant 41 : index
    %948 = memref.load %arg3[%c41_218] : memref<225xf32, #tpu.memory_space<smem>>
    %949 = vector.broadcast %948 : f32 to vector<56x128xf32>
    %950 = arith.mulf %943, %949 : vector<56x128xf32>
    %951 = arith.addf %940, %950 : vector<56x128xf32>
    %c31_219 = arith.constant 31 : index
    %952 = memref.load %arg3[%c31_219] : memref<225xf32, #tpu.memory_space<smem>>
    %953 = vector.broadcast %952 : f32 to vector<56x128xf32>
    %954 = arith.mulf %942, %953 : vector<56x128xf32>
    %955 = arith.addf %947, %954 : vector<56x128xf32>
    %c40_220 = arith.constant 40 : index
    %956 = memref.load %arg3[%c40_220] : memref<225xf32, #tpu.memory_space<smem>>
    %957 = vector.broadcast %956 : f32 to vector<56x128xf32>
    %958 = arith.mulf %942, %957 : vector<56x128xf32>
    %959 = arith.addf %951, %958 : vector<56x128xf32>
    %c127_i32_221 = arith.constant 127 : i32
    %960 = tpu.dynamic_rotate %942 by %c127_i32_221 dim 1 : vector<56x128xf32>, i32 -> vector<56x128xf32>
    %c30_222 = arith.constant 30 : index
    %961 = memref.load %arg3[%c30_222] : memref<225xf32, #tpu.memory_space<smem>>
    %962 = vector.broadcast %961 : f32 to vector<56x128xf32>
    %963 = arith.mulf %960, %962 : vector<56x128xf32>
    %964 = arith.addf %955, %963 : vector<56x128xf32>
    %c39_223 = arith.constant 39 : index
    %965 = memref.load %arg3[%c39_223] : memref<225xf32, #tpu.memory_space<smem>>
    %966 = vector.broadcast %965 : f32 to vector<56x128xf32>
    %967 = arith.mulf %960, %966 : vector<56x128xf32>
    %968 = arith.addf %959, %967 : vector<56x128xf32>
    %c0_224 = arith.constant 0 : index
    %c9_225 = arith.constant 9 : index
    %c0_226 = arith.constant 0 : index
    %969 = vector.load %arg6[%c0_224, %c9_225, %c0_226] : memref<5x72x128xf32, #tpu.memory_space<vmem>>, vector<1x56x128xf32>
    %970 = vector.shape_cast %969 : vector<1x56x128xf32> to vector<56x128xf32>
    %c1_i32_227 = arith.constant 1 : i32
    %971 = tpu.dynamic_rotate %970 by %c1_i32_227 dim 1 : vector<56x128xf32>, i32 -> vector<56x128xf32>
    %c29_228 = arith.constant 29 : index
    %972 = memref.load %arg3[%c29_228] : memref<225xf32, #tpu.memory_space<smem>>
    %973 = vector.broadcast %972 : f32 to vector<56x128xf32>
    %974 = arith.mulf %971, %973 : vector<56x128xf32>
    %975 = arith.addf %964, %974 : vector<56x128xf32>
    %c38_229 = arith.constant 38 : index
    %976 = memref.load %arg3[%c38_229] : memref<225xf32, #tpu.memory_space<smem>>
    %977 = vector.broadcast %976 : f32 to vector<56x128xf32>
    %978 = arith.mulf %971, %977 : vector<56x128xf32>
    %979 = arith.addf %968, %978 : vector<56x128xf32>
    %c28_230 = arith.constant 28 : index
    %980 = memref.load %arg3[%c28_230] : memref<225xf32, #tpu.memory_space<smem>>
    %981 = vector.broadcast %980 : f32 to vector<56x128xf32>
    %982 = arith.mulf %970, %981 : vector<56x128xf32>
    %983 = arith.addf %975, %982 : vector<56x128xf32>
    %c37_231 = arith.constant 37 : index
    %984 = memref.load %arg3[%c37_231] : memref<225xf32, #tpu.memory_space<smem>>
    %985 = vector.broadcast %984 : f32 to vector<56x128xf32>
    %986 = arith.mulf %970, %985 : vector<56x128xf32>
    %987 = arith.addf %979, %986 : vector<56x128xf32>
    %c127_i32_232 = arith.constant 127 : i32
    %988 = tpu.dynamic_rotate %970 by %c127_i32_232 dim 1 : vector<56x128xf32>, i32 -> vector<56x128xf32>
    %c27_233 = arith.constant 27 : index
    %989 = memref.load %arg3[%c27_233] : memref<225xf32, #tpu.memory_space<smem>>
    %990 = vector.broadcast %989 : f32 to vector<56x128xf32>
    %991 = arith.mulf %988, %990 : vector<56x128xf32>
    %992 = arith.addf %983, %991 : vector<56x128xf32>
    %c36_234 = arith.constant 36 : index
    %993 = memref.load %arg3[%c36_234] : memref<225xf32, #tpu.memory_space<smem>>
    %994 = vector.broadcast %993 : f32 to vector<56x128xf32>
    %995 = arith.mulf %988, %994 : vector<56x128xf32>
    %996 = arith.addf %987, %995 : vector<56x128xf32>
    %c1_235 = arith.constant 1 : index
    %c7_236 = arith.constant 7 : index
    %c0_237 = arith.constant 0 : index
    %997 = vector.load %arg6[%c1_235, %c7_236, %c0_237] : memref<5x72x128xf32, #tpu.memory_space<vmem>>, vector<1x56x128xf32>
    %998 = vector.shape_cast %997 : vector<1x56x128xf32> to vector<56x128xf32>
    %c1_i32_238 = arith.constant 1 : i32
    %999 = tpu.dynamic_rotate %998 by %c1_i32_238 dim 1 : vector<56x128xf32>, i32 -> vector<56x128xf32>
    %c80 = arith.constant 80 : index
    %1000 = memref.load %arg3[%c80] : memref<225xf32, #tpu.memory_space<smem>>
    %1001 = vector.broadcast %1000 : f32 to vector<56x128xf32>
    %1002 = arith.mulf %999, %1001 : vector<56x128xf32>
    %1003 = arith.addf %992, %1002 : vector<56x128xf32>
    %c89 = arith.constant 89 : index
    %1004 = memref.load %arg3[%c89] : memref<225xf32, #tpu.memory_space<smem>>
    %1005 = vector.broadcast %1004 : f32 to vector<56x128xf32>
    %1006 = arith.mulf %999, %1005 : vector<56x128xf32>
    %1007 = arith.addf %996, %1006 : vector<56x128xf32>
    %c79 = arith.constant 79 : index
    %1008 = memref.load %arg3[%c79] : memref<225xf32, #tpu.memory_space<smem>>
    %1009 = vector.broadcast %1008 : f32 to vector<56x128xf32>
    %1010 = arith.mulf %998, %1009 : vector<56x128xf32>
    %1011 = arith.addf %1003, %1010 : vector<56x128xf32>
    %c88 = arith.constant 88 : index
    %1012 = memref.load %arg3[%c88] : memref<225xf32, #tpu.memory_space<smem>>
    %1013 = vector.broadcast %1012 : f32 to vector<56x128xf32>
    %1014 = arith.mulf %998, %1013 : vector<56x128xf32>
    %1015 = arith.addf %1007, %1014 : vector<56x128xf32>
    %c127_i32_239 = arith.constant 127 : i32
    %1016 = tpu.dynamic_rotate %998 by %c127_i32_239 dim 1 : vector<56x128xf32>, i32 -> vector<56x128xf32>
    %c78 = arith.constant 78 : index
    %1017 = memref.load %arg3[%c78] : memref<225xf32, #tpu.memory_space<smem>>
    %1018 = vector.broadcast %1017 : f32 to vector<56x128xf32>
    %1019 = arith.mulf %1016, %1018 : vector<56x128xf32>
    %1020 = arith.addf %1011, %1019 : vector<56x128xf32>
    %c87 = arith.constant 87 : index
    %1021 = memref.load %arg3[%c87] : memref<225xf32, #tpu.memory_space<smem>>
    %1022 = vector.broadcast %1021 : f32 to vector<56x128xf32>
    %1023 = arith.mulf %1016, %1022 : vector<56x128xf32>
    %1024 = arith.addf %1015, %1023 : vector<56x128xf32>
    %c1_240 = arith.constant 1 : index
    %c8_241 = arith.constant 8 : index
    %c0_242 = arith.constant 0 : index
    %1025 = vector.load %arg6[%c1_240, %c8_241, %c0_242] : memref<5x72x128xf32, #tpu.memory_space<vmem>>, vector<1x56x128xf32>
    %1026 = vector.shape_cast %1025 : vector<1x56x128xf32> to vector<56x128xf32>
    %c1_i32_243 = arith.constant 1 : i32
    %1027 = tpu.dynamic_rotate %1026 by %c1_i32_243 dim 1 : vector<56x128xf32>, i32 -> vector<56x128xf32>
    %c77 = arith.constant 77 : index
    %1028 = memref.load %arg3[%c77] : memref<225xf32, #tpu.memory_space<smem>>
    %1029 = vector.broadcast %1028 : f32 to vector<56x128xf32>
    %1030 = arith.mulf %1027, %1029 : vector<56x128xf32>
    %1031 = arith.addf %1020, %1030 : vector<56x128xf32>
    %c86 = arith.constant 86 : index
    %1032 = memref.load %arg3[%c86] : memref<225xf32, #tpu.memory_space<smem>>
    %1033 = vector.broadcast %1032 : f32 to vector<56x128xf32>
    %1034 = arith.mulf %1027, %1033 : vector<56x128xf32>
    %1035 = arith.addf %1024, %1034 : vector<56x128xf32>
    %c76 = arith.constant 76 : index
    %1036 = memref.load %arg3[%c76] : memref<225xf32, #tpu.memory_space<smem>>
    %1037 = vector.broadcast %1036 : f32 to vector<56x128xf32>
    %1038 = arith.mulf %1026, %1037 : vector<56x128xf32>
    %1039 = arith.addf %1031, %1038 : vector<56x128xf32>
    %c85 = arith.constant 85 : index
    %1040 = memref.load %arg3[%c85] : memref<225xf32, #tpu.memory_space<smem>>
    %1041 = vector.broadcast %1040 : f32 to vector<56x128xf32>
    %1042 = arith.mulf %1026, %1041 : vector<56x128xf32>
    %1043 = arith.addf %1035, %1042 : vector<56x128xf32>
    %c127_i32_244 = arith.constant 127 : i32
    %1044 = tpu.dynamic_rotate %1026 by %c127_i32_244 dim 1 : vector<56x128xf32>, i32 -> vector<56x128xf32>
    %c75 = arith.constant 75 : index
    %1045 = memref.load %arg3[%c75] : memref<225xf32, #tpu.memory_space<smem>>
    %1046 = vector.broadcast %1045 : f32 to vector<56x128xf32>
    %1047 = arith.mulf %1044, %1046 : vector<56x128xf32>
    %1048 = arith.addf %1039, %1047 : vector<56x128xf32>
    %c84 = arith.constant 84 : index
    %1049 = memref.load %arg3[%c84] : memref<225xf32, #tpu.memory_space<smem>>
    %1050 = vector.broadcast %1049 : f32 to vector<56x128xf32>
    %1051 = arith.mulf %1044, %1050 : vector<56x128xf32>
    %1052 = arith.addf %1043, %1051 : vector<56x128xf32>
    %c1_245 = arith.constant 1 : index
    %c9_246 = arith.constant 9 : index
    %c0_247 = arith.constant 0 : index
    %1053 = vector.load %arg6[%c1_245, %c9_246, %c0_247] : memref<5x72x128xf32, #tpu.memory_space<vmem>>, vector<1x56x128xf32>
    %1054 = vector.shape_cast %1053 : vector<1x56x128xf32> to vector<56x128xf32>
    %c1_i32_248 = arith.constant 1 : i32
    %1055 = tpu.dynamic_rotate %1054 by %c1_i32_248 dim 1 : vector<56x128xf32>, i32 -> vector<56x128xf32>
    %c74 = arith.constant 74 : index
    %1056 = memref.load %arg3[%c74] : memref<225xf32, #tpu.memory_space<smem>>
    %1057 = vector.broadcast %1056 : f32 to vector<56x128xf32>
    %1058 = arith.mulf %1055, %1057 : vector<56x128xf32>
    %1059 = arith.addf %1048, %1058 : vector<56x128xf32>
    %c83 = arith.constant 83 : index
    %1060 = memref.load %arg3[%c83] : memref<225xf32, #tpu.memory_space<smem>>
    %1061 = vector.broadcast %1060 : f32 to vector<56x128xf32>
    %1062 = arith.mulf %1055, %1061 : vector<56x128xf32>
    %1063 = arith.addf %1052, %1062 : vector<56x128xf32>
    %c73 = arith.constant 73 : index
    %1064 = memref.load %arg3[%c73] : memref<225xf32, #tpu.memory_space<smem>>
    %1065 = vector.broadcast %1064 : f32 to vector<56x128xf32>
    %1066 = arith.mulf %1054, %1065 : vector<56x128xf32>
    %1067 = arith.addf %1059, %1066 : vector<56x128xf32>
    %c82 = arith.constant 82 : index
    %1068 = memref.load %arg3[%c82] : memref<225xf32, #tpu.memory_space<smem>>
    %1069 = vector.broadcast %1068 : f32 to vector<56x128xf32>
    %1070 = arith.mulf %1054, %1069 : vector<56x128xf32>
    %1071 = arith.addf %1063, %1070 : vector<56x128xf32>
    %c127_i32_249 = arith.constant 127 : i32
    %1072 = tpu.dynamic_rotate %1054 by %c127_i32_249 dim 1 : vector<56x128xf32>, i32 -> vector<56x128xf32>
    %c72 = arith.constant 72 : index
    %1073 = memref.load %arg3[%c72] : memref<225xf32, #tpu.memory_space<smem>>
    %1074 = vector.broadcast %1073 : f32 to vector<56x128xf32>
    %1075 = arith.mulf %1072, %1074 : vector<56x128xf32>
    %1076 = arith.addf %1067, %1075 : vector<56x128xf32>
    %c81 = arith.constant 81 : index
    %1077 = memref.load %arg3[%c81] : memref<225xf32, #tpu.memory_space<smem>>
    %1078 = vector.broadcast %1077 : f32 to vector<56x128xf32>
    %1079 = arith.mulf %1072, %1078 : vector<56x128xf32>
    %1080 = arith.addf %1071, %1079 : vector<56x128xf32>
    %c2_250 = arith.constant 2 : index
    %c7_251 = arith.constant 7 : index
    %c0_252 = arith.constant 0 : index
    %1081 = vector.load %arg6[%c2_250, %c7_251, %c0_252] : memref<5x72x128xf32, #tpu.memory_space<vmem>>, vector<1x56x128xf32>
    %1082 = vector.shape_cast %1081 : vector<1x56x128xf32> to vector<56x128xf32>
    %c1_i32_253 = arith.constant 1 : i32
    %1083 = tpu.dynamic_rotate %1082 by %c1_i32_253 dim 1 : vector<56x128xf32>, i32 -> vector<56x128xf32>
    %c125 = arith.constant 125 : index
    %1084 = memref.load %arg3[%c125] : memref<225xf32, #tpu.memory_space<smem>>
    %1085 = vector.broadcast %1084 : f32 to vector<56x128xf32>
    %1086 = arith.mulf %1083, %1085 : vector<56x128xf32>
    %1087 = arith.addf %1076, %1086 : vector<56x128xf32>
    %c134 = arith.constant 134 : index
    %1088 = memref.load %arg3[%c134] : memref<225xf32, #tpu.memory_space<smem>>
    %1089 = vector.broadcast %1088 : f32 to vector<56x128xf32>
    %1090 = arith.mulf %1083, %1089 : vector<56x128xf32>
    %1091 = arith.addf %1080, %1090 : vector<56x128xf32>
    %c124 = arith.constant 124 : index
    %1092 = memref.load %arg3[%c124] : memref<225xf32, #tpu.memory_space<smem>>
    %1093 = vector.broadcast %1092 : f32 to vector<56x128xf32>
    %1094 = arith.mulf %1082, %1093 : vector<56x128xf32>
    %1095 = arith.addf %1087, %1094 : vector<56x128xf32>
    %c133 = arith.constant 133 : index
    %1096 = memref.load %arg3[%c133] : memref<225xf32, #tpu.memory_space<smem>>
    %1097 = vector.broadcast %1096 : f32 to vector<56x128xf32>
    %1098 = arith.mulf %1082, %1097 : vector<56x128xf32>
    %1099 = arith.addf %1091, %1098 : vector<56x128xf32>
    %c127_i32_254 = arith.constant 127 : i32
    %1100 = tpu.dynamic_rotate %1082 by %c127_i32_254 dim 1 : vector<56x128xf32>, i32 -> vector<56x128xf32>
    %c123 = arith.constant 123 : index
    %1101 = memref.load %arg3[%c123] : memref<225xf32, #tpu.memory_space<smem>>
    %1102 = vector.broadcast %1101 : f32 to vector<56x128xf32>
    %1103 = arith.mulf %1100, %1102 : vector<56x128xf32>
    %1104 = arith.addf %1095, %1103 : vector<56x128xf32>
    %c132 = arith.constant 132 : index
    %1105 = memref.load %arg3[%c132] : memref<225xf32, #tpu.memory_space<smem>>
    %1106 = vector.broadcast %1105 : f32 to vector<56x128xf32>
    %1107 = arith.mulf %1100, %1106 : vector<56x128xf32>
    %1108 = arith.addf %1099, %1107 : vector<56x128xf32>
    %c2_255 = arith.constant 2 : index
    %c8_256 = arith.constant 8 : index
    %c0_257 = arith.constant 0 : index
    %1109 = vector.load %arg6[%c2_255, %c8_256, %c0_257] : memref<5x72x128xf32, #tpu.memory_space<vmem>>, vector<1x56x128xf32>
    %1110 = vector.shape_cast %1109 : vector<1x56x128xf32> to vector<56x128xf32>
    %c1_i32_258 = arith.constant 1 : i32
    %1111 = tpu.dynamic_rotate %1110 by %c1_i32_258 dim 1 : vector<56x128xf32>, i32 -> vector<56x128xf32>
    %c122 = arith.constant 122 : index
    %1112 = memref.load %arg3[%c122] : memref<225xf32, #tpu.memory_space<smem>>
    %1113 = vector.broadcast %1112 : f32 to vector<56x128xf32>
    %1114 = arith.mulf %1111, %1113 : vector<56x128xf32>
    %1115 = arith.addf %1104, %1114 : vector<56x128xf32>
    %c131 = arith.constant 131 : index
    %1116 = memref.load %arg3[%c131] : memref<225xf32, #tpu.memory_space<smem>>
    %1117 = vector.broadcast %1116 : f32 to vector<56x128xf32>
    %1118 = arith.mulf %1111, %1117 : vector<56x128xf32>
    %1119 = arith.addf %1108, %1118 : vector<56x128xf32>
    %c121 = arith.constant 121 : index
    %1120 = memref.load %arg3[%c121] : memref<225xf32, #tpu.memory_space<smem>>
    %1121 = vector.broadcast %1120 : f32 to vector<56x128xf32>
    %1122 = arith.mulf %1110, %1121 : vector<56x128xf32>
    %1123 = arith.addf %1115, %1122 : vector<56x128xf32>
    %c130 = arith.constant 130 : index
    %1124 = memref.load %arg3[%c130] : memref<225xf32, #tpu.memory_space<smem>>
    %1125 = vector.broadcast %1124 : f32 to vector<56x128xf32>
    %1126 = arith.mulf %1110, %1125 : vector<56x128xf32>
    %1127 = arith.addf %1119, %1126 : vector<56x128xf32>
    %c127_i32_259 = arith.constant 127 : i32
    %1128 = tpu.dynamic_rotate %1110 by %c127_i32_259 dim 1 : vector<56x128xf32>, i32 -> vector<56x128xf32>
    %c120 = arith.constant 120 : index
    %1129 = memref.load %arg3[%c120] : memref<225xf32, #tpu.memory_space<smem>>
    %1130 = vector.broadcast %1129 : f32 to vector<56x128xf32>
    %1131 = arith.mulf %1128, %1130 : vector<56x128xf32>
    %1132 = arith.addf %1123, %1131 : vector<56x128xf32>
    %c129 = arith.constant 129 : index
    %1133 = memref.load %arg3[%c129] : memref<225xf32, #tpu.memory_space<smem>>
    %1134 = vector.broadcast %1133 : f32 to vector<56x128xf32>
    %1135 = arith.mulf %1128, %1134 : vector<56x128xf32>
    %1136 = arith.addf %1127, %1135 : vector<56x128xf32>
    %c2_260 = arith.constant 2 : index
    %c9_261 = arith.constant 9 : index
    %c0_262 = arith.constant 0 : index
    %1137 = vector.load %arg6[%c2_260, %c9_261, %c0_262] : memref<5x72x128xf32, #tpu.memory_space<vmem>>, vector<1x56x128xf32>
    %1138 = vector.shape_cast %1137 : vector<1x56x128xf32> to vector<56x128xf32>
    %c1_i32_263 = arith.constant 1 : i32
    %1139 = tpu.dynamic_rotate %1138 by %c1_i32_263 dim 1 : vector<56x128xf32>, i32 -> vector<56x128xf32>
    %c119 = arith.constant 119 : index
    %1140 = memref.load %arg3[%c119] : memref<225xf32, #tpu.memory_space<smem>>
    %1141 = vector.broadcast %1140 : f32 to vector<56x128xf32>
    %1142 = arith.mulf %1139, %1141 : vector<56x128xf32>
    %1143 = arith.addf %1132, %1142 : vector<56x128xf32>
    %c128 = arith.constant 128 : index
    %1144 = memref.load %arg3[%c128] : memref<225xf32, #tpu.memory_space<smem>>
    %1145 = vector.broadcast %1144 : f32 to vector<56x128xf32>
    %1146 = arith.mulf %1139, %1145 : vector<56x128xf32>
    %1147 = arith.addf %1136, %1146 : vector<56x128xf32>
    %c118 = arith.constant 118 : index
    %1148 = memref.load %arg3[%c118] : memref<225xf32, #tpu.memory_space<smem>>
    %1149 = vector.broadcast %1148 : f32 to vector<56x128xf32>
    %1150 = arith.mulf %1138, %1149 : vector<56x128xf32>
    %1151 = arith.addf %1143, %1150 : vector<56x128xf32>
    %c127 = arith.constant 127 : index
    %1152 = memref.load %arg3[%c127] : memref<225xf32, #tpu.memory_space<smem>>
    %1153 = vector.broadcast %1152 : f32 to vector<56x128xf32>
    %1154 = arith.mulf %1138, %1153 : vector<56x128xf32>
    %1155 = arith.addf %1147, %1154 : vector<56x128xf32>
    %c127_i32_264 = arith.constant 127 : i32
    %1156 = tpu.dynamic_rotate %1138 by %c127_i32_264 dim 1 : vector<56x128xf32>, i32 -> vector<56x128xf32>
    %c117 = arith.constant 117 : index
    %1157 = memref.load %arg3[%c117] : memref<225xf32, #tpu.memory_space<smem>>
    %1158 = vector.broadcast %1157 : f32 to vector<56x128xf32>
    %1159 = arith.mulf %1156, %1158 : vector<56x128xf32>
    %1160 = arith.addf %1151, %1159 : vector<56x128xf32>
    %c126 = arith.constant 126 : index
    %1161 = memref.load %arg3[%c126] : memref<225xf32, #tpu.memory_space<smem>>
    %1162 = vector.broadcast %1161 : f32 to vector<56x128xf32>
    %1163 = arith.mulf %1156, %1162 : vector<56x128xf32>
    %1164 = arith.addf %1155, %1163 : vector<56x128xf32>
    %c3_265 = arith.constant 3 : index
    %c7_266 = arith.constant 7 : index
    %c0_267 = arith.constant 0 : index
    %1165 = vector.load %arg6[%c3_265, %c7_266, %c0_267] : memref<5x72x128xf32, #tpu.memory_space<vmem>>, vector<1x56x128xf32>
    %1166 = vector.shape_cast %1165 : vector<1x56x128xf32> to vector<56x128xf32>
    %c1_i32_268 = arith.constant 1 : i32
    %1167 = tpu.dynamic_rotate %1166 by %c1_i32_268 dim 1 : vector<56x128xf32>, i32 -> vector<56x128xf32>
    %c170 = arith.constant 170 : index
    %1168 = memref.load %arg3[%c170] : memref<225xf32, #tpu.memory_space<smem>>
    %1169 = vector.broadcast %1168 : f32 to vector<56x128xf32>
    %1170 = arith.mulf %1167, %1169 : vector<56x128xf32>
    %1171 = arith.addf %1160, %1170 : vector<56x128xf32>
    %c179 = arith.constant 179 : index
    %1172 = memref.load %arg3[%c179] : memref<225xf32, #tpu.memory_space<smem>>
    %1173 = vector.broadcast %1172 : f32 to vector<56x128xf32>
    %1174 = arith.mulf %1167, %1173 : vector<56x128xf32>
    %1175 = arith.addf %1164, %1174 : vector<56x128xf32>
    %c169 = arith.constant 169 : index
    %1176 = memref.load %arg3[%c169] : memref<225xf32, #tpu.memory_space<smem>>
    %1177 = vector.broadcast %1176 : f32 to vector<56x128xf32>
    %1178 = arith.mulf %1166, %1177 : vector<56x128xf32>
    %1179 = arith.addf %1171, %1178 : vector<56x128xf32>
    %c178 = arith.constant 178 : index
    %1180 = memref.load %arg3[%c178] : memref<225xf32, #tpu.memory_space<smem>>
    %1181 = vector.broadcast %1180 : f32 to vector<56x128xf32>
    %1182 = arith.mulf %1166, %1181 : vector<56x128xf32>
    %1183 = arith.addf %1175, %1182 : vector<56x128xf32>
    %c127_i32_269 = arith.constant 127 : i32
    %1184 = tpu.dynamic_rotate %1166 by %c127_i32_269 dim 1 : vector<56x128xf32>, i32 -> vector<56x128xf32>
    %c168 = arith.constant 168 : index
    %1185 = memref.load %arg3[%c168] : memref<225xf32, #tpu.memory_space<smem>>
    %1186 = vector.broadcast %1185 : f32 to vector<56x128xf32>
    %1187 = arith.mulf %1184, %1186 : vector<56x128xf32>
    %1188 = arith.addf %1179, %1187 : vector<56x128xf32>
    %c177 = arith.constant 177 : index
    %1189 = memref.load %arg3[%c177] : memref<225xf32, #tpu.memory_space<smem>>
    %1190 = vector.broadcast %1189 : f32 to vector<56x128xf32>
    %1191 = arith.mulf %1184, %1190 : vector<56x128xf32>
    %1192 = arith.addf %1183, %1191 : vector<56x128xf32>
    %c3_270 = arith.constant 3 : index
    %c8_271 = arith.constant 8 : index
    %c0_272 = arith.constant 0 : index
    %1193 = vector.load %arg6[%c3_270, %c8_271, %c0_272] : memref<5x72x128xf32, #tpu.memory_space<vmem>>, vector<1x56x128xf32>
    %1194 = vector.shape_cast %1193 : vector<1x56x128xf32> to vector<56x128xf32>
    %c1_i32_273 = arith.constant 1 : i32
    %1195 = tpu.dynamic_rotate %1194 by %c1_i32_273 dim 1 : vector<56x128xf32>, i32 -> vector<56x128xf32>
    %c167 = arith.constant 167 : index
    %1196 = memref.load %arg3[%c167] : memref<225xf32, #tpu.memory_space<smem>>
    %1197 = vector.broadcast %1196 : f32 to vector<56x128xf32>
    %1198 = arith.mulf %1195, %1197 : vector<56x128xf32>
    %1199 = arith.addf %1188, %1198 : vector<56x128xf32>
    %c176 = arith.constant 176 : index
    %1200 = memref.load %arg3[%c176] : memref<225xf32, #tpu.memory_space<smem>>
    %1201 = vector.broadcast %1200 : f32 to vector<56x128xf32>
    %1202 = arith.mulf %1195, %1201 : vector<56x128xf32>
    %1203 = arith.addf %1192, %1202 : vector<56x128xf32>
    %c166 = arith.constant 166 : index
    %1204 = memref.load %arg3[%c166] : memref<225xf32, #tpu.memory_space<smem>>
    %1205 = vector.broadcast %1204 : f32 to vector<56x128xf32>
    %1206 = arith.mulf %1194, %1205 : vector<56x128xf32>
    %1207 = arith.addf %1199, %1206 : vector<56x128xf32>
    %c175 = arith.constant 175 : index
    %1208 = memref.load %arg3[%c175] : memref<225xf32, #tpu.memory_space<smem>>
    %1209 = vector.broadcast %1208 : f32 to vector<56x128xf32>
    %1210 = arith.mulf %1194, %1209 : vector<56x128xf32>
    %1211 = arith.addf %1203, %1210 : vector<56x128xf32>
    %c127_i32_274 = arith.constant 127 : i32
    %1212 = tpu.dynamic_rotate %1194 by %c127_i32_274 dim 1 : vector<56x128xf32>, i32 -> vector<56x128xf32>
    %c165 = arith.constant 165 : index
    %1213 = memref.load %arg3[%c165] : memref<225xf32, #tpu.memory_space<smem>>
    %1214 = vector.broadcast %1213 : f32 to vector<56x128xf32>
    %1215 = arith.mulf %1212, %1214 : vector<56x128xf32>
    %1216 = arith.addf %1207, %1215 : vector<56x128xf32>
    %c174 = arith.constant 174 : index
    %1217 = memref.load %arg3[%c174] : memref<225xf32, #tpu.memory_space<smem>>
    %1218 = vector.broadcast %1217 : f32 to vector<56x128xf32>
    %1219 = arith.mulf %1212, %1218 : vector<56x128xf32>
    %1220 = arith.addf %1211, %1219 : vector<56x128xf32>
    %c3_275 = arith.constant 3 : index
    %c9_276 = arith.constant 9 : index
    %c0_277 = arith.constant 0 : index
    %1221 = vector.load %arg6[%c3_275, %c9_276, %c0_277] : memref<5x72x128xf32, #tpu.memory_space<vmem>>, vector<1x56x128xf32>
    %1222 = vector.shape_cast %1221 : vector<1x56x128xf32> to vector<56x128xf32>
    %c1_i32_278 = arith.constant 1 : i32
    %1223 = tpu.dynamic_rotate %1222 by %c1_i32_278 dim 1 : vector<56x128xf32>, i32 -> vector<56x128xf32>
    %c164 = arith.constant 164 : index
    %1224 = memref.load %arg3[%c164] : memref<225xf32, #tpu.memory_space<smem>>
    %1225 = vector.broadcast %1224 : f32 to vector<56x128xf32>
    %1226 = arith.mulf %1223, %1225 : vector<56x128xf32>
    %1227 = arith.addf %1216, %1226 : vector<56x128xf32>
    %c173 = arith.constant 173 : index
    %1228 = memref.load %arg3[%c173] : memref<225xf32, #tpu.memory_space<smem>>
    %1229 = vector.broadcast %1228 : f32 to vector<56x128xf32>
    %1230 = arith.mulf %1223, %1229 : vector<56x128xf32>
    %1231 = arith.addf %1220, %1230 : vector<56x128xf32>
    %c163 = arith.constant 163 : index
    %1232 = memref.load %arg3[%c163] : memref<225xf32, #tpu.memory_space<smem>>
    %1233 = vector.broadcast %1232 : f32 to vector<56x128xf32>
    %1234 = arith.mulf %1222, %1233 : vector<56x128xf32>
    %1235 = arith.addf %1227, %1234 : vector<56x128xf32>
    %c172 = arith.constant 172 : index
    %1236 = memref.load %arg3[%c172] : memref<225xf32, #tpu.memory_space<smem>>
    %1237 = vector.broadcast %1236 : f32 to vector<56x128xf32>
    %1238 = arith.mulf %1222, %1237 : vector<56x128xf32>
    %1239 = arith.addf %1231, %1238 : vector<56x128xf32>
    %c127_i32_279 = arith.constant 127 : i32
    %1240 = tpu.dynamic_rotate %1222 by %c127_i32_279 dim 1 : vector<56x128xf32>, i32 -> vector<56x128xf32>
    %c162 = arith.constant 162 : index
    %1241 = memref.load %arg3[%c162] : memref<225xf32, #tpu.memory_space<smem>>
    %1242 = vector.broadcast %1241 : f32 to vector<56x128xf32>
    %1243 = arith.mulf %1240, %1242 : vector<56x128xf32>
    %1244 = arith.addf %1235, %1243 : vector<56x128xf32>
    %c171 = arith.constant 171 : index
    %1245 = memref.load %arg3[%c171] : memref<225xf32, #tpu.memory_space<smem>>
    %1246 = vector.broadcast %1245 : f32 to vector<56x128xf32>
    %1247 = arith.mulf %1240, %1246 : vector<56x128xf32>
    %1248 = arith.addf %1239, %1247 : vector<56x128xf32>
    %c4_280 = arith.constant 4 : index
    %c7_281 = arith.constant 7 : index
    %c0_282 = arith.constant 0 : index
    %1249 = vector.load %arg6[%c4_280, %c7_281, %c0_282] : memref<5x72x128xf32, #tpu.memory_space<vmem>>, vector<1x56x128xf32>
    %1250 = vector.shape_cast %1249 : vector<1x56x128xf32> to vector<56x128xf32>
    %c1_i32_283 = arith.constant 1 : i32
    %1251 = tpu.dynamic_rotate %1250 by %c1_i32_283 dim 1 : vector<56x128xf32>, i32 -> vector<56x128xf32>
    %c215 = arith.constant 215 : index
    %1252 = memref.load %arg3[%c215] : memref<225xf32, #tpu.memory_space<smem>>
    %1253 = vector.broadcast %1252 : f32 to vector<56x128xf32>
    %1254 = arith.mulf %1251, %1253 : vector<56x128xf32>
    %1255 = arith.addf %1244, %1254 : vector<56x128xf32>
    %c224 = arith.constant 224 : index
    %1256 = memref.load %arg3[%c224] : memref<225xf32, #tpu.memory_space<smem>>
    %1257 = vector.broadcast %1256 : f32 to vector<56x128xf32>
    %1258 = arith.mulf %1251, %1257 : vector<56x128xf32>
    %1259 = arith.addf %1248, %1258 : vector<56x128xf32>
    %c214 = arith.constant 214 : index
    %1260 = memref.load %arg3[%c214] : memref<225xf32, #tpu.memory_space<smem>>
    %1261 = vector.broadcast %1260 : f32 to vector<56x128xf32>
    %1262 = arith.mulf %1250, %1261 : vector<56x128xf32>
    %1263 = arith.addf %1255, %1262 : vector<56x128xf32>
    %c223 = arith.constant 223 : index
    %1264 = memref.load %arg3[%c223] : memref<225xf32, #tpu.memory_space<smem>>
    %1265 = vector.broadcast %1264 : f32 to vector<56x128xf32>
    %1266 = arith.mulf %1250, %1265 : vector<56x128xf32>
    %1267 = arith.addf %1259, %1266 : vector<56x128xf32>
    %c127_i32_284 = arith.constant 127 : i32
    %1268 = tpu.dynamic_rotate %1250 by %c127_i32_284 dim 1 : vector<56x128xf32>, i32 -> vector<56x128xf32>
    %c213 = arith.constant 213 : index
    %1269 = memref.load %arg3[%c213] : memref<225xf32, #tpu.memory_space<smem>>
    %1270 = vector.broadcast %1269 : f32 to vector<56x128xf32>
    %1271 = arith.mulf %1268, %1270 : vector<56x128xf32>
    %1272 = arith.addf %1263, %1271 : vector<56x128xf32>
    %c222 = arith.constant 222 : index
    %1273 = memref.load %arg3[%c222] : memref<225xf32, #tpu.memory_space<smem>>
    %1274 = vector.broadcast %1273 : f32 to vector<56x128xf32>
    %1275 = arith.mulf %1268, %1274 : vector<56x128xf32>
    %1276 = arith.addf %1267, %1275 : vector<56x128xf32>
    %c4_285 = arith.constant 4 : index
    %c8_286 = arith.constant 8 : index
    %c0_287 = arith.constant 0 : index
    %1277 = vector.load %arg6[%c4_285, %c8_286, %c0_287] : memref<5x72x128xf32, #tpu.memory_space<vmem>>, vector<1x56x128xf32>
    %1278 = vector.shape_cast %1277 : vector<1x56x128xf32> to vector<56x128xf32>
    %c1_i32_288 = arith.constant 1 : i32
    %1279 = tpu.dynamic_rotate %1278 by %c1_i32_288 dim 1 : vector<56x128xf32>, i32 -> vector<56x128xf32>
    %c212 = arith.constant 212 : index
    %1280 = memref.load %arg3[%c212] : memref<225xf32, #tpu.memory_space<smem>>
    %1281 = vector.broadcast %1280 : f32 to vector<56x128xf32>
    %1282 = arith.mulf %1279, %1281 : vector<56x128xf32>
    %1283 = arith.addf %1272, %1282 : vector<56x128xf32>
    %c221 = arith.constant 221 : index
    %1284 = memref.load %arg3[%c221] : memref<225xf32, #tpu.memory_space<smem>>
    %1285 = vector.broadcast %1284 : f32 to vector<56x128xf32>
    %1286 = arith.mulf %1279, %1285 : vector<56x128xf32>
    %1287 = arith.addf %1276, %1286 : vector<56x128xf32>
    %c211 = arith.constant 211 : index
    %1288 = memref.load %arg3[%c211] : memref<225xf32, #tpu.memory_space<smem>>
    %1289 = vector.broadcast %1288 : f32 to vector<56x128xf32>
    %1290 = arith.mulf %1278, %1289 : vector<56x128xf32>
    %1291 = arith.addf %1283, %1290 : vector<56x128xf32>
    %c220 = arith.constant 220 : index
    %1292 = memref.load %arg3[%c220] : memref<225xf32, #tpu.memory_space<smem>>
    %1293 = vector.broadcast %1292 : f32 to vector<56x128xf32>
    %1294 = arith.mulf %1278, %1293 : vector<56x128xf32>
    %1295 = arith.addf %1287, %1294 : vector<56x128xf32>
    %c127_i32_289 = arith.constant 127 : i32
    %1296 = tpu.dynamic_rotate %1278 by %c127_i32_289 dim 1 : vector<56x128xf32>, i32 -> vector<56x128xf32>
    %c210 = arith.constant 210 : index
    %1297 = memref.load %arg3[%c210] : memref<225xf32, #tpu.memory_space<smem>>
    %1298 = vector.broadcast %1297 : f32 to vector<56x128xf32>
    %1299 = arith.mulf %1296, %1298 : vector<56x128xf32>
    %1300 = arith.addf %1291, %1299 : vector<56x128xf32>
    %c219 = arith.constant 219 : index
    %1301 = memref.load %arg3[%c219] : memref<225xf32, #tpu.memory_space<smem>>
    %1302 = vector.broadcast %1301 : f32 to vector<56x128xf32>
    %1303 = arith.mulf %1296, %1302 : vector<56x128xf32>
    %1304 = arith.addf %1295, %1303 : vector<56x128xf32>
    %c4_290 = arith.constant 4 : index
    %c9_291 = arith.constant 9 : index
    %c0_292 = arith.constant 0 : index
    %1305 = vector.load %arg6[%c4_290, %c9_291, %c0_292] : memref<5x72x128xf32, #tpu.memory_space<vmem>>, vector<1x56x128xf32>
    %1306 = vector.shape_cast %1305 : vector<1x56x128xf32> to vector<56x128xf32>
    %c1_i32_293 = arith.constant 1 : i32
    %1307 = tpu.dynamic_rotate %1306 by %c1_i32_293 dim 1 : vector<56x128xf32>, i32 -> vector<56x128xf32>
    %c209 = arith.constant 209 : index
    %1308 = memref.load %arg3[%c209] : memref<225xf32, #tpu.memory_space<smem>>
    %1309 = vector.broadcast %1308 : f32 to vector<56x128xf32>
    %1310 = arith.mulf %1307, %1309 : vector<56x128xf32>
    %1311 = arith.addf %1300, %1310 : vector<56x128xf32>
    %c218 = arith.constant 218 : index
    %1312 = memref.load %arg3[%c218] : memref<225xf32, #tpu.memory_space<smem>>
    %1313 = vector.broadcast %1312 : f32 to vector<56x128xf32>
    %1314 = arith.mulf %1307, %1313 : vector<56x128xf32>
    %1315 = arith.addf %1304, %1314 : vector<56x128xf32>
    %c208 = arith.constant 208 : index
    %1316 = memref.load %arg3[%c208] : memref<225xf32, #tpu.memory_space<smem>>
    %1317 = vector.broadcast %1316 : f32 to vector<56x128xf32>
    %1318 = arith.mulf %1306, %1317 : vector<56x128xf32>
    %1319 = arith.addf %1311, %1318 : vector<56x128xf32>
    %c217 = arith.constant 217 : index
    %1320 = memref.load %arg3[%c217] : memref<225xf32, #tpu.memory_space<smem>>
    %1321 = vector.broadcast %1320 : f32 to vector<56x128xf32>
    %1322 = arith.mulf %1306, %1321 : vector<56x128xf32>
    %1323 = arith.addf %1315, %1322 : vector<56x128xf32>
    %c127_i32_294 = arith.constant 127 : i32
    %1324 = tpu.dynamic_rotate %1306 by %c127_i32_294 dim 1 : vector<56x128xf32>, i32 -> vector<56x128xf32>
    %c207 = arith.constant 207 : index
    %1325 = memref.load %arg3[%c207] : memref<225xf32, #tpu.memory_space<smem>>
    %1326 = vector.broadcast %1325 : f32 to vector<56x128xf32>
    %1327 = arith.mulf %1324, %1326 : vector<56x128xf32>
    %1328 = arith.addf %1319, %1327 : vector<56x128xf32>
    %c216 = arith.constant 216 : index
    %1329 = memref.load %arg3[%c216] : memref<225xf32, #tpu.memory_space<smem>>
    %1330 = vector.broadcast %1329 : f32 to vector<56x128xf32>
    %1331 = arith.mulf %1324, %1330 : vector<56x128xf32>
    %1332 = arith.addf %1323, %1331 : vector<56x128xf32>
    %cst_295 = arith.constant 3.000000e+00 : f32
    %1333 = vector.broadcast %cst_295 : f32 to vector<56x128xf32>
    %1334 = arith.addf %1328, %1333 : vector<56x128xf32>
    %cst_296 = arith.constant 0.000000e+00 : f32
    %cst_297 = arith.constant 6.000000e+00 : f32
    %1335 = vector.broadcast %cst_296 : f32 to vector<56x128xf32>
    %1336 = arith.maximumf %1335, %1334 : vector<56x128xf32>
    %1337 = vector.broadcast %cst_297 : f32 to vector<56x128xf32>
    %1338 = arith.minimumf %1337, %1336 : vector<56x128xf32>
    %1339 = arith.mulf %1328, %1338 : vector<56x128xf32>
    %cst_298 = arith.constant 0.166666672 : f32
    %1340 = vector.broadcast %cst_298 : f32 to vector<56x128xf32>
    %1341 = arith.mulf %1339, %1340 : vector<56x128xf32>
    %c3_299 = arith.constant 3 : index
    %c0_300 = arith.constant 0 : index
    %c0_301 = arith.constant 0 : index
    %1342 = vector.load %arg5[%c3_299, %c0_300, %c0_301] : memref<5x56x128xf32, #tpu.memory_space<vmem>>, vector<1x56x128xf32>
    %1343 = vector.shape_cast %1342 : vector<1x56x128xf32> to vector<56x128xf32>
    %1344 = vector.shape_cast %1341 : vector<56x128xf32> to vector<1x56x128xf32>
    tpu.vector_store %arg5[%c3_299, %c0_300, %c0_301], %1344 {strides = array<i32>} : memref<5x56x128xf32, #tpu.memory_space<vmem>>, vector<1x56x128xf32>,
    %cst_302 = arith.constant 3.000000e+00 : f32
    %1345 = vector.broadcast %cst_302 : f32 to vector<56x128xf32>
    %1346 = arith.addf %1332, %1345 : vector<56x128xf32>
    %cst_303 = arith.constant 0.000000e+00 : f32
    %cst_304 = arith.constant 6.000000e+00 : f32
    %1347 = vector.broadcast %cst_303 : f32 to vector<56x128xf32>
    %1348 = arith.maximumf %1347, %1346 : vector<56x128xf32>
    %1349 = vector.broadcast %cst_304 : f32 to vector<56x128xf32>
    %1350 = arith.minimumf %1349, %1348 : vector<56x128xf32>
    %1351 = arith.mulf %1332, %1350 : vector<56x128xf32>
    %cst_305 = arith.constant 0.166666672 : f32
    %1352 = vector.broadcast %cst_305 : f32 to vector<56x128xf32>
    %1353 = arith.mulf %1351, %1352 : vector<56x128xf32>
    %c4_306 = arith.constant 4 : index
    %c0_307 = arith.constant 0 : index
    %c0_308 = arith.constant 0 : index
    %1354 = vector.load %arg5[%c4_306, %c0_307, %c0_308] : memref<5x56x128xf32, #tpu.memory_space<vmem>>, vector<1x56x128xf32>
    %1355 = vector.shape_cast %1354 : vector<1x56x128xf32> to vector<56x128xf32>
    %1356 = vector.shape_cast %1353 : vector<56x128xf32> to vector<1x56x128xf32>
    tpu.vector_store %arg5[%c4_306, %c0_307, %c0_308], %1356 {strides = array<i32>} : memref<5x56x128xf32, #tpu.memory_space<vmem>>, vector<1x56x128xf32>,
    return
  }
}

</mosaic_0001>

<llo_original>
// kernel: model_forward.1
$region0: #{model_forward.1}
  #allocation0 [shape = 'u32[]', space=smem, size = 0x4, offset = 0x4, fixed_abs, tag = 'smem constant byte address 0x4 - core index']
  #allocation1 [shape = 'u32[144,128]{1,0:T(1,128)}', space=vmem, size = 0x12000, scoped, tag = 'internal scratch']
  #allocation2 [shape = 'f32[5,72,128]{2,1,0:T(8,128)}', space=vmem, size = 0x2d000, scoped, tag = 'scratch operand']
  %s0 = inlined_call_operand.vmem [shape: f32[56,128], index: 0, kind: input, shape index: {}]
  %s1 = inlined_call_operand.vmem [shape: f32[45], index: 1, kind: input, shape index: {}]
  %s2 = inlined_call_operand.vmem [shape: f32[5], index: 2, kind: input, shape index: {}]
  %s3 = inlined_call_operand.vmem [shape: f32[225], index: 3, kind: input, shape index: {}]
  %s4 = inlined_call_operand.vmem [shape: f32[5], index: 4, kind: input, shape index: {}]
  %s5 = inlined_call_operand.vmem [shape: f32[5,56,128], index: 5, kind: output, shape index: {}]
  %s6 = sld [smem:[#allocation0]]
  $region46: #{model_forward.1} parent=0
    _
  %s8 = ssub.s32 1, %s6
  %s9 = scalar_select 0, %s8, %s6
  $region1: #{model_forward.1} parent=0
    #allocation3 [shape = 'u8[512]{0}', space=smem, size = 0x200, scoped, tag = 'input window, operand 1, single buffered']
    #allocation4 [shape = 's32[1]{0}', space=sflag, size = 0x4, scoped, tag = 'scoped memory for model_forward.1']
    #allocation5 [shape = 'u8[512]{0}', space=smem, size = 0x200, scoped, tag = 'input window, operand 2, single buffered']
    #allocation6 [shape = 's32[1]{0}', space=sflag, size = 0x4, scoped, tag = 'scoped memory for model_forward.1']
    #allocation7 [shape = 'u8[1024]{0}', space=smem, size = 0x400, scoped, tag = 'input window, operand 3, single buffered']
    #allocation8 [shape = 'u8[512]{0}', space=smem, size = 0x200, scoped, tag = 'input window, operand 4, single buffered']
    #allocation9 [shape = 's32[1]{0}', space=sflag, size = 0x4, scoped, tag = 'scoped memory for model_forward.1']
    %10 = vsyncpa [#allocation4], 0
    %11 = vsyncpa [#allocation6], 0
    %12 = vsyncpa [#allocation9], 0
    // Predicated region
    $region2: #{model_forward.1} parent=1 // pred_check
      _
    $region3: #{model_forward.1} parent=1 // pred_check_branch
      %14 = sbr.rel (0) target = $region5
    $region4: #{model_forward.1} parent=1 // pred_region
      _
    $region5: #{model_forward.1} parent=1 // pred_fallthru
      _
    // Predicated region
    $region6: #{model_forward.1} parent=1 // pred_check
      _
    $region7: #{model_forward.1} parent=1 // pred_check_branch
      %16 = sbr.rel (0) target = $region9
    $region8: #{model_forward.1} parent=1 // pred_region
      %s18 = ssub.s32 16, 16
      %19 = vsyncadd [#allocation4], %s18
      %s21 = sshll.u32 %s1, 4
      %s22 = int_to_ptr.vmem [resolvable:$true] %s21
      %24 = dma.vmem_to_smem %s22, 16, [#allocation3], [#allocation4]
    $region9: #{model_forward.1} parent=1 // pred_fallthru
      _
    // Predicated region
    $region10: #{model_forward.1} parent=1 // pred_check
      _
    $region11: #{model_forward.1} parent=1 // pred_check_branch
      %26 = sbr.rel (0) target = $region13
    $region12: #{model_forward.1} parent=1 // pred_region
      %s28 = ssub.s32 16, 16
      %29 = vsyncadd [#allocation6], %s28
      %s31 = sshll.u32 %s2, 4
      %s32 = int_to_ptr.vmem [resolvable:$true] %s31
      %34 = dma.vmem_to_smem %s32, 16, [#allocation5], [#allocation6]
    $region13: #{model_forward.1} parent=1 // pred_fallthru
      _
    // Predicated region
    $region14: #{model_forward.1} parent=1 // pred_check
      _
    $region15: #{model_forward.1} parent=1 // pred_check_branch
      %36 = sbr.rel (0) target = $region17
    $region16: #{model_forward.1} parent=1 // pred_region
      %s38 = ssub.s32 32, 32
      %39 = vsyncadd [#allocation6], %s38
      %s41 = sshll.u32 %s3, 4
      %s42 = int_to_ptr.vmem [resolvable:$true] %s41
      %44 = dma.vmem_to_smem %s42, 32, [#allocation7], [#allocation6]
    $region17: #{model_forward.1} parent=1 // pred_fallthru
      _
    // Predicated region
    $region18: #{model_forward.1} parent=1 // pred_check
      _
    $region19: #{model_forward.1} parent=1 // pred_check_branch
      %46 = sbr.rel (0) target = $region21
    $region20: #{model_forward.1} parent=1 // pred_region
      %s48 = ssub.s32 16, 16
      %49 = vsyncadd [#allocation9], %s48
      %s51 = sshll.u32 %s4, 4
      %s52 = int_to_ptr.vmem [resolvable:$true] %s51
      %54 = dma.vmem_to_smem %s52, 16, [#allocation8], [#allocation9]
    $region21: #{model_forward.1} parent=1 // pred_fallthru
      _
    // Predicated region
    $region22: #{model_forward.1} parent=1 // pred_check
      _
    $region23: #{model_forward.1} parent=1 // pred_check_branch
      %56 = sbr.rel (0) target = $region25
    $region24: #{model_forward.1} parent=1 // pred_region
      %57 = dma.done [#allocation4], 16
    $region25: #{model_forward.1} parent=1 // pred_fallthru
      _
    // Predicated region
    $region26: #{model_forward.1} parent=1 // pred_check
      _
    $region27: #{model_forward.1} parent=1 // pred_check_branch
      %59 = sbr.rel (0) target = $region29
    $region28: #{model_forward.1} parent=1 // pred_region
      %60 = dma.done [#allocation6], 16
    $region29: #{model_forward.1} parent=1 // pred_fallthru
      _
    // Predicated region
    $region30: #{model_forward.1} parent=1 // pred_check
      _
    $region31: #{model_forward.1} parent=1 // pred_check_branch
      %62 = sbr.rel (0) target = $region33
    $region32: #{model_forward.1} parent=1 // pred_region
      %63 = dma.done [#allocation6], 32
    $region33: #{model_forward.1} parent=1 // pred_fallthru
      _
    // Predicated region
    $region34: #{model_forward.1} parent=1 // pred_check
      _
    $region35: #{model_forward.1} parent=1 // pred_check_branch
      %65 = sbr.rel (0) target = $region37
    $region36: #{model_forward.1} parent=1 // pred_region
      %66 = dma.done [#allocation9], 16
    $region37: #{model_forward.1} parent=1 // pred_fallthru
      _
    %67 = sfence
    %v68 = vlaneseq
    %v69 = vand.u32 %v68, 127
    %vm70 = vcmp.lt.s32.totalorder %v69, 126
    %s71 = sld [smem:[#allocation5]]
    %v72 = vstv %s71
    %s73 = sld [smem:[#allocation5 + $0x1]]
    %v74 = vstv %s73
    %s75 = sld [smem:[#allocation5 + $0x2]]
    %v76 = vstv %s75
    %s77 = sld [smem:[#allocation5 + $0x3]]
    %v78 = vstv %s77
    %s79 = sld [smem:[#allocation5 + $0x4]]
    %v80 = vstv %s79
    %v81 = vld [vmem:[%s0] sm:$0xff]
    %v82 = vld [vmem:[%s0 + $0x8] sm:$0xff]
    %v83 = vld [vmem:[%s0 + $0x10] sm:$0xff]
    %v84 = vld [vmem:[%s0 + $0x18] sm:$0xff]
    %v85 = vld [vmem:[%s0 + $0x20] sm:$0xff]
    %v86 = vld [vmem:[%s0 + $0x28] sm:$0xff]
    %v87 = vld [vmem:[%s0 + $0x30] sm:$0x3f]
    %s88 = sld [smem:[#allocation3]]
    %v89 = vstv %s88
    %v90 = vmul.f32 %v81, %v89
    %v91 = vmul.f32 %v82, %v89
    %v92 = vmul.f32 %v83, %v89
    %v93 = vmul.f32 %v84, %v89
    %v94 = vmul.f32 %v85, %v89
    %v95 = vmul.f32 %v86, %v89
    %v96 = vmul.f32 %v87, %v89
    %v97 = vadd.f32 %v72, %v90
    %v98 = vadd.f32 %v72, %v91
    %v99 = vadd.f32 %v72, %v92
    %v100 = vadd.f32 %v72, %v93
    %v101 = vadd.f32 %v72, %v94
    %v102 = vadd.f32 %v72, %v95
    %v103 = vadd.f32 %v72, %v96
    %s104 = sld [smem:[#allocation3 + $0x9]]
    %v105 = vstv %s104
    %v106 = vmul.f32 %v81, %v105
    %v107 = vmul.f32 %v82, %v105
    %v108 = vmul.f32 %v83, %v105
    %v109 = vmul.f32 %v84, %v105
    %v110 = vmul.f32 %v85, %v105
    %v111 = vmul.f32 %v86, %v105
    %v112 = vmul.f32 %v87, %v105
    %v113 = vadd.f32 %v74, %v106
    %v114 = vadd.f32 %v74, %v107
    %v115 = vadd.f32 %v74, %v108
    %v116 = vadd.f32 %v74, %v109
    %v117 = vadd.f32 %v74, %v110
    %v118 = vadd.f32 %v74, %v111
    %v119 = vadd.f32 %v74, %v112
    %s120 = sld [smem:[#allocation3 + $0x12]]
    %v121 = vstv %s120
    %v122 = vmul.f32 %v81, %v121
    %v123 = vmul.f32 %v82, %v121
    %v124 = vmul.f32 %v83, %v121
    %v125 = vmul.f32 %v84, %v121
    %v126 = vmul.f32 %v85, %v121
    %v127 = vmul.f32 %v86, %v121
    %v128 = vmul.f32 %v87, %v121
    %v129 = vadd.f32 %v76, %v122
    %v130 = vadd.f32 %v76, %v123
    %v131 = vadd.f32 %v76, %v124
    %v132 = vadd.f32 %v76, %v125
    %v133 = vadd.f32 %v76, %v126
    %v134 = vadd.f32 %v76, %v127
    %v135 = vadd.f32 %v76, %v128
    %s136 = sld [smem:[#allocation3 + $0x1b]]
    %v137 = vstv %s136
    %v138 = vmul.f32 %v81, %v137
    %v139 = vmul.f32 %v82, %v137
    %v140 = vmul.f32 %v83, %v137
    %v141 = vmul.f32 %v84, %v137
    %v142 = vmul.f32 %v85, %v137
    %v143 = vmul.f32 %v86, %v137
    %v144 = vmul.f32 %v87, %v137
    %v145 = vadd.f32 %v78, %v138
    %v146 = vadd.f32 %v78, %v139
    %v147 = vadd.f32 %v78, %v140
    %v148 = vadd.f32 %v78, %v141
    %v149 = vadd.f32 %v78, %v142
    %v150 = vadd.f32 %v78, %v143
    %v151 = vadd.f32 %v78, %v144
    %s152 = sld [smem:[#allocation3 + $0x24]]
    %v153 = vstv %s152
    %v154 = vmul.f32 %v81, %v153
    %v155 = vmul.f32 %v82, %v153
    %v156 = vmul.f32 %v83, %v153
    %v157 = vmul.f32 %v84, %v153
    %v158 = vmul.f32 %v85, %v153
    %v159 = vmul.f32 %v86, %v153
    %v160 = vmul.f32 %v87, %v153
    %v161 = vadd.f32 %v80, %v154
    %v162 = vadd.f32 %v80, %v155
    %v163 = vadd.f32 %v80, %v156
    %v164 = vadd.f32 %v80, %v157
    %v165 = vadd.f32 %v80, %v158
    %v166 = vadd.f32 %v80, %v159
    %v167 = vadd.f32 %v80, %v160
    %168 = vrot.lane.b32.xlu0 %v81, 127
    %v169 = vpop.permute.xlu0 %168
    %170 = vrot.lane.b32.xlu0 %v82, 127
    %v171 = vpop.permute.xlu0 %170
    %172 = vrot.lane.b32.xlu0 %v83, 127
    %v173 = vpop.permute.xlu0 %172
    %174 = vrot.lane.b32.xlu0 %v84, 127
    %v175 = vpop.permute.xlu0 %174
    %176 = vrot.lane.b32.xlu0 %v85, 127
    %v177 = vpop.permute.xlu0 %176
    %178 = vrot.lane.b32.xlu0 %v86, 127
    %v179 = vpop.permute.xlu0 %178
    %180 = vrot.lane.b32.xlu0 %v87, 127
    %v181 = vpop.permute.xlu0 %180
    %s182 = sld [smem:[#allocation3 + $0x1]]
    %v183 = vstv %s182
    %v184 = vmul.f32 %v169, %v183
    %v185 = vmul.f32 %v171, %v183
    %v186 = vmul.f32 %v173, %v183
    %v187 = vmul.f32 %v175, %v183
    %v188 = vmul.f32 %v177, %v183
    %v189 = vmul.f32 %v179, %v183
    %v190 = vmul.f32 %v181, %v183
    %v191 = vadd.f32 %v97, %v184
    %v192 = vadd.f32 %v98, %v185
    %v193 = vadd.f32 %v99, %v186
    %v194 = vadd.f32 %v100, %v187
    %v195 = vadd.f32 %v101, %v188
    %v196 = vadd.f32 %v102, %v189
    %v197 = vadd.f32 %v103, %v190
    %s198 = sld [smem:[#allocation3 + $0xa]]
    %v199 = vstv %s198
    %v200 = vmul.f32 %v169, %v199
    %v201 = vmul.f32 %v171, %v199
    %v202 = vmul.f32 %v173, %v199
    %v203 = vmul.f32 %v175, %v199
    %v204 = vmul.f32 %v177, %v199
    %v205 = vmul.f32 %v179, %v199
    %v206 = vmul.f32 %v181, %v199
    %v207 = vadd.f32 %v113, %v200
    %v208 = vadd.f32 %v114, %v201
    %v209 = vadd.f32 %v115, %v202
    %v210 = vadd.f32 %v116, %v203
    %v211 = vadd.f32 %v117, %v204
    %v212 = vadd.f32 %v118, %v205
    %v213 = vadd.f32 %v119, %v206
    %s214 = sld [smem:[#allocation3 + $0x13]]
    %v215 = vstv %s214
    %v216 = vmul.f32 %v169, %v215
    %v217 = vmul.f32 %v171, %v215
    %v218 = vmul.f32 %v173, %v215
    %v219 = vmul.f32 %v175, %v215
    %v220 = vmul.f32 %v177, %v215
    %v221 = vmul.f32 %v179, %v215
    %v222 = vmul.f32 %v181, %v215
    %v223 = vadd.f32 %v129, %v216
    %v224 = vadd.f32 %v130, %v217
    %v225 = vadd.f32 %v131, %v218
    %v226 = vadd.f32 %v132, %v219
    %v227 = vadd.f32 %v133, %v220
    %v228 = vadd.f32 %v134, %v221
    %v229 = vadd.f32 %v135, %v222
    %s230 = sld [smem:[#allocation3 + $0x1c]]
    %v231 = vstv %s230
    %v232 = vmul.f32 %v169, %v231
    %v233 = vmul.f32 %v171, %v231
    %v234 = vmul.f32 %v173, %v231
    %v235 = vmul.f32 %v175, %v231
    %v236 = vmul.f32 %v177, %v231
    %v237 = vmul.f32 %v179, %v231
    %v238 = vmul.f32 %v181, %v231
    %v239 = vadd.f32 %v145, %v232
    %v240 = vadd.f32 %v146, %v233
    %v241 = vadd.f32 %v147, %v234
    %v242 = vadd.f32 %v148, %v235
    %v243 = vadd.f32 %v149, %v236
    %v244 = vadd.f32 %v150, %v237
    %v245 = vadd.f32 %v151, %v238
    %s246 = sld [smem:[#allocation3 + $0x25]]
    %v247 = vstv %s246
    %v248 = vmul.f32 %v169, %v247
    %v249 = vmul.f32 %v171, %v247
    %v250 = vmul.f32 %v173, %v247
    %v251 = vmul.f32 %v175, %v247
    %v252 = vmul.f32 %v177, %v247
    %v253 = vmul.f32 %v179, %v247
    %v254 = vmul.f32 %v181, %v247
    %v255 = vadd.f32 %v161, %v248
    %v256 = vadd.f32 %v162, %v249
    %v257 = vadd.f32 %v163, %v250
    %v258 = vadd.f32 %v164, %v251
    %v259 = vadd.f32 %v165, %v252
    %v260 = vadd.f32 %v166, %v253
    %v261 = vadd.f32 %v167, %v254
    %262 = vrot.lane.b32.xlu0 %v81, 126
    %v263 = vpop.permute.xlu0 %262
    %264 = vrot.lane.b32.xlu0 %v82, 126
    %v265 = vpop.permute.xlu0 %264
    %266 = vrot.lane.b32.xlu0 %v83, 126
    %v267 = vpop.permute.xlu0 %266
    %268 = vrot.lane.b32.xlu0 %v84, 126
    %v269 = vpop.permute.xlu0 %268
    %270 = vrot.lane.b32.xlu0 %v85, 126
    %v271 = vpop.permute.xlu0 %270
    %272 = vrot.lane.b32.xlu0 %v86, 126
    %v273 = vpop.permute.xlu0 %272
    %274 = vrot.lane.b32.xlu0 %v87, 126
    %v275 = vpop.permute.xlu0 %274
    %s276 = sld [smem:[#allocation3 + $0x2]]
    %v277 = vstv %s276
    %v278 = vmul.f32 %v263, %v277
    %v279 = vmul.f32 %v265, %v277
    %v280 = vmul.f32 %v267, %v277
    %v281 = vmul.f32 %v269, %v277
    %v282 = vmul.f32 %v271, %v277
    %v283 = vmul.f32 %v273, %v277
    %v284 = vmul.f32 %v275, %v277
    %v285 = vadd.f32 %v191, %v278
    %v286 = vadd.f32 %v192, %v279
    %v287 = vadd.f32 %v193, %v280
    %v288 = vadd.f32 %v194, %v281
    %v289 = vadd.f32 %v195, %v282
    %v290 = vadd.f32 %v196, %v283
    %v291 = vadd.f32 %v197, %v284
    %s292 = sld [smem:[#allocation3 + $0xb]]
    %v293 = vstv %s292
    %v294 = vmul.f32 %v263, %v293
    %v295 = vmul.f32 %v265, %v293
    %v296 = vmul.f32 %v267, %v293
    %v297 = vmul.f32 %v269, %v293
    %v298 = vmul.f32 %v271, %v293
    %v299 = vmul.f32 %v273, %v293
    %v300 = vmul.f32 %v275, %v293
    %v301 = vadd.f32 %v207, %v294
    %v302 = vadd.f32 %v208, %v295
    %v303 = vadd.f32 %v209, %v296
    %v304 = vadd.f32 %v210, %v297
    %v305 = vadd.f32 %v211, %v298
    %v306 = vadd.f32 %v212, %v299
    %v307 = vadd.f32 %v213, %v300
    %s308 = sld [smem:[#allocation3 + $0x14]]
    %v309 = vstv %s308
    %v310 = vmul.f32 %v263, %v309
    %v311 = vmul.f32 %v265, %v309
    %v312 = vmul.f32 %v267, %v309
    %v313 = vmul.f32 %v269, %v309
    %v314 = vmul.f32 %v271, %v309
    %v315 = vmul.f32 %v273, %v309
    %v316 = vmul.f32 %v275, %v309
    %v317 = vadd.f32 %v223, %v310
    %v318 = vadd.f32 %v224, %v311
    %v319 = vadd.f32 %v225, %v312
    %v320 = vadd.f32 %v226, %v313
    %v321 = vadd.f32 %v227, %v314
    %v322 = vadd.f32 %v228, %v315
    %v323 = vadd.f32 %v229, %v316
    %s324 = sld [smem:[#allocation3 + $0x1d]]
    %v325 = vstv %s324
    %v326 = vmul.f32 %v263, %v325
    %v327 = vmul.f32 %v265, %v325
    %v328 = vmul.f32 %v267, %v325
    %v329 = vmul.f32 %v269, %v325
    %v330 = vmul.f32 %v271, %v325
    %v331 = vmul.f32 %v273, %v325
    %v332 = vmul.f32 %v275, %v325
    %v333 = vadd.f32 %v239, %v326
    %v334 = vadd.f32 %v240, %v327
    %v335 = vadd.f32 %v241, %v328
    %v336 = vadd.f32 %v242, %v329
    %v337 = vadd.f32 %v243, %v330
    %v338 = vadd.f32 %v244, %v331
    %v339 = vadd.f32 %v245, %v332
    %s340 = sld [smem:[#allocation3 + $0x26]]
    %v341 = vstv %s340
    %v342 = vmul.f32 %v263, %v341
    %v343 = vmul.f32 %v265, %v341
    %v344 = vmul.f32 %v267, %v341
    %v345 = vmul.f32 %v269, %v341
    %v346 = vmul.f32 %v271, %v341
    %v347 = vmul.f32 %v273, %v341
    %v348 = vmul.f32 %v275, %v341
    %v349 = vadd.f32 %v255, %v342
    %v350 = vadd.f32 %v256, %v343
    %v351 = vadd.f32 %v257, %v344
    %v352 = vadd.f32 %v258, %v345
    %v353 = vadd.f32 %v259, %v346
    %v354 = vadd.f32 %v260, %v347
    %v355 = vadd.f32 %v261, %v348
    %v356 = vld [vmem:[%s0 + $0x1] sm:$0xff]
    %v357 = vld [vmem:[%s0 + $0x9] sm:$0xff]
    %v358 = vld [vmem:[%s0 + $0x11] sm:$0xff]
    %v359 = vld [vmem:[%s0 + $0x19] sm:$0xff]
    %v360 = vld [vmem:[%s0 + $0x21] sm:$0xff]
    %v361 = vld [vmem:[%s0 + $0x29] sm:$0xff]
    %v362 = vld [vmem:[%s0 + $0x31] sm:$0x3f]
    %s363 = sld [smem:[#allocation3 + $0x3]]
    %v364 = vstv %s363
    %v365 = vmul.f32 %v356, %v364
    %v366 = vmul.f32 %v357, %v364
    %v367 = vmul.f32 %v358, %v364
    %v368 = vmul.f32 %v359, %v364
    %v369 = vmul.f32 %v360, %v364
    %v370 = vmul.f32 %v361, %v364
    %v371 = vmul.f32 %v362, %v364
    %v372 = vadd.f32 %v285, %v365
    %v373 = vadd.f32 %v286, %v366
    %v374 = vadd.f32 %v287, %v367
    %v375 = vadd.f32 %v288, %v368
    %v376 = vadd.f32 %v289, %v369
    %v377 = vadd.f32 %v290, %v370
    %v378 = vadd.f32 %v291, %v371
    %s379 = sld [smem:[#allocation3 + $0xc]]
    %v380 = vstv %s379
    %v381 = vmul.f32 %v356, %v380
    %v382 = vmul.f32 %v357, %v380
    %v383 = vmul.f32 %v358, %v380
    %v384 = vmul.f32 %v359, %v380
    %v385 = vmul.f32 %v360, %v380
    %v386 = vmul.f32 %v361, %v380
    %v387 = vmul.f32 %v362, %v380
    %v388 = vadd.f32 %v301, %v381
    %v389 = vadd.f32 %v302, %v382
    %v390 = vadd.f32 %v303, %v383
    %v391 = vadd.f32 %v304, %v384
    %v392 = vadd.f32 %v305, %v385
    %v393 = vadd.f32 %v306, %v386
    %v394 = vadd.f32 %v307, %v387
    %s395 = sld [smem:[#allocation3 + $0x15]]
    %v396 = vstv %s395
    %v397 = vmul.f32 %v356, %v396
    %v398 = vmul.f32 %v357, %v396
    %v399 = vmul.f32 %v358, %v396
    %v400 = vmul.f32 %v359, %v396
    %v401 = vmul.f32 %v360, %v396
    %v402 = vmul.f32 %v361, %v396
    %v403 = vmul.f32 %v362, %v396
    %v404 = vadd.f32 %v317, %v397
    %v405 = vadd.f32 %v318, %v398
    %v406 = vadd.f32 %v319, %v399
    %v407 = vadd.f32 %v320, %v400
    %v408 = vadd.f32 %v321, %v401
    %v409 = vadd.f32 %v322, %v402
    %v410 = vadd.f32 %v323, %v403
    %s411 = sld [smem:[#allocation3 + $0x1e]]
    %v412 = vstv %s411
    %v413 = vmul.f32 %v356, %v412
    %v414 = vmul.f32 %v357, %v412
    %v415 = vmul.f32 %v358, %v412
    %v416 = vmul.f32 %v359, %v412
    %v417 = vmul.f32 %v360, %v412
    %v418 = vmul.f32 %v361, %v412
    %v419 = vmul.f32 %v362, %v412
    %v420 = vadd.f32 %v333, %v413
    %v421 = vadd.f32 %v334, %v414
    %v422 = vadd.f32 %v335, %v415
    %v423 = vadd.f32 %v336, %v416
    %v424 = vadd.f32 %v337, %v417
    %v425 = vadd.f32 %v338, %v418
    %v426 = vadd.f32 %v339, %v419
    %s427 = sld [smem:[#allocation3 + $0x27]]
    %v428 = vstv %s427
    %v429 = vmul.f32 %v356, %v428
    %v430 = vmul.f32 %v357, %v428
    %v431 = vmul.f32 %v358, %v428
    %v432 = vmul.f32 %v359, %v428
    %v433 = vmul.f32 %v360, %v428
    %v434 = vmul.f32 %v361, %v428
    %v435 = vmul.f32 %v362, %v428
    %v436 = vadd.f32 %v349, %v429
    %v437 = vadd.f32 %v350, %v430
    %v438 = vadd.f32 %v351, %v431
    %v439 = vadd.f32 %v352, %v432
    %v440 = vadd.f32 %v353, %v433
    %v441 = vadd.f32 %v354, %v434
    %v442 = vadd.f32 %v355, %v435
    %443 = vrot.lane.b32.xlu0 %v356, 127
    %v444 = vpop.permute.xlu0 %443
    %445 = vrot.lane.b32.xlu0 %v357, 127
    %v446 = vpop.permute.xlu0 %445
    %447 = vrot.lane.b32.xlu0 %v358, 127
    %v448 = vpop.permute.xlu0 %447
    %449 = vrot.lane.b32.xlu0 %v359, 127
    %v450 = vpop.permute.xlu0 %449
    %451 = vrot.lane.b32.xlu0 %v360, 127
    %v452 = vpop.permute.xlu0 %451
    %453 = vrot.lane.b32.xlu0 %v361, 127
    %v454 = vpop.permute.xlu0 %453
    %455 = vrot.lane.b32.xlu0 %v362, 127
    %v456 = vpop.permute.xlu0 %455
    %s457 = sld [smem:[#allocation3 + $0x4]]
    %v458 = vstv %s457
    %v459 = vmul.f32 %v444, %v458
    %v460 = vmul.f32 %v446, %v458
    %v461 = vmul.f32 %v448, %v458
    %v462 = vmul.f32 %v450, %v458
    %v463 = vmul.f32 %v452, %v458
    %v464 = vmul.f32 %v454, %v458
    %v465 = vmul.f32 %v456, %v458
    %v466 = vadd.f32 %v372, %v459
    %v467 = vadd.f32 %v373, %v460
    %v468 = vadd.f32 %v374, %v461
    %v469 = vadd.f32 %v375, %v462
    %v470 = vadd.f32 %v376, %v463
    %v471 = vadd.f32 %v377, %v464
    %v472 = vadd.f32 %v378, %v465
    %s473 = sld [smem:[#allocation3 + $0xd]]
    %v474 = vstv %s473
    %v475 = vmul.f32 %v444, %v474
    %v476 = vmul.f32 %v446, %v474
    %v477 = vmul.f32 %v448, %v474
    %v478 = vmul.f32 %v450, %v474
    %v479 = vmul.f32 %v452, %v474
    %v480 = vmul.f32 %v454, %v474
    %v481 = vmul.f32 %v456, %v474
    %v482 = vadd.f32 %v388, %v475
    %v483 = vadd.f32 %v389, %v476
    %v484 = vadd.f32 %v390, %v477
    %v485 = vadd.f32 %v391, %v478
    %v486 = vadd.f32 %v392, %v479
    %v487 = vadd.f32 %v393, %v480
    %v488 = vadd.f32 %v394, %v481
    %s489 = sld [smem:[#allocation3 + $0x16]]
    %v490 = vstv %s489
    %v491 = vmul.f32 %v444, %v490
    %v492 = vmul.f32 %v446, %v490
    %v493 = vmul.f32 %v448, %v490
    %v494 = vmul.f32 %v450, %v490
    %v495 = vmul.f32 %v452, %v490
    %v496 = vmul.f32 %v454, %v490
    %v497 = vmul.f32 %v456, %v490
    %v498 = vadd.f32 %v404, %v491
    %v499 = vadd.f32 %v405, %v492
    %v500 = vadd.f32 %v406, %v493
    %v501 = vadd.f32 %v407, %v494
    %v502 = vadd.f32 %v408, %v495
    %v503 = vadd.f32 %v409, %v496
    %v504 = vadd.f32 %v410, %v497
    %s505 = sld [smem:[#allocation3 + $0x1f]]
    %v506 = vstv %s505
    %v507 = vmul.f32 %v444, %v506
    %v508 = vmul.f32 %v446, %v506
    %v509 = vmul.f32 %v448, %v506
    %v510 = vmul.f32 %v450, %v506
    %v511 = vmul.f32 %v452, %v506
    %v512 = vmul.f32 %v454, %v506
    %v513 = vmul.f32 %v456, %v506
    %v514 = vadd.f32 %v420, %v507
    %v515 = vadd.f32 %v421, %v508
    %v516 = vadd.f32 %v422, %v509
    %v517 = vadd.f32 %v423, %v510
    %v518 = vadd.f32 %v424, %v511
    %v519 = vadd.f32 %v425, %v512
    %v520 = vadd.f32 %v426, %v513
    %s521 = sld [smem:[#allocation3 + $0x28]]
    %v522 = vstv %s521
    %v523 = vmul.f32 %v444, %v522
    %v524 = vmul.f32 %v446, %v522
    %v525 = vmul.f32 %v448, %v522
    %v526 = vmul.f32 %v450, %v522
    %v527 = vmul.f32 %v452, %v522
    %v528 = vmul.f32 %v454, %v522
    %v529 = vmul.f32 %v456, %v522
    %v530 = vadd.f32 %v436, %v523
    %v531 = vadd.f32 %v437, %v524
    %v532 = vadd.f32 %v438, %v525
    %v533 = vadd.f32 %v439, %v526
    %v534 = vadd.f32 %v440, %v527
    %v535 = vadd.f32 %v441, %v528
    %v536 = vadd.f32 %v442, %v529
    %537 = vrot.lane.b32.xlu0 %v356, 126
    %v538 = vpop.permute.xlu0 %537
    %539 = vrot.lane.b32.xlu0 %v357, 126
    %v540 = vpop.permute.xlu0 %539
    %541 = vrot.lane.b32.xlu0 %v358, 126
    %v542 = vpop.permute.xlu0 %541
    %543 = vrot.lane.b32.xlu0 %v359, 126
    %v544 = vpop.permute.xlu0 %543
    %545 = vrot.lane.b32.xlu0 %v360, 126
    %v546 = vpop.permute.xlu0 %545
    %547 = vrot.lane.b32.xlu0 %v361, 126
    %v548 = vpop.permute.xlu0 %547
    %549 = vrot.lane.b32.xlu0 %v362, 126
    %v550 = vpop.permute.xlu0 %549
    %s551 = sld [smem:[#allocation3 + $0x5]]
    %v552 = vstv %s551
    %v553 = vmul.f32 %v538, %v552
    %v554 = vmul.f32 %v540, %v552
    %v555 = vmul.f32 %v542, %v552
    %v556 = vmul.f32 %v544, %v552
    %v557 = vmul.f32 %v546, %v552
    %v558 = vmul.f32 %v548, %v552
    %v559 = vmul.f32 %v550, %v552
    %v560 = vadd.f32 %v466, %v553
    %v561 = vadd.f32 %v467, %v554
    %v562 = vadd.f32 %v468, %v555
    %v563 = vadd.f32 %v469, %v556
    %v564 = vadd.f32 %v470, %v557
    %v565 = vadd.f32 %v471, %v558
    %v566 = vadd.f32 %v472, %v559
    %s567 = sld [smem:[#allocation3 + $0xe]]
    %v568 = vstv %s567
    %v569 = vmul.f32 %v538, %v568
    %v570 = vmul.f32 %v540, %v568
    %v571 = vmul.f32 %v542, %v568
    %v572 = vmul.f32 %v544, %v568
    %v573 = vmul.f32 %v546, %v568
    %v574 = vmul.f32 %v548, %v568
    %v575 = vmul.f32 %v550, %v568
    %v576 = vadd.f32 %v482, %v569
    %v577 = vadd.f32 %v483, %v570
    %v578 = vadd.f32 %v484, %v571
    %v579 = vadd.f32 %v485, %v572
    %v580 = vadd.f32 %v486, %v573
    %v581 = vadd.f32 %v487, %v574
    %v582 = vadd.f32 %v488, %v575
    %s583 = sld [smem:[#allocation3 + $0x17]]
    %v584 = vstv %s583
    %v585 = vmul.f32 %v538, %v584
    %v586 = vmul.f32 %v540, %v584
    %v587 = vmul.f32 %v542, %v584
    %v588 = vmul.f32 %v544, %v584
    %v589 = vmul.f32 %v546, %v584
    %v590 = vmul.f32 %v548, %v584
    %v591 = vmul.f32 %v550, %v584
    %v592 = vadd.f32 %v498, %v585
    %v593 = vadd.f32 %v499, %v586
    %v594 = vadd.f32 %v500, %v587
    %v595 = vadd.f32 %v501, %v588
    %v596 = vadd.f32 %v502, %v589
    %v597 = vadd.f32 %v503, %v590
    %v598 = vadd.f32 %v504, %v591
    %s599 = sld [smem:[#allocation3 + $0x20]]
    %v600 = vstv %s599
    %v601 = vmul.f32 %v538, %v600
    %v602 = vmul.f32 %v540, %v600
    %v603 = vmul.f32 %v542, %v600
    %v604 = vmul.f32 %v544, %v600
    %v605 = vmul.f32 %v546, %v600
    %v606 = vmul.f32 %v548, %v600
    %v607 = vmul.f32 %v550, %v600
    %v608 = vadd.f32 %v514, %v601
    %v609 = vadd.f32 %v515, %v602
    %v610 = vadd.f32 %v516, %v603
    %v611 = vadd.f32 %v517, %v604
    %v612 = vadd.f32 %v518, %v605
    %v613 = vadd.f32 %v519, %v606
    %v614 = vadd.f32 %v520, %v607
    %s615 = sld [smem:[#allocation3 + $0x29]]
    %v616 = vstv %s615
    %v617 = vmul.f32 %v538, %v616
    %v618 = vmul.f32 %v540, %v616
    %v619 = vmul.f32 %v542, %v616
    %v620 = vmul.f32 %v544, %v616
    %v621 = vmul.f32 %v546, %v616
    %v622 = vmul.f32 %v548, %v616
    %v623 = vmul.f32 %v550, %v616
    %v624 = vadd.f32 %v530, %v617
    %v625 = vadd.f32 %v531, %v618
    %v626 = vadd.f32 %v532, %v619
    %v627 = vadd.f32 %v533, %v620
    %v628 = vadd.f32 %v534, %v621
    %v629 = vadd.f32 %v535, %v622
    %v630 = vadd.f32 %v536, %v623
    %v631 = vld [vmem:[%s0 + $0x2] sm:$0xff]
    %v632 = vld [vmem:[%s0 + $0xa] sm:$0xff]
    %v633 = vld [vmem:[%s0 + $0x12] sm:$0xff]
    %v634 = vld [vmem:[%s0 + $0x1a] sm:$0xff]
    %v635 = vld [vmem:[%s0 + $0x22] sm:$0xff]
    %v636 = vld [vmem:[%s0 + $0x2a] sm:$0xff]
    %v637 = vld [vmem:[%s0 + $0x32] sm:$0x3f]
    %s638 = sld [smem:[#allocation3 + $0x6]]
    %v639 = vstv %s638
    %v640 = vmul.f32 %v631, %v639
    %v641 = vmul.f32 %v632, %v639
    %v642 = vmul.f32 %v633, %v639
    %v643 = vmul.f32 %v634, %v639
    %v644 = vmul.f32 %v635, %v639
    %v645 = vmul.f32 %v636, %v639
    %v646 = vmul.f32 %v637, %v639
    %v647 = vadd.f32 %v560, %v640
    %v648 = vadd.f32 %v561, %v641
    %v649 = vadd.f32 %v562, %v642
    %v650 = vadd.f32 %v563, %v643
    %v651 = vadd.f32 %v564, %v644
    %v652 = vadd.f32 %v565, %v645
    %v653 = vadd.f32 %v566, %v646
    %s654 = sld [smem:[#allocation3 + $0xf]]
    %v655 = vstv %s654
    %v656 = vmul.f32 %v631, %v655
    %v657 = vmul.f32 %v632, %v655
    %v658 = vmul.f32 %v633, %v655
    %v659 = vmul.f32 %v634, %v655
    %v660 = vmul.f32 %v635, %v655
    %v661 = vmul.f32 %v636, %v655
    %v662 = vmul.f32 %v637, %v655
    %v663 = vadd.f32 %v576, %v656
    %v664 = vadd.f32 %v577, %v657
    %v665 = vadd.f32 %v578, %v658
    %v666 = vadd.f32 %v579, %v659
    %v667 = vadd.f32 %v580, %v660
    %v668 = vadd.f32 %v581, %v661
    %v669 = vadd.f32 %v582, %v662
    %s670 = sld [smem:[#allocation3 + $0x18]]
    %v671 = vstv %s670
    %v672 = vmul.f32 %v631, %v671
    %v673 = vmul.f32 %v632, %v671
    %v674 = vmul.f32 %v633, %v671
    %v675 = vmul.f32 %v634, %v671
    %v676 = vmul.f32 %v635, %v671
    %v677 = vmul.f32 %v636, %v671
    %v678 = vmul.f32 %v637, %v671
    %v679 = vadd.f32 %v592, %v672
    %v680 = vadd.f32 %v593, %v673
    %v681 = vadd.f32 %v594, %v674
    %v682 = vadd.f32 %v595, %v675
    %v683 = vadd.f32 %v596, %v676
    %v684 = vadd.f32 %v597, %v677
    %v685 = vadd.f32 %v598, %v678
    %s686 = sld [smem:[#allocation3 + $0x21]]
    %v687 = vstv %s686
    %v688 = vmul.f32 %v631, %v687
    %v689 = vmul.f32 %v632, %v687
    %v690 = vmul.f32 %v633, %v687
    %v691 = vmul.f32 %v634, %v687
    %v692 = vmul.f32 %v635, %v687
    %v693 = vmul.f32 %v636, %v687
    %v694 = vmul.f32 %v637, %v687
    %v695 = vadd.f32 %v608, %v688
    %v696 = vadd.f32 %v609, %v689
    %v697 = vadd.f32 %v610, %v690
    %v698 = vadd.f32 %v611, %v691
    %v699 = vadd.f32 %v612, %v692
    %v700 = vadd.f32 %v613, %v693
    %v701 = vadd.f32 %v614, %v694
    %s702 = sld [smem:[#allocation3 + $0x2a]]
    %v703 = vstv %s702
    %v704 = vmul.f32 %v631, %v703
    %v705 = vmul.f32 %v632, %v703
    %v706 = vmul.f32 %v633, %v703
    %v707 = vmul.f32 %v634, %v703
    %v708 = vmul.f32 %v635, %v703
    %v709 = vmul.f32 %v636, %v703
    %v710 = vmul.f32 %v637, %v703
    %v711 = vadd.f32 %v624, %v704
    %v712 = vadd.f32 %v625, %v705
    %v713 = vadd.f32 %v626, %v706
    %v714 = vadd.f32 %v627, %v707
    %v715 = vadd.f32 %v628, %v708
    %v716 = vadd.f32 %v629, %v709
    %v717 = vadd.f32 %v630, %v710
    %718 = vrot.lane.b32.xlu0 %v631, 127
    %v719 = vpop.permute.xlu0 %718
    %720 = vrot.lane.b32.xlu0 %v632, 127
    %v721 = vpop.permute.xlu0 %720
    %722 = vrot.lane.b32.xlu0 %v633, 127
    %v723 = vpop.permute.xlu0 %722
    %724 = vrot.lane.b32.xlu0 %v634, 127
    %v725 = vpop.permute.xlu0 %724
    %726 = vrot.lane.b32.xlu0 %v635, 127
    %v727 = vpop.permute.xlu0 %726
    %728 = vrot.lane.b32.xlu0 %v636, 127
    %v729 = vpop.permute.xlu0 %728
    %730 = vrot.lane.b32.xlu0 %v637, 127
    %v731 = vpop.permute.xlu0 %730
    %s732 = sld [smem:[#allocation3 + $0x7]]
    %v733 = vstv %s732
    %v734 = vmul.f32 %v719, %v733
    %v735 = vmul.f32 %v721, %v733
    %v736 = vmul.f32 %v723, %v733
    %v737 = vmul.f32 %v725, %v733
    %v738 = vmul.f32 %v727, %v733
    %v739 = vmul.f32 %v729, %v733
    %v740 = vmul.f32 %v731, %v733
    %v741 = vadd.f32 %v647, %v734
    %v742 = vadd.f32 %v648, %v735
    %v743 = vadd.f32 %v649, %v736
    %v744 = vadd.f32 %v650, %v737
    %v745 = vadd.f32 %v651, %v738
    %v746 = vadd.f32 %v652, %v739
    %v747 = vadd.f32 %v653, %v740
    %s748 = sld [smem:[#allocation3 + $0x10]]
    %v749 = vstv %s748
    %v750 = vmul.f32 %v719, %v749
    %v751 = vmul.f32 %v721, %v749
    %v752 = vmul.f32 %v723, %v749
    %v753 = vmul.f32 %v725, %v749
    %v754 = vmul.f32 %v727, %v749
    %v755 = vmul.f32 %v729, %v749
    %v756 = vmul.f32 %v731, %v749
    %v757 = vadd.f32 %v663, %v750
    %v758 = vadd.f32 %v664, %v751
    %v759 = vadd.f32 %v665, %v752
    %v760 = vadd.f32 %v666, %v753
    %v761 = vadd.f32 %v667, %v754
    %v762 = vadd.f32 %v668, %v755
    %v763 = vadd.f32 %v669, %v756
    %s764 = sld [smem:[#allocation3 + $0x19]]
    %v765 = vstv %s764
    %v766 = vmul.f32 %v719, %v765
    %v767 = vmul.f32 %v721, %v765
    %v768 = vmul.f32 %v723, %v765
    %v769 = vmul.f32 %v725, %v765
    %v770 = vmul.f32 %v727, %v765
    %v771 = vmul.f32 %v729, %v765
    %v772 = vmul.f32 %v731, %v765
    %v773 = vadd.f32 %v679, %v766
    %v774 = vadd.f32 %v680, %v767
    %v775 = vadd.f32 %v681, %v768
    %v776 = vadd.f32 %v682, %v769
    %v777 = vadd.f32 %v683, %v770
    %v778 = vadd.f32 %v684, %v771
    %v779 = vadd.f32 %v685, %v772
    %s780 = sld [smem:[#allocation3 + $0x22]]
    %v781 = vstv %s780
    %v782 = vmul.f32 %v719, %v781
    %v783 = vmul.f32 %v721, %v781
    %v784 = vmul.f32 %v723, %v781
    %v785 = vmul.f32 %v725, %v781
    %v786 = vmul.f32 %v727, %v781
    %v787 = vmul.f32 %v729, %v781
    %v788 = vmul.f32 %v731, %v781
    %v789 = vadd.f32 %v695, %v782
    %v790 = vadd.f32 %v696, %v783
    %v791 = vadd.f32 %v697, %v784
    %v792 = vadd.f32 %v698, %v785
    %v793 = vadd.f32 %v699, %v786
    %v794 = vadd.f32 %v700, %v787
    %v795 = vadd.f32 %v701, %v788
    %s796 = sld [smem:[#allocation3 + $0x2b]]
    %v797 = vstv %s796
    %v798 = vmul.f32 %v719, %v797
    %v799 = vmul.f32 %v721, %v797
    %v800 = vmul.f32 %v723, %v797
    %v801 = vmul.f32 %v725, %v797
    %v802 = vmul.f32 %v727, %v797
    %v803 = vmul.f32 %v729, %v797
    %v804 = vmul.f32 %v731, %v797
    %v805 = vadd.f32 %v711, %v798
    %v806 = vadd.f32 %v712, %v799
    %v807 = vadd.f32 %v713, %v800
    %v808 = vadd.f32 %v714, %v801
    %v809 = vadd.f32 %v715, %v802
    %v810 = vadd.f32 %v716, %v803
    %v811 = vadd.f32 %v717, %v804
    %812 = vrot.lane.b32.xlu0 %v631, 126
    %v813 = vpop.permute.xlu0 %812
    %814 = vrot.lane.b32.xlu0 %v632, 126
    %v815 = vpop.permute.xlu0 %814
    %816 = vrot.lane.b32.xlu0 %v633, 126
    %v817 = vpop.permute.xlu0 %816
    %818 = vrot.lane.b32.xlu0 %v634, 126
    %v819 = vpop.permute.xlu0 %818
    %820 = vrot.lane.b32.xlu0 %v635, 126
    %v821 = vpop.permute.xlu0 %820
    %822 = vrot.lane.b32.xlu0 %v636, 126
    %v823 = vpop.permute.xlu0 %822
    %824 = vrot.lane.b32.xlu0 %v637, 126
    %v825 = vpop.permute.xlu0 %824
    %s826 = sld [smem:[#allocation3 + $0x8]]
    %v827 = vstv %s826
    %v828 = vmul.f32 %v813, %v827
    %v829 = vmul.f32 %v815, %v827
    %v830 = vmul.f32 %v817, %v827
    %v831 = vmul.f32 %v819, %v827
    %v832 = vmul.f32 %v821, %v827
    %v833 = vmul.f32 %v823, %v827
    %v834 = vmul.f32 %v825, %v827
    %v835 = vadd.f32 %v741, %v828
    %v836 = vadd.f32 %v742, %v829
    %v837 = vadd.f32 %v743, %v830
    %v838 = vadd.f32 %v744, %v831
    %v839 = vadd.f32 %v745, %v832
    %v840 = vadd.f32 %v746, %v833
    %v841 = vadd.f32 %v747, %v834
    %s842 = sld [smem:[#allocation3 + $0x11]]
    %v843 = vstv %s842
    %v844 = vmul.f32 %v813, %v843
    %v845 = vmul.f32 %v815, %v843
    %v846 = vmul.f32 %v817, %v843
    %v847 = vmul.f32 %v819, %v843
    %v848 = vmul.f32 %v821, %v843
    %v849 = vmul.f32 %v823, %v843
    %v850 = vmul.f32 %v825, %v843
    %v851 = vadd.f32 %v757, %v844
    %v852 = vadd.f32 %v758, %v845
    %v853 = vadd.f32 %v759, %v846
    %v854 = vadd.f32 %v760, %v847
    %v855 = vadd.f32 %v761, %v848
    %v856 = vadd.f32 %v762, %v849
    %v857 = vadd.f32 %v763, %v850
    %s858 = sld [smem:[#allocation3 + $0x1a]]
    %v859 = vstv %s858
    %v860 = vmul.f32 %v813, %v859
    %v861 = vmul.f32 %v815, %v859
    %v862 = vmul.f32 %v817, %v859
    %v863 = vmul.f32 %v819, %v859
    %v864 = vmul.f32 %v821, %v859
    %v865 = vmul.f32 %v823, %v859
    %v866 = vmul.f32 %v825, %v859
    %v867 = vadd.f32 %v773, %v860
    %v868 = vadd.f32 %v774, %v861
    %v869 = vadd.f32 %v775, %v862
    %v870 = vadd.f32 %v776, %v863
    %v871 = vadd.f32 %v777, %v864
    %v872 = vadd.f32 %v778, %v865
    %v873 = vadd.f32 %v779, %v866
    %s874 = sld [smem:[#allocation3 + $0x23]]
    %v875 = vstv %s874
    %v876 = vmul.f32 %v813, %v875
    %v877 = vmul.f32 %v815, %v875
    %v878 = vmul.f32 %v817, %v875
    %v879 = vmul.f32 %v819, %v875
    %v880 = vmul.f32 %v821, %v875
    %v881 = vmul.f32 %v823, %v875
    %v882 = vmul.f32 %v825, %v875
    %v883 = vadd.f32 %v789, %v876
    %v884 = vadd.f32 %v790, %v877
    %v885 = vadd.f32 %v791, %v878
    %v886 = vadd.f32 %v792, %v879
    %v887 = vadd.f32 %v793, %v880
    %v888 = vadd.f32 %v794, %v881
    %v889 = vadd.f32 %v795, %v882
    %s890 = sld [smem:[#allocation3 + $0x2c]]
    %v891 = vstv %s890
    %v892 = vmul.f32 %v813, %v891
    %v893 = vmul.f32 %v815, %v891
    %v894 = vmul.f32 %v817, %v891
    %v895 = vmul.f32 %v819, %v891
    %v896 = vmul.f32 %v821, %v891
    %v897 = vmul.f32 %v823, %v891
    %v898 = vmul.f32 %v825, %v891
    %v899 = vadd.f32 %v805, %v892
    %v900 = vadd.f32 %v806, %v893
    %v901 = vadd.f32 %v807, %v894
    %v902 = vadd.f32 %v808, %v895
    %v903 = vadd.f32 %v809, %v896
    %v904 = vadd.f32 %v810, %v897
    %v905 = vadd.f32 %v811, %v898
    %906 = vst [vmem:[#allocation2] sm:$0xff] 0.0
    %907 = vst [vmem:[#allocation2 + $0x3e] sm:$0x3] 0.0
    %v908 = vsel %vm70, %v835, 0.0
    %v909 = vsel %vm70, %v836, 0.0
    %v910 = vsel %vm70, %v837, 0.0
    %v911 = vsel %vm70, %v838, 0.0
    %v912 = vsel %vm70, %v839, 0.0
    %v913 = vsel %vm70, %v840, 0.0
    %v914 = vsel %vm70, %v841, 0.0
    %915 = vst [vmem:[#allocation2 + $0x8] sm:$0xff] %v908
    %916 = vst [vmem:[#allocation2 + $0x10] sm:$0xff] %v909
    %917 = vst [vmem:[#allocation2 + $0x18] sm:$0xff] %v910
    %918 = vst [vmem:[#allocation2 + $0x20] sm:$0xff] %v911
    %919 = vst [vmem:[#allocation2 + $0x28] sm:$0xff] %v912
    %920 = vst [vmem:[#allocation2 + $0x30] sm:$0xff] %v913
    %921 = vst [vmem:[#allocation2 + $0x38] sm:$0x3f] %v914
    %s922 = scalar_lea.vmem [#allocation2], 72
    %923 = vst [vmem:[%s922] sm:$0xff] 0.0
    %924 = vst [vmem:[%s922 + $0x3e] sm:$0x3] 0.0
    %v925 = vsel %vm70, %v851, 0.0
    %v926 = vsel %vm70, %v852, 0.0
    %v927 = vsel %vm70, %v853, 0.0
    %v928 = vsel %vm70, %v854, 0.0
    %v929 = vsel %vm70, %v855, 0.0
    %v930 = vsel %vm70, %v856, 0.0
    %v931 = vsel %vm70, %v857, 0.0
    %932 = vst [vmem:[%s922 + $0x8] sm:$0xff] %v925
    %933 = vst [vmem:[%s922 + $0x10] sm:$0xff] %v926
    %934 = vst [vmem:[%s922 + $0x18] sm:$0xff] %v927
    %935 = vst [vmem:[%s922 + $0x20] sm:$0xff] %v928
    %936 = vst [vmem:[%s922 + $0x28] sm:$0xff] %v929
    %937 = vst [vmem:[%s922 + $0x30] sm:$0xff] %v930
    %938 = vst [vmem:[%s922 + $0x38] sm:$0x3f] %v931
    %s939 = scalar_lea.vmem [#allocation2], 144
    %940 = vst [vmem:[%s939] sm:$0xff] 0.0
    %941 = vst [vmem:[%s939 + $0x3e] sm:$0x3] 0.0
    %v942 = vsel %vm70, %v867, 0.0
    %v943 = vsel %vm70, %v868, 0.0
    %v944 = vsel %vm70, %v869, 0.0
    %v945 = vsel %vm70, %v870, 0.0
    %v946 = vsel %vm70, %v871, 0.0
    %v947 = vsel %vm70, %v872, 0.0
    %v948 = vsel %vm70, %v873, 0.0
    %949 = vst [vmem:[%s939 + $0x8] sm:$0xff] %v942
    %950 = vst [vmem:[%s939 + $0x10] sm:$0xff] %v943
    %951 = vst [vmem:[%s939 + $0x18] sm:$0xff] %v944
    %952 = vst [vmem:[%s939 + $0x20] sm:$0xff] %v945
    %953 = vst [vmem:[%s939 + $0x28] sm:$0xff] %v946
    %954 = vst [vmem:[%s939 + $0x30] sm:$0xff] %v947
    %955 = vst [vmem:[%s939 + $0x38] sm:$0x3f] %v948
    %s956 = scalar_lea.vmem [#allocation2], 216
    %957 = vst [vmem:[%s956] sm:$0xff] 0.0
    %958 = vst [vmem:[%s956 + $0x3e] sm:$0x3] 0.0
    %v959 = vsel %vm70, %v883, 0.0
    %v960 = vsel %vm70, %v884, 0.0
    %v961 = vsel %vm70, %v885, 0.0
    %v962 = vsel %vm70, %v886, 0.0
    %v963 = vsel %vm70, %v887, 0.0
    %v964 = vsel %vm70, %v888, 0.0
    %v965 = vsel %vm70, %v889, 0.0
    %966 = vst [vmem:[%s956 + $0x8] sm:$0xff] %v959
    %967 = vst [vmem:[%s956 + $0x10] sm:$0xff] %v960
    %968 = vst [vmem:[%s956 + $0x18] sm:$0xff] %v961
    %969 = vst [vmem:[%s956 + $0x20] sm:$0xff] %v962
    %970 = vst [vmem:[%s956 + $0x28] sm:$0xff] %v963
    %971 = vst [vmem:[%s956 + $0x30] sm:$0xff] %v964
    %972 = vst [vmem:[%s956 + $0x38] sm:$0x3f] %v965
    %s973 = scalar_lea.vmem [#allocation2], 288
    %974 = vst [vmem:[%s973] sm:$0xff] 0.0
    %975 = vst [vmem:[%s973 + $0x3e] sm:$0x3] 0.0
    %v976 = vsel %vm70, %v899, 0.0
    %v977 = vsel %vm70, %v900, 0.0
    %v978 = vsel %vm70, %v901, 0.0
    %v979 = vsel %vm70, %v902, 0.0
    %v980 = vsel %vm70, %v903, 0.0
    %v981 = vsel %vm70, %v904, 0.0
    %v982 = vsel %vm70, %v905, 0.0
    %983 = vst [vmem:[%s973 + $0x8] sm:$0xff] %v976
    %984 = vst [vmem:[%s973 + $0x10] sm:$0xff] %v977
    %985 = vst [vmem:[%s973 + $0x18] sm:$0xff] %v978
    %986 = vst [vmem:[%s973 + $0x20] sm:$0xff] %v979
    %987 = vst [vmem:[%s973 + $0x28] sm:$0xff] %v980
    %988 = vst [vmem:[%s973 + $0x30] sm:$0xff] %v981
    %989 = vst [vmem:[%s973 + $0x38] sm:$0x3f] %v982
    %s990 = sld [smem:[#allocation8]]
    %v991 = vstv %s990
    %s992 = sld [smem:[#allocation8 + $0x1]]
    %v993 = vstv %s992
    %s994 = sld [smem:[#allocation8 + $0x2]]
    %v995 = vstv %s994
    %v996 = vld [vmem:[#allocation2 + $0x7] sm:$0xff]
    %v997 = vld [vmem:[#allocation2 + $0xf] sm:$0xff]
    %v998 = vld [vmem:[#allocation2 + $0x17] sm:$0xff]
    %v999 = vld [vmem:[#allocation2 + $0x1f] sm:$0xff]
    %v1000 = vld [vmem:[#allocation2 + $0x27] sm:$0xff]
    %v1001 = vld [vmem:[#allocation2 + $0x2f] sm:$0xff]
    %v1002 = vld [vmem:[#allocation2 + $0x37] sm:$0xff]
    %1003 = vrot.lane.b32.xlu0 %v996, 1
    %v1004 = vpop.permute.xlu0 %1003
    %1005 = vrot.lane.b32.xlu0 %v997, 1
    %v1006 = vpop.permute.xlu0 %1005
    %1007 = vrot.lane.b32.xlu0 %v998, 1
    %v1008 = vpop.permute.xlu0 %1007
    %1009 = vrot.lane.b32.xlu0 %v999, 1
    %v1010 = vpop.permute.xlu0 %1009
    %1011 = vrot.lane.b32.xlu0 %v1000, 1
    %v1012 = vpop.permute.xlu0 %1011
    %1013 = vrot.lane.b32.xlu0 %v1001, 1
    %v1014 = vpop.permute.xlu0 %1013
    %1015 = vrot.lane.b32.xlu0 %v1002, 1
    %v1016 = vpop.permute.xlu0 %1015
    %s1017 = sld [smem:[#allocation7 + $0x8]]
    %v1018 = vstv %s1017
    %v1019 = vmul.f32 %v1004, %v1018
    %v1020 = vmul.f32 %v1006, %v1018
    %v1021 = vmul.f32 %v1008, %v1018
    %v1022 = vmul.f32 %v1010, %v1018
    %v1023 = vmul.f32 %v1012, %v1018
    %v1024 = vmul.f32 %v1014, %v1018
    %v1025 = vmul.f32 %v1016, %v1018
    %v1026 = vadd.f32 %v991, %v1019
    %v1027 = vadd.f32 %v991, %v1020
    %v1028 = vadd.f32 %v991, %v1021
    %v1029 = vadd.f32 %v991, %v1022
    %v1030 = vadd.f32 %v991, %v1023
    %v1031 = vadd.f32 %v991, %v1024
    %v1032 = vadd.f32 %v991, %v1025
    %s1033 = sld [smem:[#allocation7 + $0x11]]
    %v1034 = vstv %s1033
    %v1035 = vmul.f32 %v1004, %v1034
    %v1036 = vmul.f32 %v1006, %v1034
    %v1037 = vmul.f32 %v1008, %v1034
    %v1038 = vmul.f32 %v1010, %v1034
    %v1039 = vmul.f32 %v1012, %v1034
    %v1040 = vmul.f32 %v1014, %v1034
    %v1041 = vmul.f32 %v1016, %v1034
    %v1042 = vadd.f32 %v993, %v1035
    %v1043 = vadd.f32 %v993, %v1036
    %v1044 = vadd.f32 %v993, %v1037
    %v1045 = vadd.f32 %v993, %v1038
    %v1046 = vadd.f32 %v993, %v1039
    %v1047 = vadd.f32 %v993, %v1040
    %v1048 = vadd.f32 %v993, %v1041
    %s1049 = sld [smem:[#allocation7 + $0x1a]]
    %v1050 = vstv %s1049
    %v1051 = vmul.f32 %v1004, %v1050
    %v1052 = vmul.f32 %v1006, %v1050
    %v1053 = vmul.f32 %v1008, %v1050
    %v1054 = vmul.f32 %v1010, %v1050
    %v1055 = vmul.f32 %v1012, %v1050
    %v1056 = vmul.f32 %v1014, %v1050
    %v1057 = vmul.f32 %v1016, %v1050
    %v1058 = vadd.f32 %v995, %v1051
    %v1059 = vadd.f32 %v995, %v1052
    %v1060 = vadd.f32 %v995, %v1053
    %v1061 = vadd.f32 %v995, %v1054
    %v1062 = vadd.f32 %v995, %v1055
    %v1063 = vadd.f32 %v995, %v1056
    %v1064 = vadd.f32 %v995, %v1057
    %s1065 = sld [smem:[#allocation7 + $0x7]]
    %v1066 = vstv %s1065
    %v1067 = vmul.f32 %v996, %v1066
    %v1068 = vmul.f32 %v997, %v1066
    %v1069 = vmul.f32 %v998, %v1066
    %v1070 = vmul.f32 %v999, %v1066
    %v1071 = vmul.f32 %v1000, %v1066
    %v1072 = vmul.f32 %v1001, %v1066
    %v1073 = vmul.f32 %v1002, %v1066
    %v1074 = vadd.f32 %v1026, %v1067
    %v1075 = vadd.f32 %v1027, %v1068
    %v1076 = vadd.f32 %v1028, %v1069
    %v1077 = vadd.f32 %v1029, %v1070
    %v1078 = vadd.f32 %v1030, %v1071
    %v1079 = vadd.f32 %v1031, %v1072
    %v1080 = vadd.f32 %v1032, %v1073
    %s1081 = sld [smem:[#allocation7 + $0x10]]
    %v1082 = vstv %s1081
    %v1083 = vmul.f32 %v996, %v1082
    %v1084 = vmul.f32 %v997, %v1082
    %v1085 = vmul.f32 %v998, %v1082
    %v1086 = vmul.f32 %v999, %v1082
    %v1087 = vmul.f32 %v1000, %v1082
    %v1088 = vmul.f32 %v1001, %v1082
    %v1089 = vmul.f32 %v1002, %v1082
    %v1090 = vadd.f32 %v1042, %v1083
    %v1091 = vadd.f32 %v1043, %v1084
    %v1092 = vadd.f32 %v1044, %v1085
    %v1093 = vadd.f32 %v1045, %v1086
    %v1094 = vadd.f32 %v1046, %v1087
    %v1095 = vadd.f32 %v1047, %v1088
    %v1096 = vadd.f32 %v1048, %v1089
    %s1097 = sld [smem:[#allocation7 + $0x19]]
    %v1098 = vstv %s1097
    %v1099 = vmul.f32 %v996, %v1098
    %v1100 = vmul.f32 %v997, %v1098
    %v1101 = vmul.f32 %v998, %v1098
    %v1102 = vmul.f32 %v999, %v1098
    %v1103 = vmul.f32 %v1000, %v1098
    %v1104 = vmul.f32 %v1001, %v1098
    %v1105 = vmul.f32 %v1002, %v1098
    %v1106 = vadd.f32 %v1058, %v1099
    %v1107 = vadd.f32 %v1059, %v1100
    %v1108 = vadd.f32 %v1060, %v1101
    %v1109 = vadd.f32 %v1061, %v1102
    %v1110 = vadd.f32 %v1062, %v1103
    %v1111 = vadd.f32 %v1063, %v1104
    %v1112 = vadd.f32 %v1064, %v1105
    %1113 = vrot.lane.b32.xlu0 %v996, 127
    %v1114 = vpop.permute.xlu0 %1113
    %1115 = vrot.lane.b32.xlu0 %v997, 127
    %v1116 = vpop.permute.xlu0 %1115
    %1117 = vrot.lane.b32.xlu0 %v998, 127
    %v1118 = vpop.permute.xlu0 %1117
    %1119 = vrot.lane.b32.xlu0 %v999, 127
    %v1120 = vpop.permute.xlu0 %1119
    %1121 = vrot.lane.b32.xlu0 %v1000, 127
    %v1122 = vpop.permute.xlu0 %1121
    %1123 = vrot.lane.b32.xlu0 %v1001, 127
    %v1124 = vpop.permute.xlu0 %1123
    %1125 = vrot.lane.b32.xlu0 %v1002, 127
    %v1126 = vpop.permute.xlu0 %1125
    %s1127 = sld [smem:[#allocation7 + $0x6]]
    %v1128 = vstv %s1127
    %v1129 = vmul.f32 %v1114, %v1128
    %v1130 = vmul.f32 %v1116, %v1128
    %v1131 = vmul.f32 %v1118, %v1128
    %v1132 = vmul.f32 %v1120, %v1128
    %v1133 = vmul.f32 %v1122, %v1128
    %v1134 = vmul.f32 %v1124, %v1128
    %v1135 = vmul.f32 %v1126, %v1128
    %v1136 = vadd.f32 %v1074, %v1129
    %v1137 = vadd.f32 %v1075, %v1130
    %v1138 = vadd.f32 %v1076, %v1131
    %v1139 = vadd.f32 %v1077, %v1132
    %v1140 = vadd.f32 %v1078, %v1133
    %v1141 = vadd.f32 %v1079, %v1134
    %v1142 = vadd.f32 %v1080, %v1135
    %s1143 = sld [smem:[#allocation7 + $0xf]]
    %v1144 = vstv %s1143
    %v1145 = vmul.f32 %v1114, %v1144
    %v1146 = vmul.f32 %v1116, %v1144
    %v1147 = vmul.f32 %v1118, %v1144
    %v1148 = vmul.f32 %v1120, %v1144
    %v1149 = vmul.f32 %v1122, %v1144
    %v1150 = vmul.f32 %v1124, %v1144
    %v1151 = vmul.f32 %v1126, %v1144
    %v1152 = vadd.f32 %v1090, %v1145
    %v1153 = vadd.f32 %v1091, %v1146
    %v1154 = vadd.f32 %v1092, %v1147
    %v1155 = vadd.f32 %v1093, %v1148
    %v1156 = vadd.f32 %v1094, %v1149
    %v1157 = vadd.f32 %v1095, %v1150
    %v1158 = vadd.f32 %v1096, %v1151
    %s1159 = sld [smem:[#allocation7 + $0x18]]
    %v1160 = vstv %s1159
    %v1161 = vmul.f32 %v1114, %v1160
    %v1162 = vmul.f32 %v1116, %v1160
    %v1163 = vmul.f32 %v1118, %v1160
    %v1164 = vmul.f32 %v1120, %v1160
    %v1165 = vmul.f32 %v1122, %v1160
    %v1166 = vmul.f32 %v1124, %v1160
    %v1167 = vmul.f32 %v1126, %v1160
    %v1168 = vadd.f32 %v1106, %v1161
    %v1169 = vadd.f32 %v1107, %v1162
    %v1170 = vadd.f32 %v1108, %v1163
    %v1171 = vadd.f32 %v1109, %v1164
    %v1172 = vadd.f32 %v1110, %v1165
    %v1173 = vadd.f32 %v1111, %v1166
    %v1174 = vadd.f32 %v1112, %v1167
    %v1175 = vld [vmem:[#allocation2 + $0x8] sm:$0xff]
    %v1176 = vld [vmem:[#allocation2 + $0x10] sm:$0xff]
    %v1177 = vld [vmem:[#allocation2 + $0x18] sm:$0xff]
    %v1178 = vld [vmem:[#allocation2 + $0x20] sm:$0xff]
    %v1179 = vld [vmem:[#allocation2 + $0x28] sm:$0xff]
    %v1180 = vld [vmem:[#allocation2 + $0x30] sm:$0xff]
    %v1181 = vld [vmem:[#allocation2 + $0x38] sm:$0xff]
    %1182 = vrot.lane.b32.xlu0 %v1175, 1
    %v1183 = vpop.permute.xlu0 %1182
    %1184 = vrot.lane.b32.xlu0 %v1176, 1
    %v1185 = vpop.permute.xlu0 %1184
    %1186 = vrot.lane.b32.xlu0 %v1177, 1
    %v1187 = vpop.permute.xlu0 %1186
    %1188 = vrot.lane.b32.xlu0 %v1178, 1
    %v1189 = vpop.permute.xlu0 %1188
    %1190 = vrot.lane.b32.xlu0 %v1179, 1
    %v1191 = vpop.permute.xlu0 %1190
    %1192 = vrot.lane.b32.xlu0 %v1180, 1
    %v1193 = vpop.permute.xlu0 %1192
    %1194 = vrot.lane.b32.xlu0 %v1181, 1
    %v1195 = vpop.permute.xlu0 %1194
    %s1196 = sld [smem:[#allocation7 + $0x5]]
    %v1197 = vstv %s1196
    %v1198 = vmul.f32 %v1183, %v1197
    %v1199 = vmul.f32 %v1185, %v1197
    %v1200 = vmul.f32 %v1187, %v1197
    %v1201 = vmul.f32 %v1189, %v1197
    %v1202 = vmul.f32 %v1191, %v1197
    %v1203 = vmul.f32 %v1193, %v1197
    %v1204 = vmul.f32 %v1195, %v1197
    %v1205 = vadd.f32 %v1136, %v1198
    %v1206 = vadd.f32 %v1137, %v1199
    %v1207 = vadd.f32 %v1138, %v1200
    %v1208 = vadd.f32 %v1139, %v1201
    %v1209 = vadd.f32 %v1140, %v1202
    %v1210 = vadd.f32 %v1141, %v1203
    %v1211 = vadd.f32 %v1142, %v1204
    %s1212 = sld [smem:[#allocation7 + $0xe]]
    %v1213 = vstv %s1212
    %v1214 = vmul.f32 %v1183, %v1213
    %v1215 = vmul.f32 %v1185, %v1213
    %v1216 = vmul.f32 %v1187, %v1213
    %v1217 = vmul.f32 %v1189, %v1213
    %v1218 = vmul.f32 %v1191, %v1213
    %v1219 = vmul.f32 %v1193, %v1213
    %v1220 = vmul.f32 %v1195, %v1213
    %v1221 = vadd.f32 %v1152, %v1214
    %v1222 = vadd.f32 %v1153, %v1215
    %v1223 = vadd.f32 %v1154, %v1216
    %v1224 = vadd.f32 %v1155, %v1217
    %v1225 = vadd.f32 %v1156, %v1218
    %v1226 = vadd.f32 %v1157, %v1219
    %v1227 = vadd.f32 %v1158, %v1220
    %s1228 = sld [smem:[#allocation7 + $0x17]]
    %v1229 = vstv %s1228
    %v1230 = vmul.f32 %v1183, %v1229
    %v1231 = vmul.f32 %v1185, %v1229
    %v1232 = vmul.f32 %v1187, %v1229
    %v1233 = vmul.f32 %v1189, %v1229
    %v1234 = vmul.f32 %v1191, %v1229
    %v1235 = vmul.f32 %v1193, %v1229
    %v1236 = vmul.f32 %v1195, %v1229
    %v1237 = vadd.f32 %v1168, %v1230
    %v1238 = vadd.f32 %v1169, %v1231
    %v1239 = vadd.f32 %v1170, %v1232
    %v1240 = vadd.f32 %v1171, %v1233
    %v1241 = vadd.f32 %v1172, %v1234
    %v1242 = vadd.f32 %v1173, %v1235
    %v1243 = vadd.f32 %v1174, %v1236
    %s1244 = sld [smem:[#allocation7 + $0x4]]
    %v1245 = vstv %s1244
    %v1246 = vmul.f32 %v1175, %v1245
    %v1247 = vmul.f32 %v1176, %v1245
    %v1248 = vmul.f32 %v1177, %v1245
    %v1249 = vmul.f32 %v1178, %v1245
    %v1250 = vmul.f32 %v1179, %v1245
    %v1251 = vmul.f32 %v1180, %v1245
    %v1252 = vmul.f32 %v1181, %v1245
    %v1253 = vadd.f32 %v1205, %v1246
    %v1254 = vadd.f32 %v1206, %v1247
    %v1255 = vadd.f32 %v1207, %v1248
    %v1256 = vadd.f32 %v1208, %v1249
    %v1257 = vadd.f32 %v1209, %v1250
    %v1258 = vadd.f32 %v1210, %v1251
    %v1259 = vadd.f32 %v1211, %v1252
    %s1260 = sld [smem:[#allocation7 + $0xd]]
    %v1261 = vstv %s1260
    %v1262 = vmul.f32 %v1175, %v1261
    %v1263 = vmul.f32 %v1176, %v1261
    %v1264 = vmul.f32 %v1177, %v1261
    %v1265 = vmul.f32 %v1178, %v1261
    %v1266 = vmul.f32 %v1179, %v1261
    %v1267 = vmul.f32 %v1180, %v1261
    %v1268 = vmul.f32 %v1181, %v1261
    %v1269 = vadd.f32 %v1221, %v1262
    %v1270 = vadd.f32 %v1222, %v1263
    %v1271 = vadd.f32 %v1223, %v1264
    %v1272 = vadd.f32 %v1224, %v1265
    %v1273 = vadd.f32 %v1225, %v1266
    %v1274 = vadd.f32 %v1226, %v1267
    %v1275 = vadd.f32 %v1227, %v1268
    %s1276 = sld [smem:[#allocation7 + $0x16]]
    %v1277 = vstv %s1276
    %v1278 = vmul.f32 %v1175, %v1277
    %v1279 = vmul.f32 %v1176, %v1277
    %v1280 = vmul.f32 %v1177, %v1277
    %v1281 = vmul.f32 %v1178, %v1277
    %v1282 = vmul.f32 %v1179, %v1277
    %v1283 = vmul.f32 %v1180, %v1277
    %v1284 = vmul.f32 %v1181, %v1277
    %v1285 = vadd.f32 %v1237, %v1278
    %v1286 = vadd.f32 %v1238, %v1279
    %v1287 = vadd.f32 %v1239, %v1280
    %v1288 = vadd.f32 %v1240, %v1281
    %v1289 = vadd.f32 %v1241, %v1282
    %v1290 = vadd.f32 %v1242, %v1283
    %v1291 = vadd.f32 %v1243, %v1284
    %1292 = vrot.lane.b32.xlu0 %v1175, 127
    %v1293 = vpop.permute.xlu0 %1292
    %1294 = vrot.lane.b32.xlu0 %v1176, 127
    %v1295 = vpop.permute.xlu0 %1294
    %1296 = vrot.lane.b32.xlu0 %v1177, 127
    %v1297 = vpop.permute.xlu0 %1296
    %1298 = vrot.lane.b32.xlu0 %v1178, 127
    %v1299 = vpop.permute.xlu0 %1298
    %1300 = vrot.lane.b32.xlu0 %v1179, 127
    %v1301 = vpop.permute.xlu0 %1300
    %1302 = vrot.lane.b32.xlu0 %v1180, 127
    %v1303 = vpop.permute.xlu0 %1302
    %1304 = vrot.lane.b32.xlu0 %v1181, 127
    %v1305 = vpop.permute.xlu0 %1304
    %s1306 = sld [smem:[#allocation7 + $0x3]]
    %v1307 = vstv %s1306
    %v1308 = vmul.f32 %v1293, %v1307
    %v1309 = vmul.f32 %v1295, %v1307
    %v1310 = vmul.f32 %v1297, %v1307
    %v1311 = vmul.f32 %v1299, %v1307
    %v1312 = vmul.f32 %v1301, %v1307
    %v1313 = vmul.f32 %v1303, %v1307
    %v1314 = vmul.f32 %v1305, %v1307
    %v1315 = vadd.f32 %v1253, %v1308
    %v1316 = vadd.f32 %v1254, %v1309
    %v1317 = vadd.f32 %v1255, %v1310
    %v1318 = vadd.f32 %v1256, %v1311
    %v1319 = vadd.f32 %v1257, %v1312
    %v1320 = vadd.f32 %v1258, %v1313
    %v1321 = vadd.f32 %v1259, %v1314
    %s1322 = sld [smem:[#allocation7 + $0xc]]
    %v1323 = vstv %s1322
    %v1324 = vmul.f32 %v1293, %v1323
    %v1325 = vmul.f32 %v1295, %v1323
    %v1326 = vmul.f32 %v1297, %v1323
    %v1327 = vmul.f32 %v1299, %v1323
    %v1328 = vmul.f32 %v1301, %v1323
    %v1329 = vmul.f32 %v1303, %v1323
    %v1330 = vmul.f32 %v1305, %v1323
    %v1331 = vadd.f32 %v1269, %v1324
    %v1332 = vadd.f32 %v1270, %v1325
    %v1333 = vadd.f32 %v1271, %v1326
    %v1334 = vadd.f32 %v1272, %v1327
    %v1335 = vadd.f32 %v1273, %v1328
    %v1336 = vadd.f32 %v1274, %v1329
    %v1337 = vadd.f32 %v1275, %v1330
    %s1338 = sld [smem:[#allocation7 + $0x15]]
    %v1339 = vstv %s1338
    %v1340 = vmul.f32 %v1293, %v1339
    %v1341 = vmul.f32 %v1295, %v1339
    %v1342 = vmul.f32 %v1297, %v1339
    %v1343 = vmul.f32 %v1299, %v1339
    %v1344 = vmul.f32 %v1301, %v1339
    %v1345 = vmul.f32 %v1303, %v1339
    %v1346 = vmul.f32 %v1305, %v1339
    %v1347 = vadd.f32 %v1285, %v1340
    %v1348 = vadd.f32 %v1286, %v1341
    %v1349 = vadd.f32 %v1287, %v1342
    %v1350 = vadd.f32 %v1288, %v1343
    %v1351 = vadd.f32 %v1289, %v1344
    %v1352 = vadd.f32 %v1290, %v1345
    %v1353 = vadd.f32 %v1291, %v1346
    %v1354 = vld [vmem:[#allocation2 + $0x9] sm:$0xff]
    %v1355 = vld [vmem:[#allocation2 + $0x11] sm:$0xff]
    %v1356 = vld [vmem:[#allocation2 + $0x19] sm:$0xff]
    %v1357 = vld [vmem:[#allocation2 + $0x21] sm:$0xff]
    %v1358 = vld [vmem:[#allocation2 + $0x29] sm:$0xff]
    %v1359 = vld [vmem:[#allocation2 + $0x31] sm:$0xff]
    %v1360 = vld [vmem:[#allocation2 + $0x39] sm:$0xff]
    %1361 = vrot.lane.b32.xlu0 %v1354, 1
    %v1362 = vpop.permute.xlu0 %1361
    %1363 = vrot.lane.b32.xlu0 %v1355, 1
    %v1364 = vpop.permute.xlu0 %1363
    %1365 = vrot.lane.b32.xlu0 %v1356, 1
    %v1366 = vpop.permute.xlu0 %1365
    %1367 = vrot.lane.b32.xlu0 %v1357, 1
    %v1368 = vpop.permute.xlu0 %1367
    %1369 = vrot.lane.b32.xlu0 %v1358, 1
    %v1370 = vpop.permute.xlu0 %1369
    %1371 = vrot.lane.b32.xlu0 %v1359, 1
    %v1372 = vpop.permute.xlu0 %1371
    %1373 = vrot.lane.b32.xlu0 %v1360, 1
    %v1374 = vpop.permute.xlu0 %1373
    %s1375 = sld [smem:[#allocation7 + $0x2]]
    %v1376 = vstv %s1375
    %v1377 = vmul.f32 %v1362, %v1376
    %v1378 = vmul.f32 %v1364, %v1376
    %v1379 = vmul.f32 %v1366, %v1376
    %v1380 = vmul.f32 %v1368, %v1376
    %v1381 = vmul.f32 %v1370, %v1376
    %v1382 = vmul.f32 %v1372, %v1376
    %v1383 = vmul.f32 %v1374, %v1376
    %v1384 = vadd.f32 %v1315, %v1377
    %v1385 = vadd.f32 %v1316, %v1378
    %v1386 = vadd.f32 %v1317, %v1379
    %v1387 = vadd.f32 %v1318, %v1380
    %v1388 = vadd.f32 %v1319, %v1381
    %v1389 = vadd.f32 %v1320, %v1382
    %v1390 = vadd.f32 %v1321, %v1383
    %s1391 = sld [smem:[#allocation7 + $0xb]]
    %v1392 = vstv %s1391
    %v1393 = vmul.f32 %v1362, %v1392
    %v1394 = vmul.f32 %v1364, %v1392
    %v1395 = vmul.f32 %v1366, %v1392
    %v1396 = vmul.f32 %v1368, %v1392
    %v1397 = vmul.f32 %v1370, %v1392
    %v1398 = vmul.f32 %v1372, %v1392
    %v1399 = vmul.f32 %v1374, %v1392
    %v1400 = vadd.f32 %v1331, %v1393
    %v1401 = vadd.f32 %v1332, %v1394
    %v1402 = vadd.f32 %v1333, %v1395
    %v1403 = vadd.f32 %v1334, %v1396
    %v1404 = vadd.f32 %v1335, %v1397
    %v1405 = vadd.f32 %v1336, %v1398
    %v1406 = vadd.f32 %v1337, %v1399
    %s1407 = sld [smem:[#allocation7 + $0x14]]
    %v1408 = vstv %s1407
    %v1409 = vmul.f32 %v1362, %v1408
    %v1410 = vmul.f32 %v1364, %v1408
    %v1411 = vmul.f32 %v1366, %v1408
    %v1412 = vmul.f32 %v1368, %v1408
    %v1413 = vmul.f32 %v1370, %v1408
    %v1414 = vmul.f32 %v1372, %v1408
    %v1415 = vmul.f32 %v1374, %v1408
    %v1416 = vadd.f32 %v1347, %v1409
    %v1417 = vadd.f32 %v1348, %v1410
    %v1418 = vadd.f32 %v1349, %v1411
    %v1419 = vadd.f32 %v1350, %v1412
    %v1420 = vadd.f32 %v1351, %v1413
    %v1421 = vadd.f32 %v1352, %v1414
    %v1422 = vadd.f32 %v1353, %v1415
    %s1423 = sld [smem:[#allocation7 + $0x1]]
    %v1424 = vstv %s1423
    %v1425 = vmul.f32 %v1354, %v1424
    %v1426 = vmul.f32 %v1355, %v1424
    %v1427 = vmul.f32 %v1356, %v1424
    %v1428 = vmul.f32 %v1357, %v1424
    %v1429 = vmul.f32 %v1358, %v1424
    %v1430 = vmul.f32 %v1359, %v1424
    %v1431 = vmul.f32 %v1360, %v1424
    %v1432 = vadd.f32 %v1384, %v1425
    %v1433 = vadd.f32 %v1385, %v1426
    %v1434 = vadd.f32 %v1386, %v1427
    %v1435 = vadd.f32 %v1387, %v1428
    %v1436 = vadd.f32 %v1388, %v1429
    %v1437 = vadd.f32 %v1389, %v1430
    %v1438 = vadd.f32 %v1390, %v1431
    %s1439 = sld [smem:[#allocation7 + $0xa]]
    %v1440 = vstv %s1439
    %v1441 = vmul.f32 %v1354, %v1440
    %v1442 = vmul.f32 %v1355, %v1440
    %v1443 = vmul.f32 %v1356, %v1440
    %v1444 = vmul.f32 %v1357, %v1440
    %v1445 = vmul.f32 %v1358, %v1440
    %v1446 = vmul.f32 %v1359, %v1440
    %v1447 = vmul.f32 %v1360, %v1440
    %v1448 = vadd.f32 %v1400, %v1441
    %v1449 = vadd.f32 %v1401, %v1442
    %v1450 = vadd.f32 %v1402, %v1443
    %v1451 = vadd.f32 %v1403, %v1444
    %v1452 = vadd.f32 %v1404, %v1445
    %v1453 = vadd.f32 %v1405, %v1446
    %v1454 = vadd.f32 %v1406, %v1447
    %s1455 = sld [smem:[#allocation7 + $0x13]]
    %v1456 = vstv %s1455
    %v1457 = vmul.f32 %v1354, %v1456
    %v1458 = vmul.f32 %v1355, %v1456
    %v1459 = vmul.f32 %v1356, %v1456
    %v1460 = vmul.f32 %v1357, %v1456
    %v1461 = vmul.f32 %v1358, %v1456
    %v1462 = vmul.f32 %v1359, %v1456
    %v1463 = vmul.f32 %v1360, %v1456
    %v1464 = vadd.f32 %v1416, %v1457
    %v1465 = vadd.f32 %v1417, %v1458
    %v1466 = vadd.f32 %v1418, %v1459
    %v1467 = vadd.f32 %v1419, %v1460
    %v1468 = vadd.f32 %v1420, %v1461
    %v1469 = vadd.f32 %v1421, %v1462
    %v1470 = vadd.f32 %v1422, %v1463
    %1471 = vrot.lane.b32.xlu0 %v1354, 127
    %v1472 = vpop.permute.xlu0 %1471
    %1473 = vrot.lane.b32.xlu0 %v1355, 127
    %v1474 = vpop.permute.xlu0 %1473
    %1475 = vrot.lane.b32.xlu0 %v1356, 127
    %v1476 = vpop.permute.xlu0 %1475
    %1477 = vrot.lane.b32.xlu0 %v1357, 127
    %v1478 = vpop.permute.xlu0 %1477
    %1479 = vrot.lane.b32.xlu0 %v1358, 127
    %v1480 = vpop.permute.xlu0 %1479
    %1481 = vrot.lane.b32.xlu0 %v1359, 127
    %v1482 = vpop.permute.xlu0 %1481
    %1483 = vrot.lane.b32.xlu0 %v1360, 127
    %v1484 = vpop.permute.xlu0 %1483
    %s1485 = sld [smem:[#allocation7]]
    %v1486 = vstv %s1485
    %v1487 = vmul.f32 %v1472, %v1486
    %v1488 = vmul.f32 %v1474, %v1486
    %v1489 = vmul.f32 %v1476, %v1486
    %v1490 = vmul.f32 %v1478, %v1486
    %v1491 = vmul.f32 %v1480, %v1486
    %v1492 = vmul.f32 %v1482, %v1486
    %v1493 = vmul.f32 %v1484, %v1486
    %v1494 = vadd.f32 %v1432, %v1487
    %v1495 = vadd.f32 %v1433, %v1488
    %v1496 = vadd.f32 %v1434, %v1489
    %v1497 = vadd.f32 %v1435, %v1490
    %v1498 = vadd.f32 %v1436, %v1491
    %v1499 = vadd.f32 %v1437, %v1492
    %v1500 = vadd.f32 %v1438, %v1493
    %s1501 = sld [smem:[#allocation7 + $0x9]]
    %v1502 = vstv %s1501
    %v1503 = vmul.f32 %v1472, %v1502
    %v1504 = vmul.f32 %v1474, %v1502
    %v1505 = vmul.f32 %v1476, %v1502
    %v1506 = vmul.f32 %v1478, %v1502
    %v1507 = vmul.f32 %v1480, %v1502
    %v1508 = vmul.f32 %v1482, %v1502
    %v1509 = vmul.f32 %v1484, %v1502
    %v1510 = vadd.f32 %v1448, %v1503
    %v1511 = vadd.f32 %v1449, %v1504
    %v1512 = vadd.f32 %v1450, %v1505
    %v1513 = vadd.f32 %v1451, %v1506
    %v1514 = vadd.f32 %v1452, %v1507
    %v1515 = vadd.f32 %v1453, %v1508
    %v1516 = vadd.f32 %v1454, %v1509
    %s1517 = sld [smem:[#allocation7 + $0x12]]
    %v1518 = vstv %s1517
    %v1519 = vmul.f32 %v1472, %v1518
    %v1520 = vmul.f32 %v1474, %v1518
    %v1521 = vmul.f32 %v1476, %v1518
    %v1522 = vmul.f32 %v1478, %v1518
    %v1523 = vmul.f32 %v1480, %v1518
    %v1524 = vmul.f32 %v1482, %v1518
    %v1525 = vmul.f32 %v1484, %v1518
    %v1526 = vadd.f32 %v1464, %v1519
    %v1527 = vadd.f32 %v1465, %v1520
    %v1528 = vadd.f32 %v1466, %v1521
    %v1529 = vadd.f32 %v1467, %v1522
    %v1530 = vadd.f32 %v1468, %v1523
    %v1531 = vadd.f32 %v1469, %v1524
    %v1532 = vadd.f32 %v1470, %v1525
    %v1533 = vld [vmem:[%s922 + $0x7] sm:$0xff]
    %v1534 = vld [vmem:[%s922 + $0xf] sm:$0xff]
    %v1535 = vld [vmem:[%s922 + $0x17] sm:$0xff]
    %v1536 = vld [vmem:[%s922 + $0x1f] sm:$0xff]
    %v1537 = vld [vmem:[%s922 + $0x27] sm:$0xff]
    %v1538 = vld [vmem:[%s922 + $0x2f] sm:$0xff]
    %v1539 = vld [vmem:[%s922 + $0x37] sm:$0xff]
    %1540 = vrot.lane.b32.xlu0 %v1533, 1
    %v1541 = vpop.permute.xlu0 %1540
    %1542 = vrot.lane.b32.xlu0 %v1534, 1
    %v1543 = vpop.permute.xlu0 %1542
    %1544 = vrot.lane.b32.xlu0 %v1535, 1
    %v1545 = vpop.permute.xlu0 %1544
    %1546 = vrot.lane.b32.xlu0 %v1536, 1
    %v1547 = vpop.permute.xlu0 %1546
    %1548 = vrot.lane.b32.xlu0 %v1537, 1
    %v1549 = vpop.permute.xlu0 %1548
    %1550 = vrot.lane.b32.xlu0 %v1538, 1
    %v1551 = vpop.permute.xlu0 %1550
    %1552 = vrot.lane.b32.xlu0 %v1539, 1
    %v1553 = vpop.permute.xlu0 %1552
    %s1554 = sld [smem:[#allocation7 + $0x35]]
    %v1555 = vstv %s1554
    %v1556 = vmul.f32 %v1541, %v1555
    %v1557 = vmul.f32 %v1543, %v1555
    %v1558 = vmul.f32 %v1545, %v1555
    %v1559 = vmul.f32 %v1547, %v1555
    %v1560 = vmul.f32 %v1549, %v1555
    %v1561 = vmul.f32 %v1551, %v1555
    %v1562 = vmul.f32 %v1553, %v1555
    %v1563 = vadd.f32 %v1494, %v1556
    %v1564 = vadd.f32 %v1495, %v1557
    %v1565 = vadd.f32 %v1496, %v1558
    %v1566 = vadd.f32 %v1497, %v1559
    %v1567 = vadd.f32 %v1498, %v1560
    %v1568 = vadd.f32 %v1499, %v1561
    %v1569 = vadd.f32 %v1500, %v1562
    %s1570 = sld [smem:[#allocation7 + $0x3e]]
    %v1571 = vstv %s1570
    %v1572 = vmul.f32 %v1541, %v1571
    %v1573 = vmul.f32 %v1543, %v1571
    %v1574 = vmul.f32 %v1545, %v1571
    %v1575 = vmul.f32 %v1547, %v1571
    %v1576 = vmul.f32 %v1549, %v1571
    %v1577 = vmul.f32 %v1551, %v1571
    %v1578 = vmul.f32 %v1553, %v1571
    %v1579 = vadd.f32 %v1510, %v1572
    %v1580 = vadd.f32 %v1511, %v1573
    %v1581 = vadd.f32 %v1512, %v1574
    %v1582 = vadd.f32 %v1513, %v1575
    %v1583 = vadd.f32 %v1514, %v1576
    %v1584 = vadd.f32 %v1515, %v1577
    %v1585 = vadd.f32 %v1516, %v1578
    %s1586 = sld [smem:[#allocation7 + $0x47]]
    %v1587 = vstv %s1586
    %v1588 = vmul.f32 %v1541, %v1587
    %v1589 = vmul.f32 %v1543, %v1587
    %v1590 = vmul.f32 %v1545, %v1587
    %v1591 = vmul.f32 %v1547, %v1587
    %v1592 = vmul.f32 %v1549, %v1587
    %v1593 = vmul.f32 %v1551, %v1587
    %v1594 = vmul.f32 %v1553, %v1587
    %v1595 = vadd.f32 %v1526, %v1588
    %v1596 = vadd.f32 %v1527, %v1589
    %v1597 = vadd.f32 %v1528, %v1590
    %v1598 = vadd.f32 %v1529, %v1591
    %v1599 = vadd.f32 %v1530, %v1592
    %v1600 = vadd.f32 %v1531, %v1593
    %v1601 = vadd.f32 %v1532, %v1594
    %s1602 = sld [smem:[#allocation7 + $0x34]]
    %v1603 = vstv %s1602
    %v1604 = vmul.f32 %v1533, %v1603
    %v1605 = vmul.f32 %v1534, %v1603
    %v1606 = vmul.f32 %v1535, %v1603
    %v1607 = vmul.f32 %v1536, %v1603
    %v1608 = vmul.f32 %v1537, %v1603
    %v1609 = vmul.f32 %v1538, %v1603
    %v1610 = vmul.f32 %v1539, %v1603
    %v1611 = vadd.f32 %v1563, %v1604
    %v1612 = vadd.f32 %v1564, %v1605
    %v1613 = vadd.f32 %v1565, %v1606
    %v1614 = vadd.f32 %v1566, %v1607
    %v1615 = vadd.f32 %v1567, %v1608
    %v1616 = vadd.f32 %v1568, %v1609
    %v1617 = vadd.f32 %v1569, %v1610
    %s1618 = sld [smem:[#allocation7 + $0x3d]]
    %v1619 = vstv %s1618
    %v1620 = vmul.f32 %v1533, %v1619
    %v1621 = vmul.f32 %v1534, %v1619
    %v1622 = vmul.f32 %v1535, %v1619
    %v1623 = vmul.f32 %v1536, %v1619
    %v1624 = vmul.f32 %v1537, %v1619
    %v1625 = vmul.f32 %v1538, %v1619
    %v1626 = vmul.f32 %v1539, %v1619
    %v1627 = vadd.f32 %v1579, %v1620
    %v1628 = vadd.f32 %v1580, %v1621
    %v1629 = vadd.f32 %v1581, %v1622
    %v1630 = vadd.f32 %v1582, %v1623
    %v1631 = vadd.f32 %v1583, %v1624
    %v1632 = vadd.f32 %v1584, %v1625
    %v1633 = vadd.f32 %v1585, %v1626
    %s1634 = sld [smem:[#allocation7 + $0x46]]
    %v1635 = vstv %s1634
    %v1636 = vmul.f32 %v1533, %v1635
    %v1637 = vmul.f32 %v1534, %v1635
    %v1638 = vmul.f32 %v1535, %v1635
    %v1639 = vmul.f32 %v1536, %v1635
    %v1640 = vmul.f32 %v1537, %v1635
    %v1641 = vmul.f32 %v1538, %v1635
    %v1642 = vmul.f32 %v1539, %v1635
    %v1643 = vadd.f32 %v1595, %v1636
    %v1644 = vadd.f32 %v1596, %v1637
    %v1645 = vadd.f32 %v1597, %v1638
    %v1646 = vadd.f32 %v1598, %v1639
    %v1647 = vadd.f32 %v1599, %v1640
    %v1648 = vadd.f32 %v1600, %v1641
    %v1649 = vadd.f32 %v1601, %v1642
    %1650 = vrot.lane.b32.xlu0 %v1533, 127
    %v1651 = vpop.permute.xlu0 %1650
    %1652 = vrot.lane.b32.xlu0 %v1534, 127
    %v1653 = vpop.permute.xlu0 %1652
    %1654 = vrot.lane.b32.xlu0 %v1535, 127
    %v1655 = vpop.permute.xlu0 %1654
    %1656 = vrot.lane.b32.xlu0 %v1536, 127
    %v1657 = vpop.permute.xlu0 %1656
    %1658 = vrot.lane.b32.xlu0 %v1537, 127
    %v1659 = vpop.permute.xlu0 %1658
    %1660 = vrot.lane.b32.xlu0 %v1538, 127
    %v1661 = vpop.permute.xlu0 %1660
    %1662 = vrot.lane.b32.xlu0 %v1539, 127
    %v1663 = vpop.permute.xlu0 %1662
    %s1664 = sld [smem:[#allocation7 + $0x33]]
    %v1665 = vstv %s1664
    %v1666 = vmul.f32 %v1651, %v1665
    %v1667 = vmul.f32 %v1653, %v1665
    %v1668 = vmul.f32 %v1655, %v1665
    %v1669 = vmul.f32 %v1657, %v1665
    %v1670 = vmul.f32 %v1659, %v1665
    %v1671 = vmul.f32 %v1661, %v1665
    %v1672 = vmul.f32 %v1663, %v1665
    %v1673 = vadd.f32 %v1611, %v1666
    %v1674 = vadd.f32 %v1612, %v1667
    %v1675 = vadd.f32 %v1613, %v1668
    %v1676 = vadd.f32 %v1614, %v1669
    %v1677 = vadd.f32 %v1615, %v1670
    %v1678 = vadd.f32 %v1616, %v1671
    %v1679 = vadd.f32 %v1617, %v1672
    %s1680 = sld [smem:[#allocation7 + $0x3c]]
    %v1681 = vstv %s1680
    %v1682 = vmul.f32 %v1651, %v1681
    %v1683 = vmul.f32 %v1653, %v1681
    %v1684 = vmul.f32 %v1655, %v1681
    %v1685 = vmul.f32 %v1657, %v1681
    %v1686 = vmul.f32 %v1659, %v1681
    %v1687 = vmul.f32 %v1661, %v1681
    %v1688 = vmul.f32 %v1663, %v1681
    %v1689 = vadd.f32 %v1627, %v1682
    %v1690 = vadd.f32 %v1628, %v1683
    %v1691 = vadd.f32 %v1629, %v1684
    %v1692 = vadd.f32 %v1630, %v1685
    %v1693 = vadd.f32 %v1631, %v1686
    %v1694 = vadd.f32 %v1632, %v1687
    %v1695 = vadd.f32 %v1633, %v1688
    %s1696 = sld [smem:[#allocation7 + $0x45]]
    %v1697 = vstv %s1696
    %v1698 = vmul.f32 %v1651, %v1697
    %v1699 = vmul.f32 %v1653, %v1697
    %v1700 = vmul.f32 %v1655, %v1697
    %v1701 = vmul.f32 %v1657, %v1697
    %v1702 = vmul.f32 %v1659, %v1697
    %v1703 = vmul.f32 %v1661, %v1697
    %v1704 = vmul.f32 %v1663, %v1697
    %v1705 = vadd.f32 %v1643, %v1698
    %v1706 = vadd.f32 %v1644, %v1699
    %v1707 = vadd.f32 %v1645, %v1700
    %v1708 = vadd.f32 %v1646, %v1701
    %v1709 = vadd.f32 %v1647, %v1702
    %v1710 = vadd.f32 %v1648, %v1703
    %v1711 = vadd.f32 %v1649, %v1704
    %v1712 = vld [vmem:[%s922 + $0x8] sm:$0xff]
    %v1713 = vld [vmem:[%s922 + $0x10] sm:$0xff]
    %v1714 = vld [vmem:[%s922 + $0x18] sm:$0xff]
    %v1715 = vld [vmem:[%s922 + $0x20] sm:$0xff]
    %v1716 = vld [vmem:[%s922 + $0x28] sm:$0xff]
    %v1717 = vld [vmem:[%s922 + $0x30] sm:$0xff]
    %v1718 = vld [vmem:[%s922 + $0x38] sm:$0xff]
    %1719 = vrot.lane.b32.xlu0 %v1712, 1
    %v1720 = vpop.permute.xlu0 %1719
    %1721 = vrot.lane.b32.xlu0 %v1713, 1
    %v1722 = vpop.permute.xlu0 %1721
    %1723 = vrot.lane.b32.xlu0 %v1714, 1
    %v1724 = vpop.permute.xlu0 %1723
    %1725 = vrot.lane.b32.xlu0 %v1715, 1
    %v1726 = vpop.permute.xlu0 %1725
    %1727 = vrot.lane.b32.xlu0 %v1716, 1
    %v1728 = vpop.permute.xlu0 %1727
    %1729 = vrot.lane.b32.xlu0 %v1717, 1
    %v1730 = vpop.permute.xlu0 %1729
    %1731 = vrot.lane.b32.xlu0 %v1718, 1
    %v1732 = vpop.permute.xlu0 %1731
    %s1733 = sld [smem:[#allocation7 + $0x32]]
    %v1734 = vstv %s1733
    %v1735 = vmul.f32 %v1720, %v1734
    %v1736 = vmul.f32 %v1722, %v1734
    %v1737 = vmul.f32 %v1724, %v1734
    %v1738 = vmul.f32 %v1726, %v1734
    %v1739 = vmul.f32 %v1728, %v1734
    %v1740 = vmul.f32 %v1730, %v1734
    %v1741 = vmul.f32 %v1732, %v1734
    %v1742 = vadd.f32 %v1673, %v1735
    %v1743 = vadd.f32 %v1674, %v1736
    %v1744 = vadd.f32 %v1675, %v1737
    %v1745 = vadd.f32 %v1676, %v1738
    %v1746 = vadd.f32 %v1677, %v1739
    %v1747 = vadd.f32 %v1678, %v1740
    %v1748 = vadd.f32 %v1679, %v1741
    %s1749 = sld [smem:[#allocation7 + $0x3b]]
    %v1750 = vstv %s1749
    %v1751 = vmul.f32 %v1720, %v1750
    %v1752 = vmul.f32 %v1722, %v1750
    %v1753 = vmul.f32 %v1724, %v1750
    %v1754 = vmul.f32 %v1726, %v1750
    %v1755 = vmul.f32 %v1728, %v1750
    %v1756 = vmul.f32 %v1730, %v1750
    %v1757 = vmul.f32 %v1732, %v1750
    %v1758 = vadd.f32 %v1689, %v1751
    %v1759 = vadd.f32 %v1690, %v1752
    %v1760 = vadd.f32 %v1691, %v1753
    %v1761 = vadd.f32 %v1692, %v1754
    %v1762 = vadd.f32 %v1693, %v1755
    %v1763 = vadd.f32 %v1694, %v1756
    %v1764 = vadd.f32 %v1695, %v1757
    %s1765 = sld [smem:[#allocation7 + $0x44]]
    %v1766 = vstv %s1765
    %v1767 = vmul.f32 %v1720, %v1766
    %v1768 = vmul.f32 %v1722, %v1766
    %v1769 = vmul.f32 %v1724, %v1766
    %v1770 = vmul.f32 %v1726, %v1766
    %v1771 = vmul.f32 %v1728, %v1766
    %v1772 = vmul.f32 %v1730, %v1766
    %v1773 = vmul.f32 %v1732, %v1766
    %v1774 = vadd.f32 %v1705, %v1767
    %v1775 = vadd.f32 %v1706, %v1768
    %v1776 = vadd.f32 %v1707, %v1769
    %v1777 = vadd.f32 %v1708, %v1770
    %v1778 = vadd.f32 %v1709, %v1771
    %v1779 = vadd.f32 %v1710, %v1772
    %v1780 = vadd.f32 %v1711, %v1773
    %s1781 = sld [smem:[#allocation7 + $0x31]]
    %v1782 = vstv %s1781
    %v1783 = vmul.f32 %v1712, %v1782
    %v1784 = vmul.f32 %v1713, %v1782
    %v1785 = vmul.f32 %v1714, %v1782
    %v1786 = vmul.f32 %v1715, %v1782
    %v1787 = vmul.f32 %v1716, %v1782
    %v1788 = vmul.f32 %v1717, %v1782
    %v1789 = vmul.f32 %v1718, %v1782
    %v1790 = vadd.f32 %v1742, %v1783
    %v1791 = vadd.f32 %v1743, %v1784
    %v1792 = vadd.f32 %v1744, %v1785
    %v1793 = vadd.f32 %v1745, %v1786
    %v1794 = vadd.f32 %v1746, %v1787
    %v1795 = vadd.f32 %v1747, %v1788
    %v1796 = vadd.f32 %v1748, %v1789
    %s1797 = sld [smem:[#allocation7 + $0x3a]]
    %v1798 = vstv %s1797
    %v1799 = vmul.f32 %v1712, %v1798
    %v1800 = vmul.f32 %v1713, %v1798
    %v1801 = vmul.f32 %v1714, %v1798
    %v1802 = vmul.f32 %v1715, %v1798
    %v1803 = vmul.f32 %v1716, %v1798
    %v1804 = vmul.f32 %v1717, %v1798
    %v1805 = vmul.f32 %v1718, %v1798
    %v1806 = vadd.f32 %v1758, %v1799
    %v1807 = vadd.f32 %v1759, %v1800
    %v1808 = vadd.f32 %v1760, %v1801
    %v1809 = vadd.f32 %v1761, %v1802
    %v1810 = vadd.f32 %v1762, %v1803
    %v1811 = vadd.f32 %v1763, %v1804
    %v1812 = vadd.f32 %v1764, %v1805
    %s1813 = sld [smem:[#allocation7 + $0x43]]
    %v1814 = vstv %s1813
    %v1815 = vmul.f32 %v1712, %v1814
    %v1816 = vmul.f32 %v1713, %v1814
    %v1817 = vmul.f32 %v1714, %v1814
    %v1818 = vmul.f32 %v1715, %v1814
    %v1819 = vmul.f32 %v1716, %v1814
    %v1820 = vmul.f32 %v1717, %v1814
    %v1821 = vmul.f32 %v1718, %v1814
    %v1822 = vadd.f32 %v1774, %v1815
    %v1823 = vadd.f32 %v1775, %v1816
    %v1824 = vadd.f32 %v1776, %v1817
    %v1825 = vadd.f32 %v1777, %v1818
    %v1826 = vadd.f32 %v1778, %v1819
    %v1827 = vadd.f32 %v1779, %v1820
    %v1828 = vadd.f32 %v1780, %v1821
    %1829 = vrot.lane.b32.xlu0 %v1712, 127
    %v1830 = vpop.permute.xlu0 %1829
    %1831 = vrot.lane.b32.xlu0 %v1713, 127
    %v1832 = vpop.permute.xlu0 %1831
    %1833 = vrot.lane.b32.xlu0 %v1714, 127
    %v1834 = vpop.permute.xlu0 %1833
    %1835 = vrot.lane.b32.xlu0 %v1715, 127
    %v1836 = vpop.permute.xlu0 %1835
    %1837 = vrot.lane.b32.xlu0 %v1716, 127
    %v1838 = vpop.permute.xlu0 %1837
    %1839 = vrot.lane.b32.xlu0 %v1717, 127
    %v1840 = vpop.permute.xlu0 %1839
    %1841 = vrot.lane.b32.xlu0 %v1718, 127
    %v1842 = vpop.permute.xlu0 %1841
    %s1843 = sld [smem:[#allocation7 + $0x30]]
    %v1844 = vstv %s1843
    %v1845 = vmul.f32 %v1830, %v1844
    %v1846 = vmul.f32 %v1832, %v1844
    %v1847 = vmul.f32 %v1834, %v1844
    %v1848 = vmul.f32 %v1836, %v1844
    %v1849 = vmul.f32 %v1838, %v1844
    %v1850 = vmul.f32 %v1840, %v1844
    %v1851 = vmul.f32 %v1842, %v1844
    %v1852 = vadd.f32 %v1790, %v1845
    %v1853 = vadd.f32 %v1791, %v1846
    %v1854 = vadd.f32 %v1792, %v1847
    %v1855 = vadd.f32 %v1793, %v1848
    %v1856 = vadd.f32 %v1794, %v1849
    %v1857 = vadd.f32 %v1795, %v1850
    %v1858 = vadd.f32 %v1796, %v1851
    %s1859 = sld [smem:[#allocation7 + $0x39]]
    %v1860 = vstv %s1859
    %v1861 = vmul.f32 %v1830, %v1860
    %v1862 = vmul.f32 %v1832, %v1860
    %v1863 = vmul.f32 %v1834, %v1860
    %v1864 = vmul.f32 %v1836, %v1860
    %v1865 = vmul.f32 %v1838, %v1860
    %v1866 = vmul.f32 %v1840, %v1860
    %v1867 = vmul.f32 %v1842, %v1860
    %v1868 = vadd.f32 %v1806, %v1861
    %v1869 = vadd.f32 %v1807, %v1862
    %v1870 = vadd.f32 %v1808, %v1863
    %v1871 = vadd.f32 %v1809, %v1864
    %v1872 = vadd.f32 %v1810, %v1865
    %v1873 = vadd.f32 %v1811, %v1866
    %v1874 = vadd.f32 %v1812, %v1867
    %s1875 = sld [smem:[#allocation7 + $0x42]]
    %v1876 = vstv %s1875
    %v1877 = vmul.f32 %v1830, %v1876
    %v1878 = vmul.f32 %v1832, %v1876
    %v1879 = vmul.f32 %v1834, %v1876
    %v1880 = vmul.f32 %v1836, %v1876
    %v1881 = vmul.f32 %v1838, %v1876
    %v1882 = vmul.f32 %v1840, %v1876
    %v1883 = vmul.f32 %v1842, %v1876
    %v1884 = vadd.f32 %v1822, %v1877
    %v1885 = vadd.f32 %v1823, %v1878
    %v1886 = vadd.f32 %v1824, %v1879
    %v1887 = vadd.f32 %v1825, %v1880
    %v1888 = vadd.f32 %v1826, %v1881
    %v1889 = vadd.f32 %v1827, %v1882
    %v1890 = vadd.f32 %v1828, %v1883
    %v1891 = vld [vmem:[%s922 + $0x9] sm:$0xff]
    %v1892 = vld [vmem:[%s922 + $0x11] sm:$0xff]
    %v1893 = vld [vmem:[%s922 + $0x19] sm:$0xff]
    %v1894 = vld [vmem:[%s922 + $0x21] sm:$0xff]
    %v1895 = vld [vmem:[%s922 + $0x29] sm:$0xff]
    %v1896 = vld [vmem:[%s922 + $0x31] sm:$0xff]
    %v1897 = vld [vmem:[%s922 + $0x39] sm:$0xff]
    %1898 = vrot.lane.b32.xlu0 %v1891, 1
    %v1899 = vpop.permute.xlu0 %1898
    %1900 = vrot.lane.b32.xlu0 %v1892, 1
    %v1901 = vpop.permute.xlu0 %1900
    %1902 = vrot.lane.b32.xlu0 %v1893, 1
    %v1903 = vpop.permute.xlu0 %1902
    %1904 = vrot.lane.b32.xlu0 %v1894, 1
    %v1905 = vpop.permute.xlu0 %1904
    %1906 = vrot.lane.b32.xlu0 %v1895, 1
    %v1907 = vpop.permute.xlu0 %1906
    %1908 = vrot.lane.b32.xlu0 %v1896, 1
    %v1909 = vpop.permute.xlu0 %1908
    %1910 = vrot.lane.b32.xlu0 %v1897, 1
    %v1911 = vpop.permute.xlu0 %1910
    %s1912 = sld [smem:[#allocation7 + $0x2f]]
    %v1913 = vstv %s1912
    %v1914 = vmul.f32 %v1899, %v1913
    %v1915 = vmul.f32 %v1901, %v1913
    %v1916 = vmul.f32 %v1903, %v1913
    %v1917 = vmul.f32 %v1905, %v1913
    %v1918 = vmul.f32 %v1907, %v1913
    %v1919 = vmul.f32 %v1909, %v1913
    %v1920 = vmul.f32 %v1911, %v1913
    %v1921 = vadd.f32 %v1852, %v1914
    %v1922 = vadd.f32 %v1853, %v1915
    %v1923 = vadd.f32 %v1854, %v1916
    %v1924 = vadd.f32 %v1855, %v1917
    %v1925 = vadd.f32 %v1856, %v1918
    %v1926 = vadd.f32 %v1857, %v1919
    %v1927 = vadd.f32 %v1858, %v1920
    %s1928 = sld [smem:[#allocation7 + $0x38]]
    %v1929 = vstv %s1928
    %v1930 = vmul.f32 %v1899, %v1929
    %v1931 = vmul.f32 %v1901, %v1929
    %v1932 = vmul.f32 %v1903, %v1929
    %v1933 = vmul.f32 %v1905, %v1929
    %v1934 = vmul.f32 %v1907, %v1929
    %v1935 = vmul.f32 %v1909, %v1929
    %v1936 = vmul.f32 %v1911, %v1929
    %v1937 = vadd.f32 %v1868, %v1930
    %v1938 = vadd.f32 %v1869, %v1931
    %v1939 = vadd.f32 %v1870, %v1932
    %v1940 = vadd.f32 %v1871, %v1933
    %v1941 = vadd.f32 %v1872, %v1934
    %v1942 = vadd.f32 %v1873, %v1935
    %v1943 = vadd.f32 %v1874, %v1936
    %s1944 = sld [smem:[#allocation7 + $0x41]]
    %v1945 = vstv %s1944
    %v1946 = vmul.f32 %v1899, %v1945
    %v1947 = vmul.f32 %v1901, %v1945
    %v1948 = vmul.f32 %v1903, %v1945
    %v1949 = vmul.f32 %v1905, %v1945
    %v1950 = vmul.f32 %v1907, %v1945
    %v1951 = vmul.f32 %v1909, %v1945
    %v1952 = vmul.f32 %v1911, %v1945
    %v1953 = vadd.f32 %v1884, %v1946
    %v1954 = vadd.f32 %v1885, %v1947
    %v1955 = vadd.f32 %v1886, %v1948
    %v1956 = vadd.f32 %v1887, %v1949
    %v1957 = vadd.f32 %v1888, %v1950
    %v1958 = vadd.f32 %v1889, %v1951
    %v1959 = vadd.f32 %v1890, %v1952
    %s1960 = sld [smem:[#allocation7 + $0x2e]]
    %v1961 = vstv %s1960
    %v1962 = vmul.f32 %v1891, %v1961
    %v1963 = vmul.f32 %v1892, %v1961
    %v1964 = vmul.f32 %v1893, %v1961
    %v1965 = vmul.f32 %v1894, %v1961
    %v1966 = vmul.f32 %v1895, %v1961
    %v1967 = vmul.f32 %v1896, %v1961
    %v1968 = vmul.f32 %v1897, %v1961
    %v1969 = vadd.f32 %v1921, %v1962
    %v1970 = vadd.f32 %v1922, %v1963
    %v1971 = vadd.f32 %v1923, %v1964
    %v1972 = vadd.f32 %v1924, %v1965
    %v1973 = vadd.f32 %v1925, %v1966
    %v1974 = vadd.f32 %v1926, %v1967
    %v1975 = vadd.f32 %v1927, %v1968
    %s1976 = sld [smem:[#allocation7 + $0x37]]
    %v1977 = vstv %s1976
    %v1978 = vmul.f32 %v1891, %v1977
    %v1979 = vmul.f32 %v1892, %v1977
    %v1980 = vmul.f32 %v1893, %v1977
    %v1981 = vmul.f32 %v1894, %v1977
    %v1982 = vmul.f32 %v1895, %v1977
    %v1983 = vmul.f32 %v1896, %v1977
    %v1984 = vmul.f32 %v1897, %v1977
    %v1985 = vadd.f32 %v1937, %v1978
    %v1986 = vadd.f32 %v1938, %v1979
    %v1987 = vadd.f32 %v1939, %v1980
    %v1988 = vadd.f32 %v1940, %v1981
    %v1989 = vadd.f32 %v1941, %v1982
    %v1990 = vadd.f32 %v1942, %v1983
    %v1991 = vadd.f32 %v1943, %v1984
    %s1992 = sld [smem:[#allocation7 + $0x40]]
    %v1993 = vstv %s1992
    %v1994 = vmul.f32 %v1891, %v1993
    %v1995 = vmul.f32 %v1892, %v1993
    %v1996 = vmul.f32 %v1893, %v1993
    %v1997 = vmul.f32 %v1894, %v1993
    %v1998 = vmul.f32 %v1895, %v1993
    %v1999 = vmul.f32 %v1896, %v1993
    %v2000 = vmul.f32 %v1897, %v1993
    %v2001 = vadd.f32 %v1953, %v1994
    %v2002 = vadd.f32 %v1954, %v1995
    %v2003 = vadd.f32 %v1955, %v1996
    %v2004 = vadd.f32 %v1956, %v1997
    %v2005 = vadd.f32 %v1957, %v1998
    %v2006 = vadd.f32 %v1958, %v1999
    %v2007 = vadd.f32 %v1959, %v2000
    %2008 = vrot.lane.b32.xlu0 %v1891, 127
    %v2009 = vpop.permute.xlu0 %2008
    %2010 = vrot.lane.b32.xlu0 %v1892, 127
    %v2011 = vpop.permute.xlu0 %2010
    %2012 = vrot.lane.b32.xlu0 %v1893, 127
    %v2013 = vpop.permute.xlu0 %2012
    %2014 = vrot.lane.b32.xlu0 %v1894, 127
    %v2015 = vpop.permute.xlu0 %2014
    %2016 = vrot.lane.b32.xlu0 %v1895, 127
    %v2017 = vpop.permute.xlu0 %2016
    %2018 = vrot.lane.b32.xlu0 %v1896, 127
    %v2019 = vpop.permute.xlu0 %2018
    %2020 = vrot.lane.b32.xlu0 %v1897, 127
    %v2021 = vpop.permute.xlu0 %2020
    %s2022 = sld [smem:[#allocation7 + $0x2d]]
    %v2023 = vstv %s2022
    %v2024 = vmul.f32 %v2009, %v2023
    %v2025 = vmul.f32 %v2011, %v2023
    %v2026 = vmul.f32 %v2013, %v2023
    %v2027 = vmul.f32 %v2015, %v2023
    %v2028 = vmul.f32 %v2017, %v2023
    %v2029 = vmul.f32 %v2019, %v2023
    %v2030 = vmul.f32 %v2021, %v2023
    %v2031 = vadd.f32 %v1969, %v2024
    %v2032 = vadd.f32 %v1970, %v2025
    %v2033 = vadd.f32 %v1971, %v2026
    %v2034 = vadd.f32 %v1972, %v2027
    %v2035 = vadd.f32 %v1973, %v2028
    %v2036 = vadd.f32 %v1974, %v2029
    %v2037 = vadd.f32 %v1975, %v2030
    %s2038 = sld [smem:[#allocation7 + $0x36]]
    %v2039 = vstv %s2038
    %v2040 = vmul.f32 %v2009, %v2039
    %v2041 = vmul.f32 %v2011, %v2039
    %v2042 = vmul.f32 %v2013, %v2039
    %v2043 = vmul.f32 %v2015, %v2039
    %v2044 = vmul.f32 %v2017, %v2039
    %v2045 = vmul.f32 %v2019, %v2039
    %v2046 = vmul.f32 %v2021, %v2039
    %v2047 = vadd.f32 %v1985, %v2040
    %v2048 = vadd.f32 %v1986, %v2041
    %v2049 = vadd.f32 %v1987, %v2042
    %v2050 = vadd.f32 %v1988, %v2043
    %v2051 = vadd.f32 %v1989, %v2044
    %v2052 = vadd.f32 %v1990, %v2045
    %v2053 = vadd.f32 %v1991, %v2046
    %s2054 = sld [smem:[#allocation7 + $0x3f]]
    %v2055 = vstv %s2054
    %v2056 = vmul.f32 %v2009, %v2055
    %v2057 = vmul.f32 %v2011, %v2055
    %v2058 = vmul.f32 %v2013, %v2055
    %v2059 = vmul.f32 %v2015, %v2055
    %v2060 = vmul.f32 %v2017, %v2055
    %v2061 = vmul.f32 %v2019, %v2055
    %v2062 = vmul.f32 %v2021, %v2055
    %v2063 = vadd.f32 %v2001, %v2056
    %v2064 = vadd.f32 %v2002, %v2057
    %v2065 = vadd.f32 %v2003, %v2058
    %v2066 = vadd.f32 %v2004, %v2059
    %v2067 = vadd.f32 %v2005, %v2060
    %v2068 = vadd.f32 %v2006, %v2061
    %v2069 = vadd.f32 %v2007, %v2062
    %v2070 = vld [vmem:[%s939 + $0x7] sm:$0xff]
    %v2071 = vld [vmem:[%s939 + $0xf] sm:$0xff]
    %v2072 = vld [vmem:[%s939 + $0x17] sm:$0xff]
    %v2073 = vld [vmem:[%s939 + $0x1f] sm:$0xff]
    %v2074 = vld [vmem:[%s939 + $0x27] sm:$0xff]
    %v2075 = vld [vmem:[%s939 + $0x2f] sm:$0xff]
    %v2076 = vld [vmem:[%s939 + $0x37] sm:$0xff]
    %2077 = vrot.lane.b32.xlu0 %v2070, 1
    %v2078 = vpop.permute.xlu0 %2077
    %2079 = vrot.lane.b32.xlu0 %v2071, 1
    %v2080 = vpop.permute.xlu0 %2079
    %2081 = vrot.lane.b32.xlu0 %v2072, 1
    %v2082 = vpop.permute.xlu0 %2081
    %2083 = vrot.lane.b32.xlu0 %v2073, 1
    %v2084 = vpop.permute.xlu0 %2083
    %2085 = vrot.lane.b32.xlu0 %v2074, 1
    %v2086 = vpop.permute.xlu0 %2085
    %2087 = vrot.lane.b32.xlu0 %v2075, 1
    %v2088 = vpop.permute.xlu0 %2087
    %2089 = vrot.lane.b32.xlu0 %v2076, 1
    %v2090 = vpop.permute.xlu0 %2089
    %s2091 = sld [smem:[#allocation7 + $0x62]]
    %v2092 = vstv %s2091
    %v2093 = vmul.f32 %v2078, %v2092
    %v2094 = vmul.f32 %v2080, %v2092
    %v2095 = vmul.f32 %v2082, %v2092
    %v2096 = vmul.f32 %v2084, %v2092
    %v2097 = vmul.f32 %v2086, %v2092
    %v2098 = vmul.f32 %v2088, %v2092
    %v2099 = vmul.f32 %v2090, %v2092
    %v2100 = vadd.f32 %v2031, %v2093
    %v2101 = vadd.f32 %v2032, %v2094
    %v2102 = vadd.f32 %v2033, %v2095
    %v2103 = vadd.f32 %v2034, %v2096
    %v2104 = vadd.f32 %v2035, %v2097
    %v2105 = vadd.f32 %v2036, %v2098
    %v2106 = vadd.f32 %v2037, %v2099
    %s2107 = sld [smem:[#allocation7 + $0x6b]]
    %v2108 = vstv %s2107
    %v2109 = vmul.f32 %v2078, %v2108
    %v2110 = vmul.f32 %v2080, %v2108
    %v2111 = vmul.f32 %v2082, %v2108
    %v2112 = vmul.f32 %v2084, %v2108
    %v2113 = vmul.f32 %v2086, %v2108
    %v2114 = vmul.f32 %v2088, %v2108
    %v2115 = vmul.f32 %v2090, %v2108
    %v2116 = vadd.f32 %v2047, %v2109
    %v2117 = vadd.f32 %v2048, %v2110
    %v2118 = vadd.f32 %v2049, %v2111
    %v2119 = vadd.f32 %v2050, %v2112
    %v2120 = vadd.f32 %v2051, %v2113
    %v2121 = vadd.f32 %v2052, %v2114
    %v2122 = vadd.f32 %v2053, %v2115
    %s2123 = sld [smem:[#allocation7 + $0x74]]
    %v2124 = vstv %s2123
    %v2125 = vmul.f32 %v2078, %v2124
    %v2126 = vmul.f32 %v2080, %v2124
    %v2127 = vmul.f32 %v2082, %v2124
    %v2128 = vmul.f32 %v2084, %v2124
    %v2129 = vmul.f32 %v2086, %v2124
    %v2130 = vmul.f32 %v2088, %v2124
    %v2131 = vmul.f32 %v2090, %v2124
    %v2132 = vadd.f32 %v2063, %v2125
    %v2133 = vadd.f32 %v2064, %v2126
    %v2134 = vadd.f32 %v2065, %v2127
    %v2135 = vadd.f32 %v2066, %v2128
    %v2136 = vadd.f32 %v2067, %v2129
    %v2137 = vadd.f32 %v2068, %v2130
    %v2138 = vadd.f32 %v2069, %v2131
    %s2139 = sld [smem:[#allocation7 + $0x61]]
    %v2140 = vstv %s2139
    %v2141 = vmul.f32 %v2070, %v2140
    %v2142 = vmul.f32 %v2071, %v2140
    %v2143 = vmul.f32 %v2072, %v2140
    %v2144 = vmul.f32 %v2073, %v2140
    %v2145 = vmul.f32 %v2074, %v2140
    %v2146 = vmul.f32 %v2075, %v2140
    %v2147 = vmul.f32 %v2076, %v2140
    %v2148 = vadd.f32 %v2100, %v2141
    %v2149 = vadd.f32 %v2101, %v2142
    %v2150 = vadd.f32 %v2102, %v2143
    %v2151 = vadd.f32 %v2103, %v2144
    %v2152 = vadd.f32 %v2104, %v2145
    %v2153 = vadd.f32 %v2105, %v2146
    %v2154 = vadd.f32 %v2106, %v2147
    %s2155 = sld [smem:[#allocation7 + $0x6a]]
    %v2156 = vstv %s2155
    %v2157 = vmul.f32 %v2070, %v2156
    %v2158 = vmul.f32 %v2071, %v2156
    %v2159 = vmul.f32 %v2072, %v2156
    %v2160 = vmul.f32 %v2073, %v2156
    %v2161 = vmul.f32 %v2074, %v2156
    %v2162 = vmul.f32 %v2075, %v2156
    %v2163 = vmul.f32 %v2076, %v2156
    %v2164 = vadd.f32 %v2116, %v2157
    %v2165 = vadd.f32 %v2117, %v2158
    %v2166 = vadd.f32 %v2118, %v2159
    %v2167 = vadd.f32 %v2119, %v2160
    %v2168 = vadd.f32 %v2120, %v2161
    %v2169 = vadd.f32 %v2121, %v2162
    %v2170 = vadd.f32 %v2122, %v2163
    %s2171 = sld [smem:[#allocation7 + $0x73]]
    %v2172 = vstv %s2171
    %v2173 = vmul.f32 %v2070, %v2172
    %v2174 = vmul.f32 %v2071, %v2172
    %v2175 = vmul.f32 %v2072, %v2172
    %v2176 = vmul.f32 %v2073, %v2172
    %v2177 = vmul.f32 %v2074, %v2172
    %v2178 = vmul.f32 %v2075, %v2172
    %v2179 = vmul.f32 %v2076, %v2172
    %v2180 = vadd.f32 %v2132, %v2173
    %v2181 = vadd.f32 %v2133, %v2174
    %v2182 = vadd.f32 %v2134, %v2175
    %v2183 = vadd.f32 %v2135, %v2176
    %v2184 = vadd.f32 %v2136, %v2177
    %v2185 = vadd.f32 %v2137, %v2178
    %v2186 = vadd.f32 %v2138, %v2179
    %2187 = vrot.lane.b32.xlu0 %v2070, 127
    %v2188 = vpop.permute.xlu0 %2187
    %2189 = vrot.lane.b32.xlu0 %v2071, 127
    %v2190 = vpop.permute.xlu0 %2189
    %2191 = vrot.lane.b32.xlu0 %v2072, 127
    %v2192 = vpop.permute.xlu0 %2191
    %2193 = vrot.lane.b32.xlu0 %v2073, 127
    %v2194 = vpop.permute.xlu0 %2193
    %2195 = vrot.lane.b32.xlu0 %v2074, 127
    %v2196 = vpop.permute.xlu0 %2195
    %2197 = vrot.lane.b32.xlu0 %v2075, 127
    %v2198 = vpop.permute.xlu0 %2197
    %2199 = vrot.lane.b32.xlu0 %v2076, 127
    %v2200 = vpop.permute.xlu0 %2199
    %s2201 = sld [smem:[#allocation7 + $0x60]]
    %v2202 = vstv %s2201
    %v2203 = vmul.f32 %v2188, %v2202
    %v2204 = vmul.f32 %v2190, %v2202
    %v2205 = vmul.f32 %v2192, %v2202
    %v2206 = vmul.f32 %v2194, %v2202
    %v2207 = vmul.f32 %v2196, %v2202
    %v2208 = vmul.f32 %v2198, %v2202
    %v2209 = vmul.f32 %v2200, %v2202
    %v2210 = vadd.f32 %v2148, %v2203
    %v2211 = vadd.f32 %v2149, %v2204
    %v2212 = vadd.f32 %v2150, %v2205
    %v2213 = vadd.f32 %v2151, %v2206
    %v2214 = vadd.f32 %v2152, %v2207
    %v2215 = vadd.f32 %v2153, %v2208
    %v2216 = vadd.f32 %v2154, %v2209
    %s2217 = sld [smem:[#allocation7 + $0x69]]
    %v2218 = vstv %s2217
    %v2219 = vmul.f32 %v2188, %v2218
    %v2220 = vmul.f32 %v2190, %v2218
    %v2221 = vmul.f32 %v2192, %v2218
    %v2222 = vmul.f32 %v2194, %v2218
    %v2223 = vmul.f32 %v2196, %v2218
    %v2224 = vmul.f32 %v2198, %v2218
    %v2225 = vmul.f32 %v2200, %v2218
    %v2226 = vadd.f32 %v2164, %v2219
    %v2227 = vadd.f32 %v2165, %v2220
    %v2228 = vadd.f32 %v2166, %v2221
    %v2229 = vadd.f32 %v2167, %v2222
    %v2230 = vadd.f32 %v2168, %v2223
    %v2231 = vadd.f32 %v2169, %v2224
    %v2232 = vadd.f32 %v2170, %v2225
    %s2233 = sld [smem:[#allocation7 + $0x72]]
    %v2234 = vstv %s2233
    %v2235 = vmul.f32 %v2188, %v2234
    %v2236 = vmul.f32 %v2190, %v2234
    %v2237 = vmul.f32 %v2192, %v2234
    %v2238 = vmul.f32 %v2194, %v2234
    %v2239 = vmul.f32 %v2196, %v2234
    %v2240 = vmul.f32 %v2198, %v2234
    %v2241 = vmul.f32 %v2200, %v2234
    %v2242 = vadd.f32 %v2180, %v2235
    %v2243 = vadd.f32 %v2181, %v2236
    %v2244 = vadd.f32 %v2182, %v2237
    %v2245 = vadd.f32 %v2183, %v2238
    %v2246 = vadd.f32 %v2184, %v2239
    %v2247 = vadd.f32 %v2185, %v2240
    %v2248 = vadd.f32 %v2186, %v2241
    %v2249 = vld [vmem:[%s939 + $0x8] sm:$0xff]
    %v2250 = vld [vmem:[%s939 + $0x10] sm:$0xff]
    %v2251 = vld [vmem:[%s939 + $0x18] sm:$0xff]
    %v2252 = vld [vmem:[%s939 + $0x20] sm:$0xff]
    %v2253 = vld [vmem:[%s939 + $0x28] sm:$0xff]
    %v2254 = vld [vmem:[%s939 + $0x30] sm:$0xff]
    %v2255 = vld [vmem:[%s939 + $0x38] sm:$0xff]
    %2256 = vrot.lane.b32.xlu0 %v2249, 1
    %v2257 = vpop.permute.xlu0 %2256
    %2258 = vrot.lane.b32.xlu0 %v2250, 1
    %v2259 = vpop.permute.xlu0 %2258
    %2260 = vrot.lane.b32.xlu0 %v2251, 1
    %v2261 = vpop.permute.xlu0 %2260
    %2262 = vrot.lane.b32.xlu0 %v2252, 1
    %v2263 = vpop.permute.xlu0 %2262
    %2264 = vrot.lane.b32.xlu0 %v2253, 1
    %v2265 = vpop.permute.xlu0 %2264
    %2266 = vrot.lane.b32.xlu0 %v2254, 1
    %v2267 = vpop.permute.xlu0 %2266
    %2268 = vrot.lane.b32.xlu0 %v2255, 1
    %v2269 = vpop.permute.xlu0 %2268
    %s2270 = sld [smem:[#allocation7 + $0x5f]]
    %v2271 = vstv %s2270
    %v2272 = vmul.f32 %v2257, %v2271
    %v2273 = vmul.f32 %v2259, %v2271
    %v2274 = vmul.f32 %v2261, %v2271
    %v2275 = vmul.f32 %v2263, %v2271
    %v2276 = vmul.f32 %v2265, %v2271
    %v2277 = vmul.f32 %v2267, %v2271
    %v2278 = vmul.f32 %v2269, %v2271
    %v2279 = vadd.f32 %v2210, %v2272
    %v2280 = vadd.f32 %v2211, %v2273
    %v2281 = vadd.f32 %v2212, %v2274
    %v2282 = vadd.f32 %v2213, %v2275
    %v2283 = vadd.f32 %v2214, %v2276
    %v2284 = vadd.f32 %v2215, %v2277
    %v2285 = vadd.f32 %v2216, %v2278
    %s2286 = sld [smem:[#allocation7 + $0x68]]
    %v2287 = vstv %s2286
    %v2288 = vmul.f32 %v2257, %v2287
    %v2289 = vmul.f32 %v2259, %v2287
    %v2290 = vmul.f32 %v2261, %v2287
    %v2291 = vmul.f32 %v2263, %v2287
    %v2292 = vmul.f32 %v2265, %v2287
    %v2293 = vmul.f32 %v2267, %v2287
    %v2294 = vmul.f32 %v2269, %v2287
    %v2295 = vadd.f32 %v2226, %v2288
    %v2296 = vadd.f32 %v2227, %v2289
    %v2297 = vadd.f32 %v2228, %v2290
    %v2298 = vadd.f32 %v2229, %v2291
    %v2299 = vadd.f32 %v2230, %v2292
    %v2300 = vadd.f32 %v2231, %v2293
    %v2301 = vadd.f32 %v2232, %v2294
    %s2302 = sld [smem:[#allocation7 + $0x71]]
    %v2303 = vstv %s2302
    %v2304 = vmul.f32 %v2257, %v2303
    %v2305 = vmul.f32 %v2259, %v2303
    %v2306 = vmul.f32 %v2261, %v2303
    %v2307 = vmul.f32 %v2263, %v2303
    %v2308 = vmul.f32 %v2265, %v2303
    %v2309 = vmul.f32 %v2267, %v2303
    %v2310 = vmul.f32 %v2269, %v2303
    %v2311 = vadd.f32 %v2242, %v2304
    %v2312 = vadd.f32 %v2243, %v2305
    %v2313 = vadd.f32 %v2244, %v2306
    %v2314 = vadd.f32 %v2245, %v2307
    %v2315 = vadd.f32 %v2246, %v2308
    %v2316 = vadd.f32 %v2247, %v2309
    %v2317 = vadd.f32 %v2248, %v2310
    %s2318 = sld [smem:[#allocation7 + $0x5e]]
    %v2319 = vstv %s2318
    %v2320 = vmul.f32 %v2249, %v2319
    %v2321 = vmul.f32 %v2250, %v2319
    %v2322 = vmul.f32 %v2251, %v2319
    %v2323 = vmul.f32 %v2252, %v2319
    %v2324 = vmul.f32 %v2253, %v2319
    %v2325 = vmul.f32 %v2254, %v2319
    %v2326 = vmul.f32 %v2255, %v2319
    %v2327 = vadd.f32 %v2279, %v2320
    %v2328 = vadd.f32 %v2280, %v2321
    %v2329 = vadd.f32 %v2281, %v2322
    %v2330 = vadd.f32 %v2282, %v2323
    %v2331 = vadd.f32 %v2283, %v2324
    %v2332 = vadd.f32 %v2284, %v2325
    %v2333 = vadd.f32 %v2285, %v2326
    %s2334 = sld [smem:[#allocation7 + $0x67]]
    %v2335 = vstv %s2334
    %v2336 = vmul.f32 %v2249, %v2335
    %v2337 = vmul.f32 %v2250, %v2335
    %v2338 = vmul.f32 %v2251, %v2335
    %v2339 = vmul.f32 %v2252, %v2335
    %v2340 = vmul.f32 %v2253, %v2335
    %v2341 = vmul.f32 %v2254, %v2335
    %v2342 = vmul.f32 %v2255, %v2335
    %v2343 = vadd.f32 %v2295, %v2336
    %v2344 = vadd.f32 %v2296, %v2337
    %v2345 = vadd.f32 %v2297, %v2338
    %v2346 = vadd.f32 %v2298, %v2339
    %v2347 = vadd.f32 %v2299, %v2340
    %v2348 = vadd.f32 %v2300, %v2341
    %v2349 = vadd.f32 %v2301, %v2342
    %s2350 = sld [smem:[#allocation7 + $0x70]]
    %v2351 = vstv %s2350
    %v2352 = vmul.f32 %v2249, %v2351
    %v2353 = vmul.f32 %v2250, %v2351
    %v2354 = vmul.f32 %v2251, %v2351
    %v2355 = vmul.f32 %v2252, %v2351
    %v2356 = vmul.f32 %v2253, %v2351
    %v2357 = vmul.f32 %v2254, %v2351
    %v2358 = vmul.f32 %v2255, %v2351
    %v2359 = vadd.f32 %v2311, %v2352
    %v2360 = vadd.f32 %v2312, %v2353
    %v2361 = vadd.f32 %v2313, %v2354
    %v2362 = vadd.f32 %v2314, %v2355
    %v2363 = vadd.f32 %v2315, %v2356
    %v2364 = vadd.f32 %v2316, %v2357
    %v2365 = vadd.f32 %v2317, %v2358
    %2366 = vrot.lane.b32.xlu0 %v2249, 127
    %v2367 = vpop.permute.xlu0 %2366
    %2368 = vrot.lane.b32.xlu0 %v2250, 127
    %v2369 = vpop.permute.xlu0 %2368
    %2370 = vrot.lane.b32.xlu0 %v2251, 127
    %v2371 = vpop.permute.xlu0 %2370
    %2372 = vrot.lane.b32.xlu0 %v2252, 127
    %v2373 = vpop.permute.xlu0 %2372
    %2374 = vrot.lane.b32.xlu0 %v2253, 127
    %v2375 = vpop.permute.xlu0 %2374
    %2376 = vrot.lane.b32.xlu0 %v2254, 127
    %v2377 = vpop.permute.xlu0 %2376
    %2378 = vrot.lane.b32.xlu0 %v2255, 127
    %v2379 = vpop.permute.xlu0 %2378
    %s2380 = sld [smem:[#allocation7 + $0x5d]]
    %v2381 = vstv %s2380
    %v2382 = vmul.f32 %v2367, %v2381
    %v2383 = vmul.f32 %v2369, %v2381
    %v2384 = vmul.f32 %v2371, %v2381
    %v2385 = vmul.f32 %v2373, %v2381
    %v2386 = vmul.f32 %v2375, %v2381
    %v2387 = vmul.f32 %v2377, %v2381
    %v2388 = vmul.f32 %v2379, %v2381
    %v2389 = vadd.f32 %v2327, %v2382
    %v2390 = vadd.f32 %v2328, %v2383
    %v2391 = vadd.f32 %v2329, %v2384
    %v2392 = vadd.f32 %v2330, %v2385
    %v2393 = vadd.f32 %v2331, %v2386
    %v2394 = vadd.f32 %v2332, %v2387
    %v2395 = vadd.f32 %v2333, %v2388
    %s2396 = sld [smem:[#allocation7 + $0x66]]
    %v2397 = vstv %s2396
    %v2398 = vmul.f32 %v2367, %v2397
    %v2399 = vmul.f32 %v2369, %v2397
    %v2400 = vmul.f32 %v2371, %v2397
    %v2401 = vmul.f32 %v2373, %v2397
    %v2402 = vmul.f32 %v2375, %v2397
    %v2403 = vmul.f32 %v2377, %v2397
    %v2404 = vmul.f32 %v2379, %v2397
    %v2405 = vadd.f32 %v2343, %v2398
    %v2406 = vadd.f32 %v2344, %v2399
    %v2407 = vadd.f32 %v2345, %v2400
    %v2408 = vadd.f32 %v2346, %v2401
    %v2409 = vadd.f32 %v2347, %v2402
    %v2410 = vadd.f32 %v2348, %v2403
    %v2411 = vadd.f32 %v2349, %v2404
    %s2412 = sld [smem:[#allocation7 + $0x6f]]
    %v2413 = vstv %s2412
    %v2414 = vmul.f32 %v2367, %v2413
    %v2415 = vmul.f32 %v2369, %v2413
    %v2416 = vmul.f32 %v2371, %v2413
    %v2417 = vmul.f32 %v2373, %v2413
    %v2418 = vmul.f32 %v2375, %v2413
    %v2419 = vmul.f32 %v2377, %v2413
    %v2420 = vmul.f32 %v2379, %v2413
    %v2421 = vadd.f32 %v2359, %v2414
    %v2422 = vadd.f32 %v2360, %v2415
    %v2423 = vadd.f32 %v2361, %v2416
    %v2424 = vadd.f32 %v2362, %v2417
    %v2425 = vadd.f32 %v2363, %v2418
    %v2426 = vadd.f32 %v2364, %v2419
    %v2427 = vadd.f32 %v2365, %v2420
    %v2428 = vld [vmem:[%s939 + $0x9] sm:$0xff]
    %v2429 = vld [vmem:[%s939 + $0x11] sm:$0xff]
    %v2430 = vld [vmem:[%s939 + $0x19] sm:$0xff]
    %v2431 = vld [vmem:[%s939 + $0x21] sm:$0xff]
    %v2432 = vld [vmem:[%s939 + $0x29] sm:$0xff]
    %v2433 = vld [vmem:[%s939 + $0x31] sm:$0xff]
    %v2434 = vld [vmem:[%s939 + $0x39] sm:$0xff]
    %2435 = vrot.lane.b32.xlu0 %v2428, 1
    %v2436 = vpop.permute.xlu0 %2435
    %2437 = vrot.lane.b32.xlu0 %v2429, 1
    %v2438 = vpop.permute.xlu0 %2437
    %2439 = vrot.lane.b32.xlu0 %v2430, 1
    %v2440 = vpop.permute.xlu0 %2439
    %2441 = vrot.lane.b32.xlu0 %v2431, 1
    %v2442 = vpop.permute.xlu0 %2441
    %2443 = vrot.lane.b32.xlu0 %v2432, 1
    %v2444 = vpop.permute.xlu0 %2443
    %2445 = vrot.lane.b32.xlu0 %v2433, 1
    %v2446 = vpop.permute.xlu0 %2445
    %2447 = vrot.lane.b32.xlu0 %v2434, 1
    %v2448 = vpop.permute.xlu0 %2447
    %s2449 = sld [smem:[#allocation7 + $0x5c]]
    %v2450 = vstv %s2449
    %v2451 = vmul.f32 %v2436, %v2450
    %v2452 = vmul.f32 %v2438, %v2450
    %v2453 = vmul.f32 %v2440, %v2450
    %v2454 = vmul.f32 %v2442, %v2450
    %v2455 = vmul.f32 %v2444, %v2450
    %v2456 = vmul.f32 %v2446, %v2450
    %v2457 = vmul.f32 %v2448, %v2450
    %v2458 = vadd.f32 %v2389, %v2451
    %v2459 = vadd.f32 %v2390, %v2452
    %v2460 = vadd.f32 %v2391, %v2453
    %v2461 = vadd.f32 %v2392, %v2454
    %v2462 = vadd.f32 %v2393, %v2455
    %v2463 = vadd.f32 %v2394, %v2456
    %v2464 = vadd.f32 %v2395, %v2457
    %s2465 = sld [smem:[#allocation7 + $0x65]]
    %v2466 = vstv %s2465
    %v2467 = vmul.f32 %v2436, %v2466
    %v2468 = vmul.f32 %v2438, %v2466
    %v2469 = vmul.f32 %v2440, %v2466
    %v2470 = vmul.f32 %v2442, %v2466
    %v2471 = vmul.f32 %v2444, %v2466
    %v2472 = vmul.f32 %v2446, %v2466
    %v2473 = vmul.f32 %v2448, %v2466
    %v2474 = vadd.f32 %v2405, %v2467
    %v2475 = vadd.f32 %v2406, %v2468
    %v2476 = vadd.f32 %v2407, %v2469
    %v2477 = vadd.f32 %v2408, %v2470
    %v2478 = vadd.f32 %v2409, %v2471
    %v2479 = vadd.f32 %v2410, %v2472
    %v2480 = vadd.f32 %v2411, %v2473
    %s2481 = sld [smem:[#allocation7 + $0x6e]]
    %v2482 = vstv %s2481
    %v2483 = vmul.f32 %v2436, %v2482
    %v2484 = vmul.f32 %v2438, %v2482
    %v2485 = vmul.f32 %v2440, %v2482
    %v2486 = vmul.f32 %v2442, %v2482
    %v2487 = vmul.f32 %v2444, %v2482
    %v2488 = vmul.f32 %v2446, %v2482
    %v2489 = vmul.f32 %v2448, %v2482
    %v2490 = vadd.f32 %v2421, %v2483
    %v2491 = vadd.f32 %v2422, %v2484
    %v2492 = vadd.f32 %v2423, %v2485
    %v2493 = vadd.f32 %v2424, %v2486
    %v2494 = vadd.f32 %v2425, %v2487
    %v2495 = vadd.f32 %v2426, %v2488
    %v2496 = vadd.f32 %v2427, %v2489
    %s2497 = sld [smem:[#allocation7 + $0x5b]]
    %v2498 = vstv %s2497
    %v2499 = vmul.f32 %v2428, %v2498
    %v2500 = vmul.f32 %v2429, %v2498
    %v2501 = vmul.f32 %v2430, %v2498
    %v2502 = vmul.f32 %v2431, %v2498
    %v2503 = vmul.f32 %v2432, %v2498
    %v2504 = vmul.f32 %v2433, %v2498
    %v2505 = vmul.f32 %v2434, %v2498
    %v2506 = vadd.f32 %v2458, %v2499
    %v2507 = vadd.f32 %v2459, %v2500
    %v2508 = vadd.f32 %v2460, %v2501
    %v2509 = vadd.f32 %v2461, %v2502
    %v2510 = vadd.f32 %v2462, %v2503
    %v2511 = vadd.f32 %v2463, %v2504
    %v2512 = vadd.f32 %v2464, %v2505
    %s2513 = sld [smem:[#allocation7 + $0x64]]
    %v2514 = vstv %s2513
    %v2515 = vmul.f32 %v2428, %v2514
    %v2516 = vmul.f32 %v2429, %v2514
    %v2517 = vmul.f32 %v2430, %v2514
    %v2518 = vmul.f32 %v2431, %v2514
    %v2519 = vmul.f32 %v2432, %v2514
    %v2520 = vmul.f32 %v2433, %v2514
    %v2521 = vmul.f32 %v2434, %v2514
    %v2522 = vadd.f32 %v2474, %v2515
    %v2523 = vadd.f32 %v2475, %v2516
    %v2524 = vadd.f32 %v2476, %v2517
    %v2525 = vadd.f32 %v2477, %v2518
    %v2526 = vadd.f32 %v2478, %v2519
    %v2527 = vadd.f32 %v2479, %v2520
    %v2528 = vadd.f32 %v2480, %v2521
    %s2529 = sld [smem:[#allocation7 + $0x6d]]
    %v2530 = vstv %s2529
    %v2531 = vmul.f32 %v2428, %v2530
    %v2532 = vmul.f32 %v2429, %v2530
    %v2533 = vmul.f32 %v2430, %v2530
    %v2534 = vmul.f32 %v2431, %v2530
    %v2535 = vmul.f32 %v2432, %v2530
    %v2536 = vmul.f32 %v2433, %v2530
    %v2537 = vmul.f32 %v2434, %v2530
    %v2538 = vadd.f32 %v2490, %v2531
    %v2539 = vadd.f32 %v2491, %v2532
    %v2540 = vadd.f32 %v2492, %v2533
    %v2541 = vadd.f32 %v2493, %v2534
    %v2542 = vadd.f32 %v2494, %v2535
    %v2543 = vadd.f32 %v2495, %v2536
    %v2544 = vadd.f32 %v2496, %v2537
    %2545 = vrot.lane.b32.xlu0 %v2428, 127
    %v2546 = vpop.permute.xlu0 %2545
    %2547 = vrot.lane.b32.xlu0 %v2429, 127
    %v2548 = vpop.permute.xlu0 %2547
    %2549 = vrot.lane.b32.xlu0 %v2430, 127
    %v2550 = vpop.permute.xlu0 %2549
    %2551 = vrot.lane.b32.xlu0 %v2431, 127
    %v2552 = vpop.permute.xlu0 %2551
    %2553 = vrot.lane.b32.xlu0 %v2432, 127
    %v2554 = vpop.permute.xlu0 %2553
    %2555 = vrot.lane.b32.xlu0 %v2433, 127
    %v2556 = vpop.permute.xlu0 %2555
    %2557 = vrot.lane.b32.xlu0 %v2434, 127
    %v2558 = vpop.permute.xlu0 %2557
    %s2559 = sld [smem:[#allocation7 + $0x5a]]
    %v2560 = vstv %s2559
    %v2561 = vmul.f32 %v2546, %v2560
    %v2562 = vmul.f32 %v2548, %v2560
    %v2563 = vmul.f32 %v2550, %v2560
    %v2564 = vmul.f32 %v2552, %v2560
    %v2565 = vmul.f32 %v2554, %v2560
    %v2566 = vmul.f32 %v2556, %v2560
    %v2567 = vmul.f32 %v2558, %v2560
    %v2568 = vadd.f32 %v2506, %v2561
    %v2569 = vadd.f32 %v2507, %v2562
    %v2570 = vadd.f32 %v2508, %v2563
    %v2571 = vadd.f32 %v2509, %v2564
    %v2572 = vadd.f32 %v2510, %v2565
    %v2573 = vadd.f32 %v2511, %v2566
    %v2574 = vadd.f32 %v2512, %v2567
    %s2575 = sld [smem:[#allocation7 + $0x63]]
    %v2576 = vstv %s2575
    %v2577 = vmul.f32 %v2546, %v2576
    %v2578 = vmul.f32 %v2548, %v2576
    %v2579 = vmul.f32 %v2550, %v2576
    %v2580 = vmul.f32 %v2552, %v2576
    %v2581 = vmul.f32 %v2554, %v2576
    %v2582 = vmul.f32 %v2556, %v2576
    %v2583 = vmul.f32 %v2558, %v2576
    %v2584 = vadd.f32 %v2522, %v2577
    %v2585 = vadd.f32 %v2523, %v2578
    %v2586 = vadd.f32 %v2524, %v2579
    %v2587 = vadd.f32 %v2525, %v2580
    %v2588 = vadd.f32 %v2526, %v2581
    %v2589 = vadd.f32 %v2527, %v2582
    %v2590 = vadd.f32 %v2528, %v2583
    %s2591 = sld [smem:[#allocation7 + $0x6c]]
    %v2592 = vstv %s2591
    %v2593 = vmul.f32 %v2546, %v2592
    %v2594 = vmul.f32 %v2548, %v2592
    %v2595 = vmul.f32 %v2550, %v2592
    %v2596 = vmul.f32 %v2552, %v2592
    %v2597 = vmul.f32 %v2554, %v2592
    %v2598 = vmul.f32 %v2556, %v2592
    %v2599 = vmul.f32 %v2558, %v2592
    %v2600 = vadd.f32 %v2538, %v2593
    %v2601 = vadd.f32 %v2539, %v2594
    %v2602 = vadd.f32 %v2540, %v2595
    %v2603 = vadd.f32 %v2541, %v2596
    %v2604 = vadd.f32 %v2542, %v2597
    %v2605 = vadd.f32 %v2543, %v2598
    %v2606 = vadd.f32 %v2544, %v2599
    %v2607 = vld [vmem:[%s956 + $0x7] sm:$0xff]
    %v2608 = vld [vmem:[%s956 + $0xf] sm:$0xff]
    %v2609 = vld [vmem:[%s956 + $0x17] sm:$0xff]
    %v2610 = vld [vmem:[%s956 + $0x1f] sm:$0xff]
    %v2611 = vld [vmem:[%s956 + $0x27] sm:$0xff]
    %v2612 = vld [vmem:[%s956 + $0x2f] sm:$0xff]
    %v2613 = vld [vmem:[%s956 + $0x37] sm:$0xff]
    %2614 = vrot.lane.b32.xlu0 %v2607, 1
    %v2615 = vpop.permute.xlu0 %2614
    %2616 = vrot.lane.b32.xlu0 %v2608, 1
    %v2617 = vpop.permute.xlu0 %2616
    %2618 = vrot.lane.b32.xlu0 %v2609, 1
    %v2619 = vpop.permute.xlu0 %2618
    %2620 = vrot.lane.b32.xlu0 %v2610, 1
    %v2621 = vpop.permute.xlu0 %2620
    %2622 = vrot.lane.b32.xlu0 %v2611, 1
    %v2623 = vpop.permute.xlu0 %2622
    %2624 = vrot.lane.b32.xlu0 %v2612, 1
    %v2625 = vpop.permute.xlu0 %2624
    %2626 = vrot.lane.b32.xlu0 %v2613, 1
    %v2627 = vpop.permute.xlu0 %2626
    %s2628 = sld [smem:[#allocation7 + $0x8f]]
    %v2629 = vstv %s2628
    %v2630 = vmul.f32 %v2615, %v2629
    %v2631 = vmul.f32 %v2617, %v2629
    %v2632 = vmul.f32 %v2619, %v2629
    %v2633 = vmul.f32 %v2621, %v2629
    %v2634 = vmul.f32 %v2623, %v2629
    %v2635 = vmul.f32 %v2625, %v2629
    %v2636 = vmul.f32 %v2627, %v2629
    %v2637 = vadd.f32 %v2568, %v2630
    %v2638 = vadd.f32 %v2569, %v2631
    %v2639 = vadd.f32 %v2570, %v2632
    %v2640 = vadd.f32 %v2571, %v2633
    %v2641 = vadd.f32 %v2572, %v2634
    %v2642 = vadd.f32 %v2573, %v2635
    %v2643 = vadd.f32 %v2574, %v2636
    %s2644 = sld [smem:[#allocation7 + $0x98]]
    %v2645 = vstv %s2644
    %v2646 = vmul.f32 %v2615, %v2645
    %v2647 = vmul.f32 %v2617, %v2645
    %v2648 = vmul.f32 %v2619, %v2645
    %v2649 = vmul.f32 %v2621, %v2645
    %v2650 = vmul.f32 %v2623, %v2645
    %v2651 = vmul.f32 %v2625, %v2645
    %v2652 = vmul.f32 %v2627, %v2645
    %v2653 = vadd.f32 %v2584, %v2646
    %v2654 = vadd.f32 %v2585, %v2647
    %v2655 = vadd.f32 %v2586, %v2648
    %v2656 = vadd.f32 %v2587, %v2649
    %v2657 = vadd.f32 %v2588, %v2650
    %v2658 = vadd.f32 %v2589, %v2651
    %v2659 = vadd.f32 %v2590, %v2652
    %s2660 = sld [smem:[#allocation7 + $0xa1]]
    %v2661 = vstv %s2660
    %v2662 = vmul.f32 %v2615, %v2661
    %v2663 = vmul.f32 %v2617, %v2661
    %v2664 = vmul.f32 %v2619, %v2661
    %v2665 = vmul.f32 %v2621, %v2661
    %v2666 = vmul.f32 %v2623, %v2661
    %v2667 = vmul.f32 %v2625, %v2661
    %v2668 = vmul.f32 %v2627, %v2661
    %v2669 = vadd.f32 %v2600, %v2662
    %v2670 = vadd.f32 %v2601, %v2663
    %v2671 = vadd.f32 %v2602, %v2664
    %v2672 = vadd.f32 %v2603, %v2665
    %v2673 = vadd.f32 %v2604, %v2666
    %v2674 = vadd.f32 %v2605, %v2667
    %v2675 = vadd.f32 %v2606, %v2668
    %s2676 = sld [smem:[#allocation7 + $0x8e]]
    %v2677 = vstv %s2676
    %v2678 = vmul.f32 %v2607, %v2677
    %v2679 = vmul.f32 %v2608, %v2677
    %v2680 = vmul.f32 %v2609, %v2677
    %v2681 = vmul.f32 %v2610, %v2677
    %v2682 = vmul.f32 %v2611, %v2677
    %v2683 = vmul.f32 %v2612, %v2677
    %v2684 = vmul.f32 %v2613, %v2677
    %v2685 = vadd.f32 %v2637, %v2678
    %v2686 = vadd.f32 %v2638, %v2679
    %v2687 = vadd.f32 %v2639, %v2680
    %v2688 = vadd.f32 %v2640, %v2681
    %v2689 = vadd.f32 %v2641, %v2682
    %v2690 = vadd.f32 %v2642, %v2683
    %v2691 = vadd.f32 %v2643, %v2684
    %s2692 = sld [smem:[#allocation7 + $0x97]]
    %v2693 = vstv %s2692
    %v2694 = vmul.f32 %v2607, %v2693
    %v2695 = vmul.f32 %v2608, %v2693
    %v2696 = vmul.f32 %v2609, %v2693
    %v2697 = vmul.f32 %v2610, %v2693
    %v2698 = vmul.f32 %v2611, %v2693
    %v2699 = vmul.f32 %v2612, %v2693
    %v2700 = vmul.f32 %v2613, %v2693
    %v2701 = vadd.f32 %v2653, %v2694
    %v2702 = vadd.f32 %v2654, %v2695
    %v2703 = vadd.f32 %v2655, %v2696
    %v2704 = vadd.f32 %v2656, %v2697
    %v2705 = vadd.f32 %v2657, %v2698
    %v2706 = vadd.f32 %v2658, %v2699
    %v2707 = vadd.f32 %v2659, %v2700
    %s2708 = sld [smem:[#allocation7 + $0xa0]]
    %v2709 = vstv %s2708
    %v2710 = vmul.f32 %v2607, %v2709
    %v2711 = vmul.f32 %v2608, %v2709
    %v2712 = vmul.f32 %v2609, %v2709
    %v2713 = vmul.f32 %v2610, %v2709
    %v2714 = vmul.f32 %v2611, %v2709
    %v2715 = vmul.f32 %v2612, %v2709
    %v2716 = vmul.f32 %v2613, %v2709
    %v2717 = vadd.f32 %v2669, %v2710
    %v2718 = vadd.f32 %v2670, %v2711
    %v2719 = vadd.f32 %v2671, %v2712
    %v2720 = vadd.f32 %v2672, %v2713
    %v2721 = vadd.f32 %v2673, %v2714
    %v2722 = vadd.f32 %v2674, %v2715
    %v2723 = vadd.f32 %v2675, %v2716
    %2724 = vrot.lane.b32.xlu0 %v2607, 127
    %v2725 = vpop.permute.xlu0 %2724
    %2726 = vrot.lane.b32.xlu0 %v2608, 127
    %v2727 = vpop.permute.xlu0 %2726
    %2728 = vrot.lane.b32.xlu0 %v2609, 127
    %v2729 = vpop.permute.xlu0 %2728
    %2730 = vrot.lane.b32.xlu0 %v2610, 127
    %v2731 = vpop.permute.xlu0 %2730
    %2732 = vrot.lane.b32.xlu0 %v2611, 127
    %v2733 = vpop.permute.xlu0 %2732
    %2734 = vrot.lane.b32.xlu0 %v2612, 127
    %v2735 = vpop.permute.xlu0 %2734
    %2736 = vrot.lane.b32.xlu0 %v2613, 127
    %v2737 = vpop.permute.xlu0 %2736
    %s2738 = sld [smem:[#allocation7 + $0x8d]]
    %v2739 = vstv %s2738
    %v2740 = vmul.f32 %v2725, %v2739
    %v2741 = vmul.f32 %v2727, %v2739
    %v2742 = vmul.f32 %v2729, %v2739
    %v2743 = vmul.f32 %v2731, %v2739
    %v2744 = vmul.f32 %v2733, %v2739
    %v2745 = vmul.f32 %v2735, %v2739
    %v2746 = vmul.f32 %v2737, %v2739
    %v2747 = vadd.f32 %v2685, %v2740
    %v2748 = vadd.f32 %v2686, %v2741
    %v2749 = vadd.f32 %v2687, %v2742
    %v2750 = vadd.f32 %v2688, %v2743
    %v2751 = vadd.f32 %v2689, %v2744
    %v2752 = vadd.f32 %v2690, %v2745
    %v2753 = vadd.f32 %v2691, %v2746
    %s2754 = sld [smem:[#allocation7 + $0x96]]
    %v2755 = vstv %s2754
    %v2756 = vmul.f32 %v2725, %v2755
    %v2757 = vmul.f32 %v2727, %v2755
    %v2758 = vmul.f32 %v2729, %v2755
    %v2759 = vmul.f32 %v2731, %v2755
    %v2760 = vmul.f32 %v2733, %v2755
    %v2761 = vmul.f32 %v2735, %v2755
    %v2762 = vmul.f32 %v2737, %v2755
    %v2763 = vadd.f32 %v2701, %v2756
    %v2764 = vadd.f32 %v2702, %v2757
    %v2765 = vadd.f32 %v2703, %v2758
    %v2766 = vadd.f32 %v2704, %v2759
    %v2767 = vadd.f32 %v2705, %v2760
    %v2768 = vadd.f32 %v2706, %v2761
    %v2769 = vadd.f32 %v2707, %v2762
    %s2770 = sld [smem:[#allocation7 + $0x9f]]
    %v2771 = vstv %s2770
    %v2772 = vmul.f32 %v2725, %v2771
    %v2773 = vmul.f32 %v2727, %v2771
    %v2774 = vmul.f32 %v2729, %v2771
    %v2775 = vmul.f32 %v2731, %v2771
    %v2776 = vmul.f32 %v2733, %v2771
    %v2777 = vmul.f32 %v2735, %v2771
    %v2778 = vmul.f32 %v2737, %v2771
    %v2779 = vadd.f32 %v2717, %v2772
    %v2780 = vadd.f32 %v2718, %v2773
    %v2781 = vadd.f32 %v2719, %v2774
    %v2782 = vadd.f32 %v2720, %v2775
    %v2783 = vadd.f32 %v2721, %v2776
    %v2784 = vadd.f32 %v2722, %v2777
    %v2785 = vadd.f32 %v2723, %v2778
    %v2786 = vld [vmem:[%s956 + $0x8] sm:$0xff]
    %v2787 = vld [vmem:[%s956 + $0x10] sm:$0xff]
    %v2788 = vld [vmem:[%s956 + $0x18] sm:$0xff]
    %v2789 = vld [vmem:[%s956 + $0x20] sm:$0xff]
    %v2790 = vld [vmem:[%s956 + $0x28] sm:$0xff]
    %v2791 = vld [vmem:[%s956 + $0x30] sm:$0xff]
    %v2792 = vld [vmem:[%s956 + $0x38] sm:$0xff]
    %2793 = vrot.lane.b32.xlu0 %v2786, 1
    %v2794 = vpop.permute.xlu0 %2793
    %2795 = vrot.lane.b32.xlu0 %v2787, 1
    %v2796 = vpop.permute.xlu0 %2795
    %2797 = vrot.lane.b32.xlu0 %v2788, 1
    %v2798 = vpop.permute.xlu0 %2797
    %2799 = vrot.lane.b32.xlu0 %v2789, 1
    %v2800 = vpop.permute.xlu0 %2799
    %2801 = vrot.lane.b32.xlu0 %v2790, 1
    %v2802 = vpop.permute.xlu0 %2801
    %2803 = vrot.lane.b32.xlu0 %v2791, 1
    %v2804 = vpop.permute.xlu0 %2803
    %2805 = vrot.lane.b32.xlu0 %v2792, 1
    %v2806 = vpop.permute.xlu0 %2805
    %s2807 = sld [smem:[#allocation7 + $0x8c]]
    %v2808 = vstv %s2807
    %v2809 = vmul.f32 %v2794, %v2808
    %v2810 = vmul.f32 %v2796, %v2808
    %v2811 = vmul.f32 %v2798, %v2808
    %v2812 = vmul.f32 %v2800, %v2808
    %v2813 = vmul.f32 %v2802, %v2808
    %v2814 = vmul.f32 %v2804, %v2808
    %v2815 = vmul.f32 %v2806, %v2808
    %v2816 = vadd.f32 %v2747, %v2809
    %v2817 = vadd.f32 %v2748, %v2810
    %v2818 = vadd.f32 %v2749, %v2811
    %v2819 = vadd.f32 %v2750, %v2812
    %v2820 = vadd.f32 %v2751, %v2813
    %v2821 = vadd.f32 %v2752, %v2814
    %v2822 = vadd.f32 %v2753, %v2815
    %s2823 = sld [smem:[#allocation7 + $0x95]]
    %v2824 = vstv %s2823
    %v2825 = vmul.f32 %v2794, %v2824
    %v2826 = vmul.f32 %v2796, %v2824
    %v2827 = vmul.f32 %v2798, %v2824
    %v2828 = vmul.f32 %v2800, %v2824
    %v2829 = vmul.f32 %v2802, %v2824
    %v2830 = vmul.f32 %v2804, %v2824
    %v2831 = vmul.f32 %v2806, %v2824
    %v2832 = vadd.f32 %v2763, %v2825
    %v2833 = vadd.f32 %v2764, %v2826
    %v2834 = vadd.f32 %v2765, %v2827
    %v2835 = vadd.f32 %v2766, %v2828
    %v2836 = vadd.f32 %v2767, %v2829
    %v2837 = vadd.f32 %v2768, %v2830
    %v2838 = vadd.f32 %v2769, %v2831
    %s2839 = sld [smem:[#allocation7 + $0x9e]]
    %v2840 = vstv %s2839
    %v2841 = vmul.f32 %v2794, %v2840
    %v2842 = vmul.f32 %v2796, %v2840
    %v2843 = vmul.f32 %v2798, %v2840
    %v2844 = vmul.f32 %v2800, %v2840
    %v2845 = vmul.f32 %v2802, %v2840
    %v2846 = vmul.f32 %v2804, %v2840
    %v2847 = vmul.f32 %v2806, %v2840
    %v2848 = vadd.f32 %v2779, %v2841
    %v2849 = vadd.f32 %v2780, %v2842
    %v2850 = vadd.f32 %v2781, %v2843
    %v2851 = vadd.f32 %v2782, %v2844
    %v2852 = vadd.f32 %v2783, %v2845
    %v2853 = vadd.f32 %v2784, %v2846
    %v2854 = vadd.f32 %v2785, %v2847
    %s2855 = sld [smem:[#allocation7 + $0x8b]]
    %v2856 = vstv %s2855
    %v2857 = vmul.f32 %v2786, %v2856
    %v2858 = vmul.f32 %v2787, %v2856
    %v2859 = vmul.f32 %v2788, %v2856
    %v2860 = vmul.f32 %v2789, %v2856
    %v2861 = vmul.f32 %v2790, %v2856
    %v2862 = vmul.f32 %v2791, %v2856
    %v2863 = vmul.f32 %v2792, %v2856
    %v2864 = vadd.f32 %v2816, %v2857
    %v2865 = vadd.f32 %v2817, %v2858
    %v2866 = vadd.f32 %v2818, %v2859
    %v2867 = vadd.f32 %v2819, %v2860
    %v2868 = vadd.f32 %v2820, %v2861
    %v2869 = vadd.f32 %v2821, %v2862
    %v2870 = vadd.f32 %v2822, %v2863
    %s2871 = sld [smem:[#allocation7 + $0x94]]
    %v2872 = vstv %s2871
    %v2873 = vmul.f32 %v2786, %v2872
    %v2874 = vmul.f32 %v2787, %v2872
    %v2875 = vmul.f32 %v2788, %v2872
    %v2876 = vmul.f32 %v2789, %v2872
    %v2877 = vmul.f32 %v2790, %v2872
    %v2878 = vmul.f32 %v2791, %v2872
    %v2879 = vmul.f32 %v2792, %v2872
    %v2880 = vadd.f32 %v2832, %v2873
    %v2881 = vadd.f32 %v2833, %v2874
    %v2882 = vadd.f32 %v2834, %v2875
    %v2883 = vadd.f32 %v2835, %v2876
    %v2884 = vadd.f32 %v2836, %v2877
    %v2885 = vadd.f32 %v2837, %v2878
    %v2886 = vadd.f32 %v2838, %v2879
    %s2887 = sld [smem:[#allocation7 + $0x9d]]
    %v2888 = vstv %s2887
    %v2889 = vmul.f32 %v2786, %v2888
    %v2890 = vmul.f32 %v2787, %v2888
    %v2891 = vmul.f32 %v2788, %v2888
    %v2892 = vmul.f32 %v2789, %v2888
    %v2893 = vmul.f32 %v2790, %v2888
    %v2894 = vmul.f32 %v2791, %v2888
    %v2895 = vmul.f32 %v2792, %v2888
    %v2896 = vadd.f32 %v2848, %v2889
    %v2897 = vadd.f32 %v2849, %v2890
    %v2898 = vadd.f32 %v2850, %v2891
    %v2899 = vadd.f32 %v2851, %v2892
    %v2900 = vadd.f32 %v2852, %v2893
    %v2901 = vadd.f32 %v2853, %v2894
    %v2902 = vadd.f32 %v2854, %v2895
    %2903 = vrot.lane.b32.xlu0 %v2786, 127
    %v2904 = vpop.permute.xlu0 %2903
    %2905 = vrot.lane.b32.xlu0 %v2787, 127
    %v2906 = vpop.permute.xlu0 %2905
    %2907 = vrot.lane.b32.xlu0 %v2788, 127
    %v2908 = vpop.permute.xlu0 %2907
    %2909 = vrot.lane.b32.xlu0 %v2789, 127
    %v2910 = vpop.permute.xlu0 %2909
    %2911 = vrot.lane.b32.xlu0 %v2790, 127
    %v2912 = vpop.permute.xlu0 %2911
    %2913 = vrot.lane.b32.xlu0 %v2791, 127
    %v2914 = vpop.permute.xlu0 %2913
    %2915 = vrot.lane.b32.xlu0 %v2792, 127
    %v2916 = vpop.permute.xlu0 %2915
    %s2917 = sld [smem:[#allocation7 + $0x8a]]
    %v2918 = vstv %s2917
    %v2919 = vmul.f32 %v2904, %v2918
    %v2920 = vmul.f32 %v2906, %v2918
    %v2921 = vmul.f32 %v2908, %v2918
    %v2922 = vmul.f32 %v2910, %v2918
    %v2923 = vmul.f32 %v2912, %v2918
    %v2924 = vmul.f32 %v2914, %v2918
    %v2925 = vmul.f32 %v2916, %v2918
    %v2926 = vadd.f32 %v2864, %v2919
    %v2927 = vadd.f32 %v2865, %v2920
    %v2928 = vadd.f32 %v2866, %v2921
    %v2929 = vadd.f32 %v2867, %v2922
    %v2930 = vadd.f32 %v2868, %v2923
    %v2931 = vadd.f32 %v2869, %v2924
    %v2932 = vadd.f32 %v2870, %v2925
    %s2933 = sld [smem:[#allocation7 + $0x93]]
    %v2934 = vstv %s2933
    %v2935 = vmul.f32 %v2904, %v2934
    %v2936 = vmul.f32 %v2906, %v2934
    %v2937 = vmul.f32 %v2908, %v2934
    %v2938 = vmul.f32 %v2910, %v2934
    %v2939 = vmul.f32 %v2912, %v2934
    %v2940 = vmul.f32 %v2914, %v2934
    %v2941 = vmul.f32 %v2916, %v2934
    %v2942 = vadd.f32 %v2880, %v2935
    %v2943 = vadd.f32 %v2881, %v2936
    %v2944 = vadd.f32 %v2882, %v2937
    %v2945 = vadd.f32 %v2883, %v2938
    %v2946 = vadd.f32 %v2884, %v2939
    %v2947 = vadd.f32 %v2885, %v2940
    %v2948 = vadd.f32 %v2886, %v2941
    %s2949 = sld [smem:[#allocation7 + $0x9c]]
    %v2950 = vstv %s2949
    %v2951 = vmul.f32 %v2904, %v2950
    %v2952 = vmul.f32 %v2906, %v2950
    %v2953 = vmul.f32 %v2908, %v2950
    %v2954 = vmul.f32 %v2910, %v2950
    %v2955 = vmul.f32 %v2912, %v2950
    %v2956 = vmul.f32 %v2914, %v2950
    %v2957 = vmul.f32 %v2916, %v2950
    %v2958 = vadd.f32 %v2896, %v2951
    %v2959 = vadd.f32 %v2897, %v2952
    %v2960 = vadd.f32 %v2898, %v2953
    %v2961 = vadd.f32 %v2899, %v2954
    %v2962 = vadd.f32 %v2900, %v2955
    %v2963 = vadd.f32 %v2901, %v2956
    %v2964 = vadd.f32 %v2902, %v2957
    %v2965 = vld [vmem:[%s956 + $0x9] sm:$0xff]
    %v2966 = vld [vmem:[%s956 + $0x11] sm:$0xff]
    %v2967 = vld [vmem:[%s956 + $0x19] sm:$0xff]
    %v2968 = vld [vmem:[%s956 + $0x21] sm:$0xff]
    %v2969 = vld [vmem:[%s956 + $0x29] sm:$0xff]
    %v2970 = vld [vmem:[%s956 + $0x31] sm:$0xff]
    %v2971 = vld [vmem:[%s956 + $0x39] sm:$0xff]
    %2972 = vrot.lane.b32.xlu0 %v2965, 1
    %v2973 = vpop.permute.xlu0 %2972
    %2974 = vrot.lane.b32.xlu0 %v2966, 1
    %v2975 = vpop.permute.xlu0 %2974
    %2976 = vrot.lane.b32.xlu0 %v2967, 1
    %v2977 = vpop.permute.xlu0 %2976
    %2978 = vrot.lane.b32.xlu0 %v2968, 1
    %v2979 = vpop.permute.xlu0 %2978
    %2980 = vrot.lane.b32.xlu0 %v2969, 1
    %v2981 = vpop.permute.xlu0 %2980
    %2982 = vrot.lane.b32.xlu0 %v2970, 1
    %v2983 = vpop.permute.xlu0 %2982
    %2984 = vrot.lane.b32.xlu0 %v2971, 1
    %v2985 = vpop.permute.xlu0 %2984
    %s2986 = sld [smem:[#allocation7 + $0x89]]
    %v2987 = vstv %s2986
    %v2988 = vmul.f32 %v2973, %v2987
    %v2989 = vmul.f32 %v2975, %v2987
    %v2990 = vmul.f32 %v2977, %v2987
    %v2991 = vmul.f32 %v2979, %v2987
    %v2992 = vmul.f32 %v2981, %v2987
    %v2993 = vmul.f32 %v2983, %v2987
    %v2994 = vmul.f32 %v2985, %v2987
    %v2995 = vadd.f32 %v2926, %v2988
    %v2996 = vadd.f32 %v2927, %v2989
    %v2997 = vadd.f32 %v2928, %v2990
    %v2998 = vadd.f32 %v2929, %v2991
    %v2999 = vadd.f32 %v2930, %v2992
    %v3000 = vadd.f32 %v2931, %v2993
    %v3001 = vadd.f32 %v2932, %v2994
    %s3002 = sld [smem:[#allocation7 + $0x92]]
    %v3003 = vstv %s3002
    %v3004 = vmul.f32 %v2973, %v3003
    %v3005 = vmul.f32 %v2975, %v3003
    %v3006 = vmul.f32 %v2977, %v3003
    %v3007 = vmul.f32 %v2979, %v3003
    %v3008 = vmul.f32 %v2981, %v3003
    %v3009 = vmul.f32 %v2983, %v3003
    %v3010 = vmul.f32 %v2985, %v3003
    %v3011 = vadd.f32 %v2942, %v3004
    %v3012 = vadd.f32 %v2943, %v3005
    %v3013 = vadd.f32 %v2944, %v3006
    %v3014 = vadd.f32 %v2945, %v3007
    %v3015 = vadd.f32 %v2946, %v3008
    %v3016 = vadd.f32 %v2947, %v3009
    %v3017 = vadd.f32 %v2948, %v3010
    %s3018 = sld [smem:[#allocation7 + $0x9b]]
    %v3019 = vstv %s3018
    %v3020 = vmul.f32 %v2973, %v3019
    %v3021 = vmul.f32 %v2975, %v3019
    %v3022 = vmul.f32 %v2977, %v3019
    %v3023 = vmul.f32 %v2979, %v3019
    %v3024 = vmul.f32 %v2981, %v3019
    %v3025 = vmul.f32 %v2983, %v3019
    %v3026 = vmul.f32 %v2985, %v3019
    %v3027 = vadd.f32 %v2958, %v3020
    %v3028 = vadd.f32 %v2959, %v3021
    %v3029 = vadd.f32 %v2960, %v3022
    %v3030 = vadd.f32 %v2961, %v3023
    %v3031 = vadd.f32 %v2962, %v3024
    %v3032 = vadd.f32 %v2963, %v3025
    %v3033 = vadd.f32 %v2964, %v3026
    %s3034 = sld [smem:[#allocation7 + $0x88]]
    %v3035 = vstv %s3034
    %v3036 = vmul.f32 %v2965, %v3035
    %v3037 = vmul.f32 %v2966, %v3035
    %v3038 = vmul.f32 %v2967, %v3035
    %v3039 = vmul.f32 %v2968, %v3035
    %v3040 = vmul.f32 %v2969, %v3035
    %v3041 = vmul.f32 %v2970, %v3035
    %v3042 = vmul.f32 %v2971, %v3035
    %v3043 = vadd.f32 %v2995, %v3036
    %v3044 = vadd.f32 %v2996, %v3037
    %v3045 = vadd.f32 %v2997, %v3038
    %v3046 = vadd.f32 %v2998, %v3039
    %v3047 = vadd.f32 %v2999, %v3040
    %v3048 = vadd.f32 %v3000, %v3041
    %v3049 = vadd.f32 %v3001, %v3042
    %s3050 = sld [smem:[#allocation7 + $0x91]]
    %v3051 = vstv %s3050
    %v3052 = vmul.f32 %v2965, %v3051
    %v3053 = vmul.f32 %v2966, %v3051
    %v3054 = vmul.f32 %v2967, %v3051
    %v3055 = vmul.f32 %v2968, %v3051
    %v3056 = vmul.f32 %v2969, %v3051
    %v3057 = vmul.f32 %v2970, %v3051
    %v3058 = vmul.f32 %v2971, %v3051
    %v3059 = vadd.f32 %v3011, %v3052
    %v3060 = vadd.f32 %v3012, %v3053
    %v3061 = vadd.f32 %v3013, %v3054
    %v3062 = vadd.f32 %v3014, %v3055
    %v3063 = vadd.f32 %v3015, %v3056
    %v3064 = vadd.f32 %v3016, %v3057
    %v3065 = vadd.f32 %v3017, %v3058
    %s3066 = sld [smem:[#allocation7 + $0x9a]]
    %v3067 = vstv %s3066
    %v3068 = vmul.f32 %v2965, %v3067
    %v3069 = vmul.f32 %v2966, %v3067
    %v3070 = vmul.f32 %v2967, %v3067
    %v3071 = vmul.f32 %v2968, %v3067
    %v3072 = vmul.f32 %v2969, %v3067
    %v3073 = vmul.f32 %v2970, %v3067
    %v3074 = vmul.f32 %v2971, %v3067
    %v3075 = vadd.f32 %v3027, %v3068
    %v3076 = vadd.f32 %v3028, %v3069
    %v3077 = vadd.f32 %v3029, %v3070
    %v3078 = vadd.f32 %v3030, %v3071
    %v3079 = vadd.f32 %v3031, %v3072
    %v3080 = vadd.f32 %v3032, %v3073
    %v3081 = vadd.f32 %v3033, %v3074
    %3082 = vrot.lane.b32.xlu0 %v2965, 127
    %v3083 = vpop.permute.xlu0 %3082
    %3084 = vrot.lane.b32.xlu0 %v2966, 127
    %v3085 = vpop.permute.xlu0 %3084
    %3086 = vrot.lane.b32.xlu0 %v2967, 127
    %v3087 = vpop.permute.xlu0 %3086
    %3088 = vrot.lane.b32.xlu0 %v2968, 127
    %v3089 = vpop.permute.xlu0 %3088
    %3090 = vrot.lane.b32.xlu0 %v2969, 127
    %v3091 = vpop.permute.xlu0 %3090
    %3092 = vrot.lane.b32.xlu0 %v2970, 127
    %v3093 = vpop.permute.xlu0 %3092
    %3094 = vrot.lane.b32.xlu0 %v2971, 127
    %v3095 = vpop.permute.xlu0 %3094
    %s3096 = sld [smem:[#allocation7 + $0x87]]
    %v3097 = vstv %s3096
    %v3098 = vmul.f32 %v3083, %v3097
    %v3099 = vmul.f32 %v3085, %v3097
    %v3100 = vmul.f32 %v3087, %v3097
    %v3101 = vmul.f32 %v3089, %v3097
    %v3102 = vmul.f32 %v3091, %v3097
    %v3103 = vmul.f32 %v3093, %v3097
    %v3104 = vmul.f32 %v3095, %v3097
    %v3105 = vadd.f32 %v3043, %v3098
    %v3106 = vadd.f32 %v3044, %v3099
    %v3107 = vadd.f32 %v3045, %v3100
    %v3108 = vadd.f32 %v3046, %v3101
    %v3109 = vadd.f32 %v3047, %v3102
    %v3110 = vadd.f32 %v3048, %v3103
    %v3111 = vadd.f32 %v3049, %v3104
    %s3112 = sld [smem:[#allocation7 + $0x90]]
    %v3113 = vstv %s3112
    %v3114 = vmul.f32 %v3083, %v3113
    %v3115 = vmul.f32 %v3085, %v3113
    %v3116 = vmul.f32 %v3087, %v3113
    %v3117 = vmul.f32 %v3089, %v3113
    %v3118 = vmul.f32 %v3091, %v3113
    %v3119 = vmul.f32 %v3093, %v3113
    %v3120 = vmul.f32 %v3095, %v3113
    %v3121 = vadd.f32 %v3059, %v3114
    %v3122 = vadd.f32 %v3060, %v3115
    %v3123 = vadd.f32 %v3061, %v3116
    %v3124 = vadd.f32 %v3062, %v3117
    %v3125 = vadd.f32 %v3063, %v3118
    %v3126 = vadd.f32 %v3064, %v3119
    %v3127 = vadd.f32 %v3065, %v3120
    %s3128 = sld [smem:[#allocation7 + $0x99]]
    %v3129 = vstv %s3128
    %v3130 = vmul.f32 %v3083, %v3129
    %v3131 = vmul.f32 %v3085, %v3129
    %v3132 = vmul.f32 %v3087, %v3129
    %v3133 = vmul.f32 %v3089, %v3129
    %v3134 = vmul.f32 %v3091, %v3129
    %v3135 = vmul.f32 %v3093, %v3129
    %v3136 = vmul.f32 %v3095, %v3129
    %v3137 = vadd.f32 %v3075, %v3130
    %v3138 = vadd.f32 %v3076, %v3131
    %v3139 = vadd.f32 %v3077, %v3132
    %v3140 = vadd.f32 %v3078, %v3133
    %v3141 = vadd.f32 %v3079, %v3134
    %v3142 = vadd.f32 %v3080, %v3135
    %v3143 = vadd.f32 %v3081, %v3136
    %v3144 = vld [vmem:[%s973 + $0x7] sm:$0xff]
    %v3145 = vld [vmem:[%s973 + $0xf] sm:$0xff]
    %v3146 = vld [vmem:[%s973 + $0x17] sm:$0xff]
    %v3147 = vld [vmem:[%s973 + $0x1f] sm:$0xff]
    %v3148 = vld [vmem:[%s973 + $0x27] sm:$0xff]
    %v3149 = vld [vmem:[%s973 + $0x2f] sm:$0xff]
    %v3150 = vld [vmem:[%s973 + $0x37] sm:$0xff]
    %3151 = vrot.lane.b32.xlu0 %v3144, 1
    %v3152 = vpop.permute.xlu0 %3151
    %3153 = vrot.lane.b32.xlu0 %v3145, 1
    %v3154 = vpop.permute.xlu0 %3153
    %3155 = vrot.lane.b32.xlu0 %v3146, 1
    %v3156 = vpop.permute.xlu0 %3155
    %3157 = vrot.lane.b32.xlu0 %v3147, 1
    %v3158 = vpop.permute.xlu0 %3157
    %3159 = vrot.lane.b32.xlu0 %v3148, 1
    %v3160 = vpop.permute.xlu0 %3159
    %3161 = vrot.lane.b32.xlu0 %v3149, 1
    %v3162 = vpop.permute.xlu0 %3161
    %3163 = vrot.lane.b32.xlu0 %v3150, 1
    %v3164 = vpop.permute.xlu0 %3163
    %s3165 = sld [smem:[#allocation7 + $0xbc]]
    %v3166 = vstv %s3165
    %v3167 = vmul.f32 %v3152, %v3166
    %v3168 = vmul.f32 %v3154, %v3166
    %v3169 = vmul.f32 %v3156, %v3166
    %v3170 = vmul.f32 %v3158, %v3166
    %v3171 = vmul.f32 %v3160, %v3166
    %v3172 = vmul.f32 %v3162, %v3166
    %v3173 = vmul.f32 %v3164, %v3166
    %v3174 = vadd.f32 %v3105, %v3167
    %v3175 = vadd.f32 %v3106, %v3168
    %v3176 = vadd.f32 %v3107, %v3169
    %v3177 = vadd.f32 %v3108, %v3170
    %v3178 = vadd.f32 %v3109, %v3171
    %v3179 = vadd.f32 %v3110, %v3172
    %v3180 = vadd.f32 %v3111, %v3173
    %s3181 = sld [smem:[#allocation7 + $0xc5]]
    %v3182 = vstv %s3181
    %v3183 = vmul.f32 %v3152, %v3182
    %v3184 = vmul.f32 %v3154, %v3182
    %v3185 = vmul.f32 %v3156, %v3182
    %v3186 = vmul.f32 %v3158, %v3182
    %v3187 = vmul.f32 %v3160, %v3182
    %v3188 = vmul.f32 %v3162, %v3182
    %v3189 = vmul.f32 %v3164, %v3182
    %v3190 = vadd.f32 %v3121, %v3183
    %v3191 = vadd.f32 %v3122, %v3184
    %v3192 = vadd.f32 %v3123, %v3185
    %v3193 = vadd.f32 %v3124, %v3186
    %v3194 = vadd.f32 %v3125, %v3187
    %v3195 = vadd.f32 %v3126, %v3188
    %v3196 = vadd.f32 %v3127, %v3189
    %s3197 = sld [smem:[#allocation7 + $0xce]]
    %v3198 = vstv %s3197
    %v3199 = vmul.f32 %v3152, %v3198
    %v3200 = vmul.f32 %v3154, %v3198
    %v3201 = vmul.f32 %v3156, %v3198
    %v3202 = vmul.f32 %v3158, %v3198
    %v3203 = vmul.f32 %v3160, %v3198
    %v3204 = vmul.f32 %v3162, %v3198
    %v3205 = vmul.f32 %v3164, %v3198
    %v3206 = vadd.f32 %v3137, %v3199
    %v3207 = vadd.f32 %v3138, %v3200
    %v3208 = vadd.f32 %v3139, %v3201
    %v3209 = vadd.f32 %v3140, %v3202
    %v3210 = vadd.f32 %v3141, %v3203
    %v3211 = vadd.f32 %v3142, %v3204
    %v3212 = vadd.f32 %v3143, %v3205
    %s3213 = sld [smem:[#allocation7 + $0xbb]]
    %v3214 = vstv %s3213
    %v3215 = vmul.f32 %v3144, %v3214
    %v3216 = vmul.f32 %v3145, %v3214
    %v3217 = vmul.f32 %v3146, %v3214
    %v3218 = vmul.f32 %v3147, %v3214
    %v3219 = vmul.f32 %v3148, %v3214
    %v3220 = vmul.f32 %v3149, %v3214
    %v3221 = vmul.f32 %v3150, %v3214
    %v3222 = vadd.f32 %v3174, %v3215
    %v3223 = vadd.f32 %v3175, %v3216
    %v3224 = vadd.f32 %v3176, %v3217
    %v3225 = vadd.f32 %v3177, %v3218
    %v3226 = vadd.f32 %v3178, %v3219
    %v3227 = vadd.f32 %v3179, %v3220
    %v3228 = vadd.f32 %v3180, %v3221
    %s3229 = sld [smem:[#allocation7 + $0xc4]]
    %v3230 = vstv %s3229
    %v3231 = vmul.f32 %v3144, %v3230
    %v3232 = vmul.f32 %v3145, %v3230
    %v3233 = vmul.f32 %v3146, %v3230
    %v3234 = vmul.f32 %v3147, %v3230
    %v3235 = vmul.f32 %v3148, %v3230
    %v3236 = vmul.f32 %v3149, %v3230
    %v3237 = vmul.f32 %v3150, %v3230
    %v3238 = vadd.f32 %v3190, %v3231
    %v3239 = vadd.f32 %v3191, %v3232
    %v3240 = vadd.f32 %v3192, %v3233
    %v3241 = vadd.f32 %v3193, %v3234
    %v3242 = vadd.f32 %v3194, %v3235
    %v3243 = vadd.f32 %v3195, %v3236
    %v3244 = vadd.f32 %v3196, %v3237
    %s3245 = sld [smem:[#allocation7 + $0xcd]]
    %v3246 = vstv %s3245
    %v3247 = vmul.f32 %v3144, %v3246
    %v3248 = vmul.f32 %v3145, %v3246
    %v3249 = vmul.f32 %v3146, %v3246
    %v3250 = vmul.f32 %v3147, %v3246
    %v3251 = vmul.f32 %v3148, %v3246
    %v3252 = vmul.f32 %v3149, %v3246
    %v3253 = vmul.f32 %v3150, %v3246
    %v3254 = vadd.f32 %v3206, %v3247
    %v3255 = vadd.f32 %v3207, %v3248
    %v3256 = vadd.f32 %v3208, %v3249
    %v3257 = vadd.f32 %v3209, %v3250
    %v3258 = vadd.f32 %v3210, %v3251
    %v3259 = vadd.f32 %v3211, %v3252
    %v3260 = vadd.f32 %v3212, %v3253
    %3261 = vrot.lane.b32.xlu0 %v3144, 127
    %v3262 = vpop.permute.xlu0 %3261
    %3263 = vrot.lane.b32.xlu0 %v3145, 127
    %v3264 = vpop.permute.xlu0 %3263
    %3265 = vrot.lane.b32.xlu0 %v3146, 127
    %v3266 = vpop.permute.xlu0 %3265
    %3267 = vrot.lane.b32.xlu0 %v3147, 127
    %v3268 = vpop.permute.xlu0 %3267
    %3269 = vrot.lane.b32.xlu0 %v3148, 127
    %v3270 = vpop.permute.xlu0 %3269
    %3271 = vrot.lane.b32.xlu0 %v3149, 127
    %v3272 = vpop.permute.xlu0 %3271
    %3273 = vrot.lane.b32.xlu0 %v3150, 127
    %v3274 = vpop.permute.xlu0 %3273
    %s3275 = sld [smem:[#allocation7 + $0xba]]
    %v3276 = vstv %s3275
    %v3277 = vmul.f32 %v3262, %v3276
    %v3278 = vmul.f32 %v3264, %v3276
    %v3279 = vmul.f32 %v3266, %v3276
    %v3280 = vmul.f32 %v3268, %v3276
    %v3281 = vmul.f32 %v3270, %v3276
    %v3282 = vmul.f32 %v3272, %v3276
    %v3283 = vmul.f32 %v3274, %v3276
    %v3284 = vadd.f32 %v3222, %v3277
    %v3285 = vadd.f32 %v3223, %v3278
    %v3286 = vadd.f32 %v3224, %v3279
    %v3287 = vadd.f32 %v3225, %v3280
    %v3288 = vadd.f32 %v3226, %v3281
    %v3289 = vadd.f32 %v3227, %v3282
    %v3290 = vadd.f32 %v3228, %v3283
    %s3291 = sld [smem:[#allocation7 + $0xc3]]
    %v3292 = vstv %s3291
    %v3293 = vmul.f32 %v3262, %v3292
    %v3294 = vmul.f32 %v3264, %v3292
    %v3295 = vmul.f32 %v3266, %v3292
    %v3296 = vmul.f32 %v3268, %v3292
    %v3297 = vmul.f32 %v3270, %v3292
    %v3298 = vmul.f32 %v3272, %v3292
    %v3299 = vmul.f32 %v3274, %v3292
    %v3300 = vadd.f32 %v3238, %v3293
    %v3301 = vadd.f32 %v3239, %v3294
    %v3302 = vadd.f32 %v3240, %v3295
    %v3303 = vadd.f32 %v3241, %v3296
    %v3304 = vadd.f32 %v3242, %v3297
    %v3305 = vadd.f32 %v3243, %v3298
    %v3306 = vadd.f32 %v3244, %v3299
    %s3307 = sld [smem:[#allocation7 + $0xcc]]
    %v3308 = vstv %s3307
    %v3309 = vmul.f32 %v3262, %v3308
    %v3310 = vmul.f32 %v3264, %v3308
    %v3311 = vmul.f32 %v3266, %v3308
    %v3312 = vmul.f32 %v3268, %v3308
    %v3313 = vmul.f32 %v3270, %v3308
    %v3314 = vmul.f32 %v3272, %v3308
    %v3315 = vmul.f32 %v3274, %v3308
    %v3316 = vadd.f32 %v3254, %v3309
    %v3317 = vadd.f32 %v3255, %v3310
    %v3318 = vadd.f32 %v3256, %v3311
    %v3319 = vadd.f32 %v3257, %v3312
    %v3320 = vadd.f32 %v3258, %v3313
    %v3321 = vadd.f32 %v3259, %v3314
    %v3322 = vadd.f32 %v3260, %v3315
    %v3323 = vld [vmem:[%s973 + $0x8] sm:$0xff]
    %v3324 = vld [vmem:[%s973 + $0x10] sm:$0xff]
    %v3325 = vld [vmem:[%s973 + $0x18] sm:$0xff]
    %v3326 = vld [vmem:[%s973 + $0x20] sm:$0xff]
    %v3327 = vld [vmem:[%s973 + $0x28] sm:$0xff]
    %v3328 = vld [vmem:[%s973 + $0x30] sm:$0xff]
    %v3329 = vld [vmem:[%s973 + $0x38] sm:$0xff]
    %3330 = vrot.lane.b32.xlu0 %v3323, 1
    %v3331 = vpop.permute.xlu0 %3330
    %3332 = vrot.lane.b32.xlu0 %v3324, 1
    %v3333 = vpop.permute.xlu0 %3332
    %3334 = vrot.lane.b32.xlu0 %v3325, 1
    %v3335 = vpop.permute.xlu0 %3334
    %3336 = vrot.lane.b32.xlu0 %v3326, 1
    %v3337 = vpop.permute.xlu0 %3336
    %3338 = vrot.lane.b32.xlu0 %v3327, 1
    %v3339 = vpop.permute.xlu0 %3338
    %3340 = vrot.lane.b32.xlu0 %v3328, 1
    %v3341 = vpop.permute.xlu0 %3340
    %3342 = vrot.lane.b32.xlu0 %v3329, 1
    %v3343 = vpop.permute.xlu0 %3342
    %s3344 = sld [smem:[#allocation7 + $0xb9]]
    %v3345 = vstv %s3344
    %v3346 = vmul.f32 %v3331, %v3345
    %v3347 = vmul.f32 %v3333, %v3345
    %v3348 = vmul.f32 %v3335, %v3345
    %v3349 = vmul.f32 %v3337, %v3345
    %v3350 = vmul.f32 %v3339, %v3345
    %v3351 = vmul.f32 %v3341, %v3345
    %v3352 = vmul.f32 %v3343, %v3345
    %v3353 = vadd.f32 %v3284, %v3346
    %v3354 = vadd.f32 %v3285, %v3347
    %v3355 = vadd.f32 %v3286, %v3348
    %v3356 = vadd.f32 %v3287, %v3349
    %v3357 = vadd.f32 %v3288, %v3350
    %v3358 = vadd.f32 %v3289, %v3351
    %v3359 = vadd.f32 %v3290, %v3352
    %s3360 = sld [smem:[#allocation7 + $0xc2]]
    %v3361 = vstv %s3360
    %v3362 = vmul.f32 %v3331, %v3361
    %v3363 = vmul.f32 %v3333, %v3361
    %v3364 = vmul.f32 %v3335, %v3361
    %v3365 = vmul.f32 %v3337, %v3361
    %v3366 = vmul.f32 %v3339, %v3361
    %v3367 = vmul.f32 %v3341, %v3361
    %v3368 = vmul.f32 %v3343, %v3361
    %v3369 = vadd.f32 %v3300, %v3362
    %v3370 = vadd.f32 %v3301, %v3363
    %v3371 = vadd.f32 %v3302, %v3364
    %v3372 = vadd.f32 %v3303, %v3365
    %v3373 = vadd.f32 %v3304, %v3366
    %v3374 = vadd.f32 %v3305, %v3367
    %v3375 = vadd.f32 %v3306, %v3368
    %s3376 = sld [smem:[#allocation7 + $0xcb]]
    %v3377 = vstv %s3376
    %v3378 = vmul.f32 %v3331, %v3377
    %v3379 = vmul.f32 %v3333, %v3377
    %v3380 = vmul.f32 %v3335, %v3377
    %v3381 = vmul.f32 %v3337, %v3377
    %v3382 = vmul.f32 %v3339, %v3377
    %v3383 = vmul.f32 %v3341, %v3377
    %v3384 = vmul.f32 %v3343, %v3377
    %v3385 = vadd.f32 %v3316, %v3378
    %v3386 = vadd.f32 %v3317, %v3379
    %v3387 = vadd.f32 %v3318, %v3380
    %v3388 = vadd.f32 %v3319, %v3381
    %v3389 = vadd.f32 %v3320, %v3382
    %v3390 = vadd.f32 %v3321, %v3383
    %v3391 = vadd.f32 %v3322, %v3384
    %s3392 = sld [smem:[#allocation7 + $0xb8]]
    %v3393 = vstv %s3392
    %v3394 = vmul.f32 %v3323, %v3393
    %v3395 = vmul.f32 %v3324, %v3393
    %v3396 = vmul.f32 %v3325, %v3393
    %v3397 = vmul.f32 %v3326, %v3393
    %v3398 = vmul.f32 %v3327, %v3393
    %v3399 = vmul.f32 %v3328, %v3393
    %v3400 = vmul.f32 %v3329, %v3393
    %v3401 = vadd.f32 %v3353, %v3394
    %v3402 = vadd.f32 %v3354, %v3395
    %v3403 = vadd.f32 %v3355, %v3396
    %v3404 = vadd.f32 %v3356, %v3397
    %v3405 = vadd.f32 %v3357, %v3398
    %v3406 = vadd.f32 %v3358, %v3399
    %v3407 = vadd.f32 %v3359, %v3400
    %s3408 = sld [smem:[#allocation7 + $0xc1]]
    %v3409 = vstv %s3408
    %v3410 = vmul.f32 %v3323, %v3409
    %v3411 = vmul.f32 %v3324, %v3409
    %v3412 = vmul.f32 %v3325, %v3409
    %v3413 = vmul.f32 %v3326, %v3409
    %v3414 = vmul.f32 %v3327, %v3409
    %v3415 = vmul.f32 %v3328, %v3409
    %v3416 = vmul.f32 %v3329, %v3409
    %v3417 = vadd.f32 %v3369, %v3410
    %v3418 = vadd.f32 %v3370, %v3411
    %v3419 = vadd.f32 %v3371, %v3412
    %v3420 = vadd.f32 %v3372, %v3413
    %v3421 = vadd.f32 %v3373, %v3414
    %v3422 = vadd.f32 %v3374, %v3415
    %v3423 = vadd.f32 %v3375, %v3416
    %s3424 = sld [smem:[#allocation7 + $0xca]]
    %v3425 = vstv %s3424
    %v3426 = vmul.f32 %v3323, %v3425
    %v3427 = vmul.f32 %v3324, %v3425
    %v3428 = vmul.f32 %v3325, %v3425
    %v3429 = vmul.f32 %v3326, %v3425
    %v3430 = vmul.f32 %v3327, %v3425
    %v3431 = vmul.f32 %v3328, %v3425
    %v3432 = vmul.f32 %v3329, %v3425
    %v3433 = vadd.f32 %v3385, %v3426
    %v3434 = vadd.f32 %v3386, %v3427
    %v3435 = vadd.f32 %v3387, %v3428
    %v3436 = vadd.f32 %v3388, %v3429
    %v3437 = vadd.f32 %v3389, %v3430
    %v3438 = vadd.f32 %v3390, %v3431
    %v3439 = vadd.f32 %v3391, %v3432
    %3440 = vrot.lane.b32.xlu0 %v3323, 127
    %v3441 = vpop.permute.xlu0 %3440
    %3442 = vrot.lane.b32.xlu0 %v3324, 127
    %v3443 = vpop.permute.xlu0 %3442
    %3444 = vrot.lane.b32.xlu0 %v3325, 127
    %v3445 = vpop.permute.xlu0 %3444
    %3446 = vrot.lane.b32.xlu0 %v3326, 127
    %v3447 = vpop.permute.xlu0 %3446
    %3448 = vrot.lane.b32.xlu0 %v3327, 127
    %v3449 = vpop.permute.xlu0 %3448
    %3450 = vrot.lane.b32.xlu0 %v3328, 127
    %v3451 = vpop.permute.xlu0 %3450
    %3452 = vrot.lane.b32.xlu0 %v3329, 127
    %v3453 = vpop.permute.xlu0 %3452
    %s3454 = sld [smem:[#allocation7 + $0xb7]]
    %v3455 = vstv %s3454
    %v3456 = vmul.f32 %v3441, %v3455
    %v3457 = vmul.f32 %v3443, %v3455
    %v3458 = vmul.f32 %v3445, %v3455
    %v3459 = vmul.f32 %v3447, %v3455
    %v3460 = vmul.f32 %v3449, %v3455
    %v3461 = vmul.f32 %v3451, %v3455
    %v3462 = vmul.f32 %v3453, %v3455
    %v3463 = vadd.f32 %v3401, %v3456
    %v3464 = vadd.f32 %v3402, %v3457
    %v3465 = vadd.f32 %v3403, %v3458
    %v3466 = vadd.f32 %v3404, %v3459
    %v3467 = vadd.f32 %v3405, %v3460
    %v3468 = vadd.f32 %v3406, %v3461
    %v3469 = vadd.f32 %v3407, %v3462
    %s3470 = sld [smem:[#allocation7 + $0xc0]]
    %v3471 = vstv %s3470
    %v3472 = vmul.f32 %v3441, %v3471
    %v3473 = vmul.f32 %v3443, %v3471
    %v3474 = vmul.f32 %v3445, %v3471
    %v3475 = vmul.f32 %v3447, %v3471
    %v3476 = vmul.f32 %v3449, %v3471
    %v3477 = vmul.f32 %v3451, %v3471
    %v3478 = vmul.f32 %v3453, %v3471
    %v3479 = vadd.f32 %v3417, %v3472
    %v3480 = vadd.f32 %v3418, %v3473
    %v3481 = vadd.f32 %v3419, %v3474
    %v3482 = vadd.f32 %v3420, %v3475
    %v3483 = vadd.f32 %v3421, %v3476
    %v3484 = vadd.f32 %v3422, %v3477
    %v3485 = vadd.f32 %v3423, %v3478
    %s3486 = sld [smem:[#allocation7 + $0xc9]]
    %v3487 = vstv %s3486
    %v3488 = vmul.f32 %v3441, %v3487
    %v3489 = vmul.f32 %v3443, %v3487
    %v3490 = vmul.f32 %v3445, %v3487
    %v3491 = vmul.f32 %v3447, %v3487
    %v3492 = vmul.f32 %v3449, %v3487
    %v3493 = vmul.f32 %v3451, %v3487
    %v3494 = vmul.f32 %v3453, %v3487
    %v3495 = vadd.f32 %v3433, %v3488
    %v3496 = vadd.f32 %v3434, %v3489
    %v3497 = vadd.f32 %v3435, %v3490
    %v3498 = vadd.f32 %v3436, %v3491
    %v3499 = vadd.f32 %v3437, %v3492
    %v3500 = vadd.f32 %v3438, %v3493
    %v3501 = vadd.f32 %v3439, %v3494
    %v3502 = vld [vmem:[%s973 + $0x9] sm:$0xff]
    %v3503 = vld [vmem:[%s973 + $0x11] sm:$0xff]
    %v3504 = vld [vmem:[%s973 + $0x19] sm:$0xff]
    %v3505 = vld [vmem:[%s973 + $0x21] sm:$0xff]
    %v3506 = vld [vmem:[%s973 + $0x29] sm:$0xff]
    %v3507 = vld [vmem:[%s973 + $0x31] sm:$0xff]
    %v3508 = vld [vmem:[%s973 + $0x39] sm:$0xff]
    %3509 = vrot.lane.b32.xlu0 %v3502, 1
    %v3510 = vpop.permute.xlu0 %3509
    %3511 = vrot.lane.b32.xlu0 %v3503, 1
    %v3512 = vpop.permute.xlu0 %3511
    %3513 = vrot.lane.b32.xlu0 %v3504, 1
    %v3514 = vpop.permute.xlu0 %3513
    %3515 = vrot.lane.b32.xlu0 %v3505, 1
    %v3516 = vpop.permute.xlu0 %3515
    %3517 = vrot.lane.b32.xlu0 %v3506, 1
    %v3518 = vpop.permute.xlu0 %3517
    %3519 = vrot.lane.b32.xlu0 %v3507, 1
    %v3520 = vpop.permute.xlu0 %3519
    %3521 = vrot.lane.b32.xlu0 %v3508, 1
    %v3522 = vpop.permute.xlu0 %3521
    %s3523 = sld [smem:[#allocation7 + $0xb6]]
    %v3524 = vstv %s3523
    %v3525 = vmul.f32 %v3510, %v3524
    %v3526 = vmul.f32 %v3512, %v3524
    %v3527 = vmul.f32 %v3514, %v3524
    %v3528 = vmul.f32 %v3516, %v3524
    %v3529 = vmul.f32 %v3518, %v3524
    %v3530 = vmul.f32 %v3520, %v3524
    %v3531 = vmul.f32 %v3522, %v3524
    %v3532 = vadd.f32 %v3463, %v3525
    %v3533 = vadd.f32 %v3464, %v3526
    %v3534 = vadd.f32 %v3465, %v3527
    %v3535 = vadd.f32 %v3466, %v3528
    %v3536 = vadd.f32 %v3467, %v3529
    %v3537 = vadd.f32 %v3468, %v3530
    %v3538 = vadd.f32 %v3469, %v3531
    %s3539 = sld [smem:[#allocation7 + $0xbf]]
    %v3540 = vstv %s3539
    %v3541 = vmul.f32 %v3510, %v3540
    %v3542 = vmul.f32 %v3512, %v3540
    %v3543 = vmul.f32 %v3514, %v3540
    %v3544 = vmul.f32 %v3516, %v3540
    %v3545 = vmul.f32 %v3518, %v3540
    %v3546 = vmul.f32 %v3520, %v3540
    %v3547 = vmul.f32 %v3522, %v3540
    %v3548 = vadd.f32 %v3479, %v3541
    %v3549 = vadd.f32 %v3480, %v3542
    %v3550 = vadd.f32 %v3481, %v3543
    %v3551 = vadd.f32 %v3482, %v3544
    %v3552 = vadd.f32 %v3483, %v3545
    %v3553 = vadd.f32 %v3484, %v3546
    %v3554 = vadd.f32 %v3485, %v3547
    %s3555 = sld [smem:[#allocation7 + $0xc8]]
    %v3556 = vstv %s3555
    %v3557 = vmul.f32 %v3510, %v3556
    %v3558 = vmul.f32 %v3512, %v3556
    %v3559 = vmul.f32 %v3514, %v3556
    %v3560 = vmul.f32 %v3516, %v3556
    %v3561 = vmul.f32 %v3518, %v3556
    %v3562 = vmul.f32 %v3520, %v3556
    %v3563 = vmul.f32 %v3522, %v3556
    %v3564 = vadd.f32 %v3495, %v3557
    %v3565 = vadd.f32 %v3496, %v3558
    %v3566 = vadd.f32 %v3497, %v3559
    %v3567 = vadd.f32 %v3498, %v3560
    %v3568 = vadd.f32 %v3499, %v3561
    %v3569 = vadd.f32 %v3500, %v3562
    %v3570 = vadd.f32 %v3501, %v3563
    %s3571 = sld [smem:[#allocation7 + $0xb5]]
    %v3572 = vstv %s3571
    %v3573 = vmul.f32 %v3502, %v3572
    %v3574 = vmul.f32 %v3503, %v3572
    %v3575 = vmul.f32 %v3504, %v3572
    %v3576 = vmul.f32 %v3505, %v3572
    %v3577 = vmul.f32 %v3506, %v3572
    %v3578 = vmul.f32 %v3507, %v3572
    %v3579 = vmul.f32 %v3508, %v3572
    %v3580 = vadd.f32 %v3532, %v3573
    %v3581 = vadd.f32 %v3533, %v3574
    %v3582 = vadd.f32 %v3534, %v3575
    %v3583 = vadd.f32 %v3535, %v3576
    %v3584 = vadd.f32 %v3536, %v3577
    %v3585 = vadd.f32 %v3537, %v3578
    %v3586 = vadd.f32 %v3538, %v3579
    %s3587 = sld [smem:[#allocation7 + $0xbe]]
    %v3588 = vstv %s3587
    %v3589 = vmul.f32 %v3502, %v3588
    %v3590 = vmul.f32 %v3503, %v3588
    %v3591 = vmul.f32 %v3504, %v3588
    %v3592 = vmul.f32 %v3505, %v3588
    %v3593 = vmul.f32 %v3506, %v3588
    %v3594 = vmul.f32 %v3507, %v3588
    %v3595 = vmul.f32 %v3508, %v3588
    %v3596 = vadd.f32 %v3548, %v3589
    %v3597 = vadd.f32 %v3549, %v3590
    %v3598 = vadd.f32 %v3550, %v3591
    %v3599 = vadd.f32 %v3551, %v3592
    %v3600 = vadd.f32 %v3552, %v3593
    %v3601 = vadd.f32 %v3553, %v3594
    %v3602 = vadd.f32 %v3554, %v3595
    %s3603 = sld [smem:[#allocation7 + $0xc7]]
    %v3604 = vstv %s3603
    %v3605 = vmul.f32 %v3502, %v3604
    %v3606 = vmul.f32 %v3503, %v3604
    %v3607 = vmul.f32 %v3504, %v3604
    %v3608 = vmul.f32 %v3505, %v3604
    %v3609 = vmul.f32 %v3506, %v3604
    %v3610 = vmul.f32 %v3507, %v3604
    %v3611 = vmul.f32 %v3508, %v3604
    %v3612 = vadd.f32 %v3564, %v3605
    %v3613 = vadd.f32 %v3565, %v3606
    %v3614 = vadd.f32 %v3566, %v3607
    %v3615 = vadd.f32 %v3567, %v3608
    %v3616 = vadd.f32 %v3568, %v3609
    %v3617 = vadd.f32 %v3569, %v3610
    %v3618 = vadd.f32 %v3570, %v3611
    %3619 = vrot.lane.b32.xlu0 %v3502, 127
    %v3620 = vpop.permute.xlu0 %3619
    %3621 = vrot.lane.b32.xlu0 %v3503, 127
    %v3622 = vpop.permute.xlu0 %3621
    %3623 = vrot.lane.b32.xlu0 %v3504, 127
    %v3624 = vpop.permute.xlu0 %3623
    %3625 = vrot.lane.b32.xlu0 %v3505, 127
    %v3626 = vpop.permute.xlu0 %3625
    %3627 = vrot.lane.b32.xlu0 %v3506, 127
    %v3628 = vpop.permute.xlu0 %3627
    %3629 = vrot.lane.b32.xlu0 %v3507, 127
    %v3630 = vpop.permute.xlu0 %3629
    %3631 = vrot.lane.b32.xlu0 %v3508, 127
    %v3632 = vpop.permute.xlu0 %3631
    %s3633 = sld [smem:[#allocation7 + $0xb4]]
    %v3634 = vstv %s3633
    %v3635 = vmul.f32 %v3620, %v3634
    %v3636 = vmul.f32 %v3622, %v3634
    %v3637 = vmul.f32 %v3624, %v3634
    %v3638 = vmul.f32 %v3626, %v3634
    %v3639 = vmul.f32 %v3628, %v3634
    %v3640 = vmul.f32 %v3630, %v3634
    %v3641 = vmul.f32 %v3632, %v3634
    %v3642 = vadd.f32 %v3580, %v3635
    %v3643 = vadd.f32 %v3581, %v3636
    %v3644 = vadd.f32 %v3582, %v3637
    %v3645 = vadd.f32 %v3583, %v3638
    %v3646 = vadd.f32 %v3584, %v3639
    %v3647 = vadd.f32 %v3585, %v3640
    %v3648 = vadd.f32 %v3586, %v3641
    %s3649 = sld [smem:[#allocation7 + $0xbd]]
    %v3650 = vstv %s3649
    %v3651 = vmul.f32 %v3620, %v3650
    %v3652 = vmul.f32 %v3622, %v3650
    %v3653 = vmul.f32 %v3624, %v3650
    %v3654 = vmul.f32 %v3626, %v3650
    %v3655 = vmul.f32 %v3628, %v3650
    %v3656 = vmul.f32 %v3630, %v3650
    %v3657 = vmul.f32 %v3632, %v3650
    %v3658 = vadd.f32 %v3596, %v3651
    %v3659 = vadd.f32 %v3597, %v3652
    %v3660 = vadd.f32 %v3598, %v3653
    %v3661 = vadd.f32 %v3599, %v3654
    %v3662 = vadd.f32 %v3600, %v3655
    %v3663 = vadd.f32 %v3601, %v3656
    %v3664 = vadd.f32 %v3602, %v3657
    %s3665 = sld [smem:[#allocation7 + $0xc6]]
    %v3666 = vstv %s3665
    %v3667 = vmul.f32 %v3620, %v3666
    %v3668 = vmul.f32 %v3622, %v3666
    %v3669 = vmul.f32 %v3624, %v3666
    %v3670 = vmul.f32 %v3626, %v3666
    %v3671 = vmul.f32 %v3628, %v3666
    %v3672 = vmul.f32 %v3630, %v3666
    %v3673 = vmul.f32 %v3632, %v3666
    %v3674 = vadd.f32 %v3612, %v3667
    %v3675 = vadd.f32 %v3613, %v3668
    %v3676 = vadd.f32 %v3614, %v3669
    %v3677 = vadd.f32 %v3615, %v3670
    %v3678 = vadd.f32 %v3616, %v3671
    %v3679 = vadd.f32 %v3617, %v3672
    %v3680 = vadd.f32 %v3618, %v3673
    %v3681 = vadd.f32 %v3642, 3.0
    %v3682 = vadd.f32 %v3643, 3.0
    %v3683 = vadd.f32 %v3644, 3.0
    %v3684 = vadd.f32 %v3645, 3.0
    %v3685 = vadd.f32 %v3646, 3.0
    %v3686 = vadd.f32 %v3647, 3.0
    %v3687 = vadd.f32 %v3648, 3.0
    %v3688 = vmax.f32 %v3681, 0.0
    %v3689 = vmax.f32 %v3682, 0.0
    %v3690 = vmax.f32 %v3683, 0.0
    %v3691 = vmax.f32 %v3684, 0.0
    %v3692 = vmax.f32 %v3685, 0.0
    %v3693 = vmax.f32 %v3686, 0.0
    %v3694 = vmax.f32 %v3687, 0.0
    %v3695 = vmin.f32 %v3688, 6.0
    %v3696 = vmin.f32 %v3689, 6.0
    %v3697 = vmin.f32 %v3690, 6.0
    %v3698 = vmin.f32 %v3691, 6.0
    %v3699 = vmin.f32 %v3692, 6.0
    %v3700 = vmin.f32 %v3693, 6.0
    %v3701 = vmin.f32 %v3694, 6.0
    %v3702 = vmul.f32 %v3642, %v3695
    %v3703 = vmul.f32 %v3643, %v3696
    %v3704 = vmul.f32 %v3644, %v3697
    %v3705 = vmul.f32 %v3645, %v3698
    %v3706 = vmul.f32 %v3646, %v3699
    %v3707 = vmul.f32 %v3647, %v3700
    %v3708 = vmul.f32 %v3648, %v3701
    %v3709 = vmul.f32 %v3702, 0.16666667
    %v3710 = vmul.f32 %v3703, 0.16666667
    %v3711 = vmul.f32 %v3704, 0.16666667
    %v3712 = vmul.f32 %v3705, 0.16666667
    %v3713 = vmul.f32 %v3706, 0.16666667
    %v3714 = vmul.f32 %v3707, 0.16666667
    %v3715 = vmul.f32 %v3708, 0.16666667
    %3716 = vst [vmem:[%s5] sm:$0xff] %v3709
    %3717 = vst [vmem:[%s5 + $0x8] sm:$0xff] %v3710
    %3718 = vst [vmem:[%s5 + $0x10] sm:$0xff] %v3711
    %3719 = vst [vmem:[%s5 + $0x18] sm:$0xff] %v3712
    %3720 = vst [vmem:[%s5 + $0x20] sm:$0xff] %v3713
    %3721 = vst [vmem:[%s5 + $0x28] sm:$0xff] %v3714
    %3722 = vst [vmem:[%s5 + $0x30] sm:$0xff] %v3715
    %v3723 = vadd.f32 %v3658, 3.0
    %v3724 = vadd.f32 %v3659, 3.0
    %v3725 = vadd.f32 %v3660, 3.0
    %v3726 = vadd.f32 %v3661, 3.0
    %v3727 = vadd.f32 %v3662, 3.0
    %v3728 = vadd.f32 %v3663, 3.0
    %v3729 = vadd.f32 %v3664, 3.0
    %v3730 = vmax.f32 %v3723, 0.0
    %v3731 = vmax.f32 %v3724, 0.0
    %v3732 = vmax.f32 %v3725, 0.0
    %v3733 = vmax.f32 %v3726, 0.0
    %v3734 = vmax.f32 %v3727, 0.0
    %v3735 = vmax.f32 %v3728, 0.0
    %v3736 = vmax.f32 %v3729, 0.0
    %v3737 = vmin.f32 %v3730, 6.0
    %v3738 = vmin.f32 %v3731, 6.0
    %v3739 = vmin.f32 %v3732, 6.0
    %v3740 = vmin.f32 %v3733, 6.0
    %v3741 = vmin.f32 %v3734, 6.0
    %v3742 = vmin.f32 %v3735, 6.0
    %v3743 = vmin.f32 %v3736, 6.0
    %v3744 = vmul.f32 %v3658, %v3737
    %v3745 = vmul.f32 %v3659, %v3738
    %v3746 = vmul.f32 %v3660, %v3739
    %v3747 = vmul.f32 %v3661, %v3740
    %v3748 = vmul.f32 %v3662, %v3741
    %v3749 = vmul.f32 %v3663, %v3742
    %v3750 = vmul.f32 %v3664, %v3743
    %v3751 = vmul.f32 %v3744, 0.16666667
    %v3752 = vmul.f32 %v3745, 0.16666667
    %v3753 = vmul.f32 %v3746, 0.16666667
    %v3754 = vmul.f32 %v3747, 0.16666667
    %v3755 = vmul.f32 %v3748, 0.16666667
    %v3756 = vmul.f32 %v3749, 0.16666667
    %v3757 = vmul.f32 %v3750, 0.16666667
    %s3758 = scalar_lea.vmem %s5, 56
    %3759 = vst [vmem:[%s3758] sm:$0xff] %v3751
    %3760 = vst [vmem:[%s3758 + $0x8] sm:$0xff] %v3752
    %3761 = vst [vmem:[%s3758 + $0x10] sm:$0xff] %v3753
    %3762 = vst [vmem:[%s3758 + $0x18] sm:$0xff] %v3754
    %3763 = vst [vmem:[%s3758 + $0x20] sm:$0xff] %v3755
    %3764 = vst [vmem:[%s3758 + $0x28] sm:$0xff] %v3756
    %3765 = vst [vmem:[%s3758 + $0x30] sm:$0xff] %v3757
    %v3766 = vadd.f32 %v3674, 3.0
    %v3767 = vadd.f32 %v3675, 3.0
    %v3768 = vadd.f32 %v3676, 3.0
    %v3769 = vadd.f32 %v3677, 3.0
    %v3770 = vadd.f32 %v3678, 3.0
    %v3771 = vadd.f32 %v3679, 3.0
    %v3772 = vadd.f32 %v3680, 3.0
    %v3773 = vmax.f32 %v3766, 0.0
    %v3774 = vmax.f32 %v3767, 0.0
    %v3775 = vmax.f32 %v3768, 0.0
    %v3776 = vmax.f32 %v3769, 0.0
    %v3777 = vmax.f32 %v3770, 0.0
    %v3778 = vmax.f32 %v3771, 0.0
    %v3779 = vmax.f32 %v3772, 0.0
    %v3780 = vmin.f32 %v3773, 6.0
    %v3781 = vmin.f32 %v3774, 6.0
    %v3782 = vmin.f32 %v3775, 6.0
    %v3783 = vmin.f32 %v3776, 6.0
    %v3784 = vmin.f32 %v3777, 6.0
    %v3785 = vmin.f32 %v3778, 6.0
    %v3786 = vmin.f32 %v3779, 6.0
    %v3787 = vmul.f32 %v3674, %v3780
    %v3788 = vmul.f32 %v3675, %v3781
    %v3789 = vmul.f32 %v3676, %v3782
    %v3790 = vmul.f32 %v3677, %v3783
    %v3791 = vmul.f32 %v3678, %v3784
    %v3792 = vmul.f32 %v3679, %v3785
    %v3793 = vmul.f32 %v3680, %v3786
    %v3794 = vmul.f32 %v3787, 0.16666667
    %v3795 = vmul.f32 %v3788, 0.16666667
    %v3796 = vmul.f32 %v3789, 0.16666667
    %v3797 = vmul.f32 %v3790, 0.16666667
    %v3798 = vmul.f32 %v3791, 0.16666667
    %v3799 = vmul.f32 %v3792, 0.16666667
    %v3800 = vmul.f32 %v3793, 0.16666667
    %s3801 = scalar_lea.vmem %s5, 112
    %3802 = vst [vmem:[%s3801] sm:$0xff] %v3794
    %3803 = vst [vmem:[%s3801 + $0x8] sm:$0xff] %v3795
    %3804 = vst [vmem:[%s3801 + $0x10] sm:$0xff] %v3796
    %3805 = vst [vmem:[%s3801 + $0x18] sm:$0xff] %v3797
    %3806 = vst [vmem:[%s3801 + $0x20] sm:$0xff] %v3798
    %3807 = vst [vmem:[%s3801 + $0x28] sm:$0xff] %v3799
    %3808 = vst [vmem:[%s3801 + $0x30] sm:$0xff] %v3800
    %s3809 = sld [smem:[#allocation8 + $0x3]]
    %v3810 = vstv %s3809
    %s3811 = sld [smem:[#allocation8 + $0x4]]
    %v3812 = vstv %s3811
    %v3813 = vld [vmem:[#allocation2 + $0x7] sm:$0xff]
    %v3814 = vld [vmem:[#allocation2 + $0xf] sm:$0xff]
    %v3815 = vld [vmem:[#allocation2 + $0x17] sm:$0xff]
    %v3816 = vld [vmem:[#allocation2 + $0x1f] sm:$0xff]
    %v3817 = vld [vmem:[#allocation2 + $0x27] sm:$0xff]
    %v3818 = vld [vmem:[#allocation2 + $0x2f] sm:$0xff]
    %v3819 = vld [vmem:[#allocation2 + $0x37] sm:$0xff]
    %3820 = vrot.lane.b32.xlu0 %v3813, 1
    %v3821 = vpop.permute.xlu0 %3820
    %3822 = vrot.lane.b32.xlu0 %v3814, 1
    %v3823 = vpop.permute.xlu0 %3822
    %3824 = vrot.lane.b32.xlu0 %v3815, 1
    %v3825 = vpop.permute.xlu0 %3824
    %3826 = vrot.lane.b32.xlu0 %v3816, 1
    %v3827 = vpop.permute.xlu0 %3826
    %3828 = vrot.lane.b32.xlu0 %v3817, 1
    %v3829 = vpop.permute.xlu0 %3828
    %3830 = vrot.lane.b32.xlu0 %v3818, 1
    %v3831 = vpop.permute.xlu0 %3830
    %3832 = vrot.lane.b32.xlu0 %v3819, 1
    %v3833 = vpop.permute.xlu0 %3832
    %s3834 = sld [smem:[#allocation7 + $0x23]]
    %v3835 = vstv %s3834
    %v3836 = vmul.f32 %v3821, %v3835
    %v3837 = vmul.f32 %v3823, %v3835
    %v3838 = vmul.f32 %v3825, %v3835
    %v3839 = vmul.f32 %v3827, %v3835
    %v3840 = vmul.f32 %v3829, %v3835
    %v3841 = vmul.f32 %v3831, %v3835
    %v3842 = vmul.f32 %v3833, %v3835
    %v3843 = vadd.f32 %v3810, %v3836
    %v3844 = vadd.f32 %v3810, %v3837
    %v3845 = vadd.f32 %v3810, %v3838
    %v3846 = vadd.f32 %v3810, %v3839
    %v3847 = vadd.f32 %v3810, %v3840
    %v3848 = vadd.f32 %v3810, %v3841
    %v3849 = vadd.f32 %v3810, %v3842
    %s3850 = sld [smem:[#allocation7 + $0x2c]]
    %v3851 = vstv %s3850
    %v3852 = vmul.f32 %v3821, %v3851
    %v3853 = vmul.f32 %v3823, %v3851
    %v3854 = vmul.f32 %v3825, %v3851
    %v3855 = vmul.f32 %v3827, %v3851
    %v3856 = vmul.f32 %v3829, %v3851
    %v3857 = vmul.f32 %v3831, %v3851
    %v3858 = vmul.f32 %v3833, %v3851
    %v3859 = vadd.f32 %v3812, %v3852
    %v3860 = vadd.f32 %v3812, %v3853
    %v3861 = vadd.f32 %v3812, %v3854
    %v3862 = vadd.f32 %v3812, %v3855
    %v3863 = vadd.f32 %v3812, %v3856
    %v3864 = vadd.f32 %v3812, %v3857
    %v3865 = vadd.f32 %v3812, %v3858
    %s3866 = sld [smem:[#allocation7 + $0x22]]
    %v3867 = vstv %s3866
    %v3868 = vmul.f32 %v3813, %v3867
    %v3869 = vmul.f32 %v3814, %v3867
    %v3870 = vmul.f32 %v3815, %v3867
    %v3871 = vmul.f32 %v3816, %v3867
    %v3872 = vmul.f32 %v3817, %v3867
    %v3873 = vmul.f32 %v3818, %v3867
    %v3874 = vmul.f32 %v3819, %v3867
    %v3875 = vadd.f32 %v3843, %v3868
    %v3876 = vadd.f32 %v3844, %v3869
    %v3877 = vadd.f32 %v3845, %v3870
    %v3878 = vadd.f32 %v3846, %v3871
    %v3879 = vadd.f32 %v3847, %v3872
    %v3880 = vadd.f32 %v3848, %v3873
    %v3881 = vadd.f32 %v3849, %v3874
    %s3882 = sld [smem:[#allocation7 + $0x2b]]
    %v3883 = vstv %s3882
    %v3884 = vmul.f32 %v3813, %v3883
    %v3885 = vmul.f32 %v3814, %v3883
    %v3886 = vmul.f32 %v3815, %v3883
    %v3887 = vmul.f32 %v3816, %v3883
    %v3888 = vmul.f32 %v3817, %v3883
    %v3889 = vmul.f32 %v3818, %v3883
    %v3890 = vmul.f32 %v3819, %v3883
    %v3891 = vadd.f32 %v3859, %v3884
    %v3892 = vadd.f32 %v3860, %v3885
    %v3893 = vadd.f32 %v3861, %v3886
    %v3894 = vadd.f32 %v3862, %v3887
    %v3895 = vadd.f32 %v3863, %v3888
    %v3896 = vadd.f32 %v3864, %v3889
    %v3897 = vadd.f32 %v3865, %v3890
    %3898 = vrot.lane.b32.xlu0 %v3813, 127
    %v3899 = vpop.permute.xlu0 %3898
    %3900 = vrot.lane.b32.xlu0 %v3814, 127
    %v3901 = vpop.permute.xlu0 %3900
    %3902 = vrot.lane.b32.xlu0 %v3815, 127
    %v3903 = vpop.permute.xlu0 %3902
    %3904 = vrot.lane.b32.xlu0 %v3816, 127
    %v3905 = vpop.permute.xlu0 %3904
    %3906 = vrot.lane.b32.xlu0 %v3817, 127
    %v3907 = vpop.permute.xlu0 %3906
    %3908 = vrot.lane.b32.xlu0 %v3818, 127
    %v3909 = vpop.permute.xlu0 %3908
    %3910 = vrot.lane.b32.xlu0 %v3819, 127
    %v3911 = vpop.permute.xlu0 %3910
    %s3912 = sld [smem:[#allocation7 + $0x21]]
    %v3913 = vstv %s3912
    %v3914 = vmul.f32 %v3899, %v3913
    %v3915 = vmul.f32 %v3901, %v3913
    %v3916 = vmul.f32 %v3903, %v3913
    %v3917 = vmul.f32 %v3905, %v3913
    %v3918 = vmul.f32 %v3907, %v3913
    %v3919 = vmul.f32 %v3909, %v3913
    %v3920 = vmul.f32 %v3911, %v3913
    %v3921 = vadd.f32 %v3875, %v3914
    %v3922 = vadd.f32 %v3876, %v3915
    %v3923 = vadd.f32 %v3877, %v3916
    %v3924 = vadd.f32 %v3878, %v3917
    %v3925 = vadd.f32 %v3879, %v3918
    %v3926 = vadd.f32 %v3880, %v3919
    %v3927 = vadd.f32 %v3881, %v3920
    %s3928 = sld [smem:[#allocation7 + $0x2a]]
    %v3929 = vstv %s3928
    %v3930 = vmul.f32 %v3899, %v3929
    %v3931 = vmul.f32 %v3901, %v3929
    %v3932 = vmul.f32 %v3903, %v3929
    %v3933 = vmul.f32 %v3905, %v3929
    %v3934 = vmul.f32 %v3907, %v3929
    %v3935 = vmul.f32 %v3909, %v3929
    %v3936 = vmul.f32 %v3911, %v3929
    %v3937 = vadd.f32 %v3891, %v3930
    %v3938 = vadd.f32 %v3892, %v3931
    %v3939 = vadd.f32 %v3893, %v3932
    %v3940 = vadd.f32 %v3894, %v3933
    %v3941 = vadd.f32 %v3895, %v3934
    %v3942 = vadd.f32 %v3896, %v3935
    %v3943 = vadd.f32 %v3897, %v3936
    %v3944 = vld [vmem:[#allocation2 + $0x8] sm:$0xff]
    %v3945 = vld [vmem:[#allocation2 + $0x10] sm:$0xff]
    %v3946 = vld [vmem:[#allocation2 + $0x18] sm:$0xff]
    %v3947 = vld [vmem:[#allocation2 + $0x20] sm:$0xff]
    %v3948 = vld [vmem:[#allocation2 + $0x28] sm:$0xff]
    %v3949 = vld [vmem:[#allocation2 + $0x30] sm:$0xff]
    %v3950 = vld [vmem:[#allocation2 + $0x38] sm:$0xff]
    %3951 = vrot.lane.b32.xlu0 %v3944, 1
    %v3952 = vpop.permute.xlu0 %3951
    %3953 = vrot.lane.b32.xlu0 %v3945, 1
    %v3954 = vpop.permute.xlu0 %3953
    %3955 = vrot.lane.b32.xlu0 %v3946, 1
    %v3956 = vpop.permute.xlu0 %3955
    %3957 = vrot.lane.b32.xlu0 %v3947, 1
    %v3958 = vpop.permute.xlu0 %3957
    %3959 = vrot.lane.b32.xlu0 %v3948, 1
    %v3960 = vpop.permute.xlu0 %3959
    %3961 = vrot.lane.b32.xlu0 %v3949, 1
    %v3962 = vpop.permute.xlu0 %3961
    %3963 = vrot.lane.b32.xlu0 %v3950, 1
    %v3964 = vpop.permute.xlu0 %3963
    %s3965 = sld [smem:[#allocation7 + $0x20]]
    %v3966 = vstv %s3965
    %v3967 = vmul.f32 %v3952, %v3966
    %v3968 = vmul.f32 %v3954, %v3966
    %v3969 = vmul.f32 %v3956, %v3966
    %v3970 = vmul.f32 %v3958, %v3966
    %v3971 = vmul.f32 %v3960, %v3966
    %v3972 = vmul.f32 %v3962, %v3966
    %v3973 = vmul.f32 %v3964, %v3966
    %v3974 = vadd.f32 %v3921, %v3967
    %v3975 = vadd.f32 %v3922, %v3968
    %v3976 = vadd.f32 %v3923, %v3969
    %v3977 = vadd.f32 %v3924, %v3970
    %v3978 = vadd.f32 %v3925, %v3971
    %v3979 = vadd.f32 %v3926, %v3972
    %v3980 = vadd.f32 %v3927, %v3973
    %s3981 = sld [smem:[#allocation7 + $0x29]]
    %v3982 = vstv %s3981
    %v3983 = vmul.f32 %v3952, %v3982
    %v3984 = vmul.f32 %v3954, %v3982
    %v3985 = vmul.f32 %v3956, %v3982
    %v3986 = vmul.f32 %v3958, %v3982
    %v3987 = vmul.f32 %v3960, %v3982
    %v3988 = vmul.f32 %v3962, %v3982
    %v3989 = vmul.f32 %v3964, %v3982
    %v3990 = vadd.f32 %v3937, %v3983
    %v3991 = vadd.f32 %v3938, %v3984
    %v3992 = vadd.f32 %v3939, %v3985
    %v3993 = vadd.f32 %v3940, %v3986
    %v3994 = vadd.f32 %v3941, %v3987
    %v3995 = vadd.f32 %v3942, %v3988
    %v3996 = vadd.f32 %v3943, %v3989
    %s3997 = sld [smem:[#allocation7 + $0x1f]]
    %v3998 = vstv %s3997
    %v3999 = vmul.f32 %v3944, %v3998
    %v4000 = vmul.f32 %v3945, %v3998
    %v4001 = vmul.f32 %v3946, %v3998
    %v4002 = vmul.f32 %v3947, %v3998
    %v4003 = vmul.f32 %v3948, %v3998
    %v4004 = vmul.f32 %v3949, %v3998
    %v4005 = vmul.f32 %v3950, %v3998
    %v4006 = vadd.f32 %v3974, %v3999
    %v4007 = vadd.f32 %v3975, %v4000
    %v4008 = vadd.f32 %v3976, %v4001
    %v4009 = vadd.f32 %v3977, %v4002
    %v4010 = vadd.f32 %v3978, %v4003
    %v4011 = vadd.f32 %v3979, %v4004
    %v4012 = vadd.f32 %v3980, %v4005
    %s4013 = sld [smem:[#allocation7 + $0x28]]
    %v4014 = vstv %s4013
    %v4015 = vmul.f32 %v3944, %v4014
    %v4016 = vmul.f32 %v3945, %v4014
    %v4017 = vmul.f32 %v3946, %v4014
    %v4018 = vmul.f32 %v3947, %v4014
    %v4019 = vmul.f32 %v3948, %v4014
    %v4020 = vmul.f32 %v3949, %v4014
    %v4021 = vmul.f32 %v3950, %v4014
    %v4022 = vadd.f32 %v3990, %v4015
    %v4023 = vadd.f32 %v3991, %v4016
    %v4024 = vadd.f32 %v3992, %v4017
    %v4025 = vadd.f32 %v3993, %v4018
    %v4026 = vadd.f32 %v3994, %v4019
    %v4027 = vadd.f32 %v3995, %v4020
    %v4028 = vadd.f32 %v3996, %v4021
    %4029 = vrot.lane.b32.xlu0 %v3944, 127
    %v4030 = vpop.permute.xlu0 %4029
    %4031 = vrot.lane.b32.xlu0 %v3945, 127
    %v4032 = vpop.permute.xlu0 %4031
    %4033 = vrot.lane.b32.xlu0 %v3946, 127
    %v4034 = vpop.permute.xlu0 %4033
    %4035 = vrot.lane.b32.xlu0 %v3947, 127
    %v4036 = vpop.permute.xlu0 %4035
    %4037 = vrot.lane.b32.xlu0 %v3948, 127
    %v4038 = vpop.permute.xlu0 %4037
    %4039 = vrot.lane.b32.xlu0 %v3949, 127
    %v4040 = vpop.permute.xlu0 %4039
    %4041 = vrot.lane.b32.xlu0 %v3950, 127
    %v4042 = vpop.permute.xlu0 %4041
    %s4043 = sld [smem:[#allocation7 + $0x1e]]
    %v4044 = vstv %s4043
    %v4045 = vmul.f32 %v4030, %v4044
    %v4046 = vmul.f32 %v4032, %v4044
    %v4047 = vmul.f32 %v4034, %v4044
    %v4048 = vmul.f32 %v4036, %v4044
    %v4049 = vmul.f32 %v4038, %v4044
    %v4050 = vmul.f32 %v4040, %v4044
    %v4051 = vmul.f32 %v4042, %v4044
    %v4052 = vadd.f32 %v4006, %v4045
    %v4053 = vadd.f32 %v4007, %v4046
    %v4054 = vadd.f32 %v4008, %v4047
    %v4055 = vadd.f32 %v4009, %v4048
    %v4056 = vadd.f32 %v4010, %v4049
    %v4057 = vadd.f32 %v4011, %v4050
    %v4058 = vadd.f32 %v4012, %v4051
    %s4059 = sld [smem:[#allocation7 + $0x27]]
    %v4060 = vstv %s4059
    %v4061 = vmul.f32 %v4030, %v4060
    %v4062 = vmul.f32 %v4032, %v4060
    %v4063 = vmul.f32 %v4034, %v4060
    %v4064 = vmul.f32 %v4036, %v4060
    %v4065 = vmul.f32 %v4038, %v4060
    %v4066 = vmul.f32 %v4040, %v4060
    %v4067 = vmul.f32 %v4042, %v4060
    %v4068 = vadd.f32 %v4022, %v4061
    %v4069 = vadd.f32 %v4023, %v4062
    %v4070 = vadd.f32 %v4024, %v4063
    %v4071 = vadd.f32 %v4025, %v4064
    %v4072 = vadd.f32 %v4026, %v4065
    %v4073 = vadd.f32 %v4027, %v4066
    %v4074 = vadd.f32 %v4028, %v4067
    %v4075 = vld [vmem:[#allocation2 + $0x9] sm:$0xff]
    %v4076 = vld [vmem:[#allocation2 + $0x11] sm:$0xff]
    %v4077 = vld [vmem:[#allocation2 + $0x19] sm:$0xff]
    %v4078 = vld [vmem:[#allocation2 + $0x21] sm:$0xff]
    %v4079 = vld [vmem:[#allocation2 + $0x29] sm:$0xff]
    %v4080 = vld [vmem:[#allocation2 + $0x31] sm:$0xff]
    %v4081 = vld [vmem:[#allocation2 + $0x39] sm:$0xff]
    %4082 = vrot.lane.b32.xlu0 %v4075, 1
    %v4083 = vpop.permute.xlu0 %4082
    %4084 = vrot.lane.b32.xlu0 %v4076, 1
    %v4085 = vpop.permute.xlu0 %4084
    %4086 = vrot.lane.b32.xlu0 %v4077, 1
    %v4087 = vpop.permute.xlu0 %4086
    %4088 = vrot.lane.b32.xlu0 %v4078, 1
    %v4089 = vpop.permute.xlu0 %4088
    %4090 = vrot.lane.b32.xlu0 %v4079, 1
    %v4091 = vpop.permute.xlu0 %4090
    %4092 = vrot.lane.b32.xlu0 %v4080, 1
    %v4093 = vpop.permute.xlu0 %4092
    %4094 = vrot.lane.b32.xlu0 %v4081, 1
    %v4095 = vpop.permute.xlu0 %4094
    %s4096 = sld [smem:[#allocation7 + $0x1d]]
    %v4097 = vstv %s4096
    %v4098 = vmul.f32 %v4083, %v4097
    %v4099 = vmul.f32 %v4085, %v4097
    %v4100 = vmul.f32 %v4087, %v4097
    %v4101 = vmul.f32 %v4089, %v4097
    %v4102 = vmul.f32 %v4091, %v4097
    %v4103 = vmul.f32 %v4093, %v4097
    %v4104 = vmul.f32 %v4095, %v4097
    %v4105 = vadd.f32 %v4052, %v4098
    %v4106 = vadd.f32 %v4053, %v4099
    %v4107 = vadd.f32 %v4054, %v4100
    %v4108 = vadd.f32 %v4055, %v4101
    %v4109 = vadd.f32 %v4056, %v4102
    %v4110 = vadd.f32 %v4057, %v4103
    %v4111 = vadd.f32 %v4058, %v4104
    %s4112 = sld [smem:[#allocation7 + $0x26]]
    %v4113 = vstv %s4112
    %v4114 = vmul.f32 %v4083, %v4113
    %v4115 = vmul.f32 %v4085, %v4113
    %v4116 = vmul.f32 %v4087, %v4113
    %v4117 = vmul.f32 %v4089, %v4113
    %v4118 = vmul.f32 %v4091, %v4113
    %v4119 = vmul.f32 %v4093, %v4113
    %v4120 = vmul.f32 %v4095, %v4113
    %v4121 = vadd.f32 %v4068, %v4114
    %v4122 = vadd.f32 %v4069, %v4115
    %v4123 = vadd.f32 %v4070, %v4116
    %v4124 = vadd.f32 %v4071, %v4117
    %v4125 = vadd.f32 %v4072, %v4118
    %v4126 = vadd.f32 %v4073, %v4119
    %v4127 = vadd.f32 %v4074, %v4120
    %s4128 = sld [smem:[#allocation7 + $0x1c]]
    %v4129 = vstv %s4128
    %v4130 = vmul.f32 %v4075, %v4129
    %v4131 = vmul.f32 %v4076, %v4129
    %v4132 = vmul.f32 %v4077, %v4129
    %v4133 = vmul.f32 %v4078, %v4129
    %v4134 = vmul.f32 %v4079, %v4129
    %v4135 = vmul.f32 %v4080, %v4129
    %v4136 = vmul.f32 %v4081, %v4129
    %v4137 = vadd.f32 %v4105, %v4130
    %v4138 = vadd.f32 %v4106, %v4131
    %v4139 = vadd.f32 %v4107, %v4132
    %v4140 = vadd.f32 %v4108, %v4133
    %v4141 = vadd.f32 %v4109, %v4134
    %v4142 = vadd.f32 %v4110, %v4135
    %v4143 = vadd.f32 %v4111, %v4136
    %s4144 = sld [smem:[#allocation7 + $0x25]]
    %v4145 = vstv %s4144
    %v4146 = vmul.f32 %v4075, %v4145
    %v4147 = vmul.f32 %v4076, %v4145
    %v4148 = vmul.f32 %v4077, %v4145
    %v4149 = vmul.f32 %v4078, %v4145
    %v4150 = vmul.f32 %v4079, %v4145
    %v4151 = vmul.f32 %v4080, %v4145
    %v4152 = vmul.f32 %v4081, %v4145
    %v4153 = vadd.f32 %v4121, %v4146
    %v4154 = vadd.f32 %v4122, %v4147
    %v4155 = vadd.f32 %v4123, %v4148
    %v4156 = vadd.f32 %v4124, %v4149
    %v4157 = vadd.f32 %v4125, %v4150
    %v4158 = vadd.f32 %v4126, %v4151
    %v4159 = vadd.f32 %v4127, %v4152
    %4160 = vrot.lane.b32.xlu0 %v4075, 127
    %v4161 = vpop.permute.xlu0 %4160
    %4162 = vrot.lane.b32.xlu0 %v4076, 127
    %v4163 = vpop.permute.xlu0 %4162
    %4164 = vrot.lane.b32.xlu0 %v4077, 127
    %v4165 = vpop.permute.xlu0 %4164
    %4166 = vrot.lane.b32.xlu0 %v4078, 127
    %v4167 = vpop.permute.xlu0 %4166
    %4168 = vrot.lane.b32.xlu0 %v4079, 127
    %v4169 = vpop.permute.xlu0 %4168
    %4170 = vrot.lane.b32.xlu0 %v4080, 127
    %v4171 = vpop.permute.xlu0 %4170
    %4172 = vrot.lane.b32.xlu0 %v4081, 127
    %v4173 = vpop.permute.xlu0 %4172
    %s4174 = sld [smem:[#allocation7 + $0x1b]]
    %v4175 = vstv %s4174
    %v4176 = vmul.f32 %v4161, %v4175
    %v4177 = vmul.f32 %v4163, %v4175
    %v4178 = vmul.f32 %v4165, %v4175
    %v4179 = vmul.f32 %v4167, %v4175
    %v4180 = vmul.f32 %v4169, %v4175
    %v4181 = vmul.f32 %v4171, %v4175
    %v4182 = vmul.f32 %v4173, %v4175
    %v4183 = vadd.f32 %v4137, %v4176
    %v4184 = vadd.f32 %v4138, %v4177
    %v4185 = vadd.f32 %v4139, %v4178
    %v4186 = vadd.f32 %v4140, %v4179
    %v4187 = vadd.f32 %v4141, %v4180
    %v4188 = vadd.f32 %v4142, %v4181
    %v4189 = vadd.f32 %v4143, %v4182
    %s4190 = sld [smem:[#allocation7 + $0x24]]
    %v4191 = vstv %s4190
    %v4192 = vmul.f32 %v4161, %v4191
    %v4193 = vmul.f32 %v4163, %v4191
    %v4194 = vmul.f32 %v4165, %v4191
    %v4195 = vmul.f32 %v4167, %v4191
    %v4196 = vmul.f32 %v4169, %v4191
    %v4197 = vmul.f32 %v4171, %v4191
    %v4198 = vmul.f32 %v4173, %v4191
    %v4199 = vadd.f32 %v4153, %v4192
    %v4200 = vadd.f32 %v4154, %v4193
    %v4201 = vadd.f32 %v4155, %v4194
    %v4202 = vadd.f32 %v4156, %v4195
    %v4203 = vadd.f32 %v4157, %v4196
    %v4204 = vadd.f32 %v4158, %v4197
    %v4205 = vadd.f32 %v4159, %v4198
    %v4206 = vld [vmem:[%s922 + $0x7] sm:$0xff]
    %v4207 = vld [vmem:[%s922 + $0xf] sm:$0xff]
    %v4208 = vld [vmem:[%s922 + $0x17] sm:$0xff]
    %v4209 = vld [vmem:[%s922 + $0x1f] sm:$0xff]
    %v4210 = vld [vmem:[%s922 + $0x27] sm:$0xff]
    %v4211 = vld [vmem:[%s922 + $0x2f] sm:$0xff]
    %v4212 = vld [vmem:[%s922 + $0x37] sm:$0xff]
    %4213 = vrot.lane.b32.xlu0 %v4206, 1
    %v4214 = vpop.permute.xlu0 %4213
    %4215 = vrot.lane.b32.xlu0 %v4207, 1
    %v4216 = vpop.permute.xlu0 %4215
    %4217 = vrot.lane.b32.xlu0 %v4208, 1
    %v4218 = vpop.permute.xlu0 %4217
    %4219 = vrot.lane.b32.xlu0 %v4209, 1
    %v4220 = vpop.permute.xlu0 %4219
    %4221 = vrot.lane.b32.xlu0 %v4210, 1
    %v4222 = vpop.permute.xlu0 %4221
    %4223 = vrot.lane.b32.xlu0 %v4211, 1
    %v4224 = vpop.permute.xlu0 %4223
    %4225 = vrot.lane.b32.xlu0 %v4212, 1
    %v4226 = vpop.permute.xlu0 %4225
    %s4227 = sld [smem:[#allocation7 + $0x50]]
    %v4228 = vstv %s4227
    %v4229 = vmul.f32 %v4214, %v4228
    %v4230 = vmul.f32 %v4216, %v4228
    %v4231 = vmul.f32 %v4218, %v4228
    %v4232 = vmul.f32 %v4220, %v4228
    %v4233 = vmul.f32 %v4222, %v4228
    %v4234 = vmul.f32 %v4224, %v4228
    %v4235 = vmul.f32 %v4226, %v4228
    %v4236 = vadd.f32 %v4183, %v4229
    %v4237 = vadd.f32 %v4184, %v4230
    %v4238 = vadd.f32 %v4185, %v4231
    %v4239 = vadd.f32 %v4186, %v4232
    %v4240 = vadd.f32 %v4187, %v4233
    %v4241 = vadd.f32 %v4188, %v4234
    %v4242 = vadd.f32 %v4189, %v4235
    %s4243 = sld [smem:[#allocation7 + $0x59]]
    %v4244 = vstv %s4243
    %v4245 = vmul.f32 %v4214, %v4244
    %v4246 = vmul.f32 %v4216, %v4244
    %v4247 = vmul.f32 %v4218, %v4244
    %v4248 = vmul.f32 %v4220, %v4244
    %v4249 = vmul.f32 %v4222, %v4244
    %v4250 = vmul.f32 %v4224, %v4244
    %v4251 = vmul.f32 %v4226, %v4244
    %v4252 = vadd.f32 %v4199, %v4245
    %v4253 = vadd.f32 %v4200, %v4246
    %v4254 = vadd.f32 %v4201, %v4247
    %v4255 = vadd.f32 %v4202, %v4248
    %v4256 = vadd.f32 %v4203, %v4249
    %v4257 = vadd.f32 %v4204, %v4250
    %v4258 = vadd.f32 %v4205, %v4251
    %s4259 = sld [smem:[#allocation7 + $0x4f]]
    %v4260 = vstv %s4259
    %v4261 = vmul.f32 %v4206, %v4260
    %v4262 = vmul.f32 %v4207, %v4260
    %v4263 = vmul.f32 %v4208, %v4260
    %v4264 = vmul.f32 %v4209, %v4260
    %v4265 = vmul.f32 %v4210, %v4260
    %v4266 = vmul.f32 %v4211, %v4260
    %v4267 = vmul.f32 %v4212, %v4260
    %v4268 = vadd.f32 %v4236, %v4261
    %v4269 = vadd.f32 %v4237, %v4262
    %v4270 = vadd.f32 %v4238, %v4263
    %v4271 = vadd.f32 %v4239, %v4264
    %v4272 = vadd.f32 %v4240, %v4265
    %v4273 = vadd.f32 %v4241, %v4266
    %v4274 = vadd.f32 %v4242, %v4267
    %s4275 = sld [smem:[#allocation7 + $0x58]]
    %v4276 = vstv %s4275
    %v4277 = vmul.f32 %v4206, %v4276
    %v4278 = vmul.f32 %v4207, %v4276
    %v4279 = vmul.f32 %v4208, %v4276
    %v4280 = vmul.f32 %v4209, %v4276
    %v4281 = vmul.f32 %v4210, %v4276
    %v4282 = vmul.f32 %v4211, %v4276
    %v4283 = vmul.f32 %v4212, %v4276
    %v4284 = vadd.f32 %v4252, %v4277
    %v4285 = vadd.f32 %v4253, %v4278
    %v4286 = vadd.f32 %v4254, %v4279
    %v4287 = vadd.f32 %v4255, %v4280
    %v4288 = vadd.f32 %v4256, %v4281
    %v4289 = vadd.f32 %v4257, %v4282
    %v4290 = vadd.f32 %v4258, %v4283
    %4291 = vrot.lane.b32.xlu0 %v4206, 127
    %v4292 = vpop.permute.xlu0 %4291
    %4293 = vrot.lane.b32.xlu0 %v4207, 127
    %v4294 = vpop.permute.xlu0 %4293
    %4295 = vrot.lane.b32.xlu0 %v4208, 127
    %v4296 = vpop.permute.xlu0 %4295
    %4297 = vrot.lane.b32.xlu0 %v4209, 127
    %v4298 = vpop.permute.xlu0 %4297
    %4299 = vrot.lane.b32.xlu0 %v4210, 127
    %v4300 = vpop.permute.xlu0 %4299
    %4301 = vrot.lane.b32.xlu0 %v4211, 127
    %v4302 = vpop.permute.xlu0 %4301
    %4303 = vrot.lane.b32.xlu0 %v4212, 127
    %v4304 = vpop.permute.xlu0 %4303
    %s4305 = sld [smem:[#allocation7 + $0x4e]]
    %v4306 = vstv %s4305
    %v4307 = vmul.f32 %v4292, %v4306
    %v4308 = vmul.f32 %v4294, %v4306
    %v4309 = vmul.f32 %v4296, %v4306
    %v4310 = vmul.f32 %v4298, %v4306
    %v4311 = vmul.f32 %v4300, %v4306
    %v4312 = vmul.f32 %v4302, %v4306
    %v4313 = vmul.f32 %v4304, %v4306
    %v4314 = vadd.f32 %v4268, %v4307
    %v4315 = vadd.f32 %v4269, %v4308
    %v4316 = vadd.f32 %v4270, %v4309
    %v4317 = vadd.f32 %v4271, %v4310
    %v4318 = vadd.f32 %v4272, %v4311
    %v4319 = vadd.f32 %v4273, %v4312
    %v4320 = vadd.f32 %v4274, %v4313
    %s4321 = sld [smem:[#allocation7 + $0x57]]
    %v4322 = vstv %s4321
    %v4323 = vmul.f32 %v4292, %v4322
    %v4324 = vmul.f32 %v4294, %v4322
    %v4325 = vmul.f32 %v4296, %v4322
    %v4326 = vmul.f32 %v4298, %v4322
    %v4327 = vmul.f32 %v4300, %v4322
    %v4328 = vmul.f32 %v4302, %v4322
    %v4329 = vmul.f32 %v4304, %v4322
    %v4330 = vadd.f32 %v4284, %v4323
    %v4331 = vadd.f32 %v4285, %v4324
    %v4332 = vadd.f32 %v4286, %v4325
    %v4333 = vadd.f32 %v4287, %v4326
    %v4334 = vadd.f32 %v4288, %v4327
    %v4335 = vadd.f32 %v4289, %v4328
    %v4336 = vadd.f32 %v4290, %v4329
    %v4337 = vld [vmem:[%s922 + $0x8] sm:$0xff]
    %v4338 = vld [vmem:[%s922 + $0x10] sm:$0xff]
    %v4339 = vld [vmem:[%s922 + $0x18] sm:$0xff]
    %v4340 = vld [vmem:[%s922 + $0x20] sm:$0xff]
    %v4341 = vld [vmem:[%s922 + $0x28] sm:$0xff]
    %v4342 = vld [vmem:[%s922 + $0x30] sm:$0xff]
    %v4343 = vld [vmem:[%s922 + $0x38] sm:$0xff]
    %4344 = vrot.lane.b32.xlu0 %v4337, 1
    %v4345 = vpop.permute.xlu0 %4344
    %4346 = vrot.lane.b32.xlu0 %v4338, 1
    %v4347 = vpop.permute.xlu0 %4346
    %4348 = vrot.lane.b32.xlu0 %v4339, 1
    %v4349 = vpop.permute.xlu0 %4348
    %4350 = vrot.lane.b32.xlu0 %v4340, 1
    %v4351 = vpop.permute.xlu0 %4350
    %4352 = vrot.lane.b32.xlu0 %v4341, 1
    %v4353 = vpop.permute.xlu0 %4352
    %4354 = vrot.lane.b32.xlu0 %v4342, 1
    %v4355 = vpop.permute.xlu0 %4354
    %4356 = vrot.lane.b32.xlu0 %v4343, 1
    %v4357 = vpop.permute.xlu0 %4356
    %s4358 = sld [smem:[#allocation7 + $0x4d]]
    %v4359 = vstv %s4358
    %v4360 = vmul.f32 %v4345, %v4359
    %v4361 = vmul.f32 %v4347, %v4359
    %v4362 = vmul.f32 %v4349, %v4359
    %v4363 = vmul.f32 %v4351, %v4359
    %v4364 = vmul.f32 %v4353, %v4359
    %v4365 = vmul.f32 %v4355, %v4359
    %v4366 = vmul.f32 %v4357, %v4359
    %v4367 = vadd.f32 %v4314, %v4360
    %v4368 = vadd.f32 %v4315, %v4361
    %v4369 = vadd.f32 %v4316, %v4362
    %v4370 = vadd.f32 %v4317, %v4363
    %v4371 = vadd.f32 %v4318, %v4364
    %v4372 = vadd.f32 %v4319, %v4365
    %v4373 = vadd.f32 %v4320, %v4366
    %s4374 = sld [smem:[#allocation7 + $0x56]]
    %v4375 = vstv %s4374
    %v4376 = vmul.f32 %v4345, %v4375
    %v4377 = vmul.f32 %v4347, %v4375
    %v4378 = vmul.f32 %v4349, %v4375
    %v4379 = vmul.f32 %v4351, %v4375
    %v4380 = vmul.f32 %v4353, %v4375
    %v4381 = vmul.f32 %v4355, %v4375
    %v4382 = vmul.f32 %v4357, %v4375
    %v4383 = vadd.f32 %v4330, %v4376
    %v4384 = vadd.f32 %v4331, %v4377
    %v4385 = vadd.f32 %v4332, %v4378
    %v4386 = vadd.f32 %v4333, %v4379
    %v4387 = vadd.f32 %v4334, %v4380
    %v4388 = vadd.f32 %v4335, %v4381
    %v4389 = vadd.f32 %v4336, %v4382
    %s4390 = sld [smem:[#allocation7 + $0x4c]]
    %v4391 = vstv %s4390
    %v4392 = vmul.f32 %v4337, %v4391
    %v4393 = vmul.f32 %v4338, %v4391
    %v4394 = vmul.f32 %v4339, %v4391
    %v4395 = vmul.f32 %v4340, %v4391
    %v4396 = vmul.f32 %v4341, %v4391
    %v4397 = vmul.f32 %v4342, %v4391
    %v4398 = vmul.f32 %v4343, %v4391
    %v4399 = vadd.f32 %v4367, %v4392
    %v4400 = vadd.f32 %v4368, %v4393
    %v4401 = vadd.f32 %v4369, %v4394
    %v4402 = vadd.f32 %v4370, %v4395
    %v4403 = vadd.f32 %v4371, %v4396
    %v4404 = vadd.f32 %v4372, %v4397
    %v4405 = vadd.f32 %v4373, %v4398
    %s4406 = sld [smem:[#allocation7 + $0x55]]
    %v4407 = vstv %s4406
    %v4408 = vmul.f32 %v4337, %v4407
    %v4409 = vmul.f32 %v4338, %v4407
    %v4410 = vmul.f32 %v4339, %v4407
    %v4411 = vmul.f32 %v4340, %v4407
    %v4412 = vmul.f32 %v4341, %v4407
    %v4413 = vmul.f32 %v4342, %v4407
    %v4414 = vmul.f32 %v4343, %v4407
    %v4415 = vadd.f32 %v4383, %v4408
    %v4416 = vadd.f32 %v4384, %v4409
    %v4417 = vadd.f32 %v4385, %v4410
    %v4418 = vadd.f32 %v4386, %v4411
    %v4419 = vadd.f32 %v4387, %v4412
    %v4420 = vadd.f32 %v4388, %v4413
    %v4421 = vadd.f32 %v4389, %v4414
    %4422 = vrot.lane.b32.xlu0 %v4337, 127
    %v4423 = vpop.permute.xlu0 %4422
    %4424 = vrot.lane.b32.xlu0 %v4338, 127
    %v4425 = vpop.permute.xlu0 %4424
    %4426 = vrot.lane.b32.xlu0 %v4339, 127
    %v4427 = vpop.permute.xlu0 %4426
    %4428 = vrot.lane.b32.xlu0 %v4340, 127
    %v4429 = vpop.permute.xlu0 %4428
    %4430 = vrot.lane.b32.xlu0 %v4341, 127
    %v4431 = vpop.permute.xlu0 %4430
    %4432 = vrot.lane.b32.xlu0 %v4342, 127
    %v4433 = vpop.permute.xlu0 %4432
    %4434 = vrot.lane.b32.xlu0 %v4343, 127
    %v4435 = vpop.permute.xlu0 %4434
    %s4436 = sld [smem:[#allocation7 + $0x4b]]
    %v4437 = vstv %s4436
    %v4438 = vmul.f32 %v4423, %v4437
    %v4439 = vmul.f32 %v4425, %v4437
    %v4440 = vmul.f32 %v4427, %v4437
    %v4441 = vmul.f32 %v4429, %v4437
    %v4442 = vmul.f32 %v4431, %v4437
    %v4443 = vmul.f32 %v4433, %v4437
    %v4444 = vmul.f32 %v4435, %v4437
    %v4445 = vadd.f32 %v4399, %v4438
    %v4446 = vadd.f32 %v4400, %v4439
    %v4447 = vadd.f32 %v4401, %v4440
    %v4448 = vadd.f32 %v4402, %v4441
    %v4449 = vadd.f32 %v4403, %v4442
    %v4450 = vadd.f32 %v4404, %v4443
    %v4451 = vadd.f32 %v4405, %v4444
    %s4452 = sld [smem:[#allocation7 + $0x54]]
    %v4453 = vstv %s4452
    %v4454 = vmul.f32 %v4423, %v4453
    %v4455 = vmul.f32 %v4425, %v4453
    %v4456 = vmul.f32 %v4427, %v4453
    %v4457 = vmul.f32 %v4429, %v4453
    %v4458 = vmul.f32 %v4431, %v4453
    %v4459 = vmul.f32 %v4433, %v4453
    %v4460 = vmul.f32 %v4435, %v4453
    %v4461 = vadd.f32 %v4415, %v4454
    %v4462 = vadd.f32 %v4416, %v4455
    %v4463 = vadd.f32 %v4417, %v4456
    %v4464 = vadd.f32 %v4418, %v4457
    %v4465 = vadd.f32 %v4419, %v4458
    %v4466 = vadd.f32 %v4420, %v4459
    %v4467 = vadd.f32 %v4421, %v4460
    %v4468 = vld [vmem:[%s922 + $0x9] sm:$0xff]
    %v4469 = vld [vmem:[%s922 + $0x11] sm:$0xff]
    %v4470 = vld [vmem:[%s922 + $0x19] sm:$0xff]
    %v4471 = vld [vmem:[%s922 + $0x21] sm:$0xff]
    %v4472 = vld [vmem:[%s922 + $0x29] sm:$0xff]
    %v4473 = vld [vmem:[%s922 + $0x31] sm:$0xff]
    %v4474 = vld [vmem:[%s922 + $0x39] sm:$0xff]
    %4475 = vrot.lane.b32.xlu0 %v4468, 1
    %v4476 = vpop.permute.xlu0 %4475
    %4477 = vrot.lane.b32.xlu0 %v4469, 1
    %v4478 = vpop.permute.xlu0 %4477
    %4479 = vrot.lane.b32.xlu0 %v4470, 1
    %v4480 = vpop.permute.xlu0 %4479
    %4481 = vrot.lane.b32.xlu0 %v4471, 1
    %v4482 = vpop.permute.xlu0 %4481
    %4483 = vrot.lane.b32.xlu0 %v4472, 1
    %v4484 = vpop.permute.xlu0 %4483
    %4485 = vrot.lane.b32.xlu0 %v4473, 1
    %v4486 = vpop.permute.xlu0 %4485
    %4487 = vrot.lane.b32.xlu0 %v4474, 1
    %v4488 = vpop.permute.xlu0 %4487
    %s4489 = sld [smem:[#allocation7 + $0x4a]]
    %v4490 = vstv %s4489
    %v4491 = vmul.f32 %v4476, %v4490
    %v4492 = vmul.f32 %v4478, %v4490
    %v4493 = vmul.f32 %v4480, %v4490
    %v4494 = vmul.f32 %v4482, %v4490
    %v4495 = vmul.f32 %v4484, %v4490
    %v4496 = vmul.f32 %v4486, %v4490
    %v4497 = vmul.f32 %v4488, %v4490
    %v4498 = vadd.f32 %v4445, %v4491
    %v4499 = vadd.f32 %v4446, %v4492
    %v4500 = vadd.f32 %v4447, %v4493
    %v4501 = vadd.f32 %v4448, %v4494
    %v4502 = vadd.f32 %v4449, %v4495
    %v4503 = vadd.f32 %v4450, %v4496
    %v4504 = vadd.f32 %v4451, %v4497
    %s4505 = sld [smem:[#allocation7 + $0x53]]
    %v4506 = vstv %s4505
    %v4507 = vmul.f32 %v4476, %v4506
    %v4508 = vmul.f32 %v4478, %v4506
    %v4509 = vmul.f32 %v4480, %v4506
    %v4510 = vmul.f32 %v4482, %v4506
    %v4511 = vmul.f32 %v4484, %v4506
    %v4512 = vmul.f32 %v4486, %v4506
    %v4513 = vmul.f32 %v4488, %v4506
    %v4514 = vadd.f32 %v4461, %v4507
    %v4515 = vadd.f32 %v4462, %v4508
    %v4516 = vadd.f32 %v4463, %v4509
    %v4517 = vadd.f32 %v4464, %v4510
    %v4518 = vadd.f32 %v4465, %v4511
    %v4519 = vadd.f32 %v4466, %v4512
    %v4520 = vadd.f32 %v4467, %v4513
    %s4521 = sld [smem:[#allocation7 + $0x49]]
    %v4522 = vstv %s4521
    %v4523 = vmul.f32 %v4468, %v4522
    %v4524 = vmul.f32 %v4469, %v4522
    %v4525 = vmul.f32 %v4470, %v4522
    %v4526 = vmul.f32 %v4471, %v4522
    %v4527 = vmul.f32 %v4472, %v4522
    %v4528 = vmul.f32 %v4473, %v4522
    %v4529 = vmul.f32 %v4474, %v4522
    %v4530 = vadd.f32 %v4498, %v4523
    %v4531 = vadd.f32 %v4499, %v4524
    %v4532 = vadd.f32 %v4500, %v4525
    %v4533 = vadd.f32 %v4501, %v4526
    %v4534 = vadd.f32 %v4502, %v4527
    %v4535 = vadd.f32 %v4503, %v4528
    %v4536 = vadd.f32 %v4504, %v4529
    %s4537 = sld [smem:[#allocation7 + $0x52]]
    %v4538 = vstv %s4537
    %v4539 = vmul.f32 %v4468, %v4538
    %v4540 = vmul.f32 %v4469, %v4538
    %v4541 = vmul.f32 %v4470, %v4538
    %v4542 = vmul.f32 %v4471, %v4538
    %v4543 = vmul.f32 %v4472, %v4538
    %v4544 = vmul.f32 %v4473, %v4538
    %v4545 = vmul.f32 %v4474, %v4538
    %v4546 = vadd.f32 %v4514, %v4539
    %v4547 = vadd.f32 %v4515, %v4540
    %v4548 = vadd.f32 %v4516, %v4541
    %v4549 = vadd.f32 %v4517, %v4542
    %v4550 = vadd.f32 %v4518, %v4543
    %v4551 = vadd.f32 %v4519, %v4544
    %v4552 = vadd.f32 %v4520, %v4545
    %4553 = vrot.lane.b32.xlu0 %v4468, 127
    %v4554 = vpop.permute.xlu0 %4553
    %4555 = vrot.lane.b32.xlu0 %v4469, 127
    %v4556 = vpop.permute.xlu0 %4555
    %4557 = vrot.lane.b32.xlu0 %v4470, 127
    %v4558 = vpop.permute.xlu0 %4557
    %4559 = vrot.lane.b32.xlu0 %v4471, 127
    %v4560 = vpop.permute.xlu0 %4559
    %4561 = vrot.lane.b32.xlu0 %v4472, 127
    %v4562 = vpop.permute.xlu0 %4561
    %4563 = vrot.lane.b32.xlu0 %v4473, 127
    %v4564 = vpop.permute.xlu0 %4563
    %4565 = vrot.lane.b32.xlu0 %v4474, 127
    %v4566 = vpop.permute.xlu0 %4565
    %s4567 = sld [smem:[#allocation7 + $0x48]]
    %v4568 = vstv %s4567
    %v4569 = vmul.f32 %v4554, %v4568
    %v4570 = vmul.f32 %v4556, %v4568
    %v4571 = vmul.f32 %v4558, %v4568
    %v4572 = vmul.f32 %v4560, %v4568
    %v4573 = vmul.f32 %v4562, %v4568
    %v4574 = vmul.f32 %v4564, %v4568
    %v4575 = vmul.f32 %v4566, %v4568
    %v4576 = vadd.f32 %v4530, %v4569
    %v4577 = vadd.f32 %v4531, %v4570
    %v4578 = vadd.f32 %v4532, %v4571
    %v4579 = vadd.f32 %v4533, %v4572
    %v4580 = vadd.f32 %v4534, %v4573
    %v4581 = vadd.f32 %v4535, %v4574
    %v4582 = vadd.f32 %v4536, %v4575
    %s4583 = sld [smem:[#allocation7 + $0x51]]
    %v4584 = vstv %s4583
    %v4585 = vmul.f32 %v4554, %v4584
    %v4586 = vmul.f32 %v4556, %v4584
    %v4587 = vmul.f32 %v4558, %v4584
    %v4588 = vmul.f32 %v4560, %v4584
    %v4589 = vmul.f32 %v4562, %v4584
    %v4590 = vmul.f32 %v4564, %v4584
    %v4591 = vmul.f32 %v4566, %v4584
    %v4592 = vadd.f32 %v4546, %v4585
    %v4593 = vadd.f32 %v4547, %v4586
    %v4594 = vadd.f32 %v4548, %v4587
    %v4595 = vadd.f32 %v4549, %v4588
    %v4596 = vadd.f32 %v4550, %v4589
    %v4597 = vadd.f32 %v4551, %v4590
    %v4598 = vadd.f32 %v4552, %v4591
    %v4599 = vld [vmem:[%s939 + $0x7] sm:$0xff]
    %v4600 = vld [vmem:[%s939 + $0xf] sm:$0xff]
    %v4601 = vld [vmem:[%s939 + $0x17] sm:$0xff]
    %v4602 = vld [vmem:[%s939 + $0x1f] sm:$0xff]
    %v4603 = vld [vmem:[%s939 + $0x27] sm:$0xff]
    %v4604 = vld [vmem:[%s939 + $0x2f] sm:$0xff]
    %v4605 = vld [vmem:[%s939 + $0x37] sm:$0xff]
    %4606 = vrot.lane.b32.xlu0 %v4599, 1
    %v4607 = vpop.permute.xlu0 %4606
    %4608 = vrot.lane.b32.xlu0 %v4600, 1
    %v4609 = vpop.permute.xlu0 %4608
    %4610 = vrot.lane.b32.xlu0 %v4601, 1
    %v4611 = vpop.permute.xlu0 %4610
    %4612 = vrot.lane.b32.xlu0 %v4602, 1
    %v4613 = vpop.permute.xlu0 %4612
    %4614 = vrot.lane.b32.xlu0 %v4603, 1
    %v4615 = vpop.permute.xlu0 %4614
    %4616 = vrot.lane.b32.xlu0 %v4604, 1
    %v4617 = vpop.permute.xlu0 %4616
    %4618 = vrot.lane.b32.xlu0 %v4605, 1
    %v4619 = vpop.permute.xlu0 %4618
    %s4620 = sld [smem:[#allocation7 + $0x7d]]
    %v4621 = vstv %s4620
    %v4622 = vmul.f32 %v4607, %v4621
    %v4623 = vmul.f32 %v4609, %v4621
    %v4624 = vmul.f32 %v4611, %v4621
    %v4625 = vmul.f32 %v4613, %v4621
    %v4626 = vmul.f32 %v4615, %v4621
    %v4627 = vmul.f32 %v4617, %v4621
    %v4628 = vmul.f32 %v4619, %v4621
    %v4629 = vadd.f32 %v4576, %v4622
    %v4630 = vadd.f32 %v4577, %v4623
    %v4631 = vadd.f32 %v4578, %v4624
    %v4632 = vadd.f32 %v4579, %v4625
    %v4633 = vadd.f32 %v4580, %v4626
    %v4634 = vadd.f32 %v4581, %v4627
    %v4635 = vadd.f32 %v4582, %v4628
    %s4636 = sld [smem:[#allocation7 + $0x86]]
    %v4637 = vstv %s4636
    %v4638 = vmul.f32 %v4607, %v4637
    %v4639 = vmul.f32 %v4609, %v4637
    %v4640 = vmul.f32 %v4611, %v4637
    %v4641 = vmul.f32 %v4613, %v4637
    %v4642 = vmul.f32 %v4615, %v4637
    %v4643 = vmul.f32 %v4617, %v4637
    %v4644 = vmul.f32 %v4619, %v4637
    %v4645 = vadd.f32 %v4592, %v4638
    %v4646 = vadd.f32 %v4593, %v4639
    %v4647 = vadd.f32 %v4594, %v4640
    %v4648 = vadd.f32 %v4595, %v4641
    %v4649 = vadd.f32 %v4596, %v4642
    %v4650 = vadd.f32 %v4597, %v4643
    %v4651 = vadd.f32 %v4598, %v4644
    %s4652 = sld [smem:[#allocation7 + $0x7c]]
    %v4653 = vstv %s4652
    %v4654 = vmul.f32 %v4599, %v4653
    %v4655 = vmul.f32 %v4600, %v4653
    %v4656 = vmul.f32 %v4601, %v4653
    %v4657 = vmul.f32 %v4602, %v4653
    %v4658 = vmul.f32 %v4603, %v4653
    %v4659 = vmul.f32 %v4604, %v4653
    %v4660 = vmul.f32 %v4605, %v4653
    %v4661 = vadd.f32 %v4629, %v4654
    %v4662 = vadd.f32 %v4630, %v4655
    %v4663 = vadd.f32 %v4631, %v4656
    %v4664 = vadd.f32 %v4632, %v4657
    %v4665 = vadd.f32 %v4633, %v4658
    %v4666 = vadd.f32 %v4634, %v4659
    %v4667 = vadd.f32 %v4635, %v4660
    %s4668 = sld [smem:[#allocation7 + $0x85]]
    %v4669 = vstv %s4668
    %v4670 = vmul.f32 %v4599, %v4669
    %v4671 = vmul.f32 %v4600, %v4669
    %v4672 = vmul.f32 %v4601, %v4669
    %v4673 = vmul.f32 %v4602, %v4669
    %v4674 = vmul.f32 %v4603, %v4669
    %v4675 = vmul.f32 %v4604, %v4669
    %v4676 = vmul.f32 %v4605, %v4669
    %v4677 = vadd.f32 %v4645, %v4670
    %v4678 = vadd.f32 %v4646, %v4671
    %v4679 = vadd.f32 %v4647, %v4672
    %v4680 = vadd.f32 %v4648, %v4673
    %v4681 = vadd.f32 %v4649, %v4674
    %v4682 = vadd.f32 %v4650, %v4675
    %v4683 = vadd.f32 %v4651, %v4676
    %4684 = vrot.lane.b32.xlu0 %v4599, 127
    %v4685 = vpop.permute.xlu0 %4684
    %4686 = vrot.lane.b32.xlu0 %v4600, 127
    %v4687 = vpop.permute.xlu0 %4686
    %4688 = vrot.lane.b32.xlu0 %v4601, 127
    %v4689 = vpop.permute.xlu0 %4688
    %4690 = vrot.lane.b32.xlu0 %v4602, 127
    %v4691 = vpop.permute.xlu0 %4690
    %4692 = vrot.lane.b32.xlu0 %v4603, 127
    %v4693 = vpop.permute.xlu0 %4692
    %4694 = vrot.lane.b32.xlu0 %v4604, 127
    %v4695 = vpop.permute.xlu0 %4694
    %4696 = vrot.lane.b32.xlu0 %v4605, 127
    %v4697 = vpop.permute.xlu0 %4696
    %s4698 = sld [smem:[#allocation7 + $0x7b]]
    %v4699 = vstv %s4698
    %v4700 = vmul.f32 %v4685, %v4699
    %v4701 = vmul.f32 %v4687, %v4699
    %v4702 = vmul.f32 %v4689, %v4699
    %v4703 = vmul.f32 %v4691, %v4699
    %v4704 = vmul.f32 %v4693, %v4699
    %v4705 = vmul.f32 %v4695, %v4699
    %v4706 = vmul.f32 %v4697, %v4699
    %v4707 = vadd.f32 %v4661, %v4700
    %v4708 = vadd.f32 %v4662, %v4701
    %v4709 = vadd.f32 %v4663, %v4702
    %v4710 = vadd.f32 %v4664, %v4703
    %v4711 = vadd.f32 %v4665, %v4704
    %v4712 = vadd.f32 %v4666, %v4705
    %v4713 = vadd.f32 %v4667, %v4706
    %s4714 = sld [smem:[#allocation7 + $0x84]]
    %v4715 = vstv %s4714
    %v4716 = vmul.f32 %v4685, %v4715
    %v4717 = vmul.f32 %v4687, %v4715
    %v4718 = vmul.f32 %v4689, %v4715
    %v4719 = vmul.f32 %v4691, %v4715
    %v4720 = vmul.f32 %v4693, %v4715
    %v4721 = vmul.f32 %v4695, %v4715
    %v4722 = vmul.f32 %v4697, %v4715
    %v4723 = vadd.f32 %v4677, %v4716
    %v4724 = vadd.f32 %v4678, %v4717
    %v4725 = vadd.f32 %v4679, %v4718
    %v4726 = vadd.f32 %v4680, %v4719
    %v4727 = vadd.f32 %v4681, %v4720
    %v4728 = vadd.f32 %v4682, %v4721
    %v4729 = vadd.f32 %v4683, %v4722
    %v4730 = vld [vmem:[%s939 + $0x8] sm:$0xff]
    %v4731 = vld [vmem:[%s939 + $0x10] sm:$0xff]
    %v4732 = vld [vmem:[%s939 + $0x18] sm:$0xff]
    %v4733 = vld [vmem:[%s939 + $0x20] sm:$0xff]
    %v4734 = vld [vmem:[%s939 + $0x28] sm:$0xff]
    %v4735 = vld [vmem:[%s939 + $0x30] sm:$0xff]
    %v4736 = vld [vmem:[%s939 + $0x38] sm:$0xff]
    %4737 = vrot.lane.b32.xlu0 %v4730, 1
    %v4738 = vpop.permute.xlu0 %4737
    %4739 = vrot.lane.b32.xlu0 %v4731, 1
    %v4740 = vpop.permute.xlu0 %4739
    %4741 = vrot.lane.b32.xlu0 %v4732, 1
    %v4742 = vpop.permute.xlu0 %4741
    %4743 = vrot.lane.b32.xlu0 %v4733, 1
    %v4744 = vpop.permute.xlu0 %4743
    %4745 = vrot.lane.b32.xlu0 %v4734, 1
    %v4746 = vpop.permute.xlu0 %4745
    %4747 = vrot.lane.b32.xlu0 %v4735, 1
    %v4748 = vpop.permute.xlu0 %4747
    %4749 = vrot.lane.b32.xlu0 %v4736, 1
    %v4750 = vpop.permute.xlu0 %4749
    %s4751 = sld [smem:[#allocation7 + $0x7a]]
    %v4752 = vstv %s4751
    %v4753 = vmul.f32 %v4738, %v4752
    %v4754 = vmul.f32 %v4740, %v4752
    %v4755 = vmul.f32 %v4742, %v4752
    %v4756 = vmul.f32 %v4744, %v4752
    %v4757 = vmul.f32 %v4746, %v4752
    %v4758 = vmul.f32 %v4748, %v4752
    %v4759 = vmul.f32 %v4750, %v4752
    %v4760 = vadd.f32 %v4707, %v4753
    %v4761 = vadd.f32 %v4708, %v4754
    %v4762 = vadd.f32 %v4709, %v4755
    %v4763 = vadd.f32 %v4710, %v4756
    %v4764 = vadd.f32 %v4711, %v4757
    %v4765 = vadd.f32 %v4712, %v4758
    %v4766 = vadd.f32 %v4713, %v4759
    %s4767 = sld [smem:[#allocation7 + $0x83]]
    %v4768 = vstv %s4767
    %v4769 = vmul.f32 %v4738, %v4768
    %v4770 = vmul.f32 %v4740, %v4768
    %v4771 = vmul.f32 %v4742, %v4768
    %v4772 = vmul.f32 %v4744, %v4768
    %v4773 = vmul.f32 %v4746, %v4768
    %v4774 = vmul.f32 %v4748, %v4768
    %v4775 = vmul.f32 %v4750, %v4768
    %v4776 = vadd.f32 %v4723, %v4769
    %v4777 = vadd.f32 %v4724, %v4770
    %v4778 = vadd.f32 %v4725, %v4771
    %v4779 = vadd.f32 %v4726, %v4772
    %v4780 = vadd.f32 %v4727, %v4773
    %v4781 = vadd.f32 %v4728, %v4774
    %v4782 = vadd.f32 %v4729, %v4775
    %s4783 = sld [smem:[#allocation7 + $0x79]]
    %v4784 = vstv %s4783
    %v4785 = vmul.f32 %v4730, %v4784
    %v4786 = vmul.f32 %v4731, %v4784
    %v4787 = vmul.f32 %v4732, %v4784
    %v4788 = vmul.f32 %v4733, %v4784
    %v4789 = vmul.f32 %v4734, %v4784
    %v4790 = vmul.f32 %v4735, %v4784
    %v4791 = vmul.f32 %v4736, %v4784
    %v4792 = vadd.f32 %v4760, %v4785
    %v4793 = vadd.f32 %v4761, %v4786
    %v4794 = vadd.f32 %v4762, %v4787
    %v4795 = vadd.f32 %v4763, %v4788
    %v4796 = vadd.f32 %v4764, %v4789
    %v4797 = vadd.f32 %v4765, %v4790
    %v4798 = vadd.f32 %v4766, %v4791
    %s4799 = sld [smem:[#allocation7 + $0x82]]
    %v4800 = vstv %s4799
    %v4801 = vmul.f32 %v4730, %v4800
    %v4802 = vmul.f32 %v4731, %v4800
    %v4803 = vmul.f32 %v4732, %v4800
    %v4804 = vmul.f32 %v4733, %v4800
    %v4805 = vmul.f32 %v4734, %v4800
    %v4806 = vmul.f32 %v4735, %v4800
    %v4807 = vmul.f32 %v4736, %v4800
    %v4808 = vadd.f32 %v4776, %v4801
    %v4809 = vadd.f32 %v4777, %v4802
    %v4810 = vadd.f32 %v4778, %v4803
    %v4811 = vadd.f32 %v4779, %v4804
    %v4812 = vadd.f32 %v4780, %v4805
    %v4813 = vadd.f32 %v4781, %v4806
    %v4814 = vadd.f32 %v4782, %v4807
    %4815 = vrot.lane.b32.xlu0 %v4730, 127
    %v4816 = vpop.permute.xlu0 %4815
    %4817 = vrot.lane.b32.xlu0 %v4731, 127
    %v4818 = vpop.permute.xlu0 %4817
    %4819 = vrot.lane.b32.xlu0 %v4732, 127
    %v4820 = vpop.permute.xlu0 %4819
    %4821 = vrot.lane.b32.xlu0 %v4733, 127
    %v4822 = vpop.permute.xlu0 %4821
    %4823 = vrot.lane.b32.xlu0 %v4734, 127
    %v4824 = vpop.permute.xlu0 %4823
    %4825 = vrot.lane.b32.xlu0 %v4735, 127
    %v4826 = vpop.permute.xlu0 %4825
    %4827 = vrot.lane.b32.xlu0 %v4736, 127
    %v4828 = vpop.permute.xlu0 %4827
    %s4829 = sld [smem:[#allocation7 + $0x78]]
    %v4830 = vstv %s4829
    %v4831 = vmul.f32 %v4816, %v4830
    %v4832 = vmul.f32 %v4818, %v4830
    %v4833 = vmul.f32 %v4820, %v4830
    %v4834 = vmul.f32 %v4822, %v4830
    %v4835 = vmul.f32 %v4824, %v4830
    %v4836 = vmul.f32 %v4826, %v4830
    %v4837 = vmul.f32 %v4828, %v4830
    %v4838 = vadd.f32 %v4792, %v4831
    %v4839 = vadd.f32 %v4793, %v4832
    %v4840 = vadd.f32 %v4794, %v4833
    %v4841 = vadd.f32 %v4795, %v4834
    %v4842 = vadd.f32 %v4796, %v4835
    %v4843 = vadd.f32 %v4797, %v4836
    %v4844 = vadd.f32 %v4798, %v4837
    %s4845 = sld [smem:[#allocation7 + $0x81]]
    %v4846 = vstv %s4845
    %v4847 = vmul.f32 %v4816, %v4846
    %v4848 = vmul.f32 %v4818, %v4846
    %v4849 = vmul.f32 %v4820, %v4846
    %v4850 = vmul.f32 %v4822, %v4846
    %v4851 = vmul.f32 %v4824, %v4846
    %v4852 = vmul.f32 %v4826, %v4846
    %v4853 = vmul.f32 %v4828, %v4846
    %v4854 = vadd.f32 %v4808, %v4847
    %v4855 = vadd.f32 %v4809, %v4848
    %v4856 = vadd.f32 %v4810, %v4849
    %v4857 = vadd.f32 %v4811, %v4850
    %v4858 = vadd.f32 %v4812, %v4851
    %v4859 = vadd.f32 %v4813, %v4852
    %v4860 = vadd.f32 %v4814, %v4853
    %v4861 = vld [vmem:[%s939 + $0x9] sm:$0xff]
    %v4862 = vld [vmem:[%s939 + $0x11] sm:$0xff]
    %v4863 = vld [vmem:[%s939 + $0x19] sm:$0xff]
    %v4864 = vld [vmem:[%s939 + $0x21] sm:$0xff]
    %v4865 = vld [vmem:[%s939 + $0x29] sm:$0xff]
    %v4866 = vld [vmem:[%s939 + $0x31] sm:$0xff]
    %v4867 = vld [vmem:[%s939 + $0x39] sm:$0xff]
    %4868 = vrot.lane.b32.xlu0 %v4861, 1
    %v4869 = vpop.permute.xlu0 %4868
    %4870 = vrot.lane.b32.xlu0 %v4862, 1
    %v4871 = vpop.permute.xlu0 %4870
    %4872 = vrot.lane.b32.xlu0 %v4863, 1
    %v4873 = vpop.permute.xlu0 %4872
    %4874 = vrot.lane.b32.xlu0 %v4864, 1
    %v4875 = vpop.permute.xlu0 %4874
    %4876 = vrot.lane.b32.xlu0 %v4865, 1
    %v4877 = vpop.permute.xlu0 %4876
    %4878 = vrot.lane.b32.xlu0 %v4866, 1
    %v4879 = vpop.permute.xlu0 %4878
    %4880 = vrot.lane.b32.xlu0 %v4867, 1
    %v4881 = vpop.permute.xlu0 %4880
    %s4882 = sld [smem:[#allocation7 + $0x77]]
    %v4883 = vstv %s4882
    %v4884 = vmul.f32 %v4869, %v4883
    %v4885 = vmul.f32 %v4871, %v4883
    %v4886 = vmul.f32 %v4873, %v4883
    %v4887 = vmul.f32 %v4875, %v4883
    %v4888 = vmul.f32 %v4877, %v4883
    %v4889 = vmul.f32 %v4879, %v4883
    %v4890 = vmul.f32 %v4881, %v4883
    %v4891 = vadd.f32 %v4838, %v4884
    %v4892 = vadd.f32 %v4839, %v4885
    %v4893 = vadd.f32 %v4840, %v4886
    %v4894 = vadd.f32 %v4841, %v4887
    %v4895 = vadd.f32 %v4842, %v4888
    %v4896 = vadd.f32 %v4843, %v4889
    %v4897 = vadd.f32 %v4844, %v4890
    %s4898 = sld [smem:[#allocation7 + $0x80]]
    %v4899 = vstv %s4898
    %v4900 = vmul.f32 %v4869, %v4899
    %v4901 = vmul.f32 %v4871, %v4899
    %v4902 = vmul.f32 %v4873, %v4899
    %v4903 = vmul.f32 %v4875, %v4899
    %v4904 = vmul.f32 %v4877, %v4899
    %v4905 = vmul.f32 %v4879, %v4899
    %v4906 = vmul.f32 %v4881, %v4899
    %v4907 = vadd.f32 %v4854, %v4900
    %v4908 = vadd.f32 %v4855, %v4901
    %v4909 = vadd.f32 %v4856, %v4902
    %v4910 = vadd.f32 %v4857, %v4903
    %v4911 = vadd.f32 %v4858, %v4904
    %v4912 = vadd.f32 %v4859, %v4905
    %v4913 = vadd.f32 %v4860, %v4906
    %s4914 = sld [smem:[#allocation7 + $0x76]]
    %v4915 = vstv %s4914
    %v4916 = vmul.f32 %v4861, %v4915
    %v4917 = vmul.f32 %v4862, %v4915
    %v4918 = vmul.f32 %v4863, %v4915
    %v4919 = vmul.f32 %v4864, %v4915
    %v4920 = vmul.f32 %v4865, %v4915
    %v4921 = vmul.f32 %v4866, %v4915
    %v4922 = vmul.f32 %v4867, %v4915
    %v4923 = vadd.f32 %v4891, %v4916
    %v4924 = vadd.f32 %v4892, %v4917
    %v4925 = vadd.f32 %v4893, %v4918
    %v4926 = vadd.f32 %v4894, %v4919
    %v4927 = vadd.f32 %v4895, %v4920
    %v4928 = vadd.f32 %v4896, %v4921
    %v4929 = vadd.f32 %v4897, %v4922
    %s4930 = sld [smem:[#allocation7 + $0x7f]]
    %v4931 = vstv %s4930
    %v4932 = vmul.f32 %v4861, %v4931
    %v4933 = vmul.f32 %v4862, %v4931
    %v4934 = vmul.f32 %v4863, %v4931
    %v4935 = vmul.f32 %v4864, %v4931
    %v4936 = vmul.f32 %v4865, %v4931
    %v4937 = vmul.f32 %v4866, %v4931
    %v4938 = vmul.f32 %v4867, %v4931
    %v4939 = vadd.f32 %v4907, %v4932
    %v4940 = vadd.f32 %v4908, %v4933
    %v4941 = vadd.f32 %v4909, %v4934
    %v4942 = vadd.f32 %v4910, %v4935
    %v4943 = vadd.f32 %v4911, %v4936
    %v4944 = vadd.f32 %v4912, %v4937
    %v4945 = vadd.f32 %v4913, %v4938
    %4946 = vrot.lane.b32.xlu0 %v4861, 127
    %v4947 = vpop.permute.xlu0 %4946
    %4948 = vrot.lane.b32.xlu0 %v4862, 127
    %v4949 = vpop.permute.xlu0 %4948
    %4950 = vrot.lane.b32.xlu0 %v4863, 127
    %v4951 = vpop.permute.xlu0 %4950
    %4952 = vrot.lane.b32.xlu0 %v4864, 127
    %v4953 = vpop.permute.xlu0 %4952
    %4954 = vrot.lane.b32.xlu0 %v4865, 127
    %v4955 = vpop.permute.xlu0 %4954
    %4956 = vrot.lane.b32.xlu0 %v4866, 127
    %v4957 = vpop.permute.xlu0 %4956
    %4958 = vrot.lane.b32.xlu0 %v4867, 127
    %v4959 = vpop.permute.xlu0 %4958
    %s4960 = sld [smem:[#allocation7 + $0x75]]
    %v4961 = vstv %s4960
    %v4962 = vmul.f32 %v4947, %v4961
    %v4963 = vmul.f32 %v4949, %v4961
    %v4964 = vmul.f32 %v4951, %v4961
    %v4965 = vmul.f32 %v4953, %v4961
    %v4966 = vmul.f32 %v4955, %v4961
    %v4967 = vmul.f32 %v4957, %v4961
    %v4968 = vmul.f32 %v4959, %v4961
    %v4969 = vadd.f32 %v4923, %v4962
    %v4970 = vadd.f32 %v4924, %v4963
    %v4971 = vadd.f32 %v4925, %v4964
    %v4972 = vadd.f32 %v4926, %v4965
    %v4973 = vadd.f32 %v4927, %v4966
    %v4974 = vadd.f32 %v4928, %v4967
    %v4975 = vadd.f32 %v4929, %v4968
    %s4976 = sld [smem:[#allocation7 + $0x7e]]
    %v4977 = vstv %s4976
    %v4978 = vmul.f32 %v4947, %v4977
    %v4979 = vmul.f32 %v4949, %v4977
    %v4980 = vmul.f32 %v4951, %v4977
    %v4981 = vmul.f32 %v4953, %v4977
    %v4982 = vmul.f32 %v4955, %v4977
    %v4983 = vmul.f32 %v4957, %v4977
    %v4984 = vmul.f32 %v4959, %v4977
    %v4985 = vadd.f32 %v4939, %v4978
    %v4986 = vadd.f32 %v4940, %v4979
    %v4987 = vadd.f32 %v4941, %v4980
    %v4988 = vadd.f32 %v4942, %v4981
    %v4989 = vadd.f32 %v4943, %v4982
    %v4990 = vadd.f32 %v4944, %v4983
    %v4991 = vadd.f32 %v4945, %v4984
    %v4992 = vld [vmem:[%s956 + $0x7] sm:$0xff]
    %v4993 = vld [vmem:[%s956 + $0xf] sm:$0xff]
    %v4994 = vld [vmem:[%s956 + $0x17] sm:$0xff]
    %v4995 = vld [vmem:[%s956 + $0x1f] sm:$0xff]
    %v4996 = vld [vmem:[%s956 + $0x27] sm:$0xff]
    %v4997 = vld [vmem:[%s956 + $0x2f] sm:$0xff]
    %v4998 = vld [vmem:[%s956 + $0x37] sm:$0xff]
    %4999 = vrot.lane.b32.xlu0 %v4992, 1
    %v5000 = vpop.permute.xlu0 %4999
    %5001 = vrot.lane.b32.xlu0 %v4993, 1
    %v5002 = vpop.permute.xlu0 %5001
    %5003 = vrot.lane.b32.xlu0 %v4994, 1
    %v5004 = vpop.permute.xlu0 %5003
    %5005 = vrot.lane.b32.xlu0 %v4995, 1
    %v5006 = vpop.permute.xlu0 %5005
    %5007 = vrot.lane.b32.xlu0 %v4996, 1
    %v5008 = vpop.permute.xlu0 %5007
    %5009 = vrot.lane.b32.xlu0 %v4997, 1
    %v5010 = vpop.permute.xlu0 %5009
    %5011 = vrot.lane.b32.xlu0 %v4998, 1
    %v5012 = vpop.permute.xlu0 %5011
    %s5013 = sld [smem:[#allocation7 + $0xaa]]
    %v5014 = vstv %s5013
    %v5015 = vmul.f32 %v5000, %v5014
    %v5016 = vmul.f32 %v5002, %v5014
    %v5017 = vmul.f32 %v5004, %v5014
    %v5018 = vmul.f32 %v5006, %v5014
    %v5019 = vmul.f32 %v5008, %v5014
    %v5020 = vmul.f32 %v5010, %v5014
    %v5021 = vmul.f32 %v5012, %v5014
    %v5022 = vadd.f32 %v4969, %v5015
    %v5023 = vadd.f32 %v4970, %v5016
    %v5024 = vadd.f32 %v4971, %v5017
    %v5025 = vadd.f32 %v4972, %v5018
    %v5026 = vadd.f32 %v4973, %v5019
    %v5027 = vadd.f32 %v4974, %v5020
    %v5028 = vadd.f32 %v4975, %v5021
    %s5029 = sld [smem:[#allocation7 + $0xb3]]
    %v5030 = vstv %s5029
    %v5031 = vmul.f32 %v5000, %v5030
    %v5032 = vmul.f32 %v5002, %v5030
    %v5033 = vmul.f32 %v5004, %v5030
    %v5034 = vmul.f32 %v5006, %v5030
    %v5035 = vmul.f32 %v5008, %v5030
    %v5036 = vmul.f32 %v5010, %v5030
    %v5037 = vmul.f32 %v5012, %v5030
    %v5038 = vadd.f32 %v4985, %v5031
    %v5039 = vadd.f32 %v4986, %v5032
    %v5040 = vadd.f32 %v4987, %v5033
    %v5041 = vadd.f32 %v4988, %v5034
    %v5042 = vadd.f32 %v4989, %v5035
    %v5043 = vadd.f32 %v4990, %v5036
    %v5044 = vadd.f32 %v4991, %v5037
    %s5045 = sld [smem:[#allocation7 + $0xa9]]
    %v5046 = vstv %s5045
    %v5047 = vmul.f32 %v4992, %v5046
    %v5048 = vmul.f32 %v4993, %v5046
    %v5049 = vmul.f32 %v4994, %v5046
    %v5050 = vmul.f32 %v4995, %v5046
    %v5051 = vmul.f32 %v4996, %v5046
    %v5052 = vmul.f32 %v4997, %v5046
    %v5053 = vmul.f32 %v4998, %v5046
    %v5054 = vadd.f32 %v5022, %v5047
    %v5055 = vadd.f32 %v5023, %v5048
    %v5056 = vadd.f32 %v5024, %v5049
    %v5057 = vadd.f32 %v5025, %v5050
    %v5058 = vadd.f32 %v5026, %v5051
    %v5059 = vadd.f32 %v5027, %v5052
    %v5060 = vadd.f32 %v5028, %v5053
    %s5061 = sld [smem:[#allocation7 + $0xb2]]
    %v5062 = vstv %s5061
    %v5063 = vmul.f32 %v4992, %v5062
    %v5064 = vmul.f32 %v4993, %v5062
    %v5065 = vmul.f32 %v4994, %v5062
    %v5066 = vmul.f32 %v4995, %v5062
    %v5067 = vmul.f32 %v4996, %v5062
    %v5068 = vmul.f32 %v4997, %v5062
    %v5069 = vmul.f32 %v4998, %v5062
    %v5070 = vadd.f32 %v5038, %v5063
    %v5071 = vadd.f32 %v5039, %v5064
    %v5072 = vadd.f32 %v5040, %v5065
    %v5073 = vadd.f32 %v5041, %v5066
    %v5074 = vadd.f32 %v5042, %v5067
    %v5075 = vadd.f32 %v5043, %v5068
    %v5076 = vadd.f32 %v5044, %v5069
    %5077 = vrot.lane.b32.xlu0 %v4992, 127
    %v5078 = vpop.permute.xlu0 %5077
    %5079 = vrot.lane.b32.xlu0 %v4993, 127
    %v5080 = vpop.permute.xlu0 %5079
    %5081 = vrot.lane.b32.xlu0 %v4994, 127
    %v5082 = vpop.permute.xlu0 %5081
    %5083 = vrot.lane.b32.xlu0 %v4995, 127
    %v5084 = vpop.permute.xlu0 %5083
    %5085 = vrot.lane.b32.xlu0 %v4996, 127
    %v5086 = vpop.permute.xlu0 %5085
    %5087 = vrot.lane.b32.xlu0 %v4997, 127
    %v5088 = vpop.permute.xlu0 %5087
    %5089 = vrot.lane.b32.xlu0 %v4998, 127
    %v5090 = vpop.permute.xlu0 %5089
    %s5091 = sld [smem:[#allocation7 + $0xa8]]
    %v5092 = vstv %s5091
    %v5093 = vmul.f32 %v5078, %v5092
    %v5094 = vmul.f32 %v5080, %v5092
    %v5095 = vmul.f32 %v5082, %v5092
    %v5096 = vmul.f32 %v5084, %v5092
    %v5097 = vmul.f32 %v5086, %v5092
    %v5098 = vmul.f32 %v5088, %v5092
    %v5099 = vmul.f32 %v5090, %v5092
    %v5100 = vadd.f32 %v5054, %v5093
    %v5101 = vadd.f32 %v5055, %v5094
    %v5102 = vadd.f32 %v5056, %v5095
    %v5103 = vadd.f32 %v5057, %v5096
    %v5104 = vadd.f32 %v5058, %v5097
    %v5105 = vadd.f32 %v5059, %v5098
    %v5106 = vadd.f32 %v5060, %v5099
    %s5107 = sld [smem:[#allocation7 + $0xb1]]
    %v5108 = vstv %s5107
    %v5109 = vmul.f32 %v5078, %v5108
    %v5110 = vmul.f32 %v5080, %v5108
    %v5111 = vmul.f32 %v5082, %v5108
    %v5112 = vmul.f32 %v5084, %v5108
    %v5113 = vmul.f32 %v5086, %v5108
    %v5114 = vmul.f32 %v5088, %v5108
    %v5115 = vmul.f32 %v5090, %v5108
    %v5116 = vadd.f32 %v5070, %v5109
    %v5117 = vadd.f32 %v5071, %v5110
    %v5118 = vadd.f32 %v5072, %v5111
    %v5119 = vadd.f32 %v5073, %v5112
    %v5120 = vadd.f32 %v5074, %v5113
    %v5121 = vadd.f32 %v5075, %v5114
    %v5122 = vadd.f32 %v5076, %v5115
    %v5123 = vld [vmem:[%s956 + $0x8] sm:$0xff]
    %v5124 = vld [vmem:[%s956 + $0x10] sm:$0xff]
    %v5125 = vld [vmem:[%s956 + $0x18] sm:$0xff]
    %v5126 = vld [vmem:[%s956 + $0x20] sm:$0xff]
    %v5127 = vld [vmem:[%s956 + $0x28] sm:$0xff]
    %v5128 = vld [vmem:[%s956 + $0x30] sm:$0xff]
    %v5129 = vld [vmem:[%s956 + $0x38] sm:$0xff]
    %5130 = vrot.lane.b32.xlu0 %v5123, 1
    %v5131 = vpop.permute.xlu0 %5130
    %5132 = vrot.lane.b32.xlu0 %v5124, 1
    %v5133 = vpop.permute.xlu0 %5132
    %5134 = vrot.lane.b32.xlu0 %v5125, 1
    %v5135 = vpop.permute.xlu0 %5134
    %5136 = vrot.lane.b32.xlu0 %v5126, 1
    %v5137 = vpop.permute.xlu0 %5136
    %5138 = vrot.lane.b32.xlu0 %v5127, 1
    %v5139 = vpop.permute.xlu0 %5138
    %5140 = vrot.lane.b32.xlu0 %v5128, 1
    %v5141 = vpop.permute.xlu0 %5140
    %5142 = vrot.lane.b32.xlu0 %v5129, 1
    %v5143 = vpop.permute.xlu0 %5142
    %s5144 = sld [smem:[#allocation7 + $0xa7]]
    %v5145 = vstv %s5144
    %v5146 = vmul.f32 %v5131, %v5145
    %v5147 = vmul.f32 %v5133, %v5145
    %v5148 = vmul.f32 %v5135, %v5145
    %v5149 = vmul.f32 %v5137, %v5145
    %v5150 = vmul.f32 %v5139, %v5145
    %v5151 = vmul.f32 %v5141, %v5145
    %v5152 = vmul.f32 %v5143, %v5145
    %v5153 = vadd.f32 %v5100, %v5146
    %v5154 = vadd.f32 %v5101, %v5147
    %v5155 = vadd.f32 %v5102, %v5148
    %v5156 = vadd.f32 %v5103, %v5149
    %v5157 = vadd.f32 %v5104, %v5150
    %v5158 = vadd.f32 %v5105, %v5151
    %v5159 = vadd.f32 %v5106, %v5152
    %s5160 = sld [smem:[#allocation7 + $0xb0]]
    %v5161 = vstv %s5160
    %v5162 = vmul.f32 %v5131, %v5161
    %v5163 = vmul.f32 %v5133, %v5161
    %v5164 = vmul.f32 %v5135, %v5161
    %v5165 = vmul.f32 %v5137, %v5161
    %v5166 = vmul.f32 %v5139, %v5161
    %v5167 = vmul.f32 %v5141, %v5161
    %v5168 = vmul.f32 %v5143, %v5161
    %v5169 = vadd.f32 %v5116, %v5162
    %v5170 = vadd.f32 %v5117, %v5163
    %v5171 = vadd.f32 %v5118, %v5164
    %v5172 = vadd.f32 %v5119, %v5165
    %v5173 = vadd.f32 %v5120, %v5166
    %v5174 = vadd.f32 %v5121, %v5167
    %v5175 = vadd.f32 %v5122, %v5168
    %s5176 = sld [smem:[#allocation7 + $0xa6]]
    %v5177 = vstv %s5176
    %v5178 = vmul.f32 %v5123, %v5177
    %v5179 = vmul.f32 %v5124, %v5177
    %v5180 = vmul.f32 %v5125, %v5177
    %v5181 = vmul.f32 %v5126, %v5177
    %v5182 = vmul.f32 %v5127, %v5177
    %v5183 = vmul.f32 %v5128, %v5177
    %v5184 = vmul.f32 %v5129, %v5177
    %v5185 = vadd.f32 %v5153, %v5178
    %v5186 = vadd.f32 %v5154, %v5179
    %v5187 = vadd.f32 %v5155, %v5180
    %v5188 = vadd.f32 %v5156, %v5181
    %v5189 = vadd.f32 %v5157, %v5182
    %v5190 = vadd.f32 %v5158, %v5183
    %v5191 = vadd.f32 %v5159, %v5184
    %s5192 = sld [smem:[#allocation7 + $0xaf]]
    %v5193 = vstv %s5192
    %v5194 = vmul.f32 %v5123, %v5193
    %v5195 = vmul.f32 %v5124, %v5193
    %v5196 = vmul.f32 %v5125, %v5193
    %v5197 = vmul.f32 %v5126, %v5193
    %v5198 = vmul.f32 %v5127, %v5193
    %v5199 = vmul.f32 %v5128, %v5193
    %v5200 = vmul.f32 %v5129, %v5193
    %v5201 = vadd.f32 %v5169, %v5194
    %v5202 = vadd.f32 %v5170, %v5195
    %v5203 = vadd.f32 %v5171, %v5196
    %v5204 = vadd.f32 %v5172, %v5197
    %v5205 = vadd.f32 %v5173, %v5198
    %v5206 = vadd.f32 %v5174, %v5199
    %v5207 = vadd.f32 %v5175, %v5200
    %5208 = vrot.lane.b32.xlu0 %v5123, 127
    %v5209 = vpop.permute.xlu0 %5208
    %5210 = vrot.lane.b32.xlu0 %v5124, 127
    %v5211 = vpop.permute.xlu0 %5210
    %5212 = vrot.lane.b32.xlu0 %v5125, 127
    %v5213 = vpop.permute.xlu0 %5212
    %5214 = vrot.lane.b32.xlu0 %v5126, 127
    %v5215 = vpop.permute.xlu0 %5214
    %5216 = vrot.lane.b32.xlu0 %v5127, 127
    %v5217 = vpop.permute.xlu0 %5216
    %5218 = vrot.lane.b32.xlu0 %v5128, 127
    %v5219 = vpop.permute.xlu0 %5218
    %5220 = vrot.lane.b32.xlu0 %v5129, 127
    %v5221 = vpop.permute.xlu0 %5220
    %s5222 = sld [smem:[#allocation7 + $0xa5]]
    %v5223 = vstv %s5222
    %v5224 = vmul.f32 %v5209, %v5223
    %v5225 = vmul.f32 %v5211, %v5223
    %v5226 = vmul.f32 %v5213, %v5223
    %v5227 = vmul.f32 %v5215, %v5223
    %v5228 = vmul.f32 %v5217, %v5223
    %v5229 = vmul.f32 %v5219, %v5223
    %v5230 = vmul.f32 %v5221, %v5223
    %v5231 = vadd.f32 %v5185, %v5224
    %v5232 = vadd.f32 %v5186, %v5225
    %v5233 = vadd.f32 %v5187, %v5226
    %v5234 = vadd.f32 %v5188, %v5227
    %v5235 = vadd.f32 %v5189, %v5228
    %v5236 = vadd.f32 %v5190, %v5229
    %v5237 = vadd.f32 %v5191, %v5230
    %s5238 = sld [smem:[#allocation7 + $0xae]]
    %v5239 = vstv %s5238
    %v5240 = vmul.f32 %v5209, %v5239
    %v5241 = vmul.f32 %v5211, %v5239
    %v5242 = vmul.f32 %v5213, %v5239
    %v5243 = vmul.f32 %v5215, %v5239
    %v5244 = vmul.f32 %v5217, %v5239
    %v5245 = vmul.f32 %v5219, %v5239
    %v5246 = vmul.f32 %v5221, %v5239
    %v5247 = vadd.f32 %v5201, %v5240
    %v5248 = vadd.f32 %v5202, %v5241
    %v5249 = vadd.f32 %v5203, %v5242
    %v5250 = vadd.f32 %v5204, %v5243
    %v5251 = vadd.f32 %v5205, %v5244
    %v5252 = vadd.f32 %v5206, %v5245
    %v5253 = vadd.f32 %v5207, %v5246
    %v5254 = vld [vmem:[%s956 + $0x9] sm:$0xff]
    %v5255 = vld [vmem:[%s956 + $0x11] sm:$0xff]
    %v5256 = vld [vmem:[%s956 + $0x19] sm:$0xff]
    %v5257 = vld [vmem:[%s956 + $0x21] sm:$0xff]
    %v5258 = vld [vmem:[%s956 + $0x29] sm:$0xff]
    %v5259 = vld [vmem:[%s956 + $0x31] sm:$0xff]
    %v5260 = vld [vmem:[%s956 + $0x39] sm:$0xff]
    %5261 = vrot.lane.b32.xlu0 %v5254, 1
    %v5262 = vpop.permute.xlu0 %5261
    %5263 = vrot.lane.b32.xlu0 %v5255, 1
    %v5264 = vpop.permute.xlu0 %5263
    %5265 = vrot.lane.b32.xlu0 %v5256, 1
    %v5266 = vpop.permute.xlu0 %5265
    %5267 = vrot.lane.b32.xlu0 %v5257, 1
    %v5268 = vpop.permute.xlu0 %5267
    %5269 = vrot.lane.b32.xlu0 %v5258, 1
    %v5270 = vpop.permute.xlu0 %5269
    %5271 = vrot.lane.b32.xlu0 %v5259, 1
    %v5272 = vpop.permute.xlu0 %5271
    %5273 = vrot.lane.b32.xlu0 %v5260, 1
    %v5274 = vpop.permute.xlu0 %5273
    %s5275 = sld [smem:[#allocation7 + $0xa4]]
    %v5276 = vstv %s5275
    %v5277 = vmul.f32 %v5262, %v5276
    %v5278 = vmul.f32 %v5264, %v5276
    %v5279 = vmul.f32 %v5266, %v5276
    %v5280 = vmul.f32 %v5268, %v5276
    %v5281 = vmul.f32 %v5270, %v5276
    %v5282 = vmul.f32 %v5272, %v5276
    %v5283 = vmul.f32 %v5274, %v5276
    %v5284 = vadd.f32 %v5231, %v5277
    %v5285 = vadd.f32 %v5232, %v5278
    %v5286 = vadd.f32 %v5233, %v5279
    %v5287 = vadd.f32 %v5234, %v5280
    %v5288 = vadd.f32 %v5235, %v5281
    %v5289 = vadd.f32 %v5236, %v5282
    %v5290 = vadd.f32 %v5237, %v5283
    %s5291 = sld [smem:[#allocation7 + $0xad]]
    %v5292 = vstv %s5291
    %v5293 = vmul.f32 %v5262, %v5292
    %v5294 = vmul.f32 %v5264, %v5292
    %v5295 = vmul.f32 %v5266, %v5292
    %v5296 = vmul.f32 %v5268, %v5292
    %v5297 = vmul.f32 %v5270, %v5292
    %v5298 = vmul.f32 %v5272, %v5292
    %v5299 = vmul.f32 %v5274, %v5292
    %v5300 = vadd.f32 %v5247, %v5293
    %v5301 = vadd.f32 %v5248, %v5294
    %v5302 = vadd.f32 %v5249, %v5295
    %v5303 = vadd.f32 %v5250, %v5296
    %v5304 = vadd.f32 %v5251, %v5297
    %v5305 = vadd.f32 %v5252, %v5298
    %v5306 = vadd.f32 %v5253, %v5299
    %s5307 = sld [smem:[#allocation7 + $0xa3]]
    %v5308 = vstv %s5307
    %v5309 = vmul.f32 %v5254, %v5308
    %v5310 = vmul.f32 %v5255, %v5308
    %v5311 = vmul.f32 %v5256, %v5308
    %v5312 = vmul.f32 %v5257, %v5308
    %v5313 = vmul.f32 %v5258, %v5308
    %v5314 = vmul.f32 %v5259, %v5308
    %v5315 = vmul.f32 %v5260, %v5308
    %v5316 = vadd.f32 %v5284, %v5309
    %v5317 = vadd.f32 %v5285, %v5310
    %v5318 = vadd.f32 %v5286, %v5311
    %v5319 = vadd.f32 %v5287, %v5312
    %v5320 = vadd.f32 %v5288, %v5313
    %v5321 = vadd.f32 %v5289, %v5314
    %v5322 = vadd.f32 %v5290, %v5315
    %s5323 = sld [smem:[#allocation7 + $0xac]]
    %v5324 = vstv %s5323
    %v5325 = vmul.f32 %v5254, %v5324
    %v5326 = vmul.f32 %v5255, %v5324
    %v5327 = vmul.f32 %v5256, %v5324
    %v5328 = vmul.f32 %v5257, %v5324
    %v5329 = vmul.f32 %v5258, %v5324
    %v5330 = vmul.f32 %v5259, %v5324
    %v5331 = vmul.f32 %v5260, %v5324
    %v5332 = vadd.f32 %v5300, %v5325
    %v5333 = vadd.f32 %v5301, %v5326
    %v5334 = vadd.f32 %v5302, %v5327
    %v5335 = vadd.f32 %v5303, %v5328
    %v5336 = vadd.f32 %v5304, %v5329
    %v5337 = vadd.f32 %v5305, %v5330
    %v5338 = vadd.f32 %v5306, %v5331
    %5339 = vrot.lane.b32.xlu0 %v5254, 127
    %v5340 = vpop.permute.xlu0 %5339
    %5341 = vrot.lane.b32.xlu0 %v5255, 127
    %v5342 = vpop.permute.xlu0 %5341
    %5343 = vrot.lane.b32.xlu0 %v5256, 127
    %v5344 = vpop.permute.xlu0 %5343
    %5345 = vrot.lane.b32.xlu0 %v5257, 127
    %v5346 = vpop.permute.xlu0 %5345
    %5347 = vrot.lane.b32.xlu0 %v5258, 127
    %v5348 = vpop.permute.xlu0 %5347
    %5349 = vrot.lane.b32.xlu0 %v5259, 127
    %v5350 = vpop.permute.xlu0 %5349
    %5351 = vrot.lane.b32.xlu0 %v5260, 127
    %v5352 = vpop.permute.xlu0 %5351
    %s5353 = sld [smem:[#allocation7 + $0xa2]]
    %v5354 = vstv %s5353
    %v5355 = vmul.f32 %v5340, %v5354
    %v5356 = vmul.f32 %v5342, %v5354
    %v5357 = vmul.f32 %v5344, %v5354
    %v5358 = vmul.f32 %v5346, %v5354
    %v5359 = vmul.f32 %v5348, %v5354
    %v5360 = vmul.f32 %v5350, %v5354
    %v5361 = vmul.f32 %v5352, %v5354
    %v5362 = vadd.f32 %v5316, %v5355
    %v5363 = vadd.f32 %v5317, %v5356
    %v5364 = vadd.f32 %v5318, %v5357
    %v5365 = vadd.f32 %v5319, %v5358
    %v5366 = vadd.f32 %v5320, %v5359
    %v5367 = vadd.f32 %v5321, %v5360
    %v5368 = vadd.f32 %v5322, %v5361
    %s5369 = sld [smem:[#allocation7 + $0xab]]
    %v5370 = vstv %s5369
    %v5371 = vmul.f32 %v5340, %v5370
    %v5372 = vmul.f32 %v5342, %v5370
    %v5373 = vmul.f32 %v5344, %v5370
    %v5374 = vmul.f32 %v5346, %v5370
    %v5375 = vmul.f32 %v5348, %v5370
    %v5376 = vmul.f32 %v5350, %v5370
    %v5377 = vmul.f32 %v5352, %v5370
    %v5378 = vadd.f32 %v5332, %v5371
    %v5379 = vadd.f32 %v5333, %v5372
    %v5380 = vadd.f32 %v5334, %v5373
    %v5381 = vadd.f32 %v5335, %v5374
    %v5382 = vadd.f32 %v5336, %v5375
    %v5383 = vadd.f32 %v5337, %v5376
    %v5384 = vadd.f32 %v5338, %v5377
    %v5385 = vld [vmem:[%s973 + $0x7] sm:$0xff]
    %v5386 = vld [vmem:[%s973 + $0xf] sm:$0xff]
    %v5387 = vld [vmem:[%s973 + $0x17] sm:$0xff]
    %v5388 = vld [vmem:[%s973 + $0x1f] sm:$0xff]
    %v5389 = vld [vmem:[%s973 + $0x27] sm:$0xff]
    %v5390 = vld [vmem:[%s973 + $0x2f] sm:$0xff]
    %v5391 = vld [vmem:[%s973 + $0x37] sm:$0xff]
    %5392 = vrot.lane.b32.xlu0 %v5385, 1
    %v5393 = vpop.permute.xlu0 %5392
    %5394 = vrot.lane.b32.xlu0 %v5386, 1
    %v5395 = vpop.permute.xlu0 %5394
    %5396 = vrot.lane.b32.xlu0 %v5387, 1
    %v5397 = vpop.permute.xlu0 %5396
    %5398 = vrot.lane.b32.xlu0 %v5388, 1
    %v5399 = vpop.permute.xlu0 %5398
    %5400 = vrot.lane.b32.xlu0 %v5389, 1
    %v5401 = vpop.permute.xlu0 %5400
    %5402 = vrot.lane.b32.xlu0 %v5390, 1
    %v5403 = vpop.permute.xlu0 %5402
    %5404 = vrot.lane.b32.xlu0 %v5391, 1
    %v5405 = vpop.permute.xlu0 %5404
    %s5406 = sld [smem:[#allocation7 + $0xd7]]
    %v5407 = vstv %s5406
    %v5408 = vmul.f32 %v5393, %v5407
    %v5409 = vmul.f32 %v5395, %v5407
    %v5410 = vmul.f32 %v5397, %v5407
    %v5411 = vmul.f32 %v5399, %v5407
    %v5412 = vmul.f32 %v5401, %v5407
    %v5413 = vmul.f32 %v5403, %v5407
    %v5414 = vmul.f32 %v5405, %v5407
    %v5415 = vadd.f32 %v5362, %v5408
    %v5416 = vadd.f32 %v5363, %v5409
    %v5417 = vadd.f32 %v5364, %v5410
    %v5418 = vadd.f32 %v5365, %v5411
    %v5419 = vadd.f32 %v5366, %v5412
    %v5420 = vadd.f32 %v5367, %v5413
    %v5421 = vadd.f32 %v5368, %v5414
    %s5422 = sld [smem:[#allocation7 + $0xe0]]
    %v5423 = vstv %s5422
    %v5424 = vmul.f32 %v5393, %v5423
    %v5425 = vmul.f32 %v5395, %v5423
    %v5426 = vmul.f32 %v5397, %v5423
    %v5427 = vmul.f32 %v5399, %v5423
    %v5428 = vmul.f32 %v5401, %v5423
    %v5429 = vmul.f32 %v5403, %v5423
    %v5430 = vmul.f32 %v5405, %v5423
    %v5431 = vadd.f32 %v5378, %v5424
    %v5432 = vadd.f32 %v5379, %v5425
    %v5433 = vadd.f32 %v5380, %v5426
    %v5434 = vadd.f32 %v5381, %v5427
    %v5435 = vadd.f32 %v5382, %v5428
    %v5436 = vadd.f32 %v5383, %v5429
    %v5437 = vadd.f32 %v5384, %v5430
    %s5438 = sld [smem:[#allocation7 + $0xd6]]
    %v5439 = vstv %s5438
    %v5440 = vmul.f32 %v5385, %v5439
    %v5441 = vmul.f32 %v5386, %v5439
    %v5442 = vmul.f32 %v5387, %v5439
    %v5443 = vmul.f32 %v5388, %v5439
    %v5444 = vmul.f32 %v5389, %v5439
    %v5445 = vmul.f32 %v5390, %v5439
    %v5446 = vmul.f32 %v5391, %v5439
    %v5447 = vadd.f32 %v5415, %v5440
    %v5448 = vadd.f32 %v5416, %v5441
    %v5449 = vadd.f32 %v5417, %v5442
    %v5450 = vadd.f32 %v5418, %v5443
    %v5451 = vadd.f32 %v5419, %v5444
    %v5452 = vadd.f32 %v5420, %v5445
    %v5453 = vadd.f32 %v5421, %v5446
    %s5454 = sld [smem:[#allocation7 + $0xdf]]
    %v5455 = vstv %s5454
    %v5456 = vmul.f32 %v5385, %v5455
    %v5457 = vmul.f32 %v5386, %v5455
    %v5458 = vmul.f32 %v5387, %v5455
    %v5459 = vmul.f32 %v5388, %v5455
    %v5460 = vmul.f32 %v5389, %v5455
    %v5461 = vmul.f32 %v5390, %v5455
    %v5462 = vmul.f32 %v5391, %v5455
    %v5463 = vadd.f32 %v5431, %v5456
    %v5464 = vadd.f32 %v5432, %v5457
    %v5465 = vadd.f32 %v5433, %v5458
    %v5466 = vadd.f32 %v5434, %v5459
    %v5467 = vadd.f32 %v5435, %v5460
    %v5468 = vadd.f32 %v5436, %v5461
    %v5469 = vadd.f32 %v5437, %v5462
    %5470 = vrot.lane.b32.xlu0 %v5385, 127
    %v5471 = vpop.permute.xlu0 %5470
    %5472 = vrot.lane.b32.xlu0 %v5386, 127
    %v5473 = vpop.permute.xlu0 %5472
    %5474 = vrot.lane.b32.xlu0 %v5387, 127
    %v5475 = vpop.permute.xlu0 %5474
    %5476 = vrot.lane.b32.xlu0 %v5388, 127
    %v5477 = vpop.permute.xlu0 %5476
    %5478 = vrot.lane.b32.xlu0 %v5389, 127
    %v5479 = vpop.permute.xlu0 %5478
    %5480 = vrot.lane.b32.xlu0 %v5390, 127
    %v5481 = vpop.permute.xlu0 %5480
    %5482 = vrot.lane.b32.xlu0 %v5391, 127
    %v5483 = vpop.permute.xlu0 %5482
    %s5484 = sld [smem:[#allocation7 + $0xd5]]
    %v5485 = vstv %s5484
    %v5486 = vmul.f32 %v5471, %v5485
    %v5487 = vmul.f32 %v5473, %v5485
    %v5488 = vmul.f32 %v5475, %v5485
    %v5489 = vmul.f32 %v5477, %v5485
    %v5490 = vmul.f32 %v5479, %v5485
    %v5491 = vmul.f32 %v5481, %v5485
    %v5492 = vmul.f32 %v5483, %v5485
    %v5493 = vadd.f32 %v5447, %v5486
    %v5494 = vadd.f32 %v5448, %v5487
    %v5495 = vadd.f32 %v5449, %v5488
    %v5496 = vadd.f32 %v5450, %v5489
    %v5497 = vadd.f32 %v5451, %v5490
    %v5498 = vadd.f32 %v5452, %v5491
    %v5499 = vadd.f32 %v5453, %v5492
    %s5500 = sld [smem:[#allocation7 + $0xde]]
    %v5501 = vstv %s5500
    %v5502 = vmul.f32 %v5471, %v5501
    %v5503 = vmul.f32 %v5473, %v5501
    %v5504 = vmul.f32 %v5475, %v5501
    %v5505 = vmul.f32 %v5477, %v5501
    %v5506 = vmul.f32 %v5479, %v5501
    %v5507 = vmul.f32 %v5481, %v5501
    %v5508 = vmul.f32 %v5483, %v5501
    %v5509 = vadd.f32 %v5463, %v5502
    %v5510 = vadd.f32 %v5464, %v5503
    %v5511 = vadd.f32 %v5465, %v5504
    %v5512 = vadd.f32 %v5466, %v5505
    %v5513 = vadd.f32 %v5467, %v5506
    %v5514 = vadd.f32 %v5468, %v5507
    %v5515 = vadd.f32 %v5469, %v5508
    %v5516 = vld [vmem:[%s973 + $0x8] sm:$0xff]
    %v5517 = vld [vmem:[%s973 + $0x10] sm:$0xff]
    %v5518 = vld [vmem:[%s973 + $0x18] sm:$0xff]
    %v5519 = vld [vmem:[%s973 + $0x20] sm:$0xff]
    %v5520 = vld [vmem:[%s973 + $0x28] sm:$0xff]
    %v5521 = vld [vmem:[%s973 + $0x30] sm:$0xff]
    %v5522 = vld [vmem:[%s973 + $0x38] sm:$0xff]
    %5523 = vrot.lane.b32.xlu0 %v5516, 1
    %v5524 = vpop.permute.xlu0 %5523
    %5525 = vrot.lane.b32.xlu0 %v5517, 1
    %v5526 = vpop.permute.xlu0 %5525
    %5527 = vrot.lane.b32.xlu0 %v5518, 1
    %v5528 = vpop.permute.xlu0 %5527
    %5529 = vrot.lane.b32.xlu0 %v5519, 1
    %v5530 = vpop.permute.xlu0 %5529
    %5531 = vrot.lane.b32.xlu0 %v5520, 1
    %v5532 = vpop.permute.xlu0 %5531
    %5533 = vrot.lane.b32.xlu0 %v5521, 1
    %v5534 = vpop.permute.xlu0 %5533
    %5535 = vrot.lane.b32.xlu0 %v5522, 1
    %v5536 = vpop.permute.xlu0 %5535
    %s5537 = sld [smem:[#allocation7 + $0xd4]]
    %v5538 = vstv %s5537
    %v5539 = vmul.f32 %v5524, %v5538
    %v5540 = vmul.f32 %v5526, %v5538
    %v5541 = vmul.f32 %v5528, %v5538
    %v5542 = vmul.f32 %v5530, %v5538
    %v5543 = vmul.f32 %v5532, %v5538
    %v5544 = vmul.f32 %v5534, %v5538
    %v5545 = vmul.f32 %v5536, %v5538
    %v5546 = vadd.f32 %v5493, %v5539
    %v5547 = vadd.f32 %v5494, %v5540
    %v5548 = vadd.f32 %v5495, %v5541
    %v5549 = vadd.f32 %v5496, %v5542
    %v5550 = vadd.f32 %v5497, %v5543
    %v5551 = vadd.f32 %v5498, %v5544
    %v5552 = vadd.f32 %v5499, %v5545
    %s5553 = sld [smem:[#allocation7 + $0xdd]]
    %v5554 = vstv %s5553
    %v5555 = vmul.f32 %v5524, %v5554
    %v5556 = vmul.f32 %v5526, %v5554
    %v5557 = vmul.f32 %v5528, %v5554
    %v5558 = vmul.f32 %v5530, %v5554
    %v5559 = vmul.f32 %v5532, %v5554
    %v5560 = vmul.f32 %v5534, %v5554
    %v5561 = vmul.f32 %v5536, %v5554
    %v5562 = vadd.f32 %v5509, %v5555
    %v5563 = vadd.f32 %v5510, %v5556
    %v5564 = vadd.f32 %v5511, %v5557
    %v5565 = vadd.f32 %v5512, %v5558
    %v5566 = vadd.f32 %v5513, %v5559
    %v5567 = vadd.f32 %v5514, %v5560
    %v5568 = vadd.f32 %v5515, %v5561
    %s5569 = sld [smem:[#allocation7 + $0xd3]]
    %v5570 = vstv %s5569
    %v5571 = vmul.f32 %v5516, %v5570
    %v5572 = vmul.f32 %v5517, %v5570
    %v5573 = vmul.f32 %v5518, %v5570
    %v5574 = vmul.f32 %v5519, %v5570
    %v5575 = vmul.f32 %v5520, %v5570
    %v5576 = vmul.f32 %v5521, %v5570
    %v5577 = vmul.f32 %v5522, %v5570
    %v5578 = vadd.f32 %v5546, %v5571
    %v5579 = vadd.f32 %v5547, %v5572
    %v5580 = vadd.f32 %v5548, %v5573
    %v5581 = vadd.f32 %v5549, %v5574
    %v5582 = vadd.f32 %v5550, %v5575
    %v5583 = vadd.f32 %v5551, %v5576
    %v5584 = vadd.f32 %v5552, %v5577
    %s5585 = sld [smem:[#allocation7 + $0xdc]]
    %v5586 = vstv %s5585
    %v5587 = vmul.f32 %v5516, %v5586
    %v5588 = vmul.f32 %v5517, %v5586
    %v5589 = vmul.f32 %v5518, %v5586
    %v5590 = vmul.f32 %v5519, %v5586
    %v5591 = vmul.f32 %v5520, %v5586
    %v5592 = vmul.f32 %v5521, %v5586
    %v5593 = vmul.f32 %v5522, %v5586
    %v5594 = vadd.f32 %v5562, %v5587
    %v5595 = vadd.f32 %v5563, %v5588
    %v5596 = vadd.f32 %v5564, %v5589
    %v5597 = vadd.f32 %v5565, %v5590
    %v5598 = vadd.f32 %v5566, %v5591
    %v5599 = vadd.f32 %v5567, %v5592
    %v5600 = vadd.f32 %v5568, %v5593
    %5601 = vrot.lane.b32.xlu0 %v5516, 127
    %v5602 = vpop.permute.xlu0 %5601
    %5603 = vrot.lane.b32.xlu0 %v5517, 127
    %v5604 = vpop.permute.xlu0 %5603
    %5605 = vrot.lane.b32.xlu0 %v5518, 127
    %v5606 = vpop.permute.xlu0 %5605
    %5607 = vrot.lane.b32.xlu0 %v5519, 127
    %v5608 = vpop.permute.xlu0 %5607
    %5609 = vrot.lane.b32.xlu0 %v5520, 127
    %v5610 = vpop.permute.xlu0 %5609
    %5611 = vrot.lane.b32.xlu0 %v5521, 127
    %v5612 = vpop.permute.xlu0 %5611
    %5613 = vrot.lane.b32.xlu0 %v5522, 127
    %v5614 = vpop.permute.xlu0 %5613
    %s5615 = sld [smem:[#allocation7 + $0xd2]]
    %v5616 = vstv %s5615
    %v5617 = vmul.f32 %v5602, %v5616
    %v5618 = vmul.f32 %v5604, %v5616
    %v5619 = vmul.f32 %v5606, %v5616
    %v5620 = vmul.f32 %v5608, %v5616
    %v5621 = vmul.f32 %v5610, %v5616
    %v5622 = vmul.f32 %v5612, %v5616
    %v5623 = vmul.f32 %v5614, %v5616
    %v5624 = vadd.f32 %v5578, %v5617
    %v5625 = vadd.f32 %v5579, %v5618
    %v5626 = vadd.f32 %v5580, %v5619
    %v5627 = vadd.f32 %v5581, %v5620
    %v5628 = vadd.f32 %v5582, %v5621
    %v5629 = vadd.f32 %v5583, %v5622
    %v5630 = vadd.f32 %v5584, %v5623
    %s5631 = sld [smem:[#allocation7 + $0xdb]]
    %v5632 = vstv %s5631
    %v5633 = vmul.f32 %v5602, %v5632
    %v5634 = vmul.f32 %v5604, %v5632
    %v5635 = vmul.f32 %v5606, %v5632
    %v5636 = vmul.f32 %v5608, %v5632
    %v5637 = vmul.f32 %v5610, %v5632
    %v5638 = vmul.f32 %v5612, %v5632
    %v5639 = vmul.f32 %v5614, %v5632
    %v5640 = vadd.f32 %v5594, %v5633
    %v5641 = vadd.f32 %v5595, %v5634
    %v5642 = vadd.f32 %v5596, %v5635
    %v5643 = vadd.f32 %v5597, %v5636
    %v5644 = vadd.f32 %v5598, %v5637
    %v5645 = vadd.f32 %v5599, %v5638
    %v5646 = vadd.f32 %v5600, %v5639
    %v5647 = vld [vmem:[%s973 + $0x9] sm:$0xff]
    %v5648 = vld [vmem:[%s973 + $0x11] sm:$0xff]
    %v5649 = vld [vmem:[%s973 + $0x19] sm:$0xff]
    %v5650 = vld [vmem:[%s973 + $0x21] sm:$0xff]
    %v5651 = vld [vmem:[%s973 + $0x29] sm:$0xff]
    %v5652 = vld [vmem:[%s973 + $0x31] sm:$0xff]
    %v5653 = vld [vmem:[%s973 + $0x39] sm:$0xff]
    %5654 = vrot.lane.b32.xlu0 %v5647, 1
    %v5655 = vpop.permute.xlu0 %5654
    %5656 = vrot.lane.b32.xlu0 %v5648, 1
    %v5657 = vpop.permute.xlu0 %5656
    %5658 = vrot.lane.b32.xlu0 %v5649, 1
    %v5659 = vpop.permute.xlu0 %5658
    %5660 = vrot.lane.b32.xlu0 %v5650, 1
    %v5661 = vpop.permute.xlu0 %5660
    %5662 = vrot.lane.b32.xlu0 %v5651, 1
    %v5663 = vpop.permute.xlu0 %5662
    %5664 = vrot.lane.b32.xlu0 %v5652, 1
    %v5665 = vpop.permute.xlu0 %5664
    %5666 = vrot.lane.b32.xlu0 %v5653, 1
    %v5667 = vpop.permute.xlu0 %5666
    %s5668 = sld [smem:[#allocation7 + $0xd1]]
    %v5669 = vstv %s5668
    %v5670 = vmul.f32 %v5655, %v5669
    %v5671 = vmul.f32 %v5657, %v5669
    %v5672 = vmul.f32 %v5659, %v5669
    %v5673 = vmul.f32 %v5661, %v5669
    %v5674 = vmul.f32 %v5663, %v5669
    %v5675 = vmul.f32 %v5665, %v5669
    %v5676 = vmul.f32 %v5667, %v5669
    %v5677 = vadd.f32 %v5624, %v5670
    %v5678 = vadd.f32 %v5625, %v5671
    %v5679 = vadd.f32 %v5626, %v5672
    %v5680 = vadd.f32 %v5627, %v5673
    %v5681 = vadd.f32 %v5628, %v5674
    %v5682 = vadd.f32 %v5629, %v5675
    %v5683 = vadd.f32 %v5630, %v5676
    %s5684 = sld [smem:[#allocation7 + $0xda]]
    %v5685 = vstv %s5684
    %v5686 = vmul.f32 %v5655, %v5685
    %v5687 = vmul.f32 %v5657, %v5685
    %v5688 = vmul.f32 %v5659, %v5685
    %v5689 = vmul.f32 %v5661, %v5685
    %v5690 = vmul.f32 %v5663, %v5685
    %v5691 = vmul.f32 %v5665, %v5685
    %v5692 = vmul.f32 %v5667, %v5685
    %v5693 = vadd.f32 %v5640, %v5686
    %v5694 = vadd.f32 %v5641, %v5687
    %v5695 = vadd.f32 %v5642, %v5688
    %v5696 = vadd.f32 %v5643, %v5689
    %v5697 = vadd.f32 %v5644, %v5690
    %v5698 = vadd.f32 %v5645, %v5691
    %v5699 = vadd.f32 %v5646, %v5692
    %s5700 = sld [smem:[#allocation7 + $0xd0]]
    %v5701 = vstv %s5700
    %v5702 = vmul.f32 %v5647, %v5701
    %v5703 = vmul.f32 %v5648, %v5701
    %v5704 = vmul.f32 %v5649, %v5701
    %v5705 = vmul.f32 %v5650, %v5701
    %v5706 = vmul.f32 %v5651, %v5701
    %v5707 = vmul.f32 %v5652, %v5701
    %v5708 = vmul.f32 %v5653, %v5701
    %v5709 = vadd.f32 %v5677, %v5702
    %v5710 = vadd.f32 %v5678, %v5703
    %v5711 = vadd.f32 %v5679, %v5704
    %v5712 = vadd.f32 %v5680, %v5705
    %v5713 = vadd.f32 %v5681, %v5706
    %v5714 = vadd.f32 %v5682, %v5707
    %v5715 = vadd.f32 %v5683, %v5708
    %s5716 = sld [smem:[#allocation7 + $0xd9]]
    %v5717 = vstv %s5716
    %v5718 = vmul.f32 %v5647, %v5717
    %v5719 = vmul.f32 %v5648, %v5717
    %v5720 = vmul.f32 %v5649, %v5717
    %v5721 = vmul.f32 %v5650, %v5717
    %v5722 = vmul.f32 %v5651, %v5717
    %v5723 = vmul.f32 %v5652, %v5717
    %v5724 = vmul.f32 %v5653, %v5717
    %v5725 = vadd.f32 %v5693, %v5718
    %v5726 = vadd.f32 %v5694, %v5719
    %v5727 = vadd.f32 %v5695, %v5720
    %v5728 = vadd.f32 %v5696, %v5721
    %v5729 = vadd.f32 %v5697, %v5722
    %v5730 = vadd.f32 %v5698, %v5723
    %v5731 = vadd.f32 %v5699, %v5724
    %5732 = vrot.lane.b32.xlu0 %v5647, 127
    %v5733 = vpop.permute.xlu0 %5732
    %5734 = vrot.lane.b32.xlu0 %v5648, 127
    %v5735 = vpop.permute.xlu0 %5734
    %5736 = vrot.lane.b32.xlu0 %v5649, 127
    %v5737 = vpop.permute.xlu0 %5736
    %5738 = vrot.lane.b32.xlu0 %v5650, 127
    %v5739 = vpop.permute.xlu0 %5738
    %5740 = vrot.lane.b32.xlu0 %v5651, 127
    %v5741 = vpop.permute.xlu0 %5740
    %5742 = vrot.lane.b32.xlu0 %v5652, 127
    %v5743 = vpop.permute.xlu0 %5742
    %5744 = vrot.lane.b32.xlu0 %v5653, 127
    %v5745 = vpop.permute.xlu0 %5744
    %s5746 = sld [smem:[#allocation7 + $0xcf]]
    %v5747 = vstv %s5746
    %v5748 = vmul.f32 %v5733, %v5747
    %v5749 = vmul.f32 %v5735, %v5747
    %v5750 = vmul.f32 %v5737, %v5747
    %v5751 = vmul.f32 %v5739, %v5747
    %v5752 = vmul.f32 %v5741, %v5747
    %v5753 = vmul.f32 %v5743, %v5747
    %v5754 = vmul.f32 %v5745, %v5747
    %v5755 = vadd.f32 %v5709, %v5748
    %v5756 = vadd.f32 %v5710, %v5749
    %v5757 = vadd.f32 %v5711, %v5750
    %v5758 = vadd.f32 %v5712, %v5751
    %v5759 = vadd.f32 %v5713, %v5752
    %v5760 = vadd.f32 %v5714, %v5753
    %v5761 = vadd.f32 %v5715, %v5754
    %s5762 = sld [smem:[#allocation7 + $0xd8]]
    %v5763 = vstv %s5762
    %v5764 = vmul.f32 %v5733, %v5763
    %v5765 = vmul.f32 %v5735, %v5763
    %v5766 = vmul.f32 %v5737, %v5763
    %v5767 = vmul.f32 %v5739, %v5763
    %v5768 = vmul.f32 %v5741, %v5763
    %v5769 = vmul.f32 %v5743, %v5763
    %v5770 = vmul.f32 %v5745, %v5763
    %v5771 = vadd.f32 %v5725, %v5764
    %v5772 = vadd.f32 %v5726, %v5765
    %v5773 = vadd.f32 %v5727, %v5766
    %v5774 = vadd.f32 %v5728, %v5767
    %v5775 = vadd.f32 %v5729, %v5768
    %v5776 = vadd.f32 %v5730, %v5769
    %v5777 = vadd.f32 %v5731, %v5770
    %v5778 = vadd.f32 %v5755, 3.0
    %v5779 = vadd.f32 %v5756, 3.0
    %v5780 = vadd.f32 %v5757, 3.0
    %v5781 = vadd.f32 %v5758, 3.0
    %v5782 = vadd.f32 %v5759, 3.0
    %v5783 = vadd.f32 %v5760, 3.0
    %v5784 = vadd.f32 %v5761, 3.0
    %v5785 = vmax.f32 %v5778, 0.0
    %v5786 = vmax.f32 %v5779, 0.0
    %v5787 = vmax.f32 %v5780, 0.0
    %v5788 = vmax.f32 %v5781, 0.0
    %v5789 = vmax.f32 %v5782, 0.0
    %v5790 = vmax.f32 %v5783, 0.0
    %v5791 = vmax.f32 %v5784, 0.0
    %v5792 = vmin.f32 %v5785, 6.0
    %v5793 = vmin.f32 %v5786, 6.0
    %v5794 = vmin.f32 %v5787, 6.0
    %v5795 = vmin.f32 %v5788, 6.0
    %v5796 = vmin.f32 %v5789, 6.0
    %v5797 = vmin.f32 %v5790, 6.0
    %v5798 = vmin.f32 %v5791, 6.0
    %v5799 = vmul.f32 %v5755, %v5792
    %v5800 = vmul.f32 %v5756, %v5793
    %v5801 = vmul.f32 %v5757, %v5794
    %v5802 = vmul.f32 %v5758, %v5795
    %v5803 = vmul.f32 %v5759, %v5796
    %v5804 = vmul.f32 %v5760, %v5797
    %v5805 = vmul.f32 %v5761, %v5798
    %v5806 = vmul.f32 %v5799, 0.16666667
    %v5807 = vmul.f32 %v5800, 0.16666667
    %v5808 = vmul.f32 %v5801, 0.16666667
    %v5809 = vmul.f32 %v5802, 0.16666667
    %v5810 = vmul.f32 %v5803, 0.16666667
    %v5811 = vmul.f32 %v5804, 0.16666667
    %v5812 = vmul.f32 %v5805, 0.16666667
    %s5813 = scalar_lea.vmem %s5, 168
    %5814 = vst [vmem:[%s5813] sm:$0xff] %v5806
    %5815 = vst [vmem:[%s5813 + $0x8] sm:$0xff] %v5807
    %5816 = vst [vmem:[%s5813 + $0x10] sm:$0xff] %v5808
    %5817 = vst [vmem:[%s5813 + $0x18] sm:$0xff] %v5809
    %5818 = vst [vmem:[%s5813 + $0x20] sm:$0xff] %v5810
    %5819 = vst [vmem:[%s5813 + $0x28] sm:$0xff] %v5811
    %5820 = vst [vmem:[%s5813 + $0x30] sm:$0xff] %v5812
    %v5821 = vadd.f32 %v5771, 3.0
    %v5822 = vadd.f32 %v5772, 3.0
    %v5823 = vadd.f32 %v5773, 3.0
    %v5824 = vadd.f32 %v5774, 3.0
    %v5825 = vadd.f32 %v5775, 3.0
    %v5826 = vadd.f32 %v5776, 3.0
    %v5827 = vadd.f32 %v5777, 3.0
    %v5828 = vmax.f32 %v5821, 0.0
    %v5829 = vmax.f32 %v5822, 0.0
    %v5830 = vmax.f32 %v5823, 0.0
    %v5831 = vmax.f32 %v5824, 0.0
    %v5832 = vmax.f32 %v5825, 0.0
    %v5833 = vmax.f32 %v5826, 0.0
    %v5834 = vmax.f32 %v5827, 0.0
    %v5835 = vmin.f32 %v5828, 6.0
    %v5836 = vmin.f32 %v5829, 6.0
    %v5837 = vmin.f32 %v5830, 6.0
    %v5838 = vmin.f32 %v5831, 6.0
    %v5839 = vmin.f32 %v5832, 6.0
    %v5840 = vmin.f32 %v5833, 6.0
    %v5841 = vmin.f32 %v5834, 6.0
    %v5842 = vmul.f32 %v5771, %v5835
    %v5843 = vmul.f32 %v5772, %v5836
    %v5844 = vmul.f32 %v5773, %v5837
    %v5845 = vmul.f32 %v5774, %v5838
    %v5846 = vmul.f32 %v5775, %v5839
    %v5847 = vmul.f32 %v5776, %v5840
    %v5848 = vmul.f32 %v5777, %v5841
    %v5849 = vmul.f32 %v5842, 0.16666667
    %v5850 = vmul.f32 %v5843, 0.16666667
    %v5851 = vmul.f32 %v5844, 0.16666667
    %v5852 = vmul.f32 %v5845, 0.16666667
    %v5853 = vmul.f32 %v5846, 0.16666667
    %v5854 = vmul.f32 %v5847, 0.16666667
    %v5855 = vmul.f32 %v5848, 0.16666667
    %s5856 = scalar_lea.vmem %s5, 224
    %5857 = vst [vmem:[%s5856] sm:$0xff] %v5849
    %5858 = vst [vmem:[%s5856 + $0x8] sm:$0xff] %v5850
    %5859 = vst [vmem:[%s5856 + $0x10] sm:$0xff] %v5851
    %5860 = vst [vmem:[%s5856 + $0x18] sm:$0xff] %v5852
    %5861 = vst [vmem:[%s5856 + $0x20] sm:$0xff] %v5853
    %5862 = vst [vmem:[%s5856 + $0x28] sm:$0xff] %v5854
    %5863 = vst [vmem:[%s5856 + $0x30] sm:$0xff] %v5855
    // Predicated region
    $region38: #{model_forward.1} parent=1 // pred_check
      _
    $region39: #{model_forward.1} parent=1 // pred_check_branch
      %5865 = sbr.rel (0) target = $region41
    $region40: #{model_forward.1} parent=1 // pred_region
      _
    $region41: #{model_forward.1} parent=1 // pred_fallthru
      _
    // Predicated region
    $region42: #{model_forward.1} parent=1 // pred_check
      _
    $region43: #{model_forward.1} parent=1 // pred_check_branch
      %5867 = sbr.rel (0) target = $region45
    $region44: #{model_forward.1} parent=1 // pred_region
      _
    $region45: #{model_forward.1} parent=1 // pred_fallthru
      _
    %5868 = vsyncpa [#allocation4], 1
    %5869 = vsyncpa [#allocation6], 1
    %5870 = vsyncpa [#allocation9], 1

</llo_original>
